<compile_context>
chip_gen: v6e
topology: v6e:2x2x1
jax: 0.10.0
libtpu: 0.0.40
codegen_flags: <defaults>
</compile_context>

<pallas_src>
import functools

import jax
import jax.numpy as jnp
from jax.experimental import pallas as pl
from jax.experimental.pallas import tpu as pltpu

ZP = 128  # lane-padded latent width (one full vreg lane block)


def _ncde_kernel(dxs_ref, x0_ref, wh_ref, wz_ref, zseq_out, *,
                 x_dim, hidden, offs_h, offs_z):
    """Whole NCDE integration (init MLP + L RK4 steps) in one kernel invocation."""
    length = dxs_ref.shape[0]
    B = dxs_ref.shape[1]
    H = hidden
    X = x_dim

    # ---- one-time loads: weights from the two packed buffers (static, aligned slices) ----
    def wh(name, rows):
        off = offs_h[name]
        return wh_ref[off:off + rows, :]

    wi1, bi1 = wh("wi1", X), wh("bi1", 1)
    wi2, bi2 = wh("wi2", H), wh("bi2", 1)
    wd1, bd1 = wh("wd1", ZP), wh("bd1", 1)
    wd2, bd2 = wh("wd2", H), wh("bd2", 1)

    def wz(name, rows, cols):
        off = offs_z[name]
        return wz_ref[off:off + rows, 0:cols]

    wi3, bi3 = wz("wi3", H, ZP), wz("bi3", 1, ZP)
    wd3, bd3 = wz("wd3", H, X * ZP), wz("bd3", 1, X * ZP)

    # Hoist bias broadcasts out of the loop (JAX does not CSE broadcast_in_dim).
    bd1b = jnp.broadcast_to(bd1, (B, H))
    bd2b = jnp.broadcast_to(bd2, (B, H))
    bd3b = jnp.broadcast_to(bd3, (B, X * ZP))

    # ---- z0 = initialize(X(t0))  (MLP with ReLU hidden activations) ----
    h = jnp.maximum(jnp.dot(x0_ref[...], wi1, preferred_element_type=jnp.float32) + bi1, 0.0)
    h = jnp.maximum(jnp.dot(h, wi2, preferred_element_type=jnp.float32) + bi2, 0.0)
    z0 = jnp.dot(h, wi3, preferred_element_type=jnp.float32) + bi3   # (B, ZP); lanes Z.. stay 0
    zseq_out[0] = z0

    third = jnp.float32(1.0 / 3.0)

    def field(z, dxb, sdxb):
        # g'(z) = dt * (f(z) @ dX/dt) = tanh(MLP(z)).view(Z, X) @ dX - 1e-3 * z * sum(dX)
        # TODO(synk): at production batch sizes benchmark a VPU rank-1 formulation of these
        # tiny dots vs. the MXU path.
        h = jnp.maximum(jnp.dot(z, wd1, preferred_element_type=jnp.float32) + bd1b, 0.0)
        h = jnp.maximum(jnp.dot(h, wd2, preferred_element_type=jnp.float32) + bd2b, 0.0)
        a = jnp.tanh(jnp.dot(h, wd3, preferred_element_type=jnp.float32) + bd3b)  # (B, X*ZP)
        prod = a * dxb                       # whole-vreg VPU multiply (lane-aligned)
        g = -0.001 * z * sdxb
        for xc in range(X):                  # static, 128-lane-aligned slice adds
            g = g + prod[:, xc * ZP:(xc + 1) * ZP]
        return g

    def step(i, z):
        dxs = dxs_ref[i]                     # (B, (X+1)*128): dX per channel + sum(dX)
        dxb = dxs[:, :X * ZP]
        sdxb = dxs[:, X * ZP:]
        # torchdiffeq fixed-grid "rk4" (3/8 rule), dt folded into dX: k_i' = dt * k_i.
        k1 = field(z, dxb, sdxb)
        k1_3 = k1 * third
        k2 = field(z + k1_3, dxb, sdxb)
        k3 = field(z + (k2 - k1_3), dxb, sdxb)
        k4 = field(z + (k1 - k2 + k3), dxb, sdxb)
        z_new = z + (k1 + 3.0 * (k2 + k3) + k4) * 0.125
        zseq_out[i + 1] = z_new
        return z_new

    if length <= 64:
        # Fully unroll: L is a compile-time constant and the RK4 chain is pure exposed
        # latency; unrolling gives the scheduler the whole chain plus next-step loads/stores.
        z = z0
        for i in range(length):
            z = step(i, z)
    else:
        jax.lax.fori_loop(0, length, step, z0, unroll=8)


def _pack_rows(pieces, width):
    """Stack 2-D f32 pieces (last dim <= width) into one buffer at 8-row-aligned offsets."""
    offs, rows = {}, 0
    for name, a in pieces:
        offs[name] = rows
        rows = -(-(rows + a.shape[0]) // 8) * 8
    buf = jnp.zeros((rows, width), jnp.float32)
    for name, a in pieces:
        buf = buf.at[offs[name]:offs[name] + a.shape[0], :a.shape[1]].set(
            a.astype(jnp.float32))
    return buf, offs


def ncde_forward(t, x, params, *, resolution=0.1):
    """NCDE.forward(t, x) for length > 0, t_eval=None, z0=None."""
    B, L, X = x.shape
    H = params["wi1"].shape[1]
    Z = params["wi3"].shape[1]

    # prepare_input: duplicate last observation, extend time grid by one resolution step.
    # TODO(synk): prepare_time_series (regular-grid resampling + NaN fill) treated as identity
    # because the example inputs are already sampled on the resolution grid.
    x_aug = jnp.concatenate([x, x[:, -1:]], axis=1).astype(jnp.float32)   # (B, L+1, X)
    t_row = t[0]
    t_merge = jnp.concatenate([t_row, t_row[-1:] + resolution])           # (L+1,)

    # dt cancels algebraically inside the RK4 step (k_i' = dt*k_i): feed dX, not dX/dt.
    dx = jnp.transpose(x_aug[:, 1:] - x_aug[:, :-1], (1, 0, 2))           # (L, B, X)
    sdx = jnp.sum(dx, axis=-1, keepdims=True)                             # (L, B, 1), hoisted
    dxs = jnp.repeat(jnp.concatenate([dx, sdx], axis=-1), ZP, axis=-1)    # (L, B, (X+1)*128)
    x0 = x_aug[:, 0]                                                      # interpolator.evaluate(t0)

    # --- lane-padded weight layouts for the 128-lane latent block ---
    f32 = jnp.float32
    wi3p = jnp.zeros((H, ZP), f32).at[:, :Z].set(params["wi3"])
    bi3p = jnp.zeros((1, ZP), f32).at[:, :Z].set(params["bi3"].reshape(1, Z))
    wd1p = jnp.zeros((ZP, H), f32).at[:Z, :].set(params["wd1"])
    # Last dynamics layer: torch .view(Z, X) column order -> channel xc at lanes
    # [xc*128, xc*128+Z), zeros elsewhere, so in-kernel contraction slices are aligned.
    wd3t = params["wd3"].reshape(H, Z, X).transpose(0, 2, 1)              # (H, X, Z)
    wd3p = jnp.zeros((H, X, ZP), f32).at[:, :, :Z].set(wd3t).reshape(H, X * ZP)
    bd3t = params["bd3"].reshape(Z, X).T                                  # (X, Z)
    bd3p = jnp.zeros((X, ZP), f32).at[:, :Z].set(bd3t).reshape(1, X * ZP)

    wbuf_h, offs_h = _pack_rows(
        [("wi1", params["wi1"]), ("bi1", params["bi1"].reshape(1, H)),
         ("wi2", params["wi2"]), ("bi2", params["bi2"].reshape(1, H)),
         ("wd1", wd1p), ("bd1", params["bd1"].reshape(1, H)),
         ("wd2", params["wd2"]), ("bd2", params["bd2"].reshape(1, H))], H)
    wbuf_z, offs_z = _pack_rows(
        [("wi3", wi3p), ("bi3", bi3p), ("wd3", wd3p), ("bd3", bd3p)], X * ZP)

    # Batch-tiled "parallel" grid: on v7x the two TensorCores split batch tiles at
    # production batch sizes; grid size is 1 at tiny B (no overhead added).
    bt = B if (B <= 8 or B % 8 != 0) else 8
    grid = (B // bt,)

    kernel = functools.partial(_ncde_kernel, x_dim=X, hidden=H,
                               offs_h=offs_h, offs_z=offs_z)
    zseq = pl.pallas_call(
        kernel,
        out_shape=jax.ShapeDtypeStruct((L + 1, B, ZP), jnp.float32),
        grid=grid,
        in_specs=[
            pl.BlockSpec((L, bt, (X + 1) * ZP), lambda b: (0, b, 0)),     # dX + sum(dX)
            pl.BlockSpec((bt, X), lambda b: (b, 0)),                      # x0
            pl.BlockSpec(wbuf_h.shape, lambda b: (0, 0)),                 # packed H-wide weights
            pl.BlockSpec(wbuf_z.shape, lambda b: (0, 0)),                 # packed lane-padded weights
        ],
        out_specs=pl.BlockSpec((L + 1, bt, ZP), lambda b: (0, b, 0)),     # lane-dense trajectory
        compiler_params=pltpu.CompilerParams(
            dimension_semantics=("parallel",),
            vmem_limit_bytes=32 * 1024 * 1024),
    )(dxs, x0, wbuf_h, wbuf_z)
    # TODO(synk): for very long sequences (L*B large) the resident (L,B,(X+1)*128) +
    # (L+1,B,128) tables exceed VMEM (notably v7x's 64 MiB); switch to a grid over L-chunks
    # carrying z in scratch and streaming dX in / the trajectory out.

    z_unified = jnp.transpose(zseq[:, :, :Z], (1, 0, 2))                  # (B, L+1, Z)

    # take_from_sequence(t_merge, z_unified, t_eval)
    t_eval = t - jnp.min(t, axis=-1, keepdims=True)                       # (B, L)
    idx = jnp.searchsorted(t_merge, t_eval, side="left")                  # (B, L)
    z = jnp.take_along_axis(z_unified, idx[:, :, None], axis=1)           # (B, L, Z)
    return z


def ncde_reference(t, x, params, *, resolution=0.1):
    """Pure-JAX reference of the same forward pass (for correctness check)."""
    B, L, X = x.shape
    Z = params["wi3"].shape[1]
    x_aug = jnp.concatenate([x, x[:, -1:]], axis=1)
    t_row = t[0]
    t_merge = jnp.concatenate([t_row, t_row[-1:] + resolution])
    dt = jnp.diff(t_merge)
    dxdt = (x_aug[:, 1:] - x_aug[:, :-1]) / dt[None, :, None]

    def init_mlp(v):
        h = jax.nn.relu(v @ params["wi1"] + params["bi1"])
        h = jax.nn.relu(h @ params["wi2"] + params["bi2"])
        return h @ params["wi3"] + params["bi3"]

    def field(z):
        h = jax.nn.relu(z @ params["wd1"] + params["bd1"])
        h = jax.nn.relu(h @ params["wd2"] + params["bd2"])
        a = jnp.tanh(h @ params["wd3"] + params["bd3"]).reshape(B, Z, X)
        return a - 0.001 * z[..., None]

    def g(z, d):
        return jnp.einsum("bzx,bx->bz", field(z), d)

    z = init_mlp(x_aug[:, 0])
    zs = [z]
    for i in range(L):
        d, h_ = dxdt[:, i], dt[i]
        k1 = g(z, d)
        k2 = g(z + h_ * k1 / 3.0, d)
        k3 = g(z + h_ * (k2 - k1 / 3.0), d)
        k4 = g(z + h_ * (k1 - k2 + k3), d)
        z = z + h_ * (k1 + 3.0 * (k2 + k3) + k4) / 8.0
        zs.append(z)
    z_unified = jnp.stack(zs, axis=1)
    t_eval = t - jnp.min(t, axis=-1, keepdims=True)
    idx = jnp.searchsorted(t_merge, t_eval, side="left")
    return jnp.take_along_axis(z_unified, idx[:, :, None], axis=1)


def init_params(key, x_dim, z_dim, hidden):
    """Deterministic synthetic weights (PyTorch Linear-style uniform init).
    TODO(synk): MLP layer structure assumed in->H, H->H, H->out with ReLU (num_layer=3)."""
    def lin(k, fan_in, fan_out):
        kw, kb = jax.random.split(k)
        lim = 1.0 / jnp.sqrt(jnp.float32(fan_in))
        w = jax.random.uniform(kw, (fan_in, fan_out), jnp.float32, -lim, lim)
        b = jax.random.uniform(kb, (1, fan_out), jnp.float32, -lim, lim)
        return w, b

    ks = jax.random.split(key, 6)
    p = {}
    p["wi1"], p["bi1"] = lin(ks[0], x_dim, hidden)
    p["wi2"], p["bi2"] = lin(ks[1], hidden, hidden)
    p["wi3"], p["bi3"] = lin(ks[2], hidden, z_dim)
    p["wd1"], p["bd1"] = lin(ks[3], z_dim, hidden)
    p["wd2"], p["bd2"] = lin(ks[4], hidden, hidden)
    p["wd3"], p["bd3"] = lin(ks[5], hidden, z_dim * x_dim)
    return p


if __name__ == "__main__":
    B, L = 2, 8               # batch, sequence length
    X = 4                     # input_size (x_dim)
    Z = 6                     # output_size (z_size)
    H = 32                    # hidden_size, num_layer = 3
    resolution = 0.1

    key = jax.random.PRNGKey(0)
    kx, kp = jax.random.split(key)
    x = jax.random.normal(kx, (B, L, X), jnp.float32)
    t = jnp.broadcast_to(resolution * jnp.arange(L, dtype=jnp.float32), (B, L))
    params = init_params(kp, X, Z, H)

    z = ncde_forward(t, x, params, resolution=resolution)
    jax.block_until_ready(z)
    assert z.shape == (B, L, Z), z.shape

    z_ref = ncde_reference(t, x, params, resolution=resolution)
    assert jnp.allclose(z, z_ref, rtol=1e-3, atol=1e-3), float(jnp.max(jnp.abs(z - z_ref)))

    print("KERNEL_OK")
</pallas_src>

<mosaic_0001>
module attributes {stable_mosaic.version = 11 : i64} {
  func.func @_ncde_kernel(%arg0: i32, %arg1: memref<8x2x640xf32, #tpu.memory_space<vmem>>, %arg2: memref<2x4xf32, #tpu.memory_space<vmem>>, %arg3: memref<232x32xf32, #tpu.memory_space<vmem>>, %arg4: memref<80x512xf32, #tpu.memory_space<vmem>>, %arg5: memref<9x2x128xf32, #tpu.memory_space<vmem>>) attributes {dimension_semantics = [#tpu.dimension_semantics<parallel>], iteration_bounds = array<i64: 1>, scalar_prefetch = 0 : i64, scratch_operands = 0 : i64, tpu.core_type = #tpu.core_type<tc>, window_params = [{transform_indices = @transform_0, window_bounds = array<i64: 8, 2, 640>}, {transform_indices = @transform_1, window_bounds = array<i64: 2, 4>}, {pipeline_mode = #tpu.pipeline_mode<synchronous>, transform_indices = @transform_2, window_bounds = array<i64: 232, 32>}, {pipeline_mode = #tpu.pipeline_mode<synchronous>, transform_indices = @transform_3, window_bounds = array<i64: 80, 512>}, {transform_indices = @transform_4, window_bounds = array<i64: 9, 2, 128>}]} {
    %c0 = arith.constant 0 : index
    %c0_0 = arith.constant 0 : index
    %0 = vector.load %arg3[%c0, %c0_0] : memref<232x32xf32, #tpu.memory_space<vmem>>, vector<4x32xf32>
    %c8 = arith.constant 8 : index
    %c0_1 = arith.constant 0 : index
    %1 = vector.load %arg3[%c8, %c0_1] : memref<232x32xf32, #tpu.memory_space<vmem>>, vector<1x32xf32>
    %c16 = arith.constant 16 : index
    %c0_2 = arith.constant 0 : index
    %2 = vector.load %arg3[%c16, %c0_2] : memref<232x32xf32, #tpu.memory_space<vmem>>, vector<32x32xf32>
    %c48 = arith.constant 48 : index
    %c0_3 = arith.constant 0 : index
    %3 = vector.load %arg3[%c48, %c0_3] : memref<232x32xf32, #tpu.memory_space<vmem>>, vector<1x32xf32>
    %c56 = arith.constant 56 : index
    %c0_4 = arith.constant 0 : index
    %4 = vector.load %arg3[%c56, %c0_4] : memref<232x32xf32, #tpu.memory_space<vmem>>, vector<128x32xf32>
    %c184 = arith.constant 184 : index
    %c0_5 = arith.constant 0 : index
    %5 = vector.load %arg3[%c184, %c0_5] : memref<232x32xf32, #tpu.memory_space<vmem>>, vector<1x32xf32>
    %c192 = arith.constant 192 : index
    %c0_6 = arith.constant 0 : index
    %6 = vector.load %arg3[%c192, %c0_6] : memref<232x32xf32, #tpu.memory_space<vmem>>, vector<32x32xf32>
    %c224 = arith.constant 224 : index
    %c0_7 = arith.constant 0 : index
    %7 = vector.load %arg3[%c224, %c0_7] : memref<232x32xf32, #tpu.memory_space<vmem>>, vector<1x32xf32>
    %c0_8 = arith.constant 0 : index
    %c0_9 = arith.constant 0 : index
    %8 = vector.load %arg4[%c0_8, %c0_9] : memref<80x512xf32, #tpu.memory_space<vmem>>, vector<32x128xf32>
    %c32 = arith.constant 32 : index
    %c0_10 = arith.constant 0 : index
    %9 = vector.load %arg4[%c32, %c0_10] : memref<80x512xf32, #tpu.memory_space<vmem>>, vector<1x128xf32>
    %c40 = arith.constant 40 : index
    %c0_11 = arith.constant 0 : index
    %10 = vector.load %arg4[%c40, %c0_11] : memref<80x512xf32, #tpu.memory_space<vmem>>, vector<32x512xf32>
    %c72 = arith.constant 72 : index
    %c0_12 = arith.constant 0 : index
    %11 = vector.load %arg4[%c72, %c0_12] : memref<80x512xf32, #tpu.memory_space<vmem>>, vector<1x512xf32>
    %12 = vector.shape_cast %5 : vector<1x32xf32> to vector<1x32xf32>
    %13 = vector.broadcast %12 : vector<1x32xf32> to vector<2x32xf32>
    %14 = vector.shape_cast %7 : vector<1x32xf32> to vector<1x32xf32>
    %15 = vector.broadcast %14 : vector<1x32xf32> to vector<2x32xf32>
    %16 = vector.shape_cast %11 : vector<1x512xf32> to vector<1x512xf32>
    %17 = vector.broadcast %16 : vector<1x512xf32> to vector<2x512xf32>
    %c0_13 = arith.constant 0 : index
    %c0_14 = arith.constant 0 : index
    %18 = vector.load %arg2[%c0_13, %c0_14] : memref<2x4xf32, #tpu.memory_space<vmem>>, vector<2x4xf32>
    %cst = arith.constant dense<0.000000e+00> : vector<2x32xf32>
    %19 = tpu.matmul %18, %0, %cst {dimension_numbers = #tpu.dot_dimension_numbers<[1], [0], [0], [1], [0, 0, 1, 1], [], []>} : vector<2x4xf32>, vector<4x32xf32>, vector<2x32xf32> -> vector<2x32xf32>
    %20 = vector.broadcast %1 : vector<1x32xf32> to vector<2x32xf32>
    %21 = arith.addf %19, %20 : vector<2x32xf32>
    %cst_15 = arith.constant 0.000000e+00 : f32
    %22 = vector.broadcast %cst_15 : f32 to vector<2x32xf32>
    %23 = arith.maximumf %21, %22 : vector<2x32xf32>
    %cst_16 = arith.constant dense<0.000000e+00> : vector<2x32xf32>
    %24 = tpu.matmul %23, %2, %cst_16 {dimension_numbers = #tpu.dot_dimension_numbers<[1], [0], [0], [1], [0, 0, 1, 1], [], []>} : vector<2x32xf32>, vector<32x32xf32>, vector<2x32xf32> -> vector<2x32xf32>
    %25 = vector.broadcast %3 : vector<1x32xf32> to vector<2x32xf32>
    %26 = arith.addf %24, %25 : vector<2x32xf32>
    %cst_17 = arith.constant 0.000000e+00 : f32
    %27 = vector.broadcast %cst_17 : f32 to vector<2x32xf32>
    %28 = arith.maximumf %26, %27 : vector<2x32xf32>
    %cst_18 = arith.constant dense<0.000000e+00> : vector<2x128xf32>
    %29 = tpu.matmul %28, %8, %cst_18 {dimension_numbers = #tpu.dot_dimension_numbers<[1], [0], [0], [1], [0, 0, 1, 1], [], []>} : vector<2x32xf32>, vector<32x128xf32>, vector<2x128xf32> -> vector<2x128xf32>
    %30 = vector.broadcast %9 : vector<1x128xf32> to vector<2x128xf32>
    %31 = arith.addf %29, %30 : vector<2x128xf32>
    %c0_19 = arith.constant 0 : index
    %c0_20 = arith.constant 0 : index
    %c0_21 = arith.constant 0 : index
    %32 = vector.load %arg5[%c0_19, %c0_20, %c0_21] : memref<9x2x128xf32, #tpu.memory_space<vmem>>, vector<1x2x128xf32>
    %33 = vector.shape_cast %32 : vector<1x2x128xf32> to vector<2x128xf32>
    %34 = vector.shape_cast %31 : vector<2x128xf32> to vector<1x2x128xf32>
    tpu.vector_store %arg5[%c0_19, %c0_20, %c0_21], %34 {strides = array<i32>} : memref<9x2x128xf32, #tpu.memory_space<vmem>>, vector<1x2x128xf32>,
    %c0_22 = arith.constant 0 : index
    %c0_23 = arith.constant 0 : index
    %c0_24 = arith.constant 0 : index
    %35 = vector.load %arg1[%c0_22, %c0_23, %c0_24] : memref<8x2x640xf32, #tpu.memory_space<vmem>>, vector<1x2x640xf32>
    %36 = vector.shape_cast %35 : vector<1x2x640xf32> to vector<2x640xf32>
    %37 = vector.extract_strided_slice %36 {offsets = [0, 0], sizes = [2, 512], strides = [1, 1]} : vector<2x640xf32> to vector<2x512xf32>
    %38 = vector.extract_strided_slice %36 {offsets = [0, 512], sizes = [2, 128], strides = [1, 1]} : vector<2x640xf32> to vector<2x128xf32>
    %cst_25 = arith.constant dense<0.000000e+00> : vector<2x32xf32>
    %39 = tpu.matmul %31, %4, %cst_25 {dimension_numbers = #tpu.dot_dimension_numbers<[1], [0], [0], [1], [0, 0, 1, 1], [], []>} : vector<2x128xf32>, vector<128x32xf32>, vector<2x32xf32> -> vector<2x32xf32>
    %40 = arith.addf %39, %13 : vector<2x32xf32>
    %cst_26 = arith.constant 0.000000e+00 : f32
    %41 = vector.broadcast %cst_26 : f32 to vector<2x32xf32>
    %42 = arith.maximumf %40, %41 : vector<2x32xf32>
    %cst_27 = arith.constant dense<0.000000e+00> : vector<2x32xf32>
    %43 = tpu.matmul %42, %6, %cst_27 {dimension_numbers = #tpu.dot_dimension_numbers<[1], [0], [0], [1], [0, 0, 1, 1], [], []>} : vector<2x32xf32>, vector<32x32xf32>, vector<2x32xf32> -> vector<2x32xf32>
    %44 = arith.addf %43, %15 : vector<2x32xf32>
    %cst_28 = arith.constant 0.000000e+00 : f32
    %45 = vector.broadcast %cst_28 : f32 to vector<2x32xf32>
    %46 = arith.maximumf %44, %45 : vector<2x32xf32>
    %cst_29 = arith.constant dense<0.000000e+00> : vector<2x512xf32>
    %47 = tpu.matmul %46, %10, %cst_29 {dimension_numbers = #tpu.dot_dimension_numbers<[1], [0], [0], [1], [0, 0, 1, 1], [], []>} : vector<2x32xf32>, vector<32x512xf32>, vector<2x512xf32> -> vector<2x512xf32>
    %48 = arith.addf %47, %17 : vector<2x512xf32>
    %49 = math.tanh %48 : vector<2x512xf32>
    %50 = arith.mulf %49, %37 : vector<2x512xf32>
    %cst_30 = arith.constant -1.000000e-03 : f32
    %51 = vector.broadcast %cst_30 : f32 to vector<2x128xf32>
    %52 = arith.mulf %51, %31 : vector<2x128xf32>
    %53 = arith.mulf %52, %38 : vector<2x128xf32>
    %54 = vector.extract_strided_slice %50 {offsets = [0, 0], sizes = [2, 128], strides = [1, 1]} : vector<2x512xf32> to vector<2x128xf32>
    %55 = arith.addf %53, %54 : vector<2x128xf32>
    %56 = vector.extract_strided_slice %50 {offsets = [0, 128], sizes = [2, 128], strides = [1, 1]} : vector<2x512xf32> to vector<2x128xf32>
    %57 = arith.addf %55, %56 : vector<2x128xf32>
    %58 = vector.extract_strided_slice %50 {offsets = [0, 256], sizes = [2, 128], strides = [1, 1]} : vector<2x512xf32> to vector<2x128xf32>
    %59 = arith.addf %57, %58 : vector<2x128xf32>
    %60 = vector.extract_strided_slice %50 {offsets = [0, 384], sizes = [2, 128], strides = [1, 1]} : vector<2x512xf32> to vector<2x128xf32>
    %61 = arith.addf %59, %60 : vector<2x128xf32>
    %cst_31 = arith.constant 0.333333343 : f32
    %62 = vector.broadcast %cst_31 : f32 to vector<2x128xf32>
    %63 = arith.mulf %61, %62 : vector<2x128xf32>
    %64 = arith.addf %31, %63 : vector<2x128xf32>
    %cst_32 = arith.constant dense<0.000000e+00> : vector<2x32xf32>
    %65 = tpu.matmul %64, %4, %cst_32 {dimension_numbers = #tpu.dot_dimension_numbers<[1], [0], [0], [1], [0, 0, 1, 1], [], []>} : vector<2x128xf32>, vector<128x32xf32>, vector<2x32xf32> -> vector<2x32xf32>
    %66 = arith.addf %65, %13 : vector<2x32xf32>
    %cst_33 = arith.constant 0.000000e+00 : f32
    %67 = vector.broadcast %cst_33 : f32 to vector<2x32xf32>
    %68 = arith.maximumf %66, %67 : vector<2x32xf32>
    %cst_34 = arith.constant dense<0.000000e+00> : vector<2x32xf32>
    %69 = tpu.matmul %68, %6, %cst_34 {dimension_numbers = #tpu.dot_dimension_numbers<[1], [0], [0], [1], [0, 0, 1, 1], [], []>} : vector<2x32xf32>, vector<32x32xf32>, vector<2x32xf32> -> vector<2x32xf32>
    %70 = arith.addf %69, %15 : vector<2x32xf32>
    %cst_35 = arith.constant 0.000000e+00 : f32
    %71 = vector.broadcast %cst_35 : f32 to vector<2x32xf32>
    %72 = arith.maximumf %70, %71 : vector<2x32xf32>
    %cst_36 = arith.constant dense<0.000000e+00> : vector<2x512xf32>
    %73 = tpu.matmul %72, %10, %cst_36 {dimension_numbers = #tpu.dot_dimension_numbers<[1], [0], [0], [1], [0, 0, 1, 1], [], []>} : vector<2x32xf32>, vector<32x512xf32>, vector<2x512xf32> -> vector<2x512xf32>
    %74 = arith.addf %73, %17 : vector<2x512xf32>
    %75 = math.tanh %74 : vector<2x512xf32>
    %76 = arith.mulf %75, %37 : vector<2x512xf32>
    %cst_37 = arith.constant -1.000000e-03 : f32
    %77 = vector.broadcast %cst_37 : f32 to vector<2x128xf32>
    %78 = arith.mulf %77, %64 : vector<2x128xf32>
    %79 = arith.mulf %78, %38 : vector<2x128xf32>
    %80 = vector.extract_strided_slice %76 {offsets = [0, 0], sizes = [2, 128], strides = [1, 1]} : vector<2x512xf32> to vector<2x128xf32>
    %81 = arith.addf %79, %80 : vector<2x128xf32>
    %82 = vector.extract_strided_slice %76 {offsets = [0, 128], sizes = [2, 128], strides = [1, 1]} : vector<2x512xf32> to vector<2x128xf32>
    %83 = arith.addf %81, %82 : vector<2x128xf32>
    %84 = vector.extract_strided_slice %76 {offsets = [0, 256], sizes = [2, 128], strides = [1, 1]} : vector<2x512xf32> to vector<2x128xf32>
    %85 = arith.addf %83, %84 : vector<2x128xf32>
    %86 = vector.extract_strided_slice %76 {offsets = [0, 384], sizes = [2, 128], strides = [1, 1]} : vector<2x512xf32> to vector<2x128xf32>
    %87 = arith.addf %85, %86 : vector<2x128xf32>
    %88 = arith.subf %87, %63 : vector<2x128xf32>
    %89 = arith.addf %31, %88 : vector<2x128xf32>
    %cst_38 = arith.constant dense<0.000000e+00> : vector<2x32xf32>
    %90 = tpu.matmul %89, %4, %cst_38 {dimension_numbers = #tpu.dot_dimension_numbers<[1], [0], [0], [1], [0, 0, 1, 1], [], []>} : vector<2x128xf32>, vector<128x32xf32>, vector<2x32xf32> -> vector<2x32xf32>
    %91 = arith.addf %90, %13 : vector<2x32xf32>
    %cst_39 = arith.constant 0.000000e+00 : f32
    %92 = vector.broadcast %cst_39 : f32 to vector<2x32xf32>
    %93 = arith.maximumf %91, %92 : vector<2x32xf32>
    %cst_40 = arith.constant dense<0.000000e+00> : vector<2x32xf32>
    %94 = tpu.matmul %93, %6, %cst_40 {dimension_numbers = #tpu.dot_dimension_numbers<[1], [0], [0], [1], [0, 0, 1, 1], [], []>} : vector<2x32xf32>, vector<32x32xf32>, vector<2x32xf32> -> vector<2x32xf32>
    %95 = arith.addf %94, %15 : vector<2x32xf32>
    %cst_41 = arith.constant 0.000000e+00 : f32
    %96 = vector.broadcast %cst_41 : f32 to vector<2x32xf32>
    %97 = arith.maximumf %95, %96 : vector<2x32xf32>
    %cst_42 = arith.constant dense<0.000000e+00> : vector<2x512xf32>
    %98 = tpu.matmul %97, %10, %cst_42 {dimension_numbers = #tpu.dot_dimension_numbers<[1], [0], [0], [1], [0, 0, 1, 1], [], []>} : vector<2x32xf32>, vector<32x512xf32>, vector<2x512xf32> -> vector<2x512xf32>
    %99 = arith.addf %98, %17 : vector<2x512xf32>
    %100 = math.tanh %99 : vector<2x512xf32>
    %101 = arith.mulf %100, %37 : vector<2x512xf32>
    %cst_43 = arith.constant -1.000000e-03 : f32
    %102 = vector.broadcast %cst_43 : f32 to vector<2x128xf32>
    %103 = arith.mulf %102, %89 : vector<2x128xf32>
    %104 = arith.mulf %103, %38 : vector<2x128xf32>
    %105 = vector.extract_strided_slice %101 {offsets = [0, 0], sizes = [2, 128], strides = [1, 1]} : vector<2x512xf32> to vector<2x128xf32>
    %106 = arith.addf %104, %105 : vector<2x128xf32>
    %107 = vector.extract_strided_slice %101 {offsets = [0, 128], sizes = [2, 128], strides = [1, 1]} : vector<2x512xf32> to vector<2x128xf32>
    %108 = arith.addf %106, %107 : vector<2x128xf32>
    %109 = vector.extract_strided_slice %101 {offsets = [0, 256], sizes = [2, 128], strides = [1, 1]} : vector<2x512xf32> to vector<2x128xf32>
    %110 = arith.addf %108, %109 : vector<2x128xf32>
    %111 = vector.extract_strided_slice %101 {offsets = [0, 384], sizes = [2, 128], strides = [1, 1]} : vector<2x512xf32> to vector<2x128xf32>
    %112 = arith.addf %110, %111 : vector<2x128xf32>
    %113 = arith.subf %61, %87 : vector<2x128xf32>
    %114 = arith.addf %113, %112 : vector<2x128xf32>
    %115 = arith.addf %31, %114 : vector<2x128xf32>
    %cst_44 = arith.constant dense<0.000000e+00> : vector<2x32xf32>
    %116 = tpu.matmul %115, %4, %cst_44 {dimension_numbers = #tpu.dot_dimension_numbers<[1], [0], [0], [1], [0, 0, 1, 1], [], []>} : vector<2x128xf32>, vector<128x32xf32>, vector<2x32xf32> -> vector<2x32xf32>
    %117 = arith.addf %116, %13 : vector<2x32xf32>
    %cst_45 = arith.constant 0.000000e+00 : f32
    %118 = vector.broadcast %cst_45 : f32 to vector<2x32xf32>
    %119 = arith.maximumf %117, %118 : vector<2x32xf32>
    %cst_46 = arith.constant dense<0.000000e+00> : vector<2x32xf32>
    %120 = tpu.matmul %119, %6, %cst_46 {dimension_numbers = #tpu.dot_dimension_numbers<[1], [0], [0], [1], [0, 0, 1, 1], [], []>} : vector<2x32xf32>, vector<32x32xf32>, vector<2x32xf32> -> vector<2x32xf32>
    %121 = arith.addf %120, %15 : vector<2x32xf32>
    %cst_47 = arith.constant 0.000000e+00 : f32
    %122 = vector.broadcast %cst_47 : f32 to vector<2x32xf32>
    %123 = arith.maximumf %121, %122 : vector<2x32xf32>
    %cst_48 = arith.constant dense<0.000000e+00> : vector<2x512xf32>
    %124 = tpu.matmul %123, %10, %cst_48 {dimension_numbers = #tpu.dot_dimension_numbers<[1], [0], [0], [1], [0, 0, 1, 1], [], []>} : vector<2x32xf32>, vector<32x512xf32>, vector<2x512xf32> -> vector<2x512xf32>
    %125 = arith.addf %124, %17 : vector<2x512xf32>
    %126 = math.tanh %125 : vector<2x512xf32>
    %127 = arith.mulf %126, %37 : vector<2x512xf32>
    %cst_49 = arith.constant -1.000000e-03 : f32
    %128 = vector.broadcast %cst_49 : f32 to vector<2x128xf32>
    %129 = arith.mulf %128, %115 : vector<2x128xf32>
    %130 = arith.mulf %129, %38 : vector<2x128xf32>
    %131 = vector.extract_strided_slice %127 {offsets = [0, 0], sizes = [2, 128], strides = [1, 1]} : vector<2x512xf32> to vector<2x128xf32>
    %132 = arith.addf %130, %131 : vector<2x128xf32>
    %133 = vector.extract_strided_slice %127 {offsets = [0, 128], sizes = [2, 128], strides = [1, 1]} : vector<2x512xf32> to vector<2x128xf32>
    %134 = arith.addf %132, %133 : vector<2x128xf32>
    %135 = vector.extract_strided_slice %127 {offsets = [0, 256], sizes = [2, 128], strides = [1, 1]} : vector<2x512xf32> to vector<2x128xf32>
    %136 = arith.addf %134, %135 : vector<2x128xf32>
    %137 = vector.extract_strided_slice %127 {offsets = [0, 384], sizes = [2, 128], strides = [1, 1]} : vector<2x512xf32> to vector<2x128xf32>
    %138 = arith.addf %136, %137 : vector<2x128xf32>
    %139 = arith.addf %87, %112 : vector<2x128xf32>
    %cst_50 = arith.constant 3.000000e+00 : f32
    %140 = vector.broadcast %cst_50 : f32 to vector<2x128xf32>
    %141 = arith.mulf %140, %139 : vector<2x128xf32>
    %142 = arith.addf %61, %141 : vector<2x128xf32>
    %143 = arith.addf %142, %138 : vector<2x128xf32>
    %cst_51 = arith.constant 1.250000e-01 : f32
    %144 = vector.broadcast %cst_51 : f32 to vector<2x128xf32>
    %145 = arith.mulf %143, %144 : vector<2x128xf32>
    %146 = arith.addf %31, %145 : vector<2x128xf32>
    %c1 = arith.constant 1 : index
    %c0_52 = arith.constant 0 : index
    %c0_53 = arith.constant 0 : index
    %147 = vector.load %arg5[%c1, %c0_52, %c0_53] : memref<9x2x128xf32, #tpu.memory_space<vmem>>, vector<1x2x128xf32>
    %148 = vector.shape_cast %147 : vector<1x2x128xf32> to vector<2x128xf32>
    %149 = vector.shape_cast %146 : vector<2x128xf32> to vector<1x2x128xf32>
    tpu.vector_store %arg5[%c1, %c0_52, %c0_53], %149 {strides = array<i32>} : memref<9x2x128xf32, #tpu.memory_space<vmem>>, vector<1x2x128xf32>,
    %c1_54 = arith.constant 1 : index
    %c0_55 = arith.constant 0 : index
    %c0_56 = arith.constant 0 : index
    %150 = vector.load %arg1[%c1_54, %c0_55, %c0_56] : memref<8x2x640xf32, #tpu.memory_space<vmem>>, vector<1x2x640xf32>
    %151 = vector.shape_cast %150 : vector<1x2x640xf32> to vector<2x640xf32>
    %152 = vector.extract_strided_slice %151 {offsets = [0, 0], sizes = [2, 512], strides = [1, 1]} : vector<2x640xf32> to vector<2x512xf32>
    %153 = vector.extract_strided_slice %151 {offsets = [0, 512], sizes = [2, 128], strides = [1, 1]} : vector<2x640xf32> to vector<2x128xf32>
    %cst_57 = arith.constant dense<0.000000e+00> : vector<2x32xf32>
    %154 = tpu.matmul %146, %4, %cst_57 {dimension_numbers = #tpu.dot_dimension_numbers<[1], [0], [0], [1], [0, 0, 1, 1], [], []>} : vector<2x128xf32>, vector<128x32xf32>, vector<2x32xf32> -> vector<2x32xf32>
    %155 = arith.addf %154, %13 : vector<2x32xf32>
    %cst_58 = arith.constant 0.000000e+00 : f32
    %156 = vector.broadcast %cst_58 : f32 to vector<2x32xf32>
    %157 = arith.maximumf %155, %156 : vector<2x32xf32>
    %cst_59 = arith.constant dense<0.000000e+00> : vector<2x32xf32>
    %158 = tpu.matmul %157, %6, %cst_59 {dimension_numbers = #tpu.dot_dimension_numbers<[1], [0], [0], [1], [0, 0, 1, 1], [], []>} : vector<2x32xf32>, vector<32x32xf32>, vector<2x32xf32> -> vector<2x32xf32>
    %159 = arith.addf %158, %15 : vector<2x32xf32>
    %cst_60 = arith.constant 0.000000e+00 : f32
    %160 = vector.broadcast %cst_60 : f32 to vector<2x32xf32>
    %161 = arith.maximumf %159, %160 : vector<2x32xf32>
    %cst_61 = arith.constant dense<0.000000e+00> : vector<2x512xf32>
    %162 = tpu.matmul %161, %10, %cst_61 {dimension_numbers = #tpu.dot_dimension_numbers<[1], [0], [0], [1], [0, 0, 1, 1], [], []>} : vector<2x32xf32>, vector<32x512xf32>, vector<2x512xf32> -> vector<2x512xf32>
    %163 = arith.addf %162, %17 : vector<2x512xf32>
    %164 = math.tanh %163 : vector<2x512xf32>
    %165 = arith.mulf %164, %152 : vector<2x512xf32>
    %cst_62 = arith.constant -1.000000e-03 : f32
    %166 = vector.broadcast %cst_62 : f32 to vector<2x128xf32>
    %167 = arith.mulf %166, %146 : vector<2x128xf32>
    %168 = arith.mulf %167, %153 : vector<2x128xf32>
    %169 = vector.extract_strided_slice %165 {offsets = [0, 0], sizes = [2, 128], strides = [1, 1]} : vector<2x512xf32> to vector<2x128xf32>
    %170 = arith.addf %168, %169 : vector<2x128xf32>
    %171 = vector.extract_strided_slice %165 {offsets = [0, 128], sizes = [2, 128], strides = [1, 1]} : vector<2x512xf32> to vector<2x128xf32>
    %172 = arith.addf %170, %171 : vector<2x128xf32>
    %173 = vector.extract_strided_slice %165 {offsets = [0, 256], sizes = [2, 128], strides = [1, 1]} : vector<2x512xf32> to vector<2x128xf32>
    %174 = arith.addf %172, %173 : vector<2x128xf32>
    %175 = vector.extract_strided_slice %165 {offsets = [0, 384], sizes = [2, 128], strides = [1, 1]} : vector<2x512xf32> to vector<2x128xf32>
    %176 = arith.addf %174, %175 : vector<2x128xf32>
    %cst_63 = arith.constant 0.333333343 : f32
    %177 = vector.broadcast %cst_63 : f32 to vector<2x128xf32>
    %178 = arith.mulf %176, %177 : vector<2x128xf32>
    %179 = arith.addf %146, %178 : vector<2x128xf32>
    %cst_64 = arith.constant dense<0.000000e+00> : vector<2x32xf32>
    %180 = tpu.matmul %179, %4, %cst_64 {dimension_numbers = #tpu.dot_dimension_numbers<[1], [0], [0], [1], [0, 0, 1, 1], [], []>} : vector<2x128xf32>, vector<128x32xf32>, vector<2x32xf32> -> vector<2x32xf32>
    %181 = arith.addf %180, %13 : vector<2x32xf32>
    %cst_65 = arith.constant 0.000000e+00 : f32
    %182 = vector.broadcast %cst_65 : f32 to vector<2x32xf32>
    %183 = arith.maximumf %181, %182 : vector<2x32xf32>
    %cst_66 = arith.constant dense<0.000000e+00> : vector<2x32xf32>
    %184 = tpu.matmul %183, %6, %cst_66 {dimension_numbers = #tpu.dot_dimension_numbers<[1], [0], [0], [1], [0, 0, 1, 1], [], []>} : vector<2x32xf32>, vector<32x32xf32>, vector<2x32xf32> -> vector<2x32xf32>
    %185 = arith.addf %184, %15 : vector<2x32xf32>
    %cst_67 = arith.constant 0.000000e+00 : f32
    %186 = vector.broadcast %cst_67 : f32 to vector<2x32xf32>
    %187 = arith.maximumf %185, %186 : vector<2x32xf32>
    %cst_68 = arith.constant dense<0.000000e+00> : vector<2x512xf32>
    %188 = tpu.matmul %187, %10, %cst_68 {dimension_numbers = #tpu.dot_dimension_numbers<[1], [0], [0], [1], [0, 0, 1, 1], [], []>} : vector<2x32xf32>, vector<32x512xf32>, vector<2x512xf32> -> vector<2x512xf32>
    %189 = arith.addf %188, %17 : vector<2x512xf32>
    %190 = math.tanh %189 : vector<2x512xf32>
    %191 = arith.mulf %190, %152 : vector<2x512xf32>
    %cst_69 = arith.constant -1.000000e-03 : f32
    %192 = vector.broadcast %cst_69 : f32 to vector<2x128xf32>
    %193 = arith.mulf %192, %179 : vector<2x128xf32>
    %194 = arith.mulf %193, %153 : vector<2x128xf32>
    %195 = vector.extract_strided_slice %191 {offsets = [0, 0], sizes = [2, 128], strides = [1, 1]} : vector<2x512xf32> to vector<2x128xf32>
    %196 = arith.addf %194, %195 : vector<2x128xf32>
    %197 = vector.extract_strided_slice %191 {offsets = [0, 128], sizes = [2, 128], strides = [1, 1]} : vector<2x512xf32> to vector<2x128xf32>
    %198 = arith.addf %196, %197 : vector<2x128xf32>
    %199 = vector.extract_strided_slice %191 {offsets = [0, 256], sizes = [2, 128], strides = [1, 1]} : vector<2x512xf32> to vector<2x128xf32>
    %200 = arith.addf %198, %199 : vector<2x128xf32>
    %201 = vector.extract_strided_slice %191 {offsets = [0, 384], sizes = [2, 128], strides = [1, 1]} : vector<2x512xf32> to vector<2x128xf32>
    %202 = arith.addf %200, %201 : vector<2x128xf32>
    %203 = arith.subf %202, %178 : vector<2x128xf32>
    %204 = arith.addf %146, %203 : vector<2x128xf32>
    %cst_70 = arith.constant dense<0.000000e+00> : vector<2x32xf32>
    %205 = tpu.matmul %204, %4, %cst_70 {dimension_numbers = #tpu.dot_dimension_numbers<[1], [0], [0], [1], [0, 0, 1, 1], [], []>} : vector<2x128xf32>, vector<128x32xf32>, vector<2x32xf32> -> vector<2x32xf32>
    %206 = arith.addf %205, %13 : vector<2x32xf32>
    %cst_71 = arith.constant 0.000000e+00 : f32
    %207 = vector.broadcast %cst_71 : f32 to vector<2x32xf32>
    %208 = arith.maximumf %206, %207 : vector<2x32xf32>
    %cst_72 = arith.constant dense<0.000000e+00> : vector<2x32xf32>
    %209 = tpu.matmul %208, %6, %cst_72 {dimension_numbers = #tpu.dot_dimension_numbers<[1], [0], [0], [1], [0, 0, 1, 1], [], []>} : vector<2x32xf32>, vector<32x32xf32>, vector<2x32xf32> -> vector<2x32xf32>
    %210 = arith.addf %209, %15 : vector<2x32xf32>
    %cst_73 = arith.constant 0.000000e+00 : f32
    %211 = vector.broadcast %cst_73 : f32 to vector<2x32xf32>
    %212 = arith.maximumf %210, %211 : vector<2x32xf32>
    %cst_74 = arith.constant dense<0.000000e+00> : vector<2x512xf32>
    %213 = tpu.matmul %212, %10, %cst_74 {dimension_numbers = #tpu.dot_dimension_numbers<[1], [0], [0], [1], [0, 0, 1, 1], [], []>} : vector<2x32xf32>, vector<32x512xf32>, vector<2x512xf32> -> vector<2x512xf32>
    %214 = arith.addf %213, %17 : vector<2x512xf32>
    %215 = math.tanh %214 : vector<2x512xf32>
    %216 = arith.mulf %215, %152 : vector<2x512xf32>
    %cst_75 = arith.constant -1.000000e-03 : f32
    %217 = vector.broadcast %cst_75 : f32 to vector<2x128xf32>
    %218 = arith.mulf %217, %204 : vector<2x128xf32>
    %219 = arith.mulf %218, %153 : vector<2x128xf32>
    %220 = vector.extract_strided_slice %216 {offsets = [0, 0], sizes = [2, 128], strides = [1, 1]} : vector<2x512xf32> to vector<2x128xf32>
    %221 = arith.addf %219, %220 : vector<2x128xf32>
    %222 = vector.extract_strided_slice %216 {offsets = [0, 128], sizes = [2, 128], strides = [1, 1]} : vector<2x512xf32> to vector<2x128xf32>
    %223 = arith.addf %221, %222 : vector<2x128xf32>
    %224 = vector.extract_strided_slice %216 {offsets = [0, 256], sizes = [2, 128], strides = [1, 1]} : vector<2x512xf32> to vector<2x128xf32>
    %225 = arith.addf %223, %224 : vector<2x128xf32>
    %226 = vector.extract_strided_slice %216 {offsets = [0, 384], sizes = [2, 128], strides = [1, 1]} : vector<2x512xf32> to vector<2x128xf32>
    %227 = arith.addf %225, %226 : vector<2x128xf32>
    %228 = arith.subf %176, %202 : vector<2x128xf32>
    %229 = arith.addf %228, %227 : vector<2x128xf32>
    %230 = arith.addf %146, %229 : vector<2x128xf32>
    %cst_76 = arith.constant dense<0.000000e+00> : vector<2x32xf32>
    %231 = tpu.matmul %230, %4, %cst_76 {dimension_numbers = #tpu.dot_dimension_numbers<[1], [0], [0], [1], [0, 0, 1, 1], [], []>} : vector<2x128xf32>, vector<128x32xf32>, vector<2x32xf32> -> vector<2x32xf32>
    %232 = arith.addf %231, %13 : vector<2x32xf32>
    %cst_77 = arith.constant 0.000000e+00 : f32
    %233 = vector.broadcast %cst_77 : f32 to vector<2x32xf32>
    %234 = arith.maximumf %232, %233 : vector<2x32xf32>
    %cst_78 = arith.constant dense<0.000000e+00> : vector<2x32xf32>
    %235 = tpu.matmul %234, %6, %cst_78 {dimension_numbers = #tpu.dot_dimension_numbers<[1], [0], [0], [1], [0, 0, 1, 1], [], []>} : vector<2x32xf32>, vector<32x32xf32>, vector<2x32xf32> -> vector<2x32xf32>
    %236 = arith.addf %235, %15 : vector<2x32xf32>
    %cst_79 = arith.constant 0.000000e+00 : f32
    %237 = vector.broadcast %cst_79 : f32 to vector<2x32xf32>
    %238 = arith.maximumf %236, %237 : vector<2x32xf32>
    %cst_80 = arith.constant dense<0.000000e+00> : vector<2x512xf32>
    %239 = tpu.matmul %238, %10, %cst_80 {dimension_numbers = #tpu.dot_dimension_numbers<[1], [0], [0], [1], [0, 0, 1, 1], [], []>} : vector<2x32xf32>, vector<32x512xf32>, vector<2x512xf32> -> vector<2x512xf32>
    %240 = arith.addf %239, %17 : vector<2x512xf32>
    %241 = math.tanh %240 : vector<2x512xf32>
    %242 = arith.mulf %241, %152 : vector<2x512xf32>
    %cst_81 = arith.constant -1.000000e-03 : f32
    %243 = vector.broadcast %cst_81 : f32 to vector<2x128xf32>
    %244 = arith.mulf %243, %230 : vector<2x128xf32>
    %245 = arith.mulf %244, %153 : vector<2x128xf32>
    %246 = vector.extract_strided_slice %242 {offsets = [0, 0], sizes = [2, 128], strides = [1, 1]} : vector<2x512xf32> to vector<2x128xf32>
    %247 = arith.addf %245, %246 : vector<2x128xf32>
    %248 = vector.extract_strided_slice %242 {offsets = [0, 128], sizes = [2, 128], strides = [1, 1]} : vector<2x512xf32> to vector<2x128xf32>
    %249 = arith.addf %247, %248 : vector<2x128xf32>
    %250 = vector.extract_strided_slice %242 {offsets = [0, 256], sizes = [2, 128], strides = [1, 1]} : vector<2x512xf32> to vector<2x128xf32>
    %251 = arith.addf %249, %250 : vector<2x128xf32>
    %252 = vector.extract_strided_slice %242 {offsets = [0, 384], sizes = [2, 128], strides = [1, 1]} : vector<2x512xf32> to vector<2x128xf32>
    %253 = arith.addf %251, %252 : vector<2x128xf32>
    %254 = arith.addf %202, %227 : vector<2x128xf32>
    %cst_82 = arith.constant 3.000000e+00 : f32
    %255 = vector.broadcast %cst_82 : f32 to vector<2x128xf32>
    %256 = arith.mulf %255, %254 : vector<2x128xf32>
    %257 = arith.addf %176, %256 : vector<2x128xf32>
    %258 = arith.addf %257, %253 : vector<2x128xf32>
    %cst_83 = arith.constant 1.250000e-01 : f32
    %259 = vector.broadcast %cst_83 : f32 to vector<2x128xf32>
    %260 = arith.mulf %258, %259 : vector<2x128xf32>
    %261 = arith.addf %146, %260 : vector<2x128xf32>
    %c2 = arith.constant 2 : index
    %c0_84 = arith.constant 0 : index
    %c0_85 = arith.constant 0 : index
    %262 = vector.load %arg5[%c2, %c0_84, %c0_85] : memref<9x2x128xf32, #tpu.memory_space<vmem>>, vector<1x2x128xf32>
    %263 = vector.shape_cast %262 : vector<1x2x128xf32> to vector<2x128xf32>
    %264 = vector.shape_cast %261 : vector<2x128xf32> to vector<1x2x128xf32>
    tpu.vector_store %arg5[%c2, %c0_84, %c0_85], %264 {strides = array<i32>} : memref<9x2x128xf32, #tpu.memory_space<vmem>>, vector<1x2x128xf32>,
    %c2_86 = arith.constant 2 : index
    %c0_87 = arith.constant 0 : index
    %c0_88 = arith.constant 0 : index
    %265 = vector.load %arg1[%c2_86, %c0_87, %c0_88] : memref<8x2x640xf32, #tpu.memory_space<vmem>>, vector<1x2x640xf32>
    %266 = vector.shape_cast %265 : vector<1x2x640xf32> to vector<2x640xf32>
    %267 = vector.extract_strided_slice %266 {offsets = [0, 0], sizes = [2, 512], strides = [1, 1]} : vector<2x640xf32> to vector<2x512xf32>
    %268 = vector.extract_strided_slice %266 {offsets = [0, 512], sizes = [2, 128], strides = [1, 1]} : vector<2x640xf32> to vector<2x128xf32>
    %cst_89 = arith.constant dense<0.000000e+00> : vector<2x32xf32>
    %269 = tpu.matmul %261, %4, %cst_89 {dimension_numbers = #tpu.dot_dimension_numbers<[1], [0], [0], [1], [0, 0, 1, 1], [], []>} : vector<2x128xf32>, vector<128x32xf32>, vector<2x32xf32> -> vector<2x32xf32>
    %270 = arith.addf %269, %13 : vector<2x32xf32>
    %cst_90 = arith.constant 0.000000e+00 : f32
    %271 = vector.broadcast %cst_90 : f32 to vector<2x32xf32>
    %272 = arith.maximumf %270, %271 : vector<2x32xf32>
    %cst_91 = arith.constant dense<0.000000e+00> : vector<2x32xf32>
    %273 = tpu.matmul %272, %6, %cst_91 {dimension_numbers = #tpu.dot_dimension_numbers<[1], [0], [0], [1], [0, 0, 1, 1], [], []>} : vector<2x32xf32>, vector<32x32xf32>, vector<2x32xf32> -> vector<2x32xf32>
    %274 = arith.addf %273, %15 : vector<2x32xf32>
    %cst_92 = arith.constant 0.000000e+00 : f32
    %275 = vector.broadcast %cst_92 : f32 to vector<2x32xf32>
    %276 = arith.maximumf %274, %275 : vector<2x32xf32>
    %cst_93 = arith.constant dense<0.000000e+00> : vector<2x512xf32>
    %277 = tpu.matmul %276, %10, %cst_93 {dimension_numbers = #tpu.dot_dimension_numbers<[1], [0], [0], [1], [0, 0, 1, 1], [], []>} : vector<2x32xf32>, vector<32x512xf32>, vector<2x512xf32> -> vector<2x512xf32>
    %278 = arith.addf %277, %17 : vector<2x512xf32>
    %279 = math.tanh %278 : vector<2x512xf32>
    %280 = arith.mulf %279, %267 : vector<2x512xf32>
    %cst_94 = arith.constant -1.000000e-03 : f32
    %281 = vector.broadcast %cst_94 : f32 to vector<2x128xf32>
    %282 = arith.mulf %281, %261 : vector<2x128xf32>
    %283 = arith.mulf %282, %268 : vector<2x128xf32>
    %284 = vector.extract_strided_slice %280 {offsets = [0, 0], sizes = [2, 128], strides = [1, 1]} : vector<2x512xf32> to vector<2x128xf32>
    %285 = arith.addf %283, %284 : vector<2x128xf32>
    %286 = vector.extract_strided_slice %280 {offsets = [0, 128], sizes = [2, 128], strides = [1, 1]} : vector<2x512xf32> to vector<2x128xf32>
    %287 = arith.addf %285, %286 : vector<2x128xf32>
    %288 = vector.extract_strided_slice %280 {offsets = [0, 256], sizes = [2, 128], strides = [1, 1]} : vector<2x512xf32> to vector<2x128xf32>
    %289 = arith.addf %287, %288 : vector<2x128xf32>
    %290 = vector.extract_strided_slice %280 {offsets = [0, 384], sizes = [2, 128], strides = [1, 1]} : vector<2x512xf32> to vector<2x128xf32>
    %291 = arith.addf %289, %290 : vector<2x128xf32>
    %cst_95 = arith.constant 0.333333343 : f32
    %292 = vector.broadcast %cst_95 : f32 to vector<2x128xf32>
    %293 = arith.mulf %291, %292 : vector<2x128xf32>
    %294 = arith.addf %261, %293 : vector<2x128xf32>
    %cst_96 = arith.constant dense<0.000000e+00> : vector<2x32xf32>
    %295 = tpu.matmul %294, %4, %cst_96 {dimension_numbers = #tpu.dot_dimension_numbers<[1], [0], [0], [1], [0, 0, 1, 1], [], []>} : vector<2x128xf32>, vector<128x32xf32>, vector<2x32xf32> -> vector<2x32xf32>
    %296 = arith.addf %295, %13 : vector<2x32xf32>
    %cst_97 = arith.constant 0.000000e+00 : f32
    %297 = vector.broadcast %cst_97 : f32 to vector<2x32xf32>
    %298 = arith.maximumf %296, %297 : vector<2x32xf32>
    %cst_98 = arith.constant dense<0.000000e+00> : vector<2x32xf32>
    %299 = tpu.matmul %298, %6, %cst_98 {dimension_numbers = #tpu.dot_dimension_numbers<[1], [0], [0], [1], [0, 0, 1, 1], [], []>} : vector<2x32xf32>, vector<32x32xf32>, vector<2x32xf32> -> vector<2x32xf32>
    %300 = arith.addf %299, %15 : vector<2x32xf32>
    %cst_99 = arith.constant 0.000000e+00 : f32
    %301 = vector.broadcast %cst_99 : f32 to vector<2x32xf32>
    %302 = arith.maximumf %300, %301 : vector<2x32xf32>
    %cst_100 = arith.constant dense<0.000000e+00> : vector<2x512xf32>
    %303 = tpu.matmul %302, %10, %cst_100 {dimension_numbers = #tpu.dot_dimension_numbers<[1], [0], [0], [1], [0, 0, 1, 1], [], []>} : vector<2x32xf32>, vector<32x512xf32>, vector<2x512xf32> -> vector<2x512xf32>
    %304 = arith.addf %303, %17 : vector<2x512xf32>
    %305 = math.tanh %304 : vector<2x512xf32>
    %306 = arith.mulf %305, %267 : vector<2x512xf32>
    %cst_101 = arith.constant -1.000000e-03 : f32
    %307 = vector.broadcast %cst_101 : f32 to vector<2x128xf32>
    %308 = arith.mulf %307, %294 : vector<2x128xf32>
    %309 = arith.mulf %308, %268 : vector<2x128xf32>
    %310 = vector.extract_strided_slice %306 {offsets = [0, 0], sizes = [2, 128], strides = [1, 1]} : vector<2x512xf32> to vector<2x128xf32>
    %311 = arith.addf %309, %310 : vector<2x128xf32>
    %312 = vector.extract_strided_slice %306 {offsets = [0, 128], sizes = [2, 128], strides = [1, 1]} : vector<2x512xf32> to vector<2x128xf32>
    %313 = arith.addf %311, %312 : vector<2x128xf32>
    %314 = vector.extract_strided_slice %306 {offsets = [0, 256], sizes = [2, 128], strides = [1, 1]} : vector<2x512xf32> to vector<2x128xf32>
    %315 = arith.addf %313, %314 : vector<2x128xf32>
    %316 = vector.extract_strided_slice %306 {offsets = [0, 384], sizes = [2, 128], strides = [1, 1]} : vector<2x512xf32> to vector<2x128xf32>
    %317 = arith.addf %315, %316 : vector<2x128xf32>
    %318 = arith.subf %317, %293 : vector<2x128xf32>
    %319 = arith.addf %261, %318 : vector<2x128xf32>
    %cst_102 = arith.constant dense<0.000000e+00> : vector<2x32xf32>
    %320 = tpu.matmul %319, %4, %cst_102 {dimension_numbers = #tpu.dot_dimension_numbers<[1], [0], [0], [1], [0, 0, 1, 1], [], []>} : vector<2x128xf32>, vector<128x32xf32>, vector<2x32xf32> -> vector<2x32xf32>
    %321 = arith.addf %320, %13 : vector<2x32xf32>
    %cst_103 = arith.constant 0.000000e+00 : f32
    %322 = vector.broadcast %cst_103 : f32 to vector<2x32xf32>
    %323 = arith.maximumf %321, %322 : vector<2x32xf32>
    %cst_104 = arith.constant dense<0.000000e+00> : vector<2x32xf32>
    %324 = tpu.matmul %323, %6, %cst_104 {dimension_numbers = #tpu.dot_dimension_numbers<[1], [0], [0], [1], [0, 0, 1, 1], [], []>} : vector<2x32xf32>, vector<32x32xf32>, vector<2x32xf32> -> vector<2x32xf32>
    %325 = arith.addf %324, %15 : vector<2x32xf32>
    %cst_105 = arith.constant 0.000000e+00 : f32
    %326 = vector.broadcast %cst_105 : f32 to vector<2x32xf32>
    %327 = arith.maximumf %325, %326 : vector<2x32xf32>
    %cst_106 = arith.constant dense<0.000000e+00> : vector<2x512xf32>
    %328 = tpu.matmul %327, %10, %cst_106 {dimension_numbers = #tpu.dot_dimension_numbers<[1], [0], [0], [1], [0, 0, 1, 1], [], []>} : vector<2x32xf32>, vector<32x512xf32>, vector<2x512xf32> -> vector<2x512xf32>
    %329 = arith.addf %328, %17 : vector<2x512xf32>
    %330 = math.tanh %329 : vector<2x512xf32>
    %331 = arith.mulf %330, %267 : vector<2x512xf32>
    %cst_107 = arith.constant -1.000000e-03 : f32
    %332 = vector.broadcast %cst_107 : f32 to vector<2x128xf32>
    %333 = arith.mulf %332, %319 : vector<2x128xf32>
    %334 = arith.mulf %333, %268 : vector<2x128xf32>
    %335 = vector.extract_strided_slice %331 {offsets = [0, 0], sizes = [2, 128], strides = [1, 1]} : vector<2x512xf32> to vector<2x128xf32>
    %336 = arith.addf %334, %335 : vector<2x128xf32>
    %337 = vector.extract_strided_slice %331 {offsets = [0, 128], sizes = [2, 128], strides = [1, 1]} : vector<2x512xf32> to vector<2x128xf32>
    %338 = arith.addf %336, %337 : vector<2x128xf32>
    %339 = vector.extract_strided_slice %331 {offsets = [0, 256], sizes = [2, 128], strides = [1, 1]} : vector<2x512xf32> to vector<2x128xf32>
    %340 = arith.addf %338, %339 : vector<2x128xf32>
    %341 = vector.extract_strided_slice %331 {offsets = [0, 384], sizes = [2, 128], strides = [1, 1]} : vector<2x512xf32> to vector<2x128xf32>
    %342 = arith.addf %340, %341 : vector<2x128xf32>
    %343 = arith.subf %291, %317 : vector<2x128xf32>
    %344 = arith.addf %343, %342 : vector<2x128xf32>
    %345 = arith.addf %261, %344 : vector<2x128xf32>
    %cst_108 = arith.constant dense<0.000000e+00> : vector<2x32xf32>
    %346 = tpu.matmul %345, %4, %cst_108 {dimension_numbers = #tpu.dot_dimension_numbers<[1], [0], [0], [1], [0, 0, 1, 1], [], []>} : vector<2x128xf32>, vector<128x32xf32>, vector<2x32xf32> -> vector<2x32xf32>
    %347 = arith.addf %346, %13 : vector<2x32xf32>
    %cst_109 = arith.constant 0.000000e+00 : f32
    %348 = vector.broadcast %cst_109 : f32 to vector<2x32xf32>
    %349 = arith.maximumf %347, %348 : vector<2x32xf32>
    %cst_110 = arith.constant dense<0.000000e+00> : vector<2x32xf32>
    %350 = tpu.matmul %349, %6, %cst_110 {dimension_numbers = #tpu.dot_dimension_numbers<[1], [0], [0], [1], [0, 0, 1, 1], [], []>} : vector<2x32xf32>, vector<32x32xf32>, vector<2x32xf32> -> vector<2x32xf32>
    %351 = arith.addf %350, %15 : vector<2x32xf32>
    %cst_111 = arith.constant 0.000000e+00 : f32
    %352 = vector.broadcast %cst_111 : f32 to vector<2x32xf32>
    %353 = arith.maximumf %351, %352 : vector<2x32xf32>
    %cst_112 = arith.constant dense<0.000000e+00> : vector<2x512xf32>
    %354 = tpu.matmul %353, %10, %cst_112 {dimension_numbers = #tpu.dot_dimension_numbers<[1], [0], [0], [1], [0, 0, 1, 1], [], []>} : vector<2x32xf32>, vector<32x512xf32>, vector<2x512xf32> -> vector<2x512xf32>
    %355 = arith.addf %354, %17 : vector<2x512xf32>
    %356 = math.tanh %355 : vector<2x512xf32>
    %357 = arith.mulf %356, %267 : vector<2x512xf32>
    %cst_113 = arith.constant -1.000000e-03 : f32
    %358 = vector.broadcast %cst_113 : f32 to vector<2x128xf32>
    %359 = arith.mulf %358, %345 : vector<2x128xf32>
    %360 = arith.mulf %359, %268 : vector<2x128xf32>
    %361 = vector.extract_strided_slice %357 {offsets = [0, 0], sizes = [2, 128], strides = [1, 1]} : vector<2x512xf32> to vector<2x128xf32>
    %362 = arith.addf %360, %361 : vector<2x128xf32>
    %363 = vector.extract_strided_slice %357 {offsets = [0, 128], sizes = [2, 128], strides = [1, 1]} : vector<2x512xf32> to vector<2x128xf32>
    %364 = arith.addf %362, %363 : vector<2x128xf32>
    %365 = vector.extract_strided_slice %357 {offsets = [0, 256], sizes = [2, 128], strides = [1, 1]} : vector<2x512xf32> to vector<2x128xf32>
    %366 = arith.addf %364, %365 : vector<2x128xf32>
    %367 = vector.extract_strided_slice %357 {offsets = [0, 384], sizes = [2, 128], strides = [1, 1]} : vector<2x512xf32> to vector<2x128xf32>
    %368 = arith.addf %366, %367 : vector<2x128xf32>
    %369 = arith.addf %317, %342 : vector<2x128xf32>
    %cst_114 = arith.constant 3.000000e+00 : f32
    %370 = vector.broadcast %cst_114 : f32 to vector<2x128xf32>
    %371 = arith.mulf %370, %369 : vector<2x128xf32>
    %372 = arith.addf %291, %371 : vector<2x128xf32>
    %373 = arith.addf %372, %368 : vector<2x128xf32>
    %cst_115 = arith.constant 1.250000e-01 : f32
    %374 = vector.broadcast %cst_115 : f32 to vector<2x128xf32>
    %375 = arith.mulf %373, %374 : vector<2x128xf32>
    %376 = arith.addf %261, %375 : vector<2x128xf32>
    %c3 = arith.constant 3 : index
    %c0_116 = arith.constant 0 : index
    %c0_117 = arith.constant 0 : index
    %377 = vector.load %arg5[%c3, %c0_116, %c0_117] : memref<9x2x128xf32, #tpu.memory_space<vmem>>, vector<1x2x128xf32>
    %378 = vector.shape_cast %377 : vector<1x2x128xf32> to vector<2x128xf32>
    %379 = vector.shape_cast %376 : vector<2x128xf32> to vector<1x2x128xf32>
    tpu.vector_store %arg5[%c3, %c0_116, %c0_117], %379 {strides = array<i32>} : memref<9x2x128xf32, #tpu.memory_space<vmem>>, vector<1x2x128xf32>,
    %c3_118 = arith.constant 3 : index
    %c0_119 = arith.constant 0 : index
    %c0_120 = arith.constant 0 : index
    %380 = vector.load %arg1[%c3_118, %c0_119, %c0_120] : memref<8x2x640xf32, #tpu.memory_space<vmem>>, vector<1x2x640xf32>
    %381 = vector.shape_cast %380 : vector<1x2x640xf32> to vector<2x640xf32>
    %382 = vector.extract_strided_slice %381 {offsets = [0, 0], sizes = [2, 512], strides = [1, 1]} : vector<2x640xf32> to vector<2x512xf32>
    %383 = vector.extract_strided_slice %381 {offsets = [0, 512], sizes = [2, 128], strides = [1, 1]} : vector<2x640xf32> to vector<2x128xf32>
    %cst_121 = arith.constant dense<0.000000e+00> : vector<2x32xf32>
    %384 = tpu.matmul %376, %4, %cst_121 {dimension_numbers = #tpu.dot_dimension_numbers<[1], [0], [0], [1], [0, 0, 1, 1], [], []>} : vector<2x128xf32>, vector<128x32xf32>, vector<2x32xf32> -> vector<2x32xf32>
    %385 = arith.addf %384, %13 : vector<2x32xf32>
    %cst_122 = arith.constant 0.000000e+00 : f32
    %386 = vector.broadcast %cst_122 : f32 to vector<2x32xf32>
    %387 = arith.maximumf %385, %386 : vector<2x32xf32>
    %cst_123 = arith.constant dense<0.000000e+00> : vector<2x32xf32>
    %388 = tpu.matmul %387, %6, %cst_123 {dimension_numbers = #tpu.dot_dimension_numbers<[1], [0], [0], [1], [0, 0, 1, 1], [], []>} : vector<2x32xf32>, vector<32x32xf32>, vector<2x32xf32> -> vector<2x32xf32>
    %389 = arith.addf %388, %15 : vector<2x32xf32>
    %cst_124 = arith.constant 0.000000e+00 : f32
    %390 = vector.broadcast %cst_124 : f32 to vector<2x32xf32>
    %391 = arith.maximumf %389, %390 : vector<2x32xf32>
    %cst_125 = arith.constant dense<0.000000e+00> : vector<2x512xf32>
    %392 = tpu.matmul %391, %10, %cst_125 {dimension_numbers = #tpu.dot_dimension_numbers<[1], [0], [0], [1], [0, 0, 1, 1], [], []>} : vector<2x32xf32>, vector<32x512xf32>, vector<2x512xf32> -> vector<2x512xf32>
    %393 = arith.addf %392, %17 : vector<2x512xf32>
    %394 = math.tanh %393 : vector<2x512xf32>
    %395 = arith.mulf %394, %382 : vector<2x512xf32>
    %cst_126 = arith.constant -1.000000e-03 : f32
    %396 = vector.broadcast %cst_126 : f32 to vector<2x128xf32>
    %397 = arith.mulf %396, %376 : vector<2x128xf32>
    %398 = arith.mulf %397, %383 : vector<2x128xf32>
    %399 = vector.extract_strided_slice %395 {offsets = [0, 0], sizes = [2, 128], strides = [1, 1]} : vector<2x512xf32> to vector<2x128xf32>
    %400 = arith.addf %398, %399 : vector<2x128xf32>
    %401 = vector.extract_strided_slice %395 {offsets = [0, 128], sizes = [2, 128], strides = [1, 1]} : vector<2x512xf32> to vector<2x128xf32>
    %402 = arith.addf %400, %401 : vector<2x128xf32>
    %403 = vector.extract_strided_slice %395 {offsets = [0, 256], sizes = [2, 128], strides = [1, 1]} : vector<2x512xf32> to vector<2x128xf32>
    %404 = arith.addf %402, %403 : vector<2x128xf32>
    %405 = vector.extract_strided_slice %395 {offsets = [0, 384], sizes = [2, 128], strides = [1, 1]} : vector<2x512xf32> to vector<2x128xf32>
    %406 = arith.addf %404, %405 : vector<2x128xf32>
    %cst_127 = arith.constant 0.333333343 : f32
    %407 = vector.broadcast %cst_127 : f32 to vector<2x128xf32>
    %408 = arith.mulf %406, %407 : vector<2x128xf32>
    %409 = arith.addf %376, %408 : vector<2x128xf32>
    %cst_128 = arith.constant dense<0.000000e+00> : vector<2x32xf32>
    %410 = tpu.matmul %409, %4, %cst_128 {dimension_numbers = #tpu.dot_dimension_numbers<[1], [0], [0], [1], [0, 0, 1, 1], [], []>} : vector<2x128xf32>, vector<128x32xf32>, vector<2x32xf32> -> vector<2x32xf32>
    %411 = arith.addf %410, %13 : vector<2x32xf32>
    %cst_129 = arith.constant 0.000000e+00 : f32
    %412 = vector.broadcast %cst_129 : f32 to vector<2x32xf32>
    %413 = arith.maximumf %411, %412 : vector<2x32xf32>
    %cst_130 = arith.constant dense<0.000000e+00> : vector<2x32xf32>
    %414 = tpu.matmul %413, %6, %cst_130 {dimension_numbers = #tpu.dot_dimension_numbers<[1], [0], [0], [1], [0, 0, 1, 1], [], []>} : vector<2x32xf32>, vector<32x32xf32>, vector<2x32xf32> -> vector<2x32xf32>
    %415 = arith.addf %414, %15 : vector<2x32xf32>
    %cst_131 = arith.constant 0.000000e+00 : f32
    %416 = vector.broadcast %cst_131 : f32 to vector<2x32xf32>
    %417 = arith.maximumf %415, %416 : vector<2x32xf32>
    %cst_132 = arith.constant dense<0.000000e+00> : vector<2x512xf32>
    %418 = tpu.matmul %417, %10, %cst_132 {dimension_numbers = #tpu.dot_dimension_numbers<[1], [0], [0], [1], [0, 0, 1, 1], [], []>} : vector<2x32xf32>, vector<32x512xf32>, vector<2x512xf32> -> vector<2x512xf32>
    %419 = arith.addf %418, %17 : vector<2x512xf32>
    %420 = math.tanh %419 : vector<2x512xf32>
    %421 = arith.mulf %420, %382 : vector<2x512xf32>
    %cst_133 = arith.constant -1.000000e-03 : f32
    %422 = vector.broadcast %cst_133 : f32 to vector<2x128xf32>
    %423 = arith.mulf %422, %409 : vector<2x128xf32>
    %424 = arith.mulf %423, %383 : vector<2x128xf32>
    %425 = vector.extract_strided_slice %421 {offsets = [0, 0], sizes = [2, 128], strides = [1, 1]} : vector<2x512xf32> to vector<2x128xf32>
    %426 = arith.addf %424, %425 : vector<2x128xf32>
    %427 = vector.extract_strided_slice %421 {offsets = [0, 128], sizes = [2, 128], strides = [1, 1]} : vector<2x512xf32> to vector<2x128xf32>
    %428 = arith.addf %426, %427 : vector<2x128xf32>
    %429 = vector.extract_strided_slice %421 {offsets = [0, 256], sizes = [2, 128], strides = [1, 1]} : vector<2x512xf32> to vector<2x128xf32>
    %430 = arith.addf %428, %429 : vector<2x128xf32>
    %431 = vector.extract_strided_slice %421 {offsets = [0, 384], sizes = [2, 128], strides = [1, 1]} : vector<2x512xf32> to vector<2x128xf32>
    %432 = arith.addf %430, %431 : vector<2x128xf32>
    %433 = arith.subf %432, %408 : vector<2x128xf32>
    %434 = arith.addf %376, %433 : vector<2x128xf32>
    %cst_134 = arith.constant dense<0.000000e+00> : vector<2x32xf32>
    %435 = tpu.matmul %434, %4, %cst_134 {dimension_numbers = #tpu.dot_dimension_numbers<[1], [0], [0], [1], [0, 0, 1, 1], [], []>} : vector<2x128xf32>, vector<128x32xf32>, vector<2x32xf32> -> vector<2x32xf32>
    %436 = arith.addf %435, %13 : vector<2x32xf32>
    %cst_135 = arith.constant 0.000000e+00 : f32
    %437 = vector.broadcast %cst_135 : f32 to vector<2x32xf32>
    %438 = arith.maximumf %436, %437 : vector<2x32xf32>
    %cst_136 = arith.constant dense<0.000000e+00> : vector<2x32xf32>
    %439 = tpu.matmul %438, %6, %cst_136 {dimension_numbers = #tpu.dot_dimension_numbers<[1], [0], [0], [1], [0, 0, 1, 1], [], []>} : vector<2x32xf32>, vector<32x32xf32>, vector<2x32xf32> -> vector<2x32xf32>
    %440 = arith.addf %439, %15 : vector<2x32xf32>
    %cst_137 = arith.constant 0.000000e+00 : f32
    %441 = vector.broadcast %cst_137 : f32 to vector<2x32xf32>
    %442 = arith.maximumf %440, %441 : vector<2x32xf32>
    %cst_138 = arith.constant dense<0.000000e+00> : vector<2x512xf32>
    %443 = tpu.matmul %442, %10, %cst_138 {dimension_numbers = #tpu.dot_dimension_numbers<[1], [0], [0], [1], [0, 0, 1, 1], [], []>} : vector<2x32xf32>, vector<32x512xf32>, vector<2x512xf32> -> vector<2x512xf32>
    %444 = arith.addf %443, %17 : vector<2x512xf32>
    %445 = math.tanh %444 : vector<2x512xf32>
    %446 = arith.mulf %445, %382 : vector<2x512xf32>
    %cst_139 = arith.constant -1.000000e-03 : f32
    %447 = vector.broadcast %cst_139 : f32 to vector<2x128xf32>
    %448 = arith.mulf %447, %434 : vector<2x128xf32>
    %449 = arith.mulf %448, %383 : vector<2x128xf32>
    %450 = vector.extract_strided_slice %446 {offsets = [0, 0], sizes = [2, 128], strides = [1, 1]} : vector<2x512xf32> to vector<2x128xf32>
    %451 = arith.addf %449, %450 : vector<2x128xf32>
    %452 = vector.extract_strided_slice %446 {offsets = [0, 128], sizes = [2, 128], strides = [1, 1]} : vector<2x512xf32> to vector<2x128xf32>
    %453 = arith.addf %451, %452 : vector<2x128xf32>
    %454 = vector.extract_strided_slice %446 {offsets = [0, 256], sizes = [2, 128], strides = [1, 1]} : vector<2x512xf32> to vector<2x128xf32>
    %455 = arith.addf %453, %454 : vector<2x128xf32>
    %456 = vector.extract_strided_slice %446 {offsets = [0, 384], sizes = [2, 128], strides = [1, 1]} : vector<2x512xf32> to vector<2x128xf32>
    %457 = arith.addf %455, %456 : vector<2x128xf32>
    %458 = arith.subf %406, %432 : vector<2x128xf32>
    %459 = arith.addf %458, %457 : vector<2x128xf32>
    %460 = arith.addf %376, %459 : vector<2x128xf32>
    %cst_140 = arith.constant dense<0.000000e+00> : vector<2x32xf32>
    %461 = tpu.matmul %460, %4, %cst_140 {dimension_numbers = #tpu.dot_dimension_numbers<[1], [0], [0], [1], [0, 0, 1, 1], [], []>} : vector<2x128xf32>, vector<128x32xf32>, vector<2x32xf32> -> vector<2x32xf32>
    %462 = arith.addf %461, %13 : vector<2x32xf32>
    %cst_141 = arith.constant 0.000000e+00 : f32
    %463 = vector.broadcast %cst_141 : f32 to vector<2x32xf32>
    %464 = arith.maximumf %462, %463 : vector<2x32xf32>
    %cst_142 = arith.constant dense<0.000000e+00> : vector<2x32xf32>
    %465 = tpu.matmul %464, %6, %cst_142 {dimension_numbers = #tpu.dot_dimension_numbers<[1], [0], [0], [1], [0, 0, 1, 1], [], []>} : vector<2x32xf32>, vector<32x32xf32>, vector<2x32xf32> -> vector<2x32xf32>
    %466 = arith.addf %465, %15 : vector<2x32xf32>
    %cst_143 = arith.constant 0.000000e+00 : f32
    %467 = vector.broadcast %cst_143 : f32 to vector<2x32xf32>
    %468 = arith.maximumf %466, %467 : vector<2x32xf32>
    %cst_144 = arith.constant dense<0.000000e+00> : vector<2x512xf32>
    %469 = tpu.matmul %468, %10, %cst_144 {dimension_numbers = #tpu.dot_dimension_numbers<[1], [0], [0], [1], [0, 0, 1, 1], [], []>} : vector<2x32xf32>, vector<32x512xf32>, vector<2x512xf32> -> vector<2x512xf32>
    %470 = arith.addf %469, %17 : vector<2x512xf32>
    %471 = math.tanh %470 : vector<2x512xf32>
    %472 = arith.mulf %471, %382 : vector<2x512xf32>
    %cst_145 = arith.constant -1.000000e-03 : f32
    %473 = vector.broadcast %cst_145 : f32 to vector<2x128xf32>
    %474 = arith.mulf %473, %460 : vector<2x128xf32>
    %475 = arith.mulf %474, %383 : vector<2x128xf32>
    %476 = vector.extract_strided_slice %472 {offsets = [0, 0], sizes = [2, 128], strides = [1, 1]} : vector<2x512xf32> to vector<2x128xf32>
    %477 = arith.addf %475, %476 : vector<2x128xf32>
    %478 = vector.extract_strided_slice %472 {offsets = [0, 128], sizes = [2, 128], strides = [1, 1]} : vector<2x512xf32> to vector<2x128xf32>
    %479 = arith.addf %477, %478 : vector<2x128xf32>
    %480 = vector.extract_strided_slice %472 {offsets = [0, 256], sizes = [2, 128], strides = [1, 1]} : vector<2x512xf32> to vector<2x128xf32>
    %481 = arith.addf %479, %480 : vector<2x128xf32>
    %482 = vector.extract_strided_slice %472 {offsets = [0, 384], sizes = [2, 128], strides = [1, 1]} : vector<2x512xf32> to vector<2x128xf32>
    %483 = arith.addf %481, %482 : vector<2x128xf32>
    %484 = arith.addf %432, %457 : vector<2x128xf32>
    %cst_146 = arith.constant 3.000000e+00 : f32
    %485 = vector.broadcast %cst_146 : f32 to vector<2x128xf32>
    %486 = arith.mulf %485, %484 : vector<2x128xf32>
    %487 = arith.addf %406, %486 : vector<2x128xf32>
    %488 = arith.addf %487, %483 : vector<2x128xf32>
    %cst_147 = arith.constant 1.250000e-01 : f32
    %489 = vector.broadcast %cst_147 : f32 to vector<2x128xf32>
    %490 = arith.mulf %488, %489 : vector<2x128xf32>
    %491 = arith.addf %376, %490 : vector<2x128xf32>
    %c4 = arith.constant 4 : index
    %c0_148 = arith.constant 0 : index
    %c0_149 = arith.constant 0 : index
    %492 = vector.load %arg5[%c4, %c0_148, %c0_149] : memref<9x2x128xf32, #tpu.memory_space<vmem>>, vector<1x2x128xf32>
    %493 = vector.shape_cast %492 : vector<1x2x128xf32> to vector<2x128xf32>
    %494 = vector.shape_cast %491 : vector<2x128xf32> to vector<1x2x128xf32>
    tpu.vector_store %arg5[%c4, %c0_148, %c0_149], %494 {strides = array<i32>} : memref<9x2x128xf32, #tpu.memory_space<vmem>>, vector<1x2x128xf32>,
    %c4_150 = arith.constant 4 : index
    %c0_151 = arith.constant 0 : index
    %c0_152 = arith.constant 0 : index
    %495 = vector.load %arg1[%c4_150, %c0_151, %c0_152] : memref<8x2x640xf32, #tpu.memory_space<vmem>>, vector<1x2x640xf32>
    %496 = vector.shape_cast %495 : vector<1x2x640xf32> to vector<2x640xf32>
    %497 = vector.extract_strided_slice %496 {offsets = [0, 0], sizes = [2, 512], strides = [1, 1]} : vector<2x640xf32> to vector<2x512xf32>
    %498 = vector.extract_strided_slice %496 {offsets = [0, 512], sizes = [2, 128], strides = [1, 1]} : vector<2x640xf32> to vector<2x128xf32>
    %cst_153 = arith.constant dense<0.000000e+00> : vector<2x32xf32>
    %499 = tpu.matmul %491, %4, %cst_153 {dimension_numbers = #tpu.dot_dimension_numbers<[1], [0], [0], [1], [0, 0, 1, 1], [], []>} : vector<2x128xf32>, vector<128x32xf32>, vector<2x32xf32> -> vector<2x32xf32>
    %500 = arith.addf %499, %13 : vector<2x32xf32>
    %cst_154 = arith.constant 0.000000e+00 : f32
    %501 = vector.broadcast %cst_154 : f32 to vector<2x32xf32>
    %502 = arith.maximumf %500, %501 : vector<2x32xf32>
    %cst_155 = arith.constant dense<0.000000e+00> : vector<2x32xf32>
    %503 = tpu.matmul %502, %6, %cst_155 {dimension_numbers = #tpu.dot_dimension_numbers<[1], [0], [0], [1], [0, 0, 1, 1], [], []>} : vector<2x32xf32>, vector<32x32xf32>, vector<2x32xf32> -> vector<2x32xf32>
    %504 = arith.addf %503, %15 : vector<2x32xf32>
    %cst_156 = arith.constant 0.000000e+00 : f32
    %505 = vector.broadcast %cst_156 : f32 to vector<2x32xf32>
    %506 = arith.maximumf %504, %505 : vector<2x32xf32>
    %cst_157 = arith.constant dense<0.000000e+00> : vector<2x512xf32>
    %507 = tpu.matmul %506, %10, %cst_157 {dimension_numbers = #tpu.dot_dimension_numbers<[1], [0], [0], [1], [0, 0, 1, 1], [], []>} : vector<2x32xf32>, vector<32x512xf32>, vector<2x512xf32> -> vector<2x512xf32>
    %508 = arith.addf %507, %17 : vector<2x512xf32>
    %509 = math.tanh %508 : vector<2x512xf32>
    %510 = arith.mulf %509, %497 : vector<2x512xf32>
    %cst_158 = arith.constant -1.000000e-03 : f32
    %511 = vector.broadcast %cst_158 : f32 to vector<2x128xf32>
    %512 = arith.mulf %511, %491 : vector<2x128xf32>
    %513 = arith.mulf %512, %498 : vector<2x128xf32>
    %514 = vector.extract_strided_slice %510 {offsets = [0, 0], sizes = [2, 128], strides = [1, 1]} : vector<2x512xf32> to vector<2x128xf32>
    %515 = arith.addf %513, %514 : vector<2x128xf32>
    %516 = vector.extract_strided_slice %510 {offsets = [0, 128], sizes = [2, 128], strides = [1, 1]} : vector<2x512xf32> to vector<2x128xf32>
    %517 = arith.addf %515, %516 : vector<2x128xf32>
    %518 = vector.extract_strided_slice %510 {offsets = [0, 256], sizes = [2, 128], strides = [1, 1]} : vector<2x512xf32> to vector<2x128xf32>
    %519 = arith.addf %517, %518 : vector<2x128xf32>
    %520 = vector.extract_strided_slice %510 {offsets = [0, 384], sizes = [2, 128], strides = [1, 1]} : vector<2x512xf32> to vector<2x128xf32>
    %521 = arith.addf %519, %520 : vector<2x128xf32>
    %cst_159 = arith.constant 0.333333343 : f32
    %522 = vector.broadcast %cst_159 : f32 to vector<2x128xf32>
    %523 = arith.mulf %521, %522 : vector<2x128xf32>
    %524 = arith.addf %491, %523 : vector<2x128xf32>
    %cst_160 = arith.constant dense<0.000000e+00> : vector<2x32xf32>
    %525 = tpu.matmul %524, %4, %cst_160 {dimension_numbers = #tpu.dot_dimension_numbers<[1], [0], [0], [1], [0, 0, 1, 1], [], []>} : vector<2x128xf32>, vector<128x32xf32>, vector<2x32xf32> -> vector<2x32xf32>
    %526 = arith.addf %525, %13 : vector<2x32xf32>
    %cst_161 = arith.constant 0.000000e+00 : f32
    %527 = vector.broadcast %cst_161 : f32 to vector<2x32xf32>
    %528 = arith.maximumf %526, %527 : vector<2x32xf32>
    %cst_162 = arith.constant dense<0.000000e+00> : vector<2x32xf32>
    %529 = tpu.matmul %528, %6, %cst_162 {dimension_numbers = #tpu.dot_dimension_numbers<[1], [0], [0], [1], [0, 0, 1, 1], [], []>} : vector<2x32xf32>, vector<32x32xf32>, vector<2x32xf32> -> vector<2x32xf32>
    %530 = arith.addf %529, %15 : vector<2x32xf32>
    %cst_163 = arith.constant 0.000000e+00 : f32
    %531 = vector.broadcast %cst_163 : f32 to vector<2x32xf32>
    %532 = arith.maximumf %530, %531 : vector<2x32xf32>
    %cst_164 = arith.constant dense<0.000000e+00> : vector<2x512xf32>
    %533 = tpu.matmul %532, %10, %cst_164 {dimension_numbers = #tpu.dot_dimension_numbers<[1], [0], [0], [1], [0, 0, 1, 1], [], []>} : vector<2x32xf32>, vector<32x512xf32>, vector<2x512xf32> -> vector<2x512xf32>
    %534 = arith.addf %533, %17 : vector<2x512xf32>
    %535 = math.tanh %534 : vector<2x512xf32>
    %536 = arith.mulf %535, %497 : vector<2x512xf32>
    %cst_165 = arith.constant -1.000000e-03 : f32
    %537 = vector.broadcast %cst_165 : f32 to vector<2x128xf32>
    %538 = arith.mulf %537, %524 : vector<2x128xf32>
    %539 = arith.mulf %538, %498 : vector<2x128xf32>
    %540 = vector.extract_strided_slice %536 {offsets = [0, 0], sizes = [2, 128], strides = [1, 1]} : vector<2x512xf32> to vector<2x128xf32>
    %541 = arith.addf %539, %540 : vector<2x128xf32>
    %542 = vector.extract_strided_slice %536 {offsets = [0, 128], sizes = [2, 128], strides = [1, 1]} : vector<2x512xf32> to vector<2x128xf32>
    %543 = arith.addf %541, %542 : vector<2x128xf32>
    %544 = vector.extract_strided_slice %536 {offsets = [0, 256], sizes = [2, 128], strides = [1, 1]} : vector<2x512xf32> to vector<2x128xf32>
    %545 = arith.addf %543, %544 : vector<2x128xf32>
    %546 = vector.extract_strided_slice %536 {offsets = [0, 384], sizes = [2, 128], strides = [1, 1]} : vector<2x512xf32> to vector<2x128xf32>
    %547 = arith.addf %545, %546 : vector<2x128xf32>
    %548 = arith.subf %547, %523 : vector<2x128xf32>
    %549 = arith.addf %491, %548 : vector<2x128xf32>
    %cst_166 = arith.constant dense<0.000000e+00> : vector<2x32xf32>
    %550 = tpu.matmul %549, %4, %cst_166 {dimension_numbers = #tpu.dot_dimension_numbers<[1], [0], [0], [1], [0, 0, 1, 1], [], []>} : vector<2x128xf32>, vector<128x32xf32>, vector<2x32xf32> -> vector<2x32xf32>
    %551 = arith.addf %550, %13 : vector<2x32xf32>
    %cst_167 = arith.constant 0.000000e+00 : f32
    %552 = vector.broadcast %cst_167 : f32 to vector<2x32xf32>
    %553 = arith.maximumf %551, %552 : vector<2x32xf32>
    %cst_168 = arith.constant dense<0.000000e+00> : vector<2x32xf32>
    %554 = tpu.matmul %553, %6, %cst_168 {dimension_numbers = #tpu.dot_dimension_numbers<[1], [0], [0], [1], [0, 0, 1, 1], [], []>} : vector<2x32xf32>, vector<32x32xf32>, vector<2x32xf32> -> vector<2x32xf32>
    %555 = arith.addf %554, %15 : vector<2x32xf32>
    %cst_169 = arith.constant 0.000000e+00 : f32
    %556 = vector.broadcast %cst_169 : f32 to vector<2x32xf32>
    %557 = arith.maximumf %555, %556 : vector<2x32xf32>
    %cst_170 = arith.constant dense<0.000000e+00> : vector<2x512xf32>
    %558 = tpu.matmul %557, %10, %cst_170 {dimension_numbers = #tpu.dot_dimension_numbers<[1], [0], [0], [1], [0, 0, 1, 1], [], []>} : vector<2x32xf32>, vector<32x512xf32>, vector<2x512xf32> -> vector<2x512xf32>
    %559 = arith.addf %558, %17 : vector<2x512xf32>
    %560 = math.tanh %559 : vector<2x512xf32>
    %561 = arith.mulf %560, %497 : vector<2x512xf32>
    %cst_171 = arith.constant -1.000000e-03 : f32
    %562 = vector.broadcast %cst_171 : f32 to vector<2x128xf32>
    %563 = arith.mulf %562, %549 : vector<2x128xf32>
    %564 = arith.mulf %563, %498 : vector<2x128xf32>
    %565 = vector.extract_strided_slice %561 {offsets = [0, 0], sizes = [2, 128], strides = [1, 1]} : vector<2x512xf32> to vector<2x128xf32>
    %566 = arith.addf %564, %565 : vector<2x128xf32>
    %567 = vector.extract_strided_slice %561 {offsets = [0, 128], sizes = [2, 128], strides = [1, 1]} : vector<2x512xf32> to vector<2x128xf32>
    %568 = arith.addf %566, %567 : vector<2x128xf32>
    %569 = vector.extract_strided_slice %561 {offsets = [0, 256], sizes = [2, 128], strides = [1, 1]} : vector<2x512xf32> to vector<2x128xf32>
    %570 = arith.addf %568, %569 : vector<2x128xf32>
    %571 = vector.extract_strided_slice %561 {offsets = [0, 384], sizes = [2, 128], strides = [1, 1]} : vector<2x512xf32> to vector<2x128xf32>
    %572 = arith.addf %570, %571 : vector<2x128xf32>
    %573 = arith.subf %521, %547 : vector<2x128xf32>
    %574 = arith.addf %573, %572 : vector<2x128xf32>
    %575 = arith.addf %491, %574 : vector<2x128xf32>
    %cst_172 = arith.constant dense<0.000000e+00> : vector<2x32xf32>
    %576 = tpu.matmul %575, %4, %cst_172 {dimension_numbers = #tpu.dot_dimension_numbers<[1], [0], [0], [1], [0, 0, 1, 1], [], []>} : vector<2x128xf32>, vector<128x32xf32>, vector<2x32xf32> -> vector<2x32xf32>
    %577 = arith.addf %576, %13 : vector<2x32xf32>
    %cst_173 = arith.constant 0.000000e+00 : f32
    %578 = vector.broadcast %cst_173 : f32 to vector<2x32xf32>
    %579 = arith.maximumf %577, %578 : vector<2x32xf32>
    %cst_174 = arith.constant dense<0.000000e+00> : vector<2x32xf32>
    %580 = tpu.matmul %579, %6, %cst_174 {dimension_numbers = #tpu.dot_dimension_numbers<[1], [0], [0], [1], [0, 0, 1, 1], [], []>} : vector<2x32xf32>, vector<32x32xf32>, vector<2x32xf32> -> vector<2x32xf32>
    %581 = arith.addf %580, %15 : vector<2x32xf32>
    %cst_175 = arith.constant 0.000000e+00 : f32
    %582 = vector.broadcast %cst_175 : f32 to vector<2x32xf32>
    %583 = arith.maximumf %581, %582 : vector<2x32xf32>
    %cst_176 = arith.constant dense<0.000000e+00> : vector<2x512xf32>
    %584 = tpu.matmul %583, %10, %cst_176 {dimension_numbers = #tpu.dot_dimension_numbers<[1], [0], [0], [1], [0, 0, 1, 1], [], []>} : vector<2x32xf32>, vector<32x512xf32>, vector<2x512xf32> -> vector<2x512xf32>
    %585 = arith.addf %584, %17 : vector<2x512xf32>
    %586 = math.tanh %585 : vector<2x512xf32>
    %587 = arith.mulf %586, %497 : vector<2x512xf32>
    %cst_177 = arith.constant -1.000000e-03 : f32
    %588 = vector.broadcast %cst_177 : f32 to vector<2x128xf32>
    %589 = arith.mulf %588, %575 : vector<2x128xf32>
    %590 = arith.mulf %589, %498 : vector<2x128xf32>
    %591 = vector.extract_strided_slice %587 {offsets = [0, 0], sizes = [2, 128], strides = [1, 1]} : vector<2x512xf32> to vector<2x128xf32>
    %592 = arith.addf %590, %591 : vector<2x128xf32>
    %593 = vector.extract_strided_slice %587 {offsets = [0, 128], sizes = [2, 128], strides = [1, 1]} : vector<2x512xf32> to vector<2x128xf32>
    %594 = arith.addf %592, %593 : vector<2x128xf32>
    %595 = vector.extract_strided_slice %587 {offsets = [0, 256], sizes = [2, 128], strides = [1, 1]} : vector<2x512xf32> to vector<2x128xf32>
    %596 = arith.addf %594, %595 : vector<2x128xf32>
    %597 = vector.extract_strided_slice %587 {offsets = [0, 384], sizes = [2, 128], strides = [1, 1]} : vector<2x512xf32> to vector<2x128xf32>
    %598 = arith.addf %596, %597 : vector<2x128xf32>
    %599 = arith.addf %547, %572 : vector<2x128xf32>
    %cst_178 = arith.constant 3.000000e+00 : f32
    %600 = vector.broadcast %cst_178 : f32 to vector<2x128xf32>
    %601 = arith.mulf %600, %599 : vector<2x128xf32>
    %602 = arith.addf %521, %601 : vector<2x128xf32>
    %603 = arith.addf %602, %598 : vector<2x128xf32>
    %cst_179 = arith.constant 1.250000e-01 : f32
    %604 = vector.broadcast %cst_179 : f32 to vector<2x128xf32>
    %605 = arith.mulf %603, %604 : vector<2x128xf32>
    %606 = arith.addf %491, %605 : vector<2x128xf32>
    %c5 = arith.constant 5 : index
    %c0_180 = arith.constant 0 : index
    %c0_181 = arith.constant 0 : index
    %607 = vector.load %arg5[%c5, %c0_180, %c0_181] : memref<9x2x128xf32, #tpu.memory_space<vmem>>, vector<1x2x128xf32>
    %608 = vector.shape_cast %607 : vector<1x2x128xf32> to vector<2x128xf32>
    %609 = vector.shape_cast %606 : vector<2x128xf32> to vector<1x2x128xf32>
    tpu.vector_store %arg5[%c5, %c0_180, %c0_181], %609 {strides = array<i32>} : memref<9x2x128xf32, #tpu.memory_space<vmem>>, vector<1x2x128xf32>,
    %c5_182 = arith.constant 5 : index
    %c0_183 = arith.constant 0 : index
    %c0_184 = arith.constant 0 : index
    %610 = vector.load %arg1[%c5_182, %c0_183, %c0_184] : memref<8x2x640xf32, #tpu.memory_space<vmem>>, vector<1x2x640xf32>
    %611 = vector.shape_cast %610 : vector<1x2x640xf32> to vector<2x640xf32>
    %612 = vector.extract_strided_slice %611 {offsets = [0, 0], sizes = [2, 512], strides = [1, 1]} : vector<2x640xf32> to vector<2x512xf32>
    %613 = vector.extract_strided_slice %611 {offsets = [0, 512], sizes = [2, 128], strides = [1, 1]} : vector<2x640xf32> to vector<2x128xf32>
    %cst_185 = arith.constant dense<0.000000e+00> : vector<2x32xf32>
    %614 = tpu.matmul %606, %4, %cst_185 {dimension_numbers = #tpu.dot_dimension_numbers<[1], [0], [0], [1], [0, 0, 1, 1], [], []>} : vector<2x128xf32>, vector<128x32xf32>, vector<2x32xf32> -> vector<2x32xf32>
    %615 = arith.addf %614, %13 : vector<2x32xf32>
    %cst_186 = arith.constant 0.000000e+00 : f32
    %616 = vector.broadcast %cst_186 : f32 to vector<2x32xf32>
    %617 = arith.maximumf %615, %616 : vector<2x32xf32>
    %cst_187 = arith.constant dense<0.000000e+00> : vector<2x32xf32>
    %618 = tpu.matmul %617, %6, %cst_187 {dimension_numbers = #tpu.dot_dimension_numbers<[1], [0], [0], [1], [0, 0, 1, 1], [], []>} : vector<2x32xf32>, vector<32x32xf32>, vector<2x32xf32> -> vector<2x32xf32>
    %619 = arith.addf %618, %15 : vector<2x32xf32>
    %cst_188 = arith.constant 0.000000e+00 : f32
    %620 = vector.broadcast %cst_188 : f32 to vector<2x32xf32>
    %621 = arith.maximumf %619, %620 : vector<2x32xf32>
    %cst_189 = arith.constant dense<0.000000e+00> : vector<2x512xf32>
    %622 = tpu.matmul %621, %10, %cst_189 {dimension_numbers = #tpu.dot_dimension_numbers<[1], [0], [0], [1], [0, 0, 1, 1], [], []>} : vector<2x32xf32>, vector<32x512xf32>, vector<2x512xf32> -> vector<2x512xf32>
    %623 = arith.addf %622, %17 : vector<2x512xf32>
    %624 = math.tanh %623 : vector<2x512xf32>
    %625 = arith.mulf %624, %612 : vector<2x512xf32>
    %cst_190 = arith.constant -1.000000e-03 : f32
    %626 = vector.broadcast %cst_190 : f32 to vector<2x128xf32>
    %627 = arith.mulf %626, %606 : vector<2x128xf32>
    %628 = arith.mulf %627, %613 : vector<2x128xf32>
    %629 = vector.extract_strided_slice %625 {offsets = [0, 0], sizes = [2, 128], strides = [1, 1]} : vector<2x512xf32> to vector<2x128xf32>
    %630 = arith.addf %628, %629 : vector<2x128xf32>
    %631 = vector.extract_strided_slice %625 {offsets = [0, 128], sizes = [2, 128], strides = [1, 1]} : vector<2x512xf32> to vector<2x128xf32>
    %632 = arith.addf %630, %631 : vector<2x128xf32>
    %633 = vector.extract_strided_slice %625 {offsets = [0, 256], sizes = [2, 128], strides = [1, 1]} : vector<2x512xf32> to vector<2x128xf32>
    %634 = arith.addf %632, %633 : vector<2x128xf32>
    %635 = vector.extract_strided_slice %625 {offsets = [0, 384], sizes = [2, 128], strides = [1, 1]} : vector<2x512xf32> to vector<2x128xf32>
    %636 = arith.addf %634, %635 : vector<2x128xf32>
    %cst_191 = arith.constant 0.333333343 : f32
    %637 = vector.broadcast %cst_191 : f32 to vector<2x128xf32>
    %638 = arith.mulf %636, %637 : vector<2x128xf32>
    %639 = arith.addf %606, %638 : vector<2x128xf32>
    %cst_192 = arith.constant dense<0.000000e+00> : vector<2x32xf32>
    %640 = tpu.matmul %639, %4, %cst_192 {dimension_numbers = #tpu.dot_dimension_numbers<[1], [0], [0], [1], [0, 0, 1, 1], [], []>} : vector<2x128xf32>, vector<128x32xf32>, vector<2x32xf32> -> vector<2x32xf32>
    %641 = arith.addf %640, %13 : vector<2x32xf32>
    %cst_193 = arith.constant 0.000000e+00 : f32
    %642 = vector.broadcast %cst_193 : f32 to vector<2x32xf32>
    %643 = arith.maximumf %641, %642 : vector<2x32xf32>
    %cst_194 = arith.constant dense<0.000000e+00> : vector<2x32xf32>
    %644 = tpu.matmul %643, %6, %cst_194 {dimension_numbers = #tpu.dot_dimension_numbers<[1], [0], [0], [1], [0, 0, 1, 1], [], []>} : vector<2x32xf32>, vector<32x32xf32>, vector<2x32xf32> -> vector<2x32xf32>
    %645 = arith.addf %644, %15 : vector<2x32xf32>
    %cst_195 = arith.constant 0.000000e+00 : f32
    %646 = vector.broadcast %cst_195 : f32 to vector<2x32xf32>
    %647 = arith.maximumf %645, %646 : vector<2x32xf32>
    %cst_196 = arith.constant dense<0.000000e+00> : vector<2x512xf32>
    %648 = tpu.matmul %647, %10, %cst_196 {dimension_numbers = #tpu.dot_dimension_numbers<[1], [0], [0], [1], [0, 0, 1, 1], [], []>} : vector<2x32xf32>, vector<32x512xf32>, vector<2x512xf32> -> vector<2x512xf32>
    %649 = arith.addf %648, %17 : vector<2x512xf32>
    %650 = math.tanh %649 : vector<2x512xf32>
    %651 = arith.mulf %650, %612 : vector<2x512xf32>
    %cst_197 = arith.constant -1.000000e-03 : f32
    %652 = vector.broadcast %cst_197 : f32 to vector<2x128xf32>
    %653 = arith.mulf %652, %639 : vector<2x128xf32>
    %654 = arith.mulf %653, %613 : vector<2x128xf32>
    %655 = vector.extract_strided_slice %651 {offsets = [0, 0], sizes = [2, 128], strides = [1, 1]} : vector<2x512xf32> to vector<2x128xf32>
    %656 = arith.addf %654, %655 : vector<2x128xf32>
    %657 = vector.extract_strided_slice %651 {offsets = [0, 128], sizes = [2, 128], strides = [1, 1]} : vector<2x512xf32> to vector<2x128xf32>
    %658 = arith.addf %656, %657 : vector<2x128xf32>
    %659 = vector.extract_strided_slice %651 {offsets = [0, 256], sizes = [2, 128], strides = [1, 1]} : vector<2x512xf32> to vector<2x128xf32>
    %660 = arith.addf %658, %659 : vector<2x128xf32>
    %661 = vector.extract_strided_slice %651 {offsets = [0, 384], sizes = [2, 128], strides = [1, 1]} : vector<2x512xf32> to vector<2x128xf32>
    %662 = arith.addf %660, %661 : vector<2x128xf32>
    %663 = arith.subf %662, %638 : vector<2x128xf32>
    %664 = arith.addf %606, %663 : vector<2x128xf32>
    %cst_198 = arith.constant dense<0.000000e+00> : vector<2x32xf32>
    %665 = tpu.matmul %664, %4, %cst_198 {dimension_numbers = #tpu.dot_dimension_numbers<[1], [0], [0], [1], [0, 0, 1, 1], [], []>} : vector<2x128xf32>, vector<128x32xf32>, vector<2x32xf32> -> vector<2x32xf32>
    %666 = arith.addf %665, %13 : vector<2x32xf32>
    %cst_199 = arith.constant 0.000000e+00 : f32
    %667 = vector.broadcast %cst_199 : f32 to vector<2x32xf32>
    %668 = arith.maximumf %666, %667 : vector<2x32xf32>
    %cst_200 = arith.constant dense<0.000000e+00> : vector<2x32xf32>
    %669 = tpu.matmul %668, %6, %cst_200 {dimension_numbers = #tpu.dot_dimension_numbers<[1], [0], [0], [1], [0, 0, 1, 1], [], []>} : vector<2x32xf32>, vector<32x32xf32>, vector<2x32xf32> -> vector<2x32xf32>
    %670 = arith.addf %669, %15 : vector<2x32xf32>
    %cst_201 = arith.constant 0.000000e+00 : f32
    %671 = vector.broadcast %cst_201 : f32 to vector<2x32xf32>
    %672 = arith.maximumf %670, %671 : vector<2x32xf32>
    %cst_202 = arith.constant dense<0.000000e+00> : vector<2x512xf32>
    %673 = tpu.matmul %672, %10, %cst_202 {dimension_numbers = #tpu.dot_dimension_numbers<[1], [0], [0], [1], [0, 0, 1, 1], [], []>} : vector<2x32xf32>, vector<32x512xf32>, vector<2x512xf32> -> vector<2x512xf32>
    %674 = arith.addf %673, %17 : vector<2x512xf32>
    %675 = math.tanh %674 : vector<2x512xf32>
    %676 = arith.mulf %675, %612 : vector<2x512xf32>
    %cst_203 = arith.constant -1.000000e-03 : f32
    %677 = vector.broadcast %cst_203 : f32 to vector<2x128xf32>
    %678 = arith.mulf %677, %664 : vector<2x128xf32>
    %679 = arith.mulf %678, %613 : vector<2x128xf32>
    %680 = vector.extract_strided_slice %676 {offsets = [0, 0], sizes = [2, 128], strides = [1, 1]} : vector<2x512xf32> to vector<2x128xf32>
    %681 = arith.addf %679, %680 : vector<2x128xf32>
    %682 = vector.extract_strided_slice %676 {offsets = [0, 128], sizes = [2, 128], strides = [1, 1]} : vector<2x512xf32> to vector<2x128xf32>
    %683 = arith.addf %681, %682 : vector<2x128xf32>
    %684 = vector.extract_strided_slice %676 {offsets = [0, 256], sizes = [2, 128], strides = [1, 1]} : vector<2x512xf32> to vector<2x128xf32>
    %685 = arith.addf %683, %684 : vector<2x128xf32>
    %686 = vector.extract_strided_slice %676 {offsets = [0, 384], sizes = [2, 128], strides = [1, 1]} : vector<2x512xf32> to vector<2x128xf32>
    %687 = arith.addf %685, %686 : vector<2x128xf32>
    %688 = arith.subf %636, %662 : vector<2x128xf32>
    %689 = arith.addf %688, %687 : vector<2x128xf32>
    %690 = arith.addf %606, %689 : vector<2x128xf32>
    %cst_204 = arith.constant dense<0.000000e+00> : vector<2x32xf32>
    %691 = tpu.matmul %690, %4, %cst_204 {dimension_numbers = #tpu.dot_dimension_numbers<[1], [0], [0], [1], [0, 0, 1, 1], [], []>} : vector<2x128xf32>, vector<128x32xf32>, vector<2x32xf32> -> vector<2x32xf32>
    %692 = arith.addf %691, %13 : vector<2x32xf32>
    %cst_205 = arith.constant 0.000000e+00 : f32
    %693 = vector.broadcast %cst_205 : f32 to vector<2x32xf32>
    %694 = arith.maximumf %692, %693 : vector<2x32xf32>
    %cst_206 = arith.constant dense<0.000000e+00> : vector<2x32xf32>
    %695 = tpu.matmul %694, %6, %cst_206 {dimension_numbers = #tpu.dot_dimension_numbers<[1], [0], [0], [1], [0, 0, 1, 1], [], []>} : vector<2x32xf32>, vector<32x32xf32>, vector<2x32xf32> -> vector<2x32xf32>
    %696 = arith.addf %695, %15 : vector<2x32xf32>
    %cst_207 = arith.constant 0.000000e+00 : f32
    %697 = vector.broadcast %cst_207 : f32 to vector<2x32xf32>
    %698 = arith.maximumf %696, %697 : vector<2x32xf32>
    %cst_208 = arith.constant dense<0.000000e+00> : vector<2x512xf32>
    %699 = tpu.matmul %698, %10, %cst_208 {dimension_numbers = #tpu.dot_dimension_numbers<[1], [0], [0], [1], [0, 0, 1, 1], [], []>} : vector<2x32xf32>, vector<32x512xf32>, vector<2x512xf32> -> vector<2x512xf32>
    %700 = arith.addf %699, %17 : vector<2x512xf32>
    %701 = math.tanh %700 : vector<2x512xf32>
    %702 = arith.mulf %701, %612 : vector<2x512xf32>
    %cst_209 = arith.constant -1.000000e-03 : f32
    %703 = vector.broadcast %cst_209 : f32 to vector<2x128xf32>
    %704 = arith.mulf %703, %690 : vector<2x128xf32>
    %705 = arith.mulf %704, %613 : vector<2x128xf32>
    %706 = vector.extract_strided_slice %702 {offsets = [0, 0], sizes = [2, 128], strides = [1, 1]} : vector<2x512xf32> to vector<2x128xf32>
    %707 = arith.addf %705, %706 : vector<2x128xf32>
    %708 = vector.extract_strided_slice %702 {offsets = [0, 128], sizes = [2, 128], strides = [1, 1]} : vector<2x512xf32> to vector<2x128xf32>
    %709 = arith.addf %707, %708 : vector<2x128xf32>
    %710 = vector.extract_strided_slice %702 {offsets = [0, 256], sizes = [2, 128], strides = [1, 1]} : vector<2x512xf32> to vector<2x128xf32>
    %711 = arith.addf %709, %710 : vector<2x128xf32>
    %712 = vector.extract_strided_slice %702 {offsets = [0, 384], sizes = [2, 128], strides = [1, 1]} : vector<2x512xf32> to vector<2x128xf32>
    %713 = arith.addf %711, %712 : vector<2x128xf32>
    %714 = arith.addf %662, %687 : vector<2x128xf32>
    %cst_210 = arith.constant 3.000000e+00 : f32
    %715 = vector.broadcast %cst_210 : f32 to vector<2x128xf32>
    %716 = arith.mulf %715, %714 : vector<2x128xf32>
    %717 = arith.addf %636, %716 : vector<2x128xf32>
    %718 = arith.addf %717, %713 : vector<2x128xf32>
    %cst_211 = arith.constant 1.250000e-01 : f32
    %719 = vector.broadcast %cst_211 : f32 to vector<2x128xf32>
    %720 = arith.mulf %718, %719 : vector<2x128xf32>
    %721 = arith.addf %606, %720 : vector<2x128xf32>
    %c6 = arith.constant 6 : index
    %c0_212 = arith.constant 0 : index
    %c0_213 = arith.constant 0 : index
    %722 = vector.load %arg5[%c6, %c0_212, %c0_213] : memref<9x2x128xf32, #tpu.memory_space<vmem>>, vector<1x2x128xf32>
    %723 = vector.shape_cast %722 : vector<1x2x128xf32> to vector<2x128xf32>
    %724 = vector.shape_cast %721 : vector<2x128xf32> to vector<1x2x128xf32>
    tpu.vector_store %arg5[%c6, %c0_212, %c0_213], %724 {strides = array<i32>} : memref<9x2x128xf32, #tpu.memory_space<vmem>>, vector<1x2x128xf32>,
    %c6_214 = arith.constant 6 : index
    %c0_215 = arith.constant 0 : index
    %c0_216 = arith.constant 0 : index
    %725 = vector.load %arg1[%c6_214, %c0_215, %c0_216] : memref<8x2x640xf32, #tpu.memory_space<vmem>>, vector<1x2x640xf32>
    %726 = vector.shape_cast %725 : vector<1x2x640xf32> to vector<2x640xf32>
    %727 = vector.extract_strided_slice %726 {offsets = [0, 0], sizes = [2, 512], strides = [1, 1]} : vector<2x640xf32> to vector<2x512xf32>
    %728 = vector.extract_strided_slice %726 {offsets = [0, 512], sizes = [2, 128], strides = [1, 1]} : vector<2x640xf32> to vector<2x128xf32>
    %cst_217 = arith.constant dense<0.000000e+00> : vector<2x32xf32>
    %729 = tpu.matmul %721, %4, %cst_217 {dimension_numbers = #tpu.dot_dimension_numbers<[1], [0], [0], [1], [0, 0, 1, 1], [], []>} : vector<2x128xf32>, vector<128x32xf32>, vector<2x32xf32> -> vector<2x32xf32>
    %730 = arith.addf %729, %13 : vector<2x32xf32>
    %cst_218 = arith.constant 0.000000e+00 : f32
    %731 = vector.broadcast %cst_218 : f32 to vector<2x32xf32>
    %732 = arith.maximumf %730, %731 : vector<2x32xf32>
    %cst_219 = arith.constant dense<0.000000e+00> : vector<2x32xf32>
    %733 = tpu.matmul %732, %6, %cst_219 {dimension_numbers = #tpu.dot_dimension_numbers<[1], [0], [0], [1], [0, 0, 1, 1], [], []>} : vector<2x32xf32>, vector<32x32xf32>, vector<2x32xf32> -> vector<2x32xf32>
    %734 = arith.addf %733, %15 : vector<2x32xf32>
    %cst_220 = arith.constant 0.000000e+00 : f32
    %735 = vector.broadcast %cst_220 : f32 to vector<2x32xf32>
    %736 = arith.maximumf %734, %735 : vector<2x32xf32>
    %cst_221 = arith.constant dense<0.000000e+00> : vector<2x512xf32>
    %737 = tpu.matmul %736, %10, %cst_221 {dimension_numbers = #tpu.dot_dimension_numbers<[1], [0], [0], [1], [0, 0, 1, 1], [], []>} : vector<2x32xf32>, vector<32x512xf32>, vector<2x512xf32> -> vector<2x512xf32>
    %738 = arith.addf %737, %17 : vector<2x512xf32>
    %739 = math.tanh %738 : vector<2x512xf32>
    %740 = arith.mulf %739, %727 : vector<2x512xf32>
    %cst_222 = arith.constant -1.000000e-03 : f32
    %741 = vector.broadcast %cst_222 : f32 to vector<2x128xf32>
    %742 = arith.mulf %741, %721 : vector<2x128xf32>
    %743 = arith.mulf %742, %728 : vector<2x128xf32>
    %744 = vector.extract_strided_slice %740 {offsets = [0, 0], sizes = [2, 128], strides = [1, 1]} : vector<2x512xf32> to vector<2x128xf32>
    %745 = arith.addf %743, %744 : vector<2x128xf32>
    %746 = vector.extract_strided_slice %740 {offsets = [0, 128], sizes = [2, 128], strides = [1, 1]} : vector<2x512xf32> to vector<2x128xf32>
    %747 = arith.addf %745, %746 : vector<2x128xf32>
    %748 = vector.extract_strided_slice %740 {offsets = [0, 256], sizes = [2, 128], strides = [1, 1]} : vector<2x512xf32> to vector<2x128xf32>
    %749 = arith.addf %747, %748 : vector<2x128xf32>
    %750 = vector.extract_strided_slice %740 {offsets = [0, 384], sizes = [2, 128], strides = [1, 1]} : vector<2x512xf32> to vector<2x128xf32>
    %751 = arith.addf %749, %750 : vector<2x128xf32>
    %cst_223 = arith.constant 0.333333343 : f32
    %752 = vector.broadcast %cst_223 : f32 to vector<2x128xf32>
    %753 = arith.mulf %751, %752 : vector<2x128xf32>
    %754 = arith.addf %721, %753 : vector<2x128xf32>
    %cst_224 = arith.constant dense<0.000000e+00> : vector<2x32xf32>
    %755 = tpu.matmul %754, %4, %cst_224 {dimension_numbers = #tpu.dot_dimension_numbers<[1], [0], [0], [1], [0, 0, 1, 1], [], []>} : vector<2x128xf32>, vector<128x32xf32>, vector<2x32xf32> -> vector<2x32xf32>
    %756 = arith.addf %755, %13 : vector<2x32xf32>
    %cst_225 = arith.constant 0.000000e+00 : f32
    %757 = vector.broadcast %cst_225 : f32 to vector<2x32xf32>
    %758 = arith.maximumf %756, %757 : vector<2x32xf32>
    %cst_226 = arith.constant dense<0.000000e+00> : vector<2x32xf32>
    %759 = tpu.matmul %758, %6, %cst_226 {dimension_numbers = #tpu.dot_dimension_numbers<[1], [0], [0], [1], [0, 0, 1, 1], [], []>} : vector<2x32xf32>, vector<32x32xf32>, vector<2x32xf32> -> vector<2x32xf32>
    %760 = arith.addf %759, %15 : vector<2x32xf32>
    %cst_227 = arith.constant 0.000000e+00 : f32
    %761 = vector.broadcast %cst_227 : f32 to vector<2x32xf32>
    %762 = arith.maximumf %760, %761 : vector<2x32xf32>
    %cst_228 = arith.constant dense<0.000000e+00> : vector<2x512xf32>
    %763 = tpu.matmul %762, %10, %cst_228 {dimension_numbers = #tpu.dot_dimension_numbers<[1], [0], [0], [1], [0, 0, 1, 1], [], []>} : vector<2x32xf32>, vector<32x512xf32>, vector<2x512xf32> -> vector<2x512xf32>
    %764 = arith.addf %763, %17 : vector<2x512xf32>
    %765 = math.tanh %764 : vector<2x512xf32>
    %766 = arith.mulf %765, %727 : vector<2x512xf32>
    %cst_229 = arith.constant -1.000000e-03 : f32
    %767 = vector.broadcast %cst_229 : f32 to vector<2x128xf32>
    %768 = arith.mulf %767, %754 : vector<2x128xf32>
    %769 = arith.mulf %768, %728 : vector<2x128xf32>
    %770 = vector.extract_strided_slice %766 {offsets = [0, 0], sizes = [2, 128], strides = [1, 1]} : vector<2x512xf32> to vector<2x128xf32>
    %771 = arith.addf %769, %770 : vector<2x128xf32>
    %772 = vector.extract_strided_slice %766 {offsets = [0, 128], sizes = [2, 128], strides = [1, 1]} : vector<2x512xf32> to vector<2x128xf32>
    %773 = arith.addf %771, %772 : vector<2x128xf32>
    %774 = vector.extract_strided_slice %766 {offsets = [0, 256], sizes = [2, 128], strides = [1, 1]} : vector<2x512xf32> to vector<2x128xf32>
    %775 = arith.addf %773, %774 : vector<2x128xf32>
    %776 = vector.extract_strided_slice %766 {offsets = [0, 384], sizes = [2, 128], strides = [1, 1]} : vector<2x512xf32> to vector<2x128xf32>
    %777 = arith.addf %775, %776 : vector<2x128xf32>
    %778 = arith.subf %777, %753 : vector<2x128xf32>
    %779 = arith.addf %721, %778 : vector<2x128xf32>
    %cst_230 = arith.constant dense<0.000000e+00> : vector<2x32xf32>
    %780 = tpu.matmul %779, %4, %cst_230 {dimension_numbers = #tpu.dot_dimension_numbers<[1], [0], [0], [1], [0, 0, 1, 1], [], []>} : vector<2x128xf32>, vector<128x32xf32>, vector<2x32xf32> -> vector<2x32xf32>
    %781 = arith.addf %780, %13 : vector<2x32xf32>
    %cst_231 = arith.constant 0.000000e+00 : f32
    %782 = vector.broadcast %cst_231 : f32 to vector<2x32xf32>
    %783 = arith.maximumf %781, %782 : vector<2x32xf32>
    %cst_232 = arith.constant dense<0.000000e+00> : vector<2x32xf32>
    %784 = tpu.matmul %783, %6, %cst_232 {dimension_numbers = #tpu.dot_dimension_numbers<[1], [0], [0], [1], [0, 0, 1, 1], [], []>} : vector<2x32xf32>, vector<32x32xf32>, vector<2x32xf32> -> vector<2x32xf32>
    %785 = arith.addf %784, %15 : vector<2x32xf32>
    %cst_233 = arith.constant 0.000000e+00 : f32
    %786 = vector.broadcast %cst_233 : f32 to vector<2x32xf32>
    %787 = arith.maximumf %785, %786 : vector<2x32xf32>
    %cst_234 = arith.constant dense<0.000000e+00> : vector<2x512xf32>
    %788 = tpu.matmul %787, %10, %cst_234 {dimension_numbers = #tpu.dot_dimension_numbers<[1], [0], [0], [1], [0, 0, 1, 1], [], []>} : vector<2x32xf32>, vector<32x512xf32>, vector<2x512xf32> -> vector<2x512xf32>
    %789 = arith.addf %788, %17 : vector<2x512xf32>
    %790 = math.tanh %789 : vector<2x512xf32>
    %791 = arith.mulf %790, %727 : vector<2x512xf32>
    %cst_235 = arith.constant -1.000000e-03 : f32
    %792 = vector.broadcast %cst_235 : f32 to vector<2x128xf32>
    %793 = arith.mulf %792, %779 : vector<2x128xf32>
    %794 = arith.mulf %793, %728 : vector<2x128xf32>
    %795 = vector.extract_strided_slice %791 {offsets = [0, 0], sizes = [2, 128], strides = [1, 1]} : vector<2x512xf32> to vector<2x128xf32>
    %796 = arith.addf %794, %795 : vector<2x128xf32>
    %797 = vector.extract_strided_slice %791 {offsets = [0, 128], sizes = [2, 128], strides = [1, 1]} : vector<2x512xf32> to vector<2x128xf32>
    %798 = arith.addf %796, %797 : vector<2x128xf32>
    %799 = vector.extract_strided_slice %791 {offsets = [0, 256], sizes = [2, 128], strides = [1, 1]} : vector<2x512xf32> to vector<2x128xf32>
    %800 = arith.addf %798, %799 : vector<2x128xf32>
    %801 = vector.extract_strided_slice %791 {offsets = [0, 384], sizes = [2, 128], strides = [1, 1]} : vector<2x512xf32> to vector<2x128xf32>
    %802 = arith.addf %800, %801 : vector<2x128xf32>
    %803 = arith.subf %751, %777 : vector<2x128xf32>
    %804 = arith.addf %803, %802 : vector<2x128xf32>
    %805 = arith.addf %721, %804 : vector<2x128xf32>
    %cst_236 = arith.constant dense<0.000000e+00> : vector<2x32xf32>
    %806 = tpu.matmul %805, %4, %cst_236 {dimension_numbers = #tpu.dot_dimension_numbers<[1], [0], [0], [1], [0, 0, 1, 1], [], []>} : vector<2x128xf32>, vector<128x32xf32>, vector<2x32xf32> -> vector<2x32xf32>
    %807 = arith.addf %806, %13 : vector<2x32xf32>
    %cst_237 = arith.constant 0.000000e+00 : f32
    %808 = vector.broadcast %cst_237 : f32 to vector<2x32xf32>
    %809 = arith.maximumf %807, %808 : vector<2x32xf32>
    %cst_238 = arith.constant dense<0.000000e+00> : vector<2x32xf32>
    %810 = tpu.matmul %809, %6, %cst_238 {dimension_numbers = #tpu.dot_dimension_numbers<[1], [0], [0], [1], [0, 0, 1, 1], [], []>} : vector<2x32xf32>, vector<32x32xf32>, vector<2x32xf32> -> vector<2x32xf32>
    %811 = arith.addf %810, %15 : vector<2x32xf32>
    %cst_239 = arith.constant 0.000000e+00 : f32
    %812 = vector.broadcast %cst_239 : f32 to vector<2x32xf32>
    %813 = arith.maximumf %811, %812 : vector<2x32xf32>
    %cst_240 = arith.constant dense<0.000000e+00> : vector<2x512xf32>
    %814 = tpu.matmul %813, %10, %cst_240 {dimension_numbers = #tpu.dot_dimension_numbers<[1], [0], [0], [1], [0, 0, 1, 1], [], []>} : vector<2x32xf32>, vector<32x512xf32>, vector<2x512xf32> -> vector<2x512xf32>
    %815 = arith.addf %814, %17 : vector<2x512xf32>
    %816 = math.tanh %815 : vector<2x512xf32>
    %817 = arith.mulf %816, %727 : vector<2x512xf32>
    %cst_241 = arith.constant -1.000000e-03 : f32
    %818 = vector.broadcast %cst_241 : f32 to vector<2x128xf32>
    %819 = arith.mulf %818, %805 : vector<2x128xf32>
    %820 = arith.mulf %819, %728 : vector<2x128xf32>
    %821 = vector.extract_strided_slice %817 {offsets = [0, 0], sizes = [2, 128], strides = [1, 1]} : vector<2x512xf32> to vector<2x128xf32>
    %822 = arith.addf %820, %821 : vector<2x128xf32>
    %823 = vector.extract_strided_slice %817 {offsets = [0, 128], sizes = [2, 128], strides = [1, 1]} : vector<2x512xf32> to vector<2x128xf32>
    %824 = arith.addf %822, %823 : vector<2x128xf32>
    %825 = vector.extract_strided_slice %817 {offsets = [0, 256], sizes = [2, 128], strides = [1, 1]} : vector<2x512xf32> to vector<2x128xf32>
    %826 = arith.addf %824, %825 : vector<2x128xf32>
    %827 = vector.extract_strided_slice %817 {offsets = [0, 384], sizes = [2, 128], strides = [1, 1]} : vector<2x512xf32> to vector<2x128xf32>
    %828 = arith.addf %826, %827 : vector<2x128xf32>
    %829 = arith.addf %777, %802 : vector<2x128xf32>
    %cst_242 = arith.constant 3.000000e+00 : f32
    %830 = vector.broadcast %cst_242 : f32 to vector<2x128xf32>
    %831 = arith.mulf %830, %829 : vector<2x128xf32>
    %832 = arith.addf %751, %831 : vector<2x128xf32>
    %833 = arith.addf %832, %828 : vector<2x128xf32>
    %cst_243 = arith.constant 1.250000e-01 : f32
    %834 = vector.broadcast %cst_243 : f32 to vector<2x128xf32>
    %835 = arith.mulf %833, %834 : vector<2x128xf32>
    %836 = arith.addf %721, %835 : vector<2x128xf32>
    %c7 = arith.constant 7 : index
    %c0_244 = arith.constant 0 : index
    %c0_245 = arith.constant 0 : index
    %837 = vector.load %arg5[%c7, %c0_244, %c0_245] : memref<9x2x128xf32, #tpu.memory_space<vmem>>, vector<1x2x128xf32>
    %838 = vector.shape_cast %837 : vector<1x2x128xf32> to vector<2x128xf32>
    %839 = vector.shape_cast %836 : vector<2x128xf32> to vector<1x2x128xf32>
    tpu.vector_store %arg5[%c7, %c0_244, %c0_245], %839 {strides = array<i32>} : memref<9x2x128xf32, #tpu.memory_space<vmem>>, vector<1x2x128xf32>,
    %c7_246 = arith.constant 7 : index
    %c0_247 = arith.constant 0 : index
    %c0_248 = arith.constant 0 : index
    %840 = vector.load %arg1[%c7_246, %c0_247, %c0_248] : memref<8x2x640xf32, #tpu.memory_space<vmem>>, vector<1x2x640xf32>
    %841 = vector.shape_cast %840 : vector<1x2x640xf32> to vector<2x640xf32>
    %842 = vector.extract_strided_slice %841 {offsets = [0, 0], sizes = [2, 512], strides = [1, 1]} : vector<2x640xf32> to vector<2x512xf32>
    %843 = vector.extract_strided_slice %841 {offsets = [0, 512], sizes = [2, 128], strides = [1, 1]} : vector<2x640xf32> to vector<2x128xf32>
    %cst_249 = arith.constant dense<0.000000e+00> : vector<2x32xf32>
    %844 = tpu.matmul %836, %4, %cst_249 {dimension_numbers = #tpu.dot_dimension_numbers<[1], [0], [0], [1], [0, 0, 1, 1], [], []>} : vector<2x128xf32>, vector<128x32xf32>, vector<2x32xf32> -> vector<2x32xf32>
    %845 = arith.addf %844, %13 : vector<2x32xf32>
    %cst_250 = arith.constant 0.000000e+00 : f32
    %846 = vector.broadcast %cst_250 : f32 to vector<2x32xf32>
    %847 = arith.maximumf %845, %846 : vector<2x32xf32>
    %cst_251 = arith.constant dense<0.000000e+00> : vector<2x32xf32>
    %848 = tpu.matmul %847, %6, %cst_251 {dimension_numbers = #tpu.dot_dimension_numbers<[1], [0], [0], [1], [0, 0, 1, 1], [], []>} : vector<2x32xf32>, vector<32x32xf32>, vector<2x32xf32> -> vector<2x32xf32>
    %849 = arith.addf %848, %15 : vector<2x32xf32>
    %cst_252 = arith.constant 0.000000e+00 : f32
    %850 = vector.broadcast %cst_252 : f32 to vector<2x32xf32>
    %851 = arith.maximumf %849, %850 : vector<2x32xf32>
    %cst_253 = arith.constant dense<0.000000e+00> : vector<2x512xf32>
    %852 = tpu.matmul %851, %10, %cst_253 {dimension_numbers = #tpu.dot_dimension_numbers<[1], [0], [0], [1], [0, 0, 1, 1], [], []>} : vector<2x32xf32>, vector<32x512xf32>, vector<2x512xf32> -> vector<2x512xf32>
    %853 = arith.addf %852, %17 : vector<2x512xf32>
    %854 = math.tanh %853 : vector<2x512xf32>
    %855 = arith.mulf %854, %842 : vector<2x512xf32>
    %cst_254 = arith.constant -1.000000e-03 : f32
    %856 = vector.broadcast %cst_254 : f32 to vector<2x128xf32>
    %857 = arith.mulf %856, %836 : vector<2x128xf32>
    %858 = arith.mulf %857, %843 : vector<2x128xf32>
    %859 = vector.extract_strided_slice %855 {offsets = [0, 0], sizes = [2, 128], strides = [1, 1]} : vector<2x512xf32> to vector<2x128xf32>
    %860 = arith.addf %858, %859 : vector<2x128xf32>
    %861 = vector.extract_strided_slice %855 {offsets = [0, 128], sizes = [2, 128], strides = [1, 1]} : vector<2x512xf32> to vector<2x128xf32>
    %862 = arith.addf %860, %861 : vector<2x128xf32>
    %863 = vector.extract_strided_slice %855 {offsets = [0, 256], sizes = [2, 128], strides = [1, 1]} : vector<2x512xf32> to vector<2x128xf32>
    %864 = arith.addf %862, %863 : vector<2x128xf32>
    %865 = vector.extract_strided_slice %855 {offsets = [0, 384], sizes = [2, 128], strides = [1, 1]} : vector<2x512xf32> to vector<2x128xf32>
    %866 = arith.addf %864, %865 : vector<2x128xf32>
    %cst_255 = arith.constant 0.333333343 : f32
    %867 = vector.broadcast %cst_255 : f32 to vector<2x128xf32>
    %868 = arith.mulf %866, %867 : vector<2x128xf32>
    %869 = arith.addf %836, %868 : vector<2x128xf32>
    %cst_256 = arith.constant dense<0.000000e+00> : vector<2x32xf32>
    %870 = tpu.matmul %869, %4, %cst_256 {dimension_numbers = #tpu.dot_dimension_numbers<[1], [0], [0], [1], [0, 0, 1, 1], [], []>} : vector<2x128xf32>, vector<128x32xf32>, vector<2x32xf32> -> vector<2x32xf32>
    %871 = arith.addf %870, %13 : vector<2x32xf32>
    %cst_257 = arith.constant 0.000000e+00 : f32
    %872 = vector.broadcast %cst_257 : f32 to vector<2x32xf32>
    %873 = arith.maximumf %871, %872 : vector<2x32xf32>
    %cst_258 = arith.constant dense<0.000000e+00> : vector<2x32xf32>
    %874 = tpu.matmul %873, %6, %cst_258 {dimension_numbers = #tpu.dot_dimension_numbers<[1], [0], [0], [1], [0, 0, 1, 1], [], []>} : vector<2x32xf32>, vector<32x32xf32>, vector<2x32xf32> -> vector<2x32xf32>
    %875 = arith.addf %874, %15 : vector<2x32xf32>
    %cst_259 = arith.constant 0.000000e+00 : f32
    %876 = vector.broadcast %cst_259 : f32 to vector<2x32xf32>
    %877 = arith.maximumf %875, %876 : vector<2x32xf32>
    %cst_260 = arith.constant dense<0.000000e+00> : vector<2x512xf32>
    %878 = tpu.matmul %877, %10, %cst_260 {dimension_numbers = #tpu.dot_dimension_numbers<[1], [0], [0], [1], [0, 0, 1, 1], [], []>} : vector<2x32xf32>, vector<32x512xf32>, vector<2x512xf32> -> vector<2x512xf32>
    %879 = arith.addf %878, %17 : vector<2x512xf32>
    %880 = math.tanh %879 : vector<2x512xf32>
    %881 = arith.mulf %880, %842 : vector<2x512xf32>
    %cst_261 = arith.constant -1.000000e-03 : f32
    %882 = vector.broadcast %cst_261 : f32 to vector<2x128xf32>
    %883 = arith.mulf %882, %869 : vector<2x128xf32>
    %884 = arith.mulf %883, %843 : vector<2x128xf32>
    %885 = vector.extract_strided_slice %881 {offsets = [0, 0], sizes = [2, 128], strides = [1, 1]} : vector<2x512xf32> to vector<2x128xf32>
    %886 = arith.addf %884, %885 : vector<2x128xf32>
    %887 = vector.extract_strided_slice %881 {offsets = [0, 128], sizes = [2, 128], strides = [1, 1]} : vector<2x512xf32> to vector<2x128xf32>
    %888 = arith.addf %886, %887 : vector<2x128xf32>
    %889 = vector.extract_strided_slice %881 {offsets = [0, 256], sizes = [2, 128], strides = [1, 1]} : vector<2x512xf32> to vector<2x128xf32>
    %890 = arith.addf %888, %889 : vector<2x128xf32>
    %891 = vector.extract_strided_slice %881 {offsets = [0, 384], sizes = [2, 128], strides = [1, 1]} : vector<2x512xf32> to vector<2x128xf32>
    %892 = arith.addf %890, %891 : vector<2x128xf32>
    %893 = arith.subf %892, %868 : vector<2x128xf32>
    %894 = arith.addf %836, %893 : vector<2x128xf32>
    %cst_262 = arith.constant dense<0.000000e+00> : vector<2x32xf32>
    %895 = tpu.matmul %894, %4, %cst_262 {dimension_numbers = #tpu.dot_dimension_numbers<[1], [0], [0], [1], [0, 0, 1, 1], [], []>} : vector<2x128xf32>, vector<128x32xf32>, vector<2x32xf32> -> vector<2x32xf32>
    %896 = arith.addf %895, %13 : vector<2x32xf32>
    %cst_263 = arith.constant 0.000000e+00 : f32
    %897 = vector.broadcast %cst_263 : f32 to vector<2x32xf32>
    %898 = arith.maximumf %896, %897 : vector<2x32xf32>
    %cst_264 = arith.constant dense<0.000000e+00> : vector<2x32xf32>
    %899 = tpu.matmul %898, %6, %cst_264 {dimension_numbers = #tpu.dot_dimension_numbers<[1], [0], [0], [1], [0, 0, 1, 1], [], []>} : vector<2x32xf32>, vector<32x32xf32>, vector<2x32xf32> -> vector<2x32xf32>
    %900 = arith.addf %899, %15 : vector<2x32xf32>
    %cst_265 = arith.constant 0.000000e+00 : f32
    %901 = vector.broadcast %cst_265 : f32 to vector<2x32xf32>
    %902 = arith.maximumf %900, %901 : vector<2x32xf32>
    %cst_266 = arith.constant dense<0.000000e+00> : vector<2x512xf32>
    %903 = tpu.matmul %902, %10, %cst_266 {dimension_numbers = #tpu.dot_dimension_numbers<[1], [0], [0], [1], [0, 0, 1, 1], [], []>} : vector<2x32xf32>, vector<32x512xf32>, vector<2x512xf32> -> vector<2x512xf32>
    %904 = arith.addf %903, %17 : vector<2x512xf32>
    %905 = math.tanh %904 : vector<2x512xf32>
    %906 = arith.mulf %905, %842 : vector<2x512xf32>
    %cst_267 = arith.constant -1.000000e-03 : f32
    %907 = vector.broadcast %cst_267 : f32 to vector<2x128xf32>
    %908 = arith.mulf %907, %894 : vector<2x128xf32>
    %909 = arith.mulf %908, %843 : vector<2x128xf32>
    %910 = vector.extract_strided_slice %906 {offsets = [0, 0], sizes = [2, 128], strides = [1, 1]} : vector<2x512xf32> to vector<2x128xf32>
    %911 = arith.addf %909, %910 : vector<2x128xf32>
    %912 = vector.extract_strided_slice %906 {offsets = [0, 128], sizes = [2, 128], strides = [1, 1]} : vector<2x512xf32> to vector<2x128xf32>
    %913 = arith.addf %911, %912 : vector<2x128xf32>
    %914 = vector.extract_strided_slice %906 {offsets = [0, 256], sizes = [2, 128], strides = [1, 1]} : vector<2x512xf32> to vector<2x128xf32>
    %915 = arith.addf %913, %914 : vector<2x128xf32>
    %916 = vector.extract_strided_slice %906 {offsets = [0, 384], sizes = [2, 128], strides = [1, 1]} : vector<2x512xf32> to vector<2x128xf32>
    %917 = arith.addf %915, %916 : vector<2x128xf32>
    %918 = arith.subf %866, %892 : vector<2x128xf32>
    %919 = arith.addf %918, %917 : vector<2x128xf32>
    %920 = arith.addf %836, %919 : vector<2x128xf32>
    %cst_268 = arith.constant dense<0.000000e+00> : vector<2x32xf32>
    %921 = tpu.matmul %920, %4, %cst_268 {dimension_numbers = #tpu.dot_dimension_numbers<[1], [0], [0], [1], [0, 0, 1, 1], [], []>} : vector<2x128xf32>, vector<128x32xf32>, vector<2x32xf32> -> vector<2x32xf32>
    %922 = arith.addf %921, %13 : vector<2x32xf32>
    %cst_269 = arith.constant 0.000000e+00 : f32
    %923 = vector.broadcast %cst_269 : f32 to vector<2x32xf32>
    %924 = arith.maximumf %922, %923 : vector<2x32xf32>
    %cst_270 = arith.constant dense<0.000000e+00> : vector<2x32xf32>
    %925 = tpu.matmul %924, %6, %cst_270 {dimension_numbers = #tpu.dot_dimension_numbers<[1], [0], [0], [1], [0, 0, 1, 1], [], []>} : vector<2x32xf32>, vector<32x32xf32>, vector<2x32xf32> -> vector<2x32xf32>
    %926 = arith.addf %925, %15 : vector<2x32xf32>
    %cst_271 = arith.constant 0.000000e+00 : f32
    %927 = vector.broadcast %cst_271 : f32 to vector<2x32xf32>
    %928 = arith.maximumf %926, %927 : vector<2x32xf32>
    %cst_272 = arith.constant dense<0.000000e+00> : vector<2x512xf32>
    %929 = tpu.matmul %928, %10, %cst_272 {dimension_numbers = #tpu.dot_dimension_numbers<[1], [0], [0], [1], [0, 0, 1, 1], [], []>} : vector<2x32xf32>, vector<32x512xf32>, vector<2x512xf32> -> vector<2x512xf32>
    %930 = arith.addf %929, %17 : vector<2x512xf32>
    %931 = math.tanh %930 : vector<2x512xf32>
    %932 = arith.mulf %931, %842 : vector<2x512xf32>
    %cst_273 = arith.constant -1.000000e-03 : f32
    %933 = vector.broadcast %cst_273 : f32 to vector<2x128xf32>
    %934 = arith.mulf %933, %920 : vector<2x128xf32>
    %935 = arith.mulf %934, %843 : vector<2x128xf32>
    %936 = vector.extract_strided_slice %932 {offsets = [0, 0], sizes = [2, 128], strides = [1, 1]} : vector<2x512xf32> to vector<2x128xf32>
    %937 = arith.addf %935, %936 : vector<2x128xf32>
    %938 = vector.extract_strided_slice %932 {offsets = [0, 128], sizes = [2, 128], strides = [1, 1]} : vector<2x512xf32> to vector<2x128xf32>
    %939 = arith.addf %937, %938 : vector<2x128xf32>
    %940 = vector.extract_strided_slice %932 {offsets = [0, 256], sizes = [2, 128], strides = [1, 1]} : vector<2x512xf32> to vector<2x128xf32>
    %941 = arith.addf %939, %940 : vector<2x128xf32>
    %942 = vector.extract_strided_slice %932 {offsets = [0, 384], sizes = [2, 128], strides = [1, 1]} : vector<2x512xf32> to vector<2x128xf32>
    %943 = arith.addf %941, %942 : vector<2x128xf32>
    %944 = arith.addf %892, %917 : vector<2x128xf32>
    %cst_274 = arith.constant 3.000000e+00 : f32
    %945 = vector.broadcast %cst_274 : f32 to vector<2x128xf32>
    %946 = arith.mulf %945, %944 : vector<2x128xf32>
    %947 = arith.addf %866, %946 : vector<2x128xf32>
    %948 = arith.addf %947, %943 : vector<2x128xf32>
    %cst_275 = arith.constant 1.250000e-01 : f32
    %949 = vector.broadcast %cst_275 : f32 to vector<2x128xf32>
    %950 = arith.mulf %948, %949 : vector<2x128xf32>
    %951 = arith.addf %836, %950 : vector<2x128xf32>
    %c8_276 = arith.constant 8 : index
    %c0_277 = arith.constant 0 : index
    %c0_278 = arith.constant 0 : index
    %952 = vector.load %arg5[%c8_276, %c0_277, %c0_278] : memref<9x2x128xf32, #tpu.memory_space<vmem>>, vector<1x2x128xf32>
    %953 = vector.shape_cast %952 : vector<1x2x128xf32> to vector<2x128xf32>
    %954 = vector.shape_cast %951 : vector<2x128xf32> to vector<1x2x128xf32>
    tpu.vector_store %arg5[%c8_276, %c0_277, %c0_278], %954 {strides = array<i32>} : memref<9x2x128xf32, #tpu.memory_space<vmem>>, vector<1x2x128xf32>,
    return
  }
  func.func @transform_0(%arg0: i32) -> (i32, i32, i32) {
    %c0_i32 = arith.constant 0 : i32
    %c0_i32_0 = arith.constant 0 : i32
    %c0_i32_1 = arith.constant 0 : i32
    return %c0_i32, %arg0, %c0_i32_0 : i32, i32, i32
  }
  func.func @transform_1(%arg0: i32) -> (i32, i32) {
    %c0_i32 = arith.constant 0 : i32
    %c0_i32_0 = arith.constant 0 : i32
    return %arg0, %c0_i32 : i32, i32
  }
  func.func @transform_2(%arg0: i32) -> (i32, i32) {
    %c0_i32 = arith.constant 0 : i32
    %c0_i32_0 = arith.constant 0 : i32
    %c0_i32_1 = arith.constant 0 : i32
    return %c0_i32, %c0_i32_0 : i32, i32
  }
  func.func @transform_3(%arg0: i32) -> (i32, i32) {
    %c0_i32 = arith.constant 0 : i32
    %c0_i32_0 = arith.constant 0 : i32
    %c0_i32_1 = arith.constant 0 : i32
    return %c0_i32, %c0_i32_0 : i32, i32
  }
  func.func @transform_4(%arg0: i32) -> (i32, i32, i32) {
    %c0_i32 = arith.constant 0 : i32
    %c0_i32_0 = arith.constant 0 : i32
    %c0_i32_1 = arith.constant 0 : i32
    return %c0_i32, %arg0, %c0_i32_0 : i32, i32, i32
  }
}

</mosaic_0001>

<llo_original>
// kernel: tpu_custom_call.1
$region0: #{tpu_custom_call.1}
  #allocation0 [shape = 'u32[]', space=smem, size = 0x4, offset = 0x4, fixed_abs, tag = 'smem constant byte address 0x4 - core index']
  #allocation1 [shape = 'u32[144,128]{1,0:T(1,128)}', space=vmem, size = 0x12000, scoped, tag = 'internal scratch']
  %s0 = inlined_call_operand.vmem [shape: f32[8,2,640], index: 0, kind: input, shape index: {}]
  %s1 = inlined_call_operand.vmem [shape: f32[2,4], index: 1, kind: input, shape index: {}]
  %s2 = inlined_call_operand.vmem [shape: f32[232,32], index: 2, kind: input, shape index: {}]
  %s3 = inlined_call_operand.hbm [shape: f32[80,512], index: 3, kind: input, shape index: {}]
  %s4 = inlined_call_operand.hbm [shape: f32[9,2,128], index: 4, kind: output, shape index: {}]
  %s5 = sld [smem:[#allocation0]]
  $region30: #{tpu_custom_call.1} parent=0
    _
  %s7 = ssub.s32 1, %s5
  %s8 = scalar_select 0, %s7, %s5
  $region1: #{tpu_custom_call.1} parent=0
    #allocation2 [shape = 'u8[163840]{0}', space=vmem, size = 0x28000, scoped, tag = 'input window, operand 3, single buffered']
    #allocation3 [shape = 's32[1]{0}', space=sflag, size = 0x4, scoped, tag = 'scoped memory for tpu_custom_call.1']
    #allocation4 [shape = 's32[1]{0}', space=sflag, size = 0x4, scoped, tag = 'scoped memory for tpu_custom_call.1']
    #allocation5 [shape = 'u8[9216]{0}', space=vmem, size = 0x2400, scoped, tag = 'output window, operand 0, single buffered']
    %9 = vsyncpa [#allocation3], 0
    %10 = vsyncpa [#allocation4], 0
    // Predicated region
    $region2: #{tpu_custom_call.1} parent=1 // pred_check
      _
    $region3: #{tpu_custom_call.1} parent=1 // pred_check_branch
      %12 = sbr.rel (0) target = $region5
    $region4: #{tpu_custom_call.1} parent=1 // pred_region
      _
    $region5: #{tpu_custom_call.1} parent=1 // pred_fallthru
      _
    // Predicated region
    $region6: #{tpu_custom_call.1} parent=1 // pred_check
      _
    $region7: #{tpu_custom_call.1} parent=1 // pred_check_branch
      %14 = sbr.rel (0) target = $region9
    $region8: #{tpu_custom_call.1} parent=1 // pred_region
      _
    $region9: #{tpu_custom_call.1} parent=1 // pred_fallthru
      _
    // Predicated region
    $region10: #{tpu_custom_call.1} parent=1 // pred_check
      _
    $region11: #{tpu_custom_call.1} parent=1 // pred_check_branch
      %16 = sbr.rel (0) target = $region13
    $region12: #{tpu_custom_call.1} parent=1 // pred_region
      _
    $region13: #{tpu_custom_call.1} parent=1 // pred_fallthru
      _
    // Predicated region
    $region14: #{tpu_custom_call.1} parent=1 // pred_check
      _
    $region15: #{tpu_custom_call.1} parent=1 // pred_check_branch
      %18 = sbr.rel (0) target = $region17
    $region16: #{tpu_custom_call.1} parent=1 // pred_region
      %s20 = ssub.s32 5120, 5120
      %21 = vsyncadd [#allocation3], %s20
      %s22 = sshll.u32 [#allocation2], 4
      %s23 = int_to_ptr.vmem [resolvable:$true] %s22
      %28 = dma.hbm_to_vmem [thread:$0]  %s3, 5120, %s23, [#allocation3], 512, 512, 32
    $region17: #{tpu_custom_call.1} parent=1 // pred_fallthru
      _
    // Predicated region
    $region18: #{tpu_custom_call.1} parent=1 // pred_check
      _
    $region19: #{tpu_custom_call.1} parent=1 // pred_check_branch
      %30 = sbr.rel (0) target = $region21
    $region20: #{tpu_custom_call.1} parent=1 // pred_region
      %31 = dma.done [#allocation3], 5120
    $region21: #{tpu_custom_call.1} parent=1 // pred_fallthru
      _
    %v32 = vld [vmem:[%s2] sm:$0xf]
    %v33 = vld [vmem:[%s2 + $0x8] sm:$0x1]
    %v34 = vld [vmem:[%s2 + $0x10] sm:$0xff]
    %v35 = vld [vmem:[%s2 + $0x18] sm:$0xff]
    %v36 = vld [vmem:[%s2 + $0x20] sm:$0xff]
    %v37 = vld [vmem:[%s2 + $0x28] sm:$0xff]
    %v38 = vld [vmem:[%s2 + $0x30] sm:$0x1]
    %v39 = vld [vmem:[%s2 + $0x38] sm:$0xff]
    %v40 = vld [vmem:[%s2 + $0x40] sm:$0xff]
    %v41 = vld [vmem:[%s2 + $0x48] sm:$0xff]
    %v42 = vld [vmem:[%s2 + $0x50] sm:$0xff]
    %v43 = vld [vmem:[%s2 + $0x58] sm:$0xff]
    %v44 = vld [vmem:[%s2 + $0x60] sm:$0xff]
    %v45 = vld [vmem:[%s2 + $0x68] sm:$0xff]
    %v46 = vld [vmem:[%s2 + $0x70] sm:$0xff]
    %v47 = vld [vmem:[%s2 + $0x78] sm:$0xff]
    %v48 = vld [vmem:[%s2 + $0x80] sm:$0xff]
    %v49 = vld [vmem:[%s2 + $0x88] sm:$0xff]
    %v50 = vld [vmem:[%s2 + $0x90] sm:$0xff]
    %v51 = vld [vmem:[%s2 + $0x98] sm:$0xff]
    %v52 = vld [vmem:[%s2 + $0xa0] sm:$0xff]
    %v53 = vld [vmem:[%s2 + $0xa8] sm:$0xff]
    %v54 = vld [vmem:[%s2 + $0xb0] sm:$0xff]
    %v55 = vld [vmem:[%s2 + $0xb8] sm:$0x1]
    %v56 = vld [vmem:[%s2 + $0xc0] sm:$0xff]
    %v57 = vld [vmem:[%s2 + $0xc8] sm:$0xff]
    %v58 = vld [vmem:[%s2 + $0xd0] sm:$0xff]
    %v59 = vld [vmem:[%s2 + $0xd8] sm:$0xff]
    %v60 = vld [vmem:[%s2 + $0xe0] sm:$0x1]
    %v61 = vld [vmem:[#allocation2] sm:$0xff]
    %v62 = vld [vmem:[#allocation2 + $0x20] sm:$0xff]
    %v63 = vld [vmem:[#allocation2 + $0x40] sm:$0xff]
    %v64 = vld [vmem:[#allocation2 + $0x60] sm:$0xff]
    %v65 = vld [vmem:[#allocation2 + $0x80] ss:$0 sm:$0xff]
    %v66 = vld [vmem:[#allocation2 + $0xa0] sm:$0xff]
    %v67 = vld [vmem:[#allocation2 + $0xa8] sm:$0xff]
    %v68 = vld [vmem:[#allocation2 + $0xb0] sm:$0xff]
    %v69 = vld [vmem:[#allocation2 + $0xb8] sm:$0xff]
    %v70 = vld [vmem:[#allocation2 + $0xc0] sm:$0xff]
    %v71 = vld [vmem:[#allocation2 + $0xc8] sm:$0xff]
    %v72 = vld [vmem:[#allocation2 + $0xd0] sm:$0xff]
    %v73 = vld [vmem:[#allocation2 + $0xd8] sm:$0xff]
    %v74 = vld [vmem:[#allocation2 + $0xe0] sm:$0xff]
    %v75 = vld [vmem:[#allocation2 + $0xe8] sm:$0xff]
    %v76 = vld [vmem:[#allocation2 + $0xf0] sm:$0xff]
    %v77 = vld [vmem:[#allocation2 + $0xf8] sm:$0xff]
    %v78 = vld [vmem:[#allocation2 + $0x100] sm:$0xff]
    %v79 = vld [vmem:[#allocation2 + $0x108] sm:$0xff]
    %v80 = vld [vmem:[#allocation2 + $0x110] sm:$0xff]
    %v81 = vld [vmem:[#allocation2 + $0x118] sm:$0xff]
    %s82 = scalar_lea.vmem [#allocation2], 288
    %v83 = vld [vmem:[%s82] ss:$8 sm:$0xf]
    %v84 = vlaneseq
    %v85 = vshrl.u32 %v84, 7
    %v86 = vsub.s32 0, %v85
    %v87 = vrot.slane %v55, %v86
    %v88 = vlaneseq
    %v89 = vshrl.u32 %v88, 7
    %v90 = vsub.s32 0, %v89
    %v91 = vrot.slane %v60, %v90
    %v93 = vlaneseq
    %v94 = vshrl.u32 %v93, 7
    %v95 = vsub.s32 0, %v94
    %v96 = vrot.slane %v83, %v95
    %v97 = vlaneseq
    %v98 = vshrl.u32 %v97, 7
    %v99 = vsub.s32 1, %v98
    %v100 = vrot.slane %v83, %v99
    %v101 = vlaneseq
    %v102 = vshrl.u32 %v101, 7
    %v103 = vsub.s32 2, %v102
    %v104 = vrot.slane %v83, %v103
    %v105 = vlaneseq
    %v106 = vshrl.u32 %v105, 7
    %v107 = vsub.s32 3, %v106
    %v108 = vrot.slane %v83, %v107
    %v113 = vld [vmem:[%s1] sm:$0x3]
    %v114 = vlaneseq
    %v115 = vshrl.u32 %v114, 7
    %v116 = vsub.s32 0, %v115
    %v117 = vrot.slane %v33, %v116
    %vm118 = vcmask 31744
    %v120 = vsel %vm118, %v113, 0
    %vm122 = vcmask 1043456
    %v124 = vsel %vm122, %v32, 0
    %126 = vmatprep.subr.mxu0 0.0
    %127 = vmatpush1.msra.mxu0 0.0
    %128 = vmatprep.subr.mxu0 0.0
    %129 = vmatpush1.msra.mxu0 0.0
    %130 = vmatprep.subr.mxu0 0.0
    %131 = vmatpush1.msra.mxu0 0.0
    %132 = vmatprep.subr.mxu0 0.0
    %133 = vmatpush1.msra.mxu0 0.0
    %134 = vmatprep.subr.mxu0 0.0
    %135 = vmatpush1.msra.mxu0 0.0
    %136 = vmatprep.subr.mxu0 0.0
    %137 = vmatpush1.msra.mxu0 0.0
    %138 = vmatprep.subr.mxu0 0.0
    %139 = vmatpush1.msra.mxu0 0.0
    %140 = vmatprep.subr.mxu0 0.0
    %141 = vmatpush1.msra.mxu0 0.0
    %142 = vmatprep.subr.mxu0 0.0
    %143 = vmatpush1.msra.mxu0 0.0
    %144 = vmatprep.subr.mxu0 0.0
    %145 = vmatpush1.msra.mxu0 0.0
    %146 = vmatprep.subr.mxu0 0.0
    %147 = vmatpush1.msra.mxu0 0.0
    %148 = vmatprep.subr.mxu0 0.0
    %149 = vmatpush1.msra.mxu0 0.0
    %150 = vmatprep.subr.mxu0 0.0
    %151 = vmatpush1.msra.mxu0 0.0
    %152 = vmatprep.subr.mxu0 0.0
    %153 = vmatpush1.msra.mxu0 0.0
    %154 = vmatprep.subr.mxu0 0.0
    %155 = vmatpush1.msra.mxu0 0.0
    %156 = vmatprep.subr.mxu0 0.0
    %157 = vmatpush1.msra.mxu0 %v124
    %158 = vmatprep.subr.mxu0 0.0
    %159 = vmatpush2.msra.mxu0 0.0
    %160 = vmatprep.subr.mxu0 0.0
    %161 = vmatpush2.msra.mxu0 0.0
    %162 = vmatprep.subr.mxu0 0.0
    %163 = vmatpush2.msra.mxu0 0.0
    %164 = vmatprep.subr.mxu0 0.0
    %165 = vmatpush2.msra.mxu0 0.0
    %166 = vmatprep.subr.mxu0 0.0
    %167 = vmatpush2.msra.mxu0 0.0
    %168 = vmatprep.subr.mxu0 0.0
    %169 = vmatpush2.msra.mxu0 0.0
    %170 = vmatprep.subr.mxu0 0.0
    %171 = vmatpush2.msra.mxu0 0.0
    %172 = vmatprep.subr.mxu0 0.0
    %173 = vmatpush2.msra.mxu0 0.0
    %174 = vmatprep.subr.mxu0 0.0
    %175 = vmatpush2.msra.mxu0 0.0
    %176 = vmatprep.subr.mxu0 0.0
    %177 = vmatpush2.msra.mxu0 0.0
    %178 = vmatprep.subr.mxu0 0.0
    %179 = vmatpush2.msra.mxu0 0.0
    %180 = vmatprep.subr.mxu0 0.0
    %181 = vmatpush2.msra.mxu0 0.0
    %182 = vmatprep.subr.mxu0 0.0
    %183 = vmatpush2.msra.mxu0 0.0
    %184 = vmatprep.subr.mxu0 0.0
    %185 = vmatpush2.msra.mxu0 0.0
    %186 = vmatprep.subr.mxu0 0.0
    %187 = vmatpush2.msra.mxu0 0.0
    %188 = vmatprep.subr.mxu0 0.0
    %189 = vmatpush2.msra.mxu0 0.0
    %190 = vmatprep.mubr.f32.mxu0 0.0
    %191 = vmatmul.mubr.f32.gmra.mxu0 %v120
    %v192 = vpop.f32.mrf.mxu0
    %v193 = vadd.f32 %v117, %v192
    %v194 = vpop.f32.mrf.mxu0
    %195 = vdwg.mxu0
    %v196 = vmax.f32 %v193, 0.0
    %v197 = vlaneseq
    %v198 = vshrl.u32 %v197, 7
    %v199 = vsub.s32 0, %v198
    %v200 = vrot.slane %v38, %v199
    %vm201 = vcmask 261120
    %v203 = vsel %vm201, %v196, 0
    %205 = vmatprep.subr.mxu0 0.0
    %206 = vmatpush1.msra.mxu0 0.0
    %207 = vmatprep.subr.mxu0 0.0
    %208 = vmatpush1.msra.mxu0 0.0
    %209 = vmatprep.subr.mxu0 0.0
    %210 = vmatpush1.msra.mxu0 0.0
    %211 = vmatprep.subr.mxu0 0.0
    %212 = vmatpush1.msra.mxu0 0.0
    %213 = vmatprep.subr.mxu0 0.0
    %214 = vmatpush1.msra.mxu0 0.0
    %215 = vmatprep.subr.mxu0 0.0
    %216 = vmatpush1.msra.mxu0 0.0
    %217 = vmatprep.subr.mxu0 0.0
    %218 = vmatpush1.msra.mxu0 0.0
    %219 = vmatprep.subr.mxu0 0.0
    %220 = vmatpush1.msra.mxu0 0.0
    %221 = vmatprep.subr.mxu0 0.0
    %222 = vmatpush1.msra.mxu0 0.0
    %223 = vmatprep.subr.mxu0 0.0
    %224 = vmatpush1.msra.mxu0 0.0
    %225 = vmatprep.subr.mxu0 0.0
    %226 = vmatpush1.msra.mxu0 0.0
    %227 = vmatprep.subr.mxu0 0.0
    %228 = vmatpush1.msra.mxu0 0.0
    %229 = vmatprep.subr.mxu0 0.0
    %230 = vmatpush1.msra.mxu0 %v37
    %231 = vmatprep.subr.mxu0 0.0
    %232 = vmatpush1.msra.mxu0 %v36
    %233 = vmatprep.subr.mxu0 0.0
    %234 = vmatpush1.msra.mxu0 %v35
    %235 = vmatprep.subr.mxu0 0.0
    %236 = vmatpush1.msra.mxu0 %v34
    %237 = vmatprep.subr.mxu0 0.0
    %238 = vmatpush2.msra.mxu0 0.0
    %239 = vmatprep.subr.mxu0 0.0
    %240 = vmatpush2.msra.mxu0 0.0
    %241 = vmatprep.subr.mxu0 0.0
    %242 = vmatpush2.msra.mxu0 0.0
    %243 = vmatprep.subr.mxu0 0.0
    %244 = vmatpush2.msra.mxu0 0.0
    %245 = vmatprep.subr.mxu0 0.0
    %246 = vmatpush2.msra.mxu0 0.0
    %247 = vmatprep.subr.mxu0 0.0
    %248 = vmatpush2.msra.mxu0 0.0
    %249 = vmatprep.subr.mxu0 0.0
    %250 = vmatpush2.msra.mxu0 0.0
    %251 = vmatprep.subr.mxu0 0.0
    %252 = vmatpush2.msra.mxu0 0.0
    %253 = vmatprep.subr.mxu0 0.0
    %254 = vmatpush2.msra.mxu0 0.0
    %255 = vmatprep.subr.mxu0 0.0
    %256 = vmatpush2.msra.mxu0 0.0
    %257 = vmatprep.subr.mxu0 0.0
    %258 = vmatpush2.msra.mxu0 0.0
    %259 = vmatprep.subr.mxu0 0.0
    %260 = vmatpush2.msra.mxu0 0.0
    %261 = vmatprep.subr.mxu0 0.0
    %262 = vmatpush2.msra.mxu0 0.0
    %263 = vmatprep.subr.mxu0 0.0
    %264 = vmatpush2.msra.mxu0 0.0
    %265 = vmatprep.subr.mxu0 0.0
    %266 = vmatpush2.msra.mxu0 0.0
    %267 = vmatprep.subr.mxu0 0.0
    %268 = vmatpush2.msra.mxu0 0.0
    %269 = vmatprep.mubr.f32.mxu0 0.0
    %270 = vmatmul.mubr.f32.gmra.mxu0 %v203
    %v271 = vpop.f32.mrf.mxu0
    %v272 = vadd.f32 %v200, %v271
    %v273 = vpop.f32.mrf.mxu0
    %274 = vdwg.mxu0
    %v275 = vmax.f32 %v272, 0.0
    %v277 = vsel %vm201, %v275, 0
    %279 = vmatprep.subr.mxu0 0.0
    %280 = vmatpush1.msra.mxu0 0.0
    %281 = vmatprep.subr.mxu0 0.0
    %282 = vmatpush1.msra.mxu0 0.0
    %283 = vmatprep.subr.mxu0 0.0
    %284 = vmatpush1.msra.mxu0 0.0
    %285 = vmatprep.subr.mxu0 0.0
    %286 = vmatpush1.msra.mxu0 0.0
    %287 = vmatprep.subr.mxu0 0.0
    %288 = vmatpush1.msra.mxu0 0.0
    %289 = vmatprep.subr.mxu0 0.0
    %290 = vmatpush1.msra.mxu0 0.0
    %291 = vmatprep.subr.mxu0 0.0
    %292 = vmatpush1.msra.mxu0 0.0
    %293 = vmatprep.subr.mxu0 0.0
    %294 = vmatpush1.msra.mxu0 0.0
    %295 = vmatprep.subr.mxu0 0.0
    %296 = vmatpush1.msra.mxu0 0.0
    %297 = vmatprep.subr.mxu0 0.0
    %298 = vmatpush1.msra.mxu0 0.0
    %299 = vmatprep.subr.mxu0 0.0
    %300 = vmatpush1.msra.mxu0 0.0
    %301 = vmatprep.subr.mxu0 0.0
    %302 = vmatpush1.msra.mxu0 0.0
    %303 = vmatprep.subr.mxu0 0.0
    %304 = vmatpush1.msra.mxu0 %v64
    %305 = vmatprep.subr.mxu0 0.0
    %306 = vmatpush1.msra.mxu0 %v63
    %307 = vmatprep.subr.mxu0 0.0
    %308 = vmatpush1.msra.mxu0 %v62
    %309 = vmatprep.subr.mxu0 0.0
    %310 = vmatpush1.msra.mxu0 %v61
    %311 = vmatprep.subr.mxu0 0.0
    %312 = vmatpush2.msra.mxu0 0.0
    %313 = vmatprep.subr.mxu0 0.0
    %314 = vmatpush2.msra.mxu0 0.0
    %315 = vmatprep.subr.mxu0 0.0
    %316 = vmatpush2.msra.mxu0 0.0
    %317 = vmatprep.subr.mxu0 0.0
    %318 = vmatpush2.msra.mxu0 0.0
    %319 = vmatprep.subr.mxu0 0.0
    %320 = vmatpush2.msra.mxu0 0.0
    %321 = vmatprep.subr.mxu0 0.0
    %322 = vmatpush2.msra.mxu0 0.0
    %323 = vmatprep.subr.mxu0 0.0
    %324 = vmatpush2.msra.mxu0 0.0
    %325 = vmatprep.subr.mxu0 0.0
    %326 = vmatpush2.msra.mxu0 0.0
    %327 = vmatprep.subr.mxu0 0.0
    %328 = vmatpush2.msra.mxu0 0.0
    %329 = vmatprep.subr.mxu0 0.0
    %330 = vmatpush2.msra.mxu0 0.0
    %331 = vmatprep.subr.mxu0 0.0
    %332 = vmatpush2.msra.mxu0 0.0
    %333 = vmatprep.subr.mxu0 0.0
    %334 = vmatpush2.msra.mxu0 0.0
    %335 = vmatprep.subr.mxu0 0.0
    %336 = vmatpush2.msra.mxu0 0.0
    %337 = vmatprep.subr.mxu0 0.0
    %338 = vmatpush2.msra.mxu0 0.0
    %339 = vmatprep.subr.mxu0 0.0
    %340 = vmatpush2.msra.mxu0 0.0
    %341 = vmatprep.subr.mxu0 0.0
    %342 = vmatpush2.msra.mxu0 0.0
    %343 = vmatprep.mubr.f32.mxu0 0.0
    %344 = vmatmul.mubr.f32.gmra.mxu0 %v277
    %v345 = vpop.f32.mrf.mxu0
    %v346 = vadd.f32 %v65, %v345
    %v347 = vpop.f32.mrf.mxu0
    %348 = vdwg.mxu0
    %349 = vst [vmem:[#allocation5] sm:$0x3] %v346
    %v350 = vld [vmem:[%s0] sm:$0xff]
    %v351 = vld [vmem:[%s0 + $0x8] sm:$0x3]
    %352 = vmatprep.subr.mxu0 0.0
    %353 = vmatpush1.msra.mxu0 %v54
    %354 = vmatprep.subr.mxu0 0.0
    %355 = vmatpush1.msra.mxu0 %v53
    %356 = vmatprep.subr.mxu0 0.0
    %357 = vmatpush1.msra.mxu0 %v52
    %358 = vmatprep.subr.mxu0 0.0
    %359 = vmatpush1.msra.mxu0 %v51
    %360 = vmatprep.subr.mxu0 0.0
    %361 = vmatpush1.msra.mxu0 %v50
    %362 = vmatprep.subr.mxu0 0.0
    %363 = vmatpush1.msra.mxu0 %v49
    %364 = vmatprep.subr.mxu0 0.0
    %365 = vmatpush1.msra.mxu0 %v48
    %366 = vmatprep.subr.mxu0 0.0
    %367 = vmatpush1.msra.mxu0 %v47
    %368 = vmatprep.subr.mxu0 0.0
    %369 = vmatpush1.msra.mxu0 %v46
    %370 = vmatprep.subr.mxu0 0.0
    %371 = vmatpush1.msra.mxu0 %v45
    %372 = vmatprep.subr.mxu0 0.0
    %373 = vmatpush1.msra.mxu0 %v44
    %374 = vmatprep.subr.mxu0 0.0
    %375 = vmatpush1.msra.mxu0 %v43
    %376 = vmatprep.subr.mxu0 0.0
    %377 = vmatpush1.msra.mxu0 %v42
    %378 = vmatprep.subr.mxu0 0.0
    %379 = vmatpush1.msra.mxu0 %v41
    %380 = vmatprep.subr.mxu0 0.0
    %381 = vmatpush1.msra.mxu0 %v40
    %382 = vmatprep.subr.mxu0 0.0
    %383 = vmatpush1.msra.mxu0 %v39
    %384 = vmatprep.subr.mxu0 0.0
    %385 = vmatpush2.msra.mxu0 0.0
    %386 = vmatprep.subr.mxu0 0.0
    %387 = vmatpush2.msra.mxu0 0.0
    %388 = vmatprep.subr.mxu0 0.0
    %389 = vmatpush2.msra.mxu0 0.0
    %390 = vmatprep.subr.mxu0 0.0
    %391 = vmatpush2.msra.mxu0 0.0
    %392 = vmatprep.subr.mxu0 0.0
    %393 = vmatpush2.msra.mxu0 0.0
    %394 = vmatprep.subr.mxu0 0.0
    %395 = vmatpush2.msra.mxu0 0.0
    %396 = vmatprep.subr.mxu0 0.0
    %397 = vmatpush2.msra.mxu0 0.0
    %398 = vmatprep.subr.mxu0 0.0
    %399 = vmatpush2.msra.mxu0 0.0
    %400 = vmatprep.subr.mxu0 0.0
    %401 = vmatpush2.msra.mxu0 0.0
    %402 = vmatprep.subr.mxu0 0.0
    %403 = vmatpush2.msra.mxu0 0.0
    %404 = vmatprep.subr.mxu0 0.0
    %405 = vmatpush2.msra.mxu0 0.0
    %406 = vmatprep.subr.mxu0 0.0
    %407 = vmatpush2.msra.mxu0 0.0
    %408 = vmatprep.subr.mxu0 0.0
    %409 = vmatpush2.msra.mxu0 0.0
    %410 = vmatprep.subr.mxu0 0.0
    %411 = vmatpush2.msra.mxu0 0.0
    %412 = vmatprep.subr.mxu0 0.0
    %413 = vmatpush2.msra.mxu0 0.0
    %414 = vmatprep.subr.mxu0 0.0
    %415 = vmatpush2.msra.mxu0 0.0
    %416 = vmatprep.mubr.f32.mxu0 0.0
    %417 = vmatmul.mubr.f32.gmra.mxu0 %v346
    %v418 = vpop.f32.mrf.mxu0
    %v419 = vadd.f32 %v87, %v418
    %v420 = vpop.f32.mrf.mxu0
    %421 = vdwg.mxu0
    %v422 = vmax.f32 %v419, 0.0
    %v424 = vsel %vm201, %v422, 0
    %426 = vmatprep.subr.mxu0 0.0
    %427 = vmatpush1.msra.mxu0 0.0
    %428 = vmatprep.subr.mxu0 0.0
    %429 = vmatpush1.msra.mxu0 0.0
    %430 = vmatprep.subr.mxu0 0.0
    %431 = vmatpush1.msra.mxu0 0.0
    %432 = vmatprep.subr.mxu0 0.0
    %433 = vmatpush1.msra.mxu0 0.0
    %434 = vmatprep.subr.mxu0 0.0
    %435 = vmatpush1.msra.mxu0 0.0
    %436 = vmatprep.subr.mxu0 0.0
    %437 = vmatpush1.msra.mxu0 0.0
    %438 = vmatprep.subr.mxu0 0.0
    %439 = vmatpush1.msra.mxu0 0.0
    %440 = vmatprep.subr.mxu0 0.0
    %441 = vmatpush1.msra.mxu0 0.0
    %442 = vmatprep.subr.mxu0 0.0
    %443 = vmatpush1.msra.mxu0 0.0
    %444 = vmatprep.subr.mxu0 0.0
    %445 = vmatpush1.msra.mxu0 0.0
    %446 = vmatprep.subr.mxu0 0.0
    %447 = vmatpush1.msra.mxu0 0.0
    %448 = vmatprep.subr.mxu0 0.0
    %449 = vmatpush1.msra.mxu0 0.0
    %450 = vmatprep.subr.mxu0 0.0
    %451 = vmatpush1.msra.mxu0 %v59
    %452 = vmatprep.subr.mxu0 0.0
    %453 = vmatpush1.msra.mxu0 %v58
    %454 = vmatprep.subr.mxu0 0.0
    %455 = vmatpush1.msra.mxu0 %v57
    %456 = vmatprep.subr.mxu0 0.0
    %457 = vmatpush1.msra.mxu0 %v56
    %458 = vmatprep.subr.mxu0 0.0
    %459 = vmatpush2.msra.mxu0 0.0
    %460 = vmatprep.subr.mxu0 0.0
    %461 = vmatpush2.msra.mxu0 0.0
    %462 = vmatprep.subr.mxu0 0.0
    %463 = vmatpush2.msra.mxu0 0.0
    %464 = vmatprep.subr.mxu0 0.0
    %465 = vmatpush2.msra.mxu0 0.0
    %466 = vmatprep.subr.mxu0 0.0
    %467 = vmatpush2.msra.mxu0 0.0
    %468 = vmatprep.subr.mxu0 0.0
    %469 = vmatpush2.msra.mxu0 0.0
    %470 = vmatprep.subr.mxu0 0.0
    %471 = vmatpush2.msra.mxu0 0.0
    %472 = vmatprep.subr.mxu0 0.0
    %473 = vmatpush2.msra.mxu0 0.0
    %474 = vmatprep.subr.mxu0 0.0
    %475 = vmatpush2.msra.mxu0 0.0
    %476 = vmatprep.subr.mxu0 0.0
    %477 = vmatpush2.msra.mxu0 0.0
    %478 = vmatprep.subr.mxu0 0.0
    %479 = vmatpush2.msra.mxu0 0.0
    %480 = vmatprep.subr.mxu0 0.0
    %481 = vmatpush2.msra.mxu0 0.0
    %482 = vmatprep.subr.mxu0 0.0
    %483 = vmatpush2.msra.mxu0 0.0
    %484 = vmatprep.subr.mxu0 0.0
    %485 = vmatpush2.msra.mxu0 0.0
    %486 = vmatprep.subr.mxu0 0.0
    %487 = vmatpush2.msra.mxu0 0.0
    %488 = vmatprep.subr.mxu0 0.0
    %489 = vmatpush2.msra.mxu0 0.0
    %490 = vmatprep.mubr.f32.mxu0 0.0
    %491 = vmatmul.mubr.f32.gmra.mxu0 %v424
    %v492 = vpop.f32.mrf.mxu0
    %v493 = vadd.f32 %v91, %v492
    %v494 = vpop.f32.mrf.mxu0
    %495 = vdwg.mxu0
    %v496 = vmax.f32 %v493, 0.0
    %v498 = vsel %vm201, %v496, 0
    %500 = vmatprep.subr.mxu0 0.0
    %501 = vmatpush1.msra.mxu0 0.0
    %502 = vmatprep.subr.mxu0 0.0
    %503 = vmatpush1.msra.mxu0 0.0
    %504 = vmatprep.subr.mxu0 0.0
    %505 = vmatpush1.msra.mxu0 0.0
    %506 = vmatprep.subr.mxu0 0.0
    %507 = vmatpush1.msra.mxu0 0.0
    %508 = vmatprep.subr.mxu0 0.0
    %509 = vmatpush1.msra.mxu0 0.0
    %510 = vmatprep.subr.mxu0 0.0
    %511 = vmatpush1.msra.mxu0 0.0
    %512 = vmatprep.subr.mxu0 0.0
    %513 = vmatpush1.msra.mxu0 0.0
    %514 = vmatprep.subr.mxu0 0.0
    %515 = vmatpush1.msra.mxu0 0.0
    %516 = vmatprep.subr.mxu0 0.0
    %517 = vmatpush1.msra.mxu0 0.0
    %518 = vmatprep.subr.mxu0 0.0
    %519 = vmatpush1.msra.mxu0 0.0
    %520 = vmatprep.subr.mxu0 0.0
    %521 = vmatpush1.msra.mxu0 0.0
    %522 = vmatprep.subr.mxu0 0.0
    %523 = vmatpush1.msra.mxu0 0.0
    %524 = vmatprep.subr.mxu0 %v79
    %525 = vmatpush1.msra.mxu0 %v78
    %526 = vmatprep.subr.mxu0 %v75
    %527 = vmatpush1.msra.mxu0 %v74
    %528 = vmatprep.subr.mxu0 %v71
    %529 = vmatpush1.msra.mxu0 %v70
    %530 = vmatprep.subr.mxu0 %v67
    %531 = vmatpush1.msra.mxu0 %v66
    %532 = vmatprep.subr.mxu0 0.0
    %533 = vmatpush2.msra.mxu0 0.0
    %534 = vmatprep.subr.mxu0 0.0
    %535 = vmatpush2.msra.mxu0 0.0
    %536 = vmatprep.subr.mxu0 0.0
    %537 = vmatpush2.msra.mxu0 0.0
    %538 = vmatprep.subr.mxu0 0.0
    %539 = vmatpush2.msra.mxu0 0.0
    %540 = vmatprep.subr.mxu0 0.0
    %541 = vmatpush2.msra.mxu0 0.0
    %542 = vmatprep.subr.mxu0 0.0
    %543 = vmatpush2.msra.mxu0 0.0
    %544 = vmatprep.subr.mxu0 0.0
    %545 = vmatpush2.msra.mxu0 0.0
    %546 = vmatprep.subr.mxu0 0.0
    %547 = vmatpush2.msra.mxu0 0.0
    %548 = vmatprep.subr.mxu0 0.0
    %549 = vmatpush2.msra.mxu0 0.0
    %550 = vmatprep.subr.mxu0 0.0
    %551 = vmatpush2.msra.mxu0 0.0
    %552 = vmatprep.subr.mxu0 0.0
    %553 = vmatpush2.msra.mxu0 0.0
    %554 = vmatprep.subr.mxu0 0.0
    %555 = vmatpush2.msra.mxu0 0.0
    %556 = vmatprep.subr.mxu0 0.0
    %557 = vmatpush2.msra.mxu0 0.0
    %558 = vmatprep.subr.mxu0 0.0
    %559 = vmatpush2.msra.mxu0 0.0
    %560 = vmatprep.subr.mxu0 0.0
    %561 = vmatpush2.msra.mxu0 0.0
    %562 = vmatprep.subr.mxu0 0.0
    %563 = vmatpush2.msra.mxu0 0.0
    %564 = vmatprep.mubr.f32.mxu0 0.0
    %565 = vmatmul.mubr.f32.gmra.mxu0 %v498
    %v566 = vpop.f32.mrf.mxu0
    %v567 = vadd.f32 %v96, %v566
    %v568 = vpop.f32.mrf.mxu0
    %v569 = vadd.f32 %v100, %v568
    %570 = vdwg.mxu0
    %571 = vmatprep.subr.mxu0 0.0
    %572 = vmatpush1.msra.mxu0 0.0
    %573 = vmatprep.subr.mxu0 0.0
    %574 = vmatpush1.msra.mxu0 0.0
    %575 = vmatprep.subr.mxu0 0.0
    %576 = vmatpush1.msra.mxu0 0.0
    %577 = vmatprep.subr.mxu0 0.0
    %578 = vmatpush1.msra.mxu0 0.0
    %579 = vmatprep.subr.mxu0 0.0
    %580 = vmatpush1.msra.mxu0 0.0
    %581 = vmatprep.subr.mxu0 0.0
    %582 = vmatpush1.msra.mxu0 0.0
    %583 = vmatprep.subr.mxu0 0.0
    %584 = vmatpush1.msra.mxu0 0.0
    %585 = vmatprep.subr.mxu0 0.0
    %586 = vmatpush1.msra.mxu0 0.0
    %587 = vmatprep.subr.mxu0 0.0
    %588 = vmatpush1.msra.mxu0 0.0
    %589 = vmatprep.subr.mxu0 0.0
    %590 = vmatpush1.msra.mxu0 0.0
    %591 = vmatprep.subr.mxu0 0.0
    %592 = vmatpush1.msra.mxu0 0.0
    %593 = vmatprep.subr.mxu0 0.0
    %594 = vmatpush1.msra.mxu0 0.0
    %595 = vmatprep.subr.mxu0 %v81
    %596 = vmatpush1.msra.mxu0 %v80
    %597 = vmatprep.subr.mxu0 %v77
    %598 = vmatpush1.msra.mxu0 %v76
    %599 = vmatprep.subr.mxu0 %v73
    %600 = vmatpush1.msra.mxu0 %v72
    %601 = vmatprep.subr.mxu0 %v69
    %602 = vmatpush1.msra.mxu0 %v68
    %603 = vmatprep.subr.mxu0 0.0
    %604 = vmatpush2.msra.mxu0 0.0
    %605 = vmatprep.subr.mxu0 0.0
    %606 = vmatpush2.msra.mxu0 0.0
    %607 = vmatprep.subr.mxu0 0.0
    %608 = vmatpush2.msra.mxu0 0.0
    %609 = vmatprep.subr.mxu0 0.0
    %610 = vmatpush2.msra.mxu0 0.0
    %611 = vmatprep.subr.mxu0 0.0
    %612 = vmatpush2.msra.mxu0 0.0
    %613 = vmatprep.subr.mxu0 0.0
    %614 = vmatpush2.msra.mxu0 0.0
    %615 = vmatprep.subr.mxu0 0.0
    %616 = vmatpush2.msra.mxu0 0.0
    %617 = vmatprep.subr.mxu0 0.0
    %618 = vmatpush2.msra.mxu0 0.0
    %619 = vmatprep.subr.mxu0 0.0
    %620 = vmatpush2.msra.mxu0 0.0
    %621 = vmatprep.subr.mxu0 0.0
    %622 = vmatpush2.msra.mxu0 0.0
    %623 = vmatprep.subr.mxu0 0.0
    %624 = vmatpush2.msra.mxu0 0.0
    %625 = vmatprep.subr.mxu0 0.0
    %626 = vmatpush2.msra.mxu0 0.0
    %627 = vmatprep.subr.mxu0 0.0
    %628 = vmatpush2.msra.mxu0 0.0
    %629 = vmatprep.subr.mxu0 0.0
    %630 = vmatpush2.msra.mxu0 0.0
    %631 = vmatprep.subr.mxu0 0.0
    %632 = vmatpush2.msra.mxu0 0.0
    %633 = vmatprep.subr.mxu0 0.0
    %634 = vmatpush2.msra.mxu0 0.0
    %635 = vmatprep.mubr.f32.mxu0 0.0
    %636 = vmatmul.mubr.f32.gmra.mxu0 %v498
    %v637 = vpop.f32.mrf.mxu0
    %v638 = vadd.f32 %v104, %v637
    %v639 = vpop.f32.mrf.mxu0
    %v640 = vadd.f32 %v108, %v639
    %641 = vdwg.mxu0
    %v642 = vtanh.pop %v567
    %v643 = vtanh.pop %v569
    %v644 = vtanh.pop %v638
    %v645 = vtanh.pop %v640
    %v647 = vcombine.high %v350, %v350
    %v649 = vunpack.c.l.s4 1983009808
    %v650 = vunpack.c.0.s8 %v649
    %v651 = vlaneseq
    %v652 = vshrl.u32 %v651, 7
    %v653 = vsub.s32 %v650, %v652
    %v654 = vrot.slane %v350, %v653
    %v656 = vunpack.c.l.s4 1983009808
    %v657 = vunpack.c.0.s8 %v656
    %v658 = vlaneseq
    %v659 = vshrl.u32 %v658, 7
    %v660 = vsub.s32 %v657, %v659
    %v661 = vrot.slane %v647, %v660
    %v662 = vcombine.high %v654, %v654
    %v663 = vcombine.high %v661, %v661
    %v668 = vmul.f32 %v642, %v654
    %v669 = vmul.f32 %v643, %v662
    %v670 = vmul.f32 %v644, %v661
    %v671 = vmul.f32 %v645, %v663
    %v672 = vmul.f32 %v346, -0.001
    %v673 = vmul.f32 %v672, %v351
    %v674 = vadd.f32 %v673, %v668
    %v675 = vadd.f32 %v674, %v669
    %v676 = vadd.f32 %v675, %v670
    %v677 = vadd.f32 %v676, %v671
    %v678 = vmul.f32 %v677, 0.33333334
    %v679 = vadd.f32 %v346, %v678
    %680 = vmatprep.subr.mxu0 0.0
    %681 = vmatpush1.msra.mxu0 %v54
    %682 = vmatprep.subr.mxu0 0.0
    %683 = vmatpush1.msra.mxu0 %v53
    %684 = vmatprep.subr.mxu0 0.0
    %685 = vmatpush1.msra.mxu0 %v52
    %686 = vmatprep.subr.mxu0 0.0
    %687 = vmatpush1.msra.mxu0 %v51
    %688 = vmatprep.subr.mxu0 0.0
    %689 = vmatpush1.msra.mxu0 %v50
    %690 = vmatprep.subr.mxu0 0.0
    %691 = vmatpush1.msra.mxu0 %v49
    %692 = vmatprep.subr.mxu0 0.0
    %693 = vmatpush1.msra.mxu0 %v48
    %694 = vmatprep.subr.mxu0 0.0
    %695 = vmatpush1.msra.mxu0 %v47
    %696 = vmatprep.subr.mxu0 0.0
    %697 = vmatpush1.msra.mxu0 %v46
    %698 = vmatprep.subr.mxu0 0.0
    %699 = vmatpush1.msra.mxu0 %v45
    %700 = vmatprep.subr.mxu0 0.0
    %701 = vmatpush1.msra.mxu0 %v44
    %702 = vmatprep.subr.mxu0 0.0
    %703 = vmatpush1.msra.mxu0 %v43
    %704 = vmatprep.subr.mxu0 0.0
    %705 = vmatpush1.msra.mxu0 %v42
    %706 = vmatprep.subr.mxu0 0.0
    %707 = vmatpush1.msra.mxu0 %v41
    %708 = vmatprep.subr.mxu0 0.0
    %709 = vmatpush1.msra.mxu0 %v40
    %710 = vmatprep.subr.mxu0 0.0
    %711 = vmatpush1.msra.mxu0 %v39
    %712 = vmatprep.subr.mxu0 0.0
    %713 = vmatpush2.msra.mxu0 0.0
    %714 = vmatprep.subr.mxu0 0.0
    %715 = vmatpush2.msra.mxu0 0.0
    %716 = vmatprep.subr.mxu0 0.0
    %717 = vmatpush2.msra.mxu0 0.0
    %718 = vmatprep.subr.mxu0 0.0
    %719 = vmatpush2.msra.mxu0 0.0
    %720 = vmatprep.subr.mxu0 0.0
    %721 = vmatpush2.msra.mxu0 0.0
    %722 = vmatprep.subr.mxu0 0.0
    %723 = vmatpush2.msra.mxu0 0.0
    %724 = vmatprep.subr.mxu0 0.0
    %725 = vmatpush2.msra.mxu0 0.0
    %726 = vmatprep.subr.mxu0 0.0
    %727 = vmatpush2.msra.mxu0 0.0
    %728 = vmatprep.subr.mxu0 0.0
    %729 = vmatpush2.msra.mxu0 0.0
    %730 = vmatprep.subr.mxu0 0.0
    %731 = vmatpush2.msra.mxu0 0.0
    %732 = vmatprep.subr.mxu0 0.0
    %733 = vmatpush2.msra.mxu0 0.0
    %734 = vmatprep.subr.mxu0 0.0
    %735 = vmatpush2.msra.mxu0 0.0
    %736 = vmatprep.subr.mxu0 0.0
    %737 = vmatpush2.msra.mxu0 0.0
    %738 = vmatprep.subr.mxu0 0.0
    %739 = vmatpush2.msra.mxu0 0.0
    %740 = vmatprep.subr.mxu0 0.0
    %741 = vmatpush2.msra.mxu0 0.0
    %742 = vmatprep.subr.mxu0 0.0
    %743 = vmatpush2.msra.mxu0 0.0
    %744 = vmatprep.mubr.f32.mxu0 0.0
    %745 = vmatmul.mubr.f32.gmra.mxu0 %v679
    %v746 = vpop.f32.mrf.mxu0
    %v747 = vadd.f32 %v87, %v746
    %v748 = vpop.f32.mrf.mxu0
    %749 = vdwg.mxu0
    %v750 = vmax.f32 %v747, 0.0
    %v752 = vsel %vm201, %v750, 0
    %754 = vmatprep.subr.mxu0 0.0
    %755 = vmatpush1.msra.mxu0 0.0
    %756 = vmatprep.subr.mxu0 0.0
    %757 = vmatpush1.msra.mxu0 0.0
    %758 = vmatprep.subr.mxu0 0.0
    %759 = vmatpush1.msra.mxu0 0.0
    %760 = vmatprep.subr.mxu0 0.0
    %761 = vmatpush1.msra.mxu0 0.0
    %762 = vmatprep.subr.mxu0 0.0
    %763 = vmatpush1.msra.mxu0 0.0
    %764 = vmatprep.subr.mxu0 0.0
    %765 = vmatpush1.msra.mxu0 0.0
    %766 = vmatprep.subr.mxu0 0.0
    %767 = vmatpush1.msra.mxu0 0.0
    %768 = vmatprep.subr.mxu0 0.0
    %769 = vmatpush1.msra.mxu0 0.0
    %770 = vmatprep.subr.mxu0 0.0
    %771 = vmatpush1.msra.mxu0 0.0
    %772 = vmatprep.subr.mxu0 0.0
    %773 = vmatpush1.msra.mxu0 0.0
    %774 = vmatprep.subr.mxu0 0.0
    %775 = vmatpush1.msra.mxu0 0.0
    %776 = vmatprep.subr.mxu0 0.0
    %777 = vmatpush1.msra.mxu0 0.0
    %778 = vmatprep.subr.mxu0 0.0
    %779 = vmatpush1.msra.mxu0 %v59
    %780 = vmatprep.subr.mxu0 0.0
    %781 = vmatpush1.msra.mxu0 %v58
    %782 = vmatprep.subr.mxu0 0.0
    %783 = vmatpush1.msra.mxu0 %v57
    %784 = vmatprep.subr.mxu0 0.0
    %785 = vmatpush1.msra.mxu0 %v56
    %786 = vmatprep.subr.mxu0 0.0
    %787 = vmatpush2.msra.mxu0 0.0
    %788 = vmatprep.subr.mxu0 0.0
    %789 = vmatpush2.msra.mxu0 0.0
    %790 = vmatprep.subr.mxu0 0.0
    %791 = vmatpush2.msra.mxu0 0.0
    %792 = vmatprep.subr.mxu0 0.0
    %793 = vmatpush2.msra.mxu0 0.0
    %794 = vmatprep.subr.mxu0 0.0
    %795 = vmatpush2.msra.mxu0 0.0
    %796 = vmatprep.subr.mxu0 0.0
    %797 = vmatpush2.msra.mxu0 0.0
    %798 = vmatprep.subr.mxu0 0.0
    %799 = vmatpush2.msra.mxu0 0.0
    %800 = vmatprep.subr.mxu0 0.0
    %801 = vmatpush2.msra.mxu0 0.0
    %802 = vmatprep.subr.mxu0 0.0
    %803 = vmatpush2.msra.mxu0 0.0
    %804 = vmatprep.subr.mxu0 0.0
    %805 = vmatpush2.msra.mxu0 0.0
    %806 = vmatprep.subr.mxu0 0.0
    %807 = vmatpush2.msra.mxu0 0.0
    %808 = vmatprep.subr.mxu0 0.0
    %809 = vmatpush2.msra.mxu0 0.0
    %810 = vmatprep.subr.mxu0 0.0
    %811 = vmatpush2.msra.mxu0 0.0
    %812 = vmatprep.subr.mxu0 0.0
    %813 = vmatpush2.msra.mxu0 0.0
    %814 = vmatprep.subr.mxu0 0.0
    %815 = vmatpush2.msra.mxu0 0.0
    %816 = vmatprep.subr.mxu0 0.0
    %817 = vmatpush2.msra.mxu0 0.0
    %818 = vmatprep.mubr.f32.mxu0 0.0
    %819 = vmatmul.mubr.f32.gmra.mxu0 %v752
    %v820 = vpop.f32.mrf.mxu0
    %v821 = vadd.f32 %v91, %v820
    %v822 = vpop.f32.mrf.mxu0
    %823 = vdwg.mxu0
    %v824 = vmax.f32 %v821, 0.0
    %v826 = vsel %vm201, %v824, 0
    %828 = vmatprep.subr.mxu0 0.0
    %829 = vmatpush1.msra.mxu0 0.0
    %830 = vmatprep.subr.mxu0 0.0
    %831 = vmatpush1.msra.mxu0 0.0
    %832 = vmatprep.subr.mxu0 0.0
    %833 = vmatpush1.msra.mxu0 0.0
    %834 = vmatprep.subr.mxu0 0.0
    %835 = vmatpush1.msra.mxu0 0.0
    %836 = vmatprep.subr.mxu0 0.0
    %837 = vmatpush1.msra.mxu0 0.0
    %838 = vmatprep.subr.mxu0 0.0
    %839 = vmatpush1.msra.mxu0 0.0
    %840 = vmatprep.subr.mxu0 0.0
    %841 = vmatpush1.msra.mxu0 0.0
    %842 = vmatprep.subr.mxu0 0.0
    %843 = vmatpush1.msra.mxu0 0.0
    %844 = vmatprep.subr.mxu0 0.0
    %845 = vmatpush1.msra.mxu0 0.0
    %846 = vmatprep.subr.mxu0 0.0
    %847 = vmatpush1.msra.mxu0 0.0
    %848 = vmatprep.subr.mxu0 0.0
    %849 = vmatpush1.msra.mxu0 0.0
    %850 = vmatprep.subr.mxu0 0.0
    %851 = vmatpush1.msra.mxu0 0.0
    %852 = vmatprep.subr.mxu0 %v79
    %853 = vmatpush1.msra.mxu0 %v78
    %854 = vmatprep.subr.mxu0 %v75
    %855 = vmatpush1.msra.mxu0 %v74
    %856 = vmatprep.subr.mxu0 %v71
    %857 = vmatpush1.msra.mxu0 %v70
    %858 = vmatprep.subr.mxu0 %v67
    %859 = vmatpush1.msra.mxu0 %v66
    %860 = vmatprep.subr.mxu0 0.0
    %861 = vmatpush2.msra.mxu0 0.0
    %862 = vmatprep.subr.mxu0 0.0
    %863 = vmatpush2.msra.mxu0 0.0
    %864 = vmatprep.subr.mxu0 0.0
    %865 = vmatpush2.msra.mxu0 0.0
    %866 = vmatprep.subr.mxu0 0.0
    %867 = vmatpush2.msra.mxu0 0.0
    %868 = vmatprep.subr.mxu0 0.0
    %869 = vmatpush2.msra.mxu0 0.0
    %870 = vmatprep.subr.mxu0 0.0
    %871 = vmatpush2.msra.mxu0 0.0
    %872 = vmatprep.subr.mxu0 0.0
    %873 = vmatpush2.msra.mxu0 0.0
    %874 = vmatprep.subr.mxu0 0.0
    %875 = vmatpush2.msra.mxu0 0.0
    %876 = vmatprep.subr.mxu0 0.0
    %877 = vmatpush2.msra.mxu0 0.0
    %878 = vmatprep.subr.mxu0 0.0
    %879 = vmatpush2.msra.mxu0 0.0
    %880 = vmatprep.subr.mxu0 0.0
    %881 = vmatpush2.msra.mxu0 0.0
    %882 = vmatprep.subr.mxu0 0.0
    %883 = vmatpush2.msra.mxu0 0.0
    %884 = vmatprep.subr.mxu0 0.0
    %885 = vmatpush2.msra.mxu0 0.0
    %886 = vmatprep.subr.mxu0 0.0
    %887 = vmatpush2.msra.mxu0 0.0
    %888 = vmatprep.subr.mxu0 0.0
    %889 = vmatpush2.msra.mxu0 0.0
    %890 = vmatprep.subr.mxu0 0.0
    %891 = vmatpush2.msra.mxu0 0.0
    %892 = vmatprep.mubr.f32.mxu0 0.0
    %893 = vmatmul.mubr.f32.gmra.mxu0 %v826
    %v894 = vpop.f32.mrf.mxu0
    %v895 = vadd.f32 %v96, %v894
    %v896 = vpop.f32.mrf.mxu0
    %v897 = vadd.f32 %v100, %v896
    %898 = vdwg.mxu0
    %899 = vmatprep.subr.mxu0 0.0
    %900 = vmatpush1.msra.mxu0 0.0
    %901 = vmatprep.subr.mxu0 0.0
    %902 = vmatpush1.msra.mxu0 0.0
    %903 = vmatprep.subr.mxu0 0.0
    %904 = vmatpush1.msra.mxu0 0.0
    %905 = vmatprep.subr.mxu0 0.0
    %906 = vmatpush1.msra.mxu0 0.0
    %907 = vmatprep.subr.mxu0 0.0
    %908 = vmatpush1.msra.mxu0 0.0
    %909 = vmatprep.subr.mxu0 0.0
    %910 = vmatpush1.msra.mxu0 0.0
    %911 = vmatprep.subr.mxu0 0.0
    %912 = vmatpush1.msra.mxu0 0.0
    %913 = vmatprep.subr.mxu0 0.0
    %914 = vmatpush1.msra.mxu0 0.0
    %915 = vmatprep.subr.mxu0 0.0
    %916 = vmatpush1.msra.mxu0 0.0
    %917 = vmatprep.subr.mxu0 0.0
    %918 = vmatpush1.msra.mxu0 0.0
    %919 = vmatprep.subr.mxu0 0.0
    %920 = vmatpush1.msra.mxu0 0.0
    %921 = vmatprep.subr.mxu0 0.0
    %922 = vmatpush1.msra.mxu0 0.0
    %923 = vmatprep.subr.mxu0 %v81
    %924 = vmatpush1.msra.mxu0 %v80
    %925 = vmatprep.subr.mxu0 %v77
    %926 = vmatpush1.msra.mxu0 %v76
    %927 = vmatprep.subr.mxu0 %v73
    %928 = vmatpush1.msra.mxu0 %v72
    %929 = vmatprep.subr.mxu0 %v69
    %930 = vmatpush1.msra.mxu0 %v68
    %931 = vmatprep.subr.mxu0 0.0
    %932 = vmatpush2.msra.mxu0 0.0
    %933 = vmatprep.subr.mxu0 0.0
    %934 = vmatpush2.msra.mxu0 0.0
    %935 = vmatprep.subr.mxu0 0.0
    %936 = vmatpush2.msra.mxu0 0.0
    %937 = vmatprep.subr.mxu0 0.0
    %938 = vmatpush2.msra.mxu0 0.0
    %939 = vmatprep.subr.mxu0 0.0
    %940 = vmatpush2.msra.mxu0 0.0
    %941 = vmatprep.subr.mxu0 0.0
    %942 = vmatpush2.msra.mxu0 0.0
    %943 = vmatprep.subr.mxu0 0.0
    %944 = vmatpush2.msra.mxu0 0.0
    %945 = vmatprep.subr.mxu0 0.0
    %946 = vmatpush2.msra.mxu0 0.0
    %947 = vmatprep.subr.mxu0 0.0
    %948 = vmatpush2.msra.mxu0 0.0
    %949 = vmatprep.subr.mxu0 0.0
    %950 = vmatpush2.msra.mxu0 0.0
    %951 = vmatprep.subr.mxu0 0.0
    %952 = vmatpush2.msra.mxu0 0.0
    %953 = vmatprep.subr.mxu0 0.0
    %954 = vmatpush2.msra.mxu0 0.0
    %955 = vmatprep.subr.mxu0 0.0
    %956 = vmatpush2.msra.mxu0 0.0
    %957 = vmatprep.subr.mxu0 0.0
    %958 = vmatpush2.msra.mxu0 0.0
    %959 = vmatprep.subr.mxu0 0.0
    %960 = vmatpush2.msra.mxu0 0.0
    %961 = vmatprep.subr.mxu0 0.0
    %962 = vmatpush2.msra.mxu0 0.0
    %963 = vmatprep.mubr.f32.mxu0 0.0
    %964 = vmatmul.mubr.f32.gmra.mxu0 %v826
    %v965 = vpop.f32.mrf.mxu0
    %v966 = vadd.f32 %v104, %v965
    %v967 = vpop.f32.mrf.mxu0
    %v968 = vadd.f32 %v108, %v967
    %969 = vdwg.mxu0
    %v970 = vtanh.pop %v895
    %v971 = vtanh.pop %v897
    %v972 = vtanh.pop %v966
    %v973 = vtanh.pop %v968
    %v974 = vmul.f32 %v970, %v654
    %v975 = vmul.f32 %v971, %v662
    %v976 = vmul.f32 %v972, %v661
    %v977 = vmul.f32 %v973, %v663
    %v978 = vmul.f32 %v679, -0.001
    %v979 = vmul.f32 %v978, %v351
    %v980 = vadd.f32 %v979, %v974
    %v981 = vadd.f32 %v980, %v975
    %v982 = vadd.f32 %v981, %v976
    %v983 = vadd.f32 %v982, %v977
    %v984 = vsub.f32 %v983, %v678
    %v985 = vadd.f32 %v346, %v984
    %986 = vmatprep.subr.mxu0 0.0
    %987 = vmatpush1.msra.mxu0 %v54
    %988 = vmatprep.subr.mxu0 0.0
    %989 = vmatpush1.msra.mxu0 %v53
    %990 = vmatprep.subr.mxu0 0.0
    %991 = vmatpush1.msra.mxu0 %v52
    %992 = vmatprep.subr.mxu0 0.0
    %993 = vmatpush1.msra.mxu0 %v51
    %994 = vmatprep.subr.mxu0 0.0
    %995 = vmatpush1.msra.mxu0 %v50
    %996 = vmatprep.subr.mxu0 0.0
    %997 = vmatpush1.msra.mxu0 %v49
    %998 = vmatprep.subr.mxu0 0.0
    %999 = vmatpush1.msra.mxu0 %v48
    %1000 = vmatprep.subr.mxu0 0.0
    %1001 = vmatpush1.msra.mxu0 %v47
    %1002 = vmatprep.subr.mxu0 0.0
    %1003 = vmatpush1.msra.mxu0 %v46
    %1004 = vmatprep.subr.mxu0 0.0
    %1005 = vmatpush1.msra.mxu0 %v45
    %1006 = vmatprep.subr.mxu0 0.0
    %1007 = vmatpush1.msra.mxu0 %v44
    %1008 = vmatprep.subr.mxu0 0.0
    %1009 = vmatpush1.msra.mxu0 %v43
    %1010 = vmatprep.subr.mxu0 0.0
    %1011 = vmatpush1.msra.mxu0 %v42
    %1012 = vmatprep.subr.mxu0 0.0
    %1013 = vmatpush1.msra.mxu0 %v41
    %1014 = vmatprep.subr.mxu0 0.0
    %1015 = vmatpush1.msra.mxu0 %v40
    %1016 = vmatprep.subr.mxu0 0.0
    %1017 = vmatpush1.msra.mxu0 %v39
    %1018 = vmatprep.subr.mxu0 0.0
    %1019 = vmatpush2.msra.mxu0 0.0
    %1020 = vmatprep.subr.mxu0 0.0
    %1021 = vmatpush2.msra.mxu0 0.0
    %1022 = vmatprep.subr.mxu0 0.0
    %1023 = vmatpush2.msra.mxu0 0.0
    %1024 = vmatprep.subr.mxu0 0.0
    %1025 = vmatpush2.msra.mxu0 0.0
    %1026 = vmatprep.subr.mxu0 0.0
    %1027 = vmatpush2.msra.mxu0 0.0
    %1028 = vmatprep.subr.mxu0 0.0
    %1029 = vmatpush2.msra.mxu0 0.0
    %1030 = vmatprep.subr.mxu0 0.0
    %1031 = vmatpush2.msra.mxu0 0.0
    %1032 = vmatprep.subr.mxu0 0.0
    %1033 = vmatpush2.msra.mxu0 0.0
    %1034 = vmatprep.subr.mxu0 0.0
    %1035 = vmatpush2.msra.mxu0 0.0
    %1036 = vmatprep.subr.mxu0 0.0
    %1037 = vmatpush2.msra.mxu0 0.0
    %1038 = vmatprep.subr.mxu0 0.0
    %1039 = vmatpush2.msra.mxu0 0.0
    %1040 = vmatprep.subr.mxu0 0.0
    %1041 = vmatpush2.msra.mxu0 0.0
    %1042 = vmatprep.subr.mxu0 0.0
    %1043 = vmatpush2.msra.mxu0 0.0
    %1044 = vmatprep.subr.mxu0 0.0
    %1045 = vmatpush2.msra.mxu0 0.0
    %1046 = vmatprep.subr.mxu0 0.0
    %1047 = vmatpush2.msra.mxu0 0.0
    %1048 = vmatprep.subr.mxu0 0.0
    %1049 = vmatpush2.msra.mxu0 0.0
    %1050 = vmatprep.mubr.f32.mxu0 0.0
    %1051 = vmatmul.mubr.f32.gmra.mxu0 %v985
    %v1052 = vpop.f32.mrf.mxu0
    %v1053 = vadd.f32 %v87, %v1052
    %v1054 = vpop.f32.mrf.mxu0
    %1055 = vdwg.mxu0
    %v1056 = vmax.f32 %v1053, 0.0
    %v1058 = vsel %vm201, %v1056, 0
    %1060 = vmatprep.subr.mxu0 0.0
    %1061 = vmatpush1.msra.mxu0 0.0
    %1062 = vmatprep.subr.mxu0 0.0
    %1063 = vmatpush1.msra.mxu0 0.0
    %1064 = vmatprep.subr.mxu0 0.0
    %1065 = vmatpush1.msra.mxu0 0.0
    %1066 = vmatprep.subr.mxu0 0.0
    %1067 = vmatpush1.msra.mxu0 0.0
    %1068 = vmatprep.subr.mxu0 0.0
    %1069 = vmatpush1.msra.mxu0 0.0
    %1070 = vmatprep.subr.mxu0 0.0
    %1071 = vmatpush1.msra.mxu0 0.0
    %1072 = vmatprep.subr.mxu0 0.0
    %1073 = vmatpush1.msra.mxu0 0.0
    %1074 = vmatprep.subr.mxu0 0.0
    %1075 = vmatpush1.msra.mxu0 0.0
    %1076 = vmatprep.subr.mxu0 0.0
    %1077 = vmatpush1.msra.mxu0 0.0
    %1078 = vmatprep.subr.mxu0 0.0
    %1079 = vmatpush1.msra.mxu0 0.0
    %1080 = vmatprep.subr.mxu0 0.0
    %1081 = vmatpush1.msra.mxu0 0.0
    %1082 = vmatprep.subr.mxu0 0.0
    %1083 = vmatpush1.msra.mxu0 0.0
    %1084 = vmatprep.subr.mxu0 0.0
    %1085 = vmatpush1.msra.mxu0 %v59
    %1086 = vmatprep.subr.mxu0 0.0
    %1087 = vmatpush1.msra.mxu0 %v58
    %1088 = vmatprep.subr.mxu0 0.0
    %1089 = vmatpush1.msra.mxu0 %v57
    %1090 = vmatprep.subr.mxu0 0.0
    %1091 = vmatpush1.msra.mxu0 %v56
    %1092 = vmatprep.subr.mxu0 0.0
    %1093 = vmatpush2.msra.mxu0 0.0
    %1094 = vmatprep.subr.mxu0 0.0
    %1095 = vmatpush2.msra.mxu0 0.0
    %1096 = vmatprep.subr.mxu0 0.0
    %1097 = vmatpush2.msra.mxu0 0.0
    %1098 = vmatprep.subr.mxu0 0.0
    %1099 = vmatpush2.msra.mxu0 0.0
    %1100 = vmatprep.subr.mxu0 0.0
    %1101 = vmatpush2.msra.mxu0 0.0
    %1102 = vmatprep.subr.mxu0 0.0
    %1103 = vmatpush2.msra.mxu0 0.0
    %1104 = vmatprep.subr.mxu0 0.0
    %1105 = vmatpush2.msra.mxu0 0.0
    %1106 = vmatprep.subr.mxu0 0.0
    %1107 = vmatpush2.msra.mxu0 0.0
    %1108 = vmatprep.subr.mxu0 0.0
    %1109 = vmatpush2.msra.mxu0 0.0
    %1110 = vmatprep.subr.mxu0 0.0
    %1111 = vmatpush2.msra.mxu0 0.0
    %1112 = vmatprep.subr.mxu0 0.0
    %1113 = vmatpush2.msra.mxu0 0.0
    %1114 = vmatprep.subr.mxu0 0.0
    %1115 = vmatpush2.msra.mxu0 0.0
    %1116 = vmatprep.subr.mxu0 0.0
    %1117 = vmatpush2.msra.mxu0 0.0
    %1118 = vmatprep.subr.mxu0 0.0
    %1119 = vmatpush2.msra.mxu0 0.0
    %1120 = vmatprep.subr.mxu0 0.0
    %1121 = vmatpush2.msra.mxu0 0.0
    %1122 = vmatprep.subr.mxu0 0.0
    %1123 = vmatpush2.msra.mxu0 0.0
    %1124 = vmatprep.mubr.f32.mxu0 0.0
    %1125 = vmatmul.mubr.f32.gmra.mxu0 %v1058
    %v1126 = vpop.f32.mrf.mxu0
    %v1127 = vadd.f32 %v91, %v1126
    %v1128 = vpop.f32.mrf.mxu0
    %1129 = vdwg.mxu0
    %v1130 = vmax.f32 %v1127, 0.0
    %v1132 = vsel %vm201, %v1130, 0
    %1134 = vmatprep.subr.mxu0 0.0
    %1135 = vmatpush1.msra.mxu0 0.0
    %1136 = vmatprep.subr.mxu0 0.0
    %1137 = vmatpush1.msra.mxu0 0.0
    %1138 = vmatprep.subr.mxu0 0.0
    %1139 = vmatpush1.msra.mxu0 0.0
    %1140 = vmatprep.subr.mxu0 0.0
    %1141 = vmatpush1.msra.mxu0 0.0
    %1142 = vmatprep.subr.mxu0 0.0
    %1143 = vmatpush1.msra.mxu0 0.0
    %1144 = vmatprep.subr.mxu0 0.0
    %1145 = vmatpush1.msra.mxu0 0.0
    %1146 = vmatprep.subr.mxu0 0.0
    %1147 = vmatpush1.msra.mxu0 0.0
    %1148 = vmatprep.subr.mxu0 0.0
    %1149 = vmatpush1.msra.mxu0 0.0
    %1150 = vmatprep.subr.mxu0 0.0
    %1151 = vmatpush1.msra.mxu0 0.0
    %1152 = vmatprep.subr.mxu0 0.0
    %1153 = vmatpush1.msra.mxu0 0.0
    %1154 = vmatprep.subr.mxu0 0.0
    %1155 = vmatpush1.msra.mxu0 0.0
    %1156 = vmatprep.subr.mxu0 0.0
    %1157 = vmatpush1.msra.mxu0 0.0
    %1158 = vmatprep.subr.mxu0 %v79
    %1159 = vmatpush1.msra.mxu0 %v78
    %1160 = vmatprep.subr.mxu0 %v75
    %1161 = vmatpush1.msra.mxu0 %v74
    %1162 = vmatprep.subr.mxu0 %v71
    %1163 = vmatpush1.msra.mxu0 %v70
    %1164 = vmatprep.subr.mxu0 %v67
    %1165 = vmatpush1.msra.mxu0 %v66
    %1166 = vmatprep.subr.mxu0 0.0
    %1167 = vmatpush2.msra.mxu0 0.0
    %1168 = vmatprep.subr.mxu0 0.0
    %1169 = vmatpush2.msra.mxu0 0.0
    %1170 = vmatprep.subr.mxu0 0.0
    %1171 = vmatpush2.msra.mxu0 0.0
    %1172 = vmatprep.subr.mxu0 0.0
    %1173 = vmatpush2.msra.mxu0 0.0
    %1174 = vmatprep.subr.mxu0 0.0
    %1175 = vmatpush2.msra.mxu0 0.0
    %1176 = vmatprep.subr.mxu0 0.0
    %1177 = vmatpush2.msra.mxu0 0.0
    %1178 = vmatprep.subr.mxu0 0.0
    %1179 = vmatpush2.msra.mxu0 0.0
    %1180 = vmatprep.subr.mxu0 0.0
    %1181 = vmatpush2.msra.mxu0 0.0
    %1182 = vmatprep.subr.mxu0 0.0
    %1183 = vmatpush2.msra.mxu0 0.0
    %1184 = vmatprep.subr.mxu0 0.0
    %1185 = vmatpush2.msra.mxu0 0.0
    %1186 = vmatprep.subr.mxu0 0.0
    %1187 = vmatpush2.msra.mxu0 0.0
    %1188 = vmatprep.subr.mxu0 0.0
    %1189 = vmatpush2.msra.mxu0 0.0
    %1190 = vmatprep.subr.mxu0 0.0
    %1191 = vmatpush2.msra.mxu0 0.0
    %1192 = vmatprep.subr.mxu0 0.0
    %1193 = vmatpush2.msra.mxu0 0.0
    %1194 = vmatprep.subr.mxu0 0.0
    %1195 = vmatpush2.msra.mxu0 0.0
    %1196 = vmatprep.subr.mxu0 0.0
    %1197 = vmatpush2.msra.mxu0 0.0
    %1198 = vmatprep.mubr.f32.mxu0 0.0
    %1199 = vmatmul.mubr.f32.gmra.mxu0 %v1132
    %v1200 = vpop.f32.mrf.mxu0
    %v1201 = vadd.f32 %v96, %v1200
    %v1202 = vpop.f32.mrf.mxu0
    %v1203 = vadd.f32 %v100, %v1202
    %1204 = vdwg.mxu0
    %1205 = vmatprep.subr.mxu0 0.0
    %1206 = vmatpush1.msra.mxu0 0.0
    %1207 = vmatprep.subr.mxu0 0.0
    %1208 = vmatpush1.msra.mxu0 0.0
    %1209 = vmatprep.subr.mxu0 0.0
    %1210 = vmatpush1.msra.mxu0 0.0
    %1211 = vmatprep.subr.mxu0 0.0
    %1212 = vmatpush1.msra.mxu0 0.0
    %1213 = vmatprep.subr.mxu0 0.0
    %1214 = vmatpush1.msra.mxu0 0.0
    %1215 = vmatprep.subr.mxu0 0.0
    %1216 = vmatpush1.msra.mxu0 0.0
    %1217 = vmatprep.subr.mxu0 0.0
    %1218 = vmatpush1.msra.mxu0 0.0
    %1219 = vmatprep.subr.mxu0 0.0
    %1220 = vmatpush1.msra.mxu0 0.0
    %1221 = vmatprep.subr.mxu0 0.0
    %1222 = vmatpush1.msra.mxu0 0.0
    %1223 = vmatprep.subr.mxu0 0.0
    %1224 = vmatpush1.msra.mxu0 0.0
    %1225 = vmatprep.subr.mxu0 0.0
    %1226 = vmatpush1.msra.mxu0 0.0
    %1227 = vmatprep.subr.mxu0 0.0
    %1228 = vmatpush1.msra.mxu0 0.0
    %1229 = vmatprep.subr.mxu0 %v81
    %1230 = vmatpush1.msra.mxu0 %v80
    %1231 = vmatprep.subr.mxu0 %v77
    %1232 = vmatpush1.msra.mxu0 %v76
    %1233 = vmatprep.subr.mxu0 %v73
    %1234 = vmatpush1.msra.mxu0 %v72
    %1235 = vmatprep.subr.mxu0 %v69
    %1236 = vmatpush1.msra.mxu0 %v68
    %1237 = vmatprep.subr.mxu0 0.0
    %1238 = vmatpush2.msra.mxu0 0.0
    %1239 = vmatprep.subr.mxu0 0.0
    %1240 = vmatpush2.msra.mxu0 0.0
    %1241 = vmatprep.subr.mxu0 0.0
    %1242 = vmatpush2.msra.mxu0 0.0
    %1243 = vmatprep.subr.mxu0 0.0
    %1244 = vmatpush2.msra.mxu0 0.0
    %1245 = vmatprep.subr.mxu0 0.0
    %1246 = vmatpush2.msra.mxu0 0.0
    %1247 = vmatprep.subr.mxu0 0.0
    %1248 = vmatpush2.msra.mxu0 0.0
    %1249 = vmatprep.subr.mxu0 0.0
    %1250 = vmatpush2.msra.mxu0 0.0
    %1251 = vmatprep.subr.mxu0 0.0
    %1252 = vmatpush2.msra.mxu0 0.0
    %1253 = vmatprep.subr.mxu0 0.0
    %1254 = vmatpush2.msra.mxu0 0.0
    %1255 = vmatprep.subr.mxu0 0.0
    %1256 = vmatpush2.msra.mxu0 0.0
    %1257 = vmatprep.subr.mxu0 0.0
    %1258 = vmatpush2.msra.mxu0 0.0
    %1259 = vmatprep.subr.mxu0 0.0
    %1260 = vmatpush2.msra.mxu0 0.0
    %1261 = vmatprep.subr.mxu0 0.0
    %1262 = vmatpush2.msra.mxu0 0.0
    %1263 = vmatprep.subr.mxu0 0.0
    %1264 = vmatpush2.msra.mxu0 0.0
    %1265 = vmatprep.subr.mxu0 0.0
    %1266 = vmatpush2.msra.mxu0 0.0
    %1267 = vmatprep.subr.mxu0 0.0
    %1268 = vmatpush2.msra.mxu0 0.0
    %1269 = vmatprep.mubr.f32.mxu0 0.0
    %1270 = vmatmul.mubr.f32.gmra.mxu0 %v1132
    %v1271 = vpop.f32.mrf.mxu0
    %v1272 = vadd.f32 %v104, %v1271
    %v1273 = vpop.f32.mrf.mxu0
    %v1274 = vadd.f32 %v108, %v1273
    %1275 = vdwg.mxu0
    %v1276 = vtanh.pop %v1201
    %v1277 = vtanh.pop %v1203
    %v1278 = vtanh.pop %v1272
    %v1279 = vtanh.pop %v1274
    %v1280 = vmul.f32 %v1276, %v654
    %v1281 = vmul.f32 %v1277, %v662
    %v1282 = vmul.f32 %v1278, %v661
    %v1283 = vmul.f32 %v1279, %v663
    %v1284 = vmul.f32 %v985, -0.001
    %v1285 = vmul.f32 %v1284, %v351
    %v1286 = vadd.f32 %v1285, %v1280
    %v1287 = vadd.f32 %v1286, %v1281
    %v1288 = vadd.f32 %v1287, %v1282
    %v1289 = vadd.f32 %v1288, %v1283
    %v1290 = vsub.f32 %v677, %v983
    %v1291 = vadd.f32 %v1290, %v1289
    %v1292 = vadd.f32 %v346, %v1291
    %1293 = vmatprep.subr.mxu0 0.0
    %1294 = vmatpush1.msra.mxu0 %v54
    %1295 = vmatprep.subr.mxu0 0.0
    %1296 = vmatpush1.msra.mxu0 %v53
    %1297 = vmatprep.subr.mxu0 0.0
    %1298 = vmatpush1.msra.mxu0 %v52
    %1299 = vmatprep.subr.mxu0 0.0
    %1300 = vmatpush1.msra.mxu0 %v51
    %1301 = vmatprep.subr.mxu0 0.0
    %1302 = vmatpush1.msra.mxu0 %v50
    %1303 = vmatprep.subr.mxu0 0.0
    %1304 = vmatpush1.msra.mxu0 %v49
    %1305 = vmatprep.subr.mxu0 0.0
    %1306 = vmatpush1.msra.mxu0 %v48
    %1307 = vmatprep.subr.mxu0 0.0
    %1308 = vmatpush1.msra.mxu0 %v47
    %1309 = vmatprep.subr.mxu0 0.0
    %1310 = vmatpush1.msra.mxu0 %v46
    %1311 = vmatprep.subr.mxu0 0.0
    %1312 = vmatpush1.msra.mxu0 %v45
    %1313 = vmatprep.subr.mxu0 0.0
    %1314 = vmatpush1.msra.mxu0 %v44
    %1315 = vmatprep.subr.mxu0 0.0
    %1316 = vmatpush1.msra.mxu0 %v43
    %1317 = vmatprep.subr.mxu0 0.0
    %1318 = vmatpush1.msra.mxu0 %v42
    %1319 = vmatprep.subr.mxu0 0.0
    %1320 = vmatpush1.msra.mxu0 %v41
    %1321 = vmatprep.subr.mxu0 0.0
    %1322 = vmatpush1.msra.mxu0 %v40
    %1323 = vmatprep.subr.mxu0 0.0
    %1324 = vmatpush1.msra.mxu0 %v39
    %1325 = vmatprep.subr.mxu0 0.0
    %1326 = vmatpush2.msra.mxu0 0.0
    %1327 = vmatprep.subr.mxu0 0.0
    %1328 = vmatpush2.msra.mxu0 0.0
    %1329 = vmatprep.subr.mxu0 0.0
    %1330 = vmatpush2.msra.mxu0 0.0
    %1331 = vmatprep.subr.mxu0 0.0
    %1332 = vmatpush2.msra.mxu0 0.0
    %1333 = vmatprep.subr.mxu0 0.0
    %1334 = vmatpush2.msra.mxu0 0.0
    %1335 = vmatprep.subr.mxu0 0.0
    %1336 = vmatpush2.msra.mxu0 0.0
    %1337 = vmatprep.subr.mxu0 0.0
    %1338 = vmatpush2.msra.mxu0 0.0
    %1339 = vmatprep.subr.mxu0 0.0
    %1340 = vmatpush2.msra.mxu0 0.0
    %1341 = vmatprep.subr.mxu0 0.0
    %1342 = vmatpush2.msra.mxu0 0.0
    %1343 = vmatprep.subr.mxu0 0.0
    %1344 = vmatpush2.msra.mxu0 0.0
    %1345 = vmatprep.subr.mxu0 0.0
    %1346 = vmatpush2.msra.mxu0 0.0
    %1347 = vmatprep.subr.mxu0 0.0
    %1348 = vmatpush2.msra.mxu0 0.0
    %1349 = vmatprep.subr.mxu0 0.0
    %1350 = vmatpush2.msra.mxu0 0.0
    %1351 = vmatprep.subr.mxu0 0.0
    %1352 = vmatpush2.msra.mxu0 0.0
    %1353 = vmatprep.subr.mxu0 0.0
    %1354 = vmatpush2.msra.mxu0 0.0
    %1355 = vmatprep.subr.mxu0 0.0
    %1356 = vmatpush2.msra.mxu0 0.0
    %1357 = vmatprep.mubr.f32.mxu0 0.0
    %1358 = vmatmul.mubr.f32.gmra.mxu0 %v1292
    %v1359 = vpop.f32.mrf.mxu0
    %v1360 = vadd.f32 %v87, %v1359
    %v1361 = vpop.f32.mrf.mxu0
    %1362 = vdwg.mxu0
    %v1363 = vmax.f32 %v1360, 0.0
    %v1365 = vsel %vm201, %v1363, 0
    %1367 = vmatprep.subr.mxu0 0.0
    %1368 = vmatpush1.msra.mxu0 0.0
    %1369 = vmatprep.subr.mxu0 0.0
    %1370 = vmatpush1.msra.mxu0 0.0
    %1371 = vmatprep.subr.mxu0 0.0
    %1372 = vmatpush1.msra.mxu0 0.0
    %1373 = vmatprep.subr.mxu0 0.0
    %1374 = vmatpush1.msra.mxu0 0.0
    %1375 = vmatprep.subr.mxu0 0.0
    %1376 = vmatpush1.msra.mxu0 0.0
    %1377 = vmatprep.subr.mxu0 0.0
    %1378 = vmatpush1.msra.mxu0 0.0
    %1379 = vmatprep.subr.mxu0 0.0
    %1380 = vmatpush1.msra.mxu0 0.0
    %1381 = vmatprep.subr.mxu0 0.0
    %1382 = vmatpush1.msra.mxu0 0.0
    %1383 = vmatprep.subr.mxu0 0.0
    %1384 = vmatpush1.msra.mxu0 0.0
    %1385 = vmatprep.subr.mxu0 0.0
    %1386 = vmatpush1.msra.mxu0 0.0
    %1387 = vmatprep.subr.mxu0 0.0
    %1388 = vmatpush1.msra.mxu0 0.0
    %1389 = vmatprep.subr.mxu0 0.0
    %1390 = vmatpush1.msra.mxu0 0.0
    %1391 = vmatprep.subr.mxu0 0.0
    %1392 = vmatpush1.msra.mxu0 %v59
    %1393 = vmatprep.subr.mxu0 0.0
    %1394 = vmatpush1.msra.mxu0 %v58
    %1395 = vmatprep.subr.mxu0 0.0
    %1396 = vmatpush1.msra.mxu0 %v57
    %1397 = vmatprep.subr.mxu0 0.0
    %1398 = vmatpush1.msra.mxu0 %v56
    %1399 = vmatprep.subr.mxu0 0.0
    %1400 = vmatpush2.msra.mxu0 0.0
    %1401 = vmatprep.subr.mxu0 0.0
    %1402 = vmatpush2.msra.mxu0 0.0
    %1403 = vmatprep.subr.mxu0 0.0
    %1404 = vmatpush2.msra.mxu0 0.0
    %1405 = vmatprep.subr.mxu0 0.0
    %1406 = vmatpush2.msra.mxu0 0.0
    %1407 = vmatprep.subr.mxu0 0.0
    %1408 = vmatpush2.msra.mxu0 0.0
    %1409 = vmatprep.subr.mxu0 0.0
    %1410 = vmatpush2.msra.mxu0 0.0
    %1411 = vmatprep.subr.mxu0 0.0
    %1412 = vmatpush2.msra.mxu0 0.0
    %1413 = vmatprep.subr.mxu0 0.0
    %1414 = vmatpush2.msra.mxu0 0.0
    %1415 = vmatprep.subr.mxu0 0.0
    %1416 = vmatpush2.msra.mxu0 0.0
    %1417 = vmatprep.subr.mxu0 0.0
    %1418 = vmatpush2.msra.mxu0 0.0
    %1419 = vmatprep.subr.mxu0 0.0
    %1420 = vmatpush2.msra.mxu0 0.0
    %1421 = vmatprep.subr.mxu0 0.0
    %1422 = vmatpush2.msra.mxu0 0.0
    %1423 = vmatprep.subr.mxu0 0.0
    %1424 = vmatpush2.msra.mxu0 0.0
    %1425 = vmatprep.subr.mxu0 0.0
    %1426 = vmatpush2.msra.mxu0 0.0
    %1427 = vmatprep.subr.mxu0 0.0
    %1428 = vmatpush2.msra.mxu0 0.0
    %1429 = vmatprep.subr.mxu0 0.0
    %1430 = vmatpush2.msra.mxu0 0.0
    %1431 = vmatprep.mubr.f32.mxu0 0.0
    %1432 = vmatmul.mubr.f32.gmra.mxu0 %v1365
    %v1433 = vpop.f32.mrf.mxu0
    %v1434 = vadd.f32 %v91, %v1433
    %v1435 = vpop.f32.mrf.mxu0
    %1436 = vdwg.mxu0
    %v1437 = vmax.f32 %v1434, 0.0
    %v1439 = vsel %vm201, %v1437, 0
    %1441 = vmatprep.subr.mxu0 0.0
    %1442 = vmatpush1.msra.mxu0 0.0
    %1443 = vmatprep.subr.mxu0 0.0
    %1444 = vmatpush1.msra.mxu0 0.0
    %1445 = vmatprep.subr.mxu0 0.0
    %1446 = vmatpush1.msra.mxu0 0.0
    %1447 = vmatprep.subr.mxu0 0.0
    %1448 = vmatpush1.msra.mxu0 0.0
    %1449 = vmatprep.subr.mxu0 0.0
    %1450 = vmatpush1.msra.mxu0 0.0
    %1451 = vmatprep.subr.mxu0 0.0
    %1452 = vmatpush1.msra.mxu0 0.0
    %1453 = vmatprep.subr.mxu0 0.0
    %1454 = vmatpush1.msra.mxu0 0.0
    %1455 = vmatprep.subr.mxu0 0.0
    %1456 = vmatpush1.msra.mxu0 0.0
    %1457 = vmatprep.subr.mxu0 0.0
    %1458 = vmatpush1.msra.mxu0 0.0
    %1459 = vmatprep.subr.mxu0 0.0
    %1460 = vmatpush1.msra.mxu0 0.0
    %1461 = vmatprep.subr.mxu0 0.0
    %1462 = vmatpush1.msra.mxu0 0.0
    %1463 = vmatprep.subr.mxu0 0.0
    %1464 = vmatpush1.msra.mxu0 0.0
    %1465 = vmatprep.subr.mxu0 %v79
    %1466 = vmatpush1.msra.mxu0 %v78
    %1467 = vmatprep.subr.mxu0 %v75
    %1468 = vmatpush1.msra.mxu0 %v74
    %1469 = vmatprep.subr.mxu0 %v71
    %1470 = vmatpush1.msra.mxu0 %v70
    %1471 = vmatprep.subr.mxu0 %v67
    %1472 = vmatpush1.msra.mxu0 %v66
    %1473 = vmatprep.subr.mxu0 0.0
    %1474 = vmatpush2.msra.mxu0 0.0
    %1475 = vmatprep.subr.mxu0 0.0
    %1476 = vmatpush2.msra.mxu0 0.0
    %1477 = vmatprep.subr.mxu0 0.0
    %1478 = vmatpush2.msra.mxu0 0.0
    %1479 = vmatprep.subr.mxu0 0.0
    %1480 = vmatpush2.msra.mxu0 0.0
    %1481 = vmatprep.subr.mxu0 0.0
    %1482 = vmatpush2.msra.mxu0 0.0
    %1483 = vmatprep.subr.mxu0 0.0
    %1484 = vmatpush2.msra.mxu0 0.0
    %1485 = vmatprep.subr.mxu0 0.0
    %1486 = vmatpush2.msra.mxu0 0.0
    %1487 = vmatprep.subr.mxu0 0.0
    %1488 = vmatpush2.msra.mxu0 0.0
    %1489 = vmatprep.subr.mxu0 0.0
    %1490 = vmatpush2.msra.mxu0 0.0
    %1491 = vmatprep.subr.mxu0 0.0
    %1492 = vmatpush2.msra.mxu0 0.0
    %1493 = vmatprep.subr.mxu0 0.0
    %1494 = vmatpush2.msra.mxu0 0.0
    %1495 = vmatprep.subr.mxu0 0.0
    %1496 = vmatpush2.msra.mxu0 0.0
    %1497 = vmatprep.subr.mxu0 0.0
    %1498 = vmatpush2.msra.mxu0 0.0
    %1499 = vmatprep.subr.mxu0 0.0
    %1500 = vmatpush2.msra.mxu0 0.0
    %1501 = vmatprep.subr.mxu0 0.0
    %1502 = vmatpush2.msra.mxu0 0.0
    %1503 = vmatprep.subr.mxu0 0.0
    %1504 = vmatpush2.msra.mxu0 0.0
    %1505 = vmatprep.mubr.f32.mxu0 0.0
    %1506 = vmatmul.mubr.f32.gmra.mxu0 %v1439
    %v1507 = vpop.f32.mrf.mxu0
    %v1508 = vadd.f32 %v96, %v1507
    %v1509 = vpop.f32.mrf.mxu0
    %v1510 = vadd.f32 %v100, %v1509
    %1511 = vdwg.mxu0
    %1512 = vmatprep.subr.mxu0 0.0
    %1513 = vmatpush1.msra.mxu0 0.0
    %1514 = vmatprep.subr.mxu0 0.0
    %1515 = vmatpush1.msra.mxu0 0.0
    %1516 = vmatprep.subr.mxu0 0.0
    %1517 = vmatpush1.msra.mxu0 0.0
    %1518 = vmatprep.subr.mxu0 0.0
    %1519 = vmatpush1.msra.mxu0 0.0
    %1520 = vmatprep.subr.mxu0 0.0
    %1521 = vmatpush1.msra.mxu0 0.0
    %1522 = vmatprep.subr.mxu0 0.0
    %1523 = vmatpush1.msra.mxu0 0.0
    %1524 = vmatprep.subr.mxu0 0.0
    %1525 = vmatpush1.msra.mxu0 0.0
    %1526 = vmatprep.subr.mxu0 0.0
    %1527 = vmatpush1.msra.mxu0 0.0
    %1528 = vmatprep.subr.mxu0 0.0
    %1529 = vmatpush1.msra.mxu0 0.0
    %1530 = vmatprep.subr.mxu0 0.0
    %1531 = vmatpush1.msra.mxu0 0.0
    %1532 = vmatprep.subr.mxu0 0.0
    %1533 = vmatpush1.msra.mxu0 0.0
    %1534 = vmatprep.subr.mxu0 0.0
    %1535 = vmatpush1.msra.mxu0 0.0
    %1536 = vmatprep.subr.mxu0 %v81
    %1537 = vmatpush1.msra.mxu0 %v80
    %1538 = vmatprep.subr.mxu0 %v77
    %1539 = vmatpush1.msra.mxu0 %v76
    %1540 = vmatprep.subr.mxu0 %v73
    %1541 = vmatpush1.msra.mxu0 %v72
    %1542 = vmatprep.subr.mxu0 %v69
    %1543 = vmatpush1.msra.mxu0 %v68
    %1544 = vmatprep.subr.mxu0 0.0
    %1545 = vmatpush2.msra.mxu0 0.0
    %1546 = vmatprep.subr.mxu0 0.0
    %1547 = vmatpush2.msra.mxu0 0.0
    %1548 = vmatprep.subr.mxu0 0.0
    %1549 = vmatpush2.msra.mxu0 0.0
    %1550 = vmatprep.subr.mxu0 0.0
    %1551 = vmatpush2.msra.mxu0 0.0
    %1552 = vmatprep.subr.mxu0 0.0
    %1553 = vmatpush2.msra.mxu0 0.0
    %1554 = vmatprep.subr.mxu0 0.0
    %1555 = vmatpush2.msra.mxu0 0.0
    %1556 = vmatprep.subr.mxu0 0.0
    %1557 = vmatpush2.msra.mxu0 0.0
    %1558 = vmatprep.subr.mxu0 0.0
    %1559 = vmatpush2.msra.mxu0 0.0
    %1560 = vmatprep.subr.mxu0 0.0
    %1561 = vmatpush2.msra.mxu0 0.0
    %1562 = vmatprep.subr.mxu0 0.0
    %1563 = vmatpush2.msra.mxu0 0.0
    %1564 = vmatprep.subr.mxu0 0.0
    %1565 = vmatpush2.msra.mxu0 0.0
    %1566 = vmatprep.subr.mxu0 0.0
    %1567 = vmatpush2.msra.mxu0 0.0
    %1568 = vmatprep.subr.mxu0 0.0
    %1569 = vmatpush2.msra.mxu0 0.0
    %1570 = vmatprep.subr.mxu0 0.0
    %1571 = vmatpush2.msra.mxu0 0.0
    %1572 = vmatprep.subr.mxu0 0.0
    %1573 = vmatpush2.msra.mxu0 0.0
    %1574 = vmatprep.subr.mxu0 0.0
    %1575 = vmatpush2.msra.mxu0 0.0
    %1576 = vmatprep.mubr.f32.mxu0 0.0
    %1577 = vmatmul.mubr.f32.gmra.mxu0 %v1439
    %v1578 = vpop.f32.mrf.mxu0
    %v1579 = vadd.f32 %v104, %v1578
    %v1580 = vpop.f32.mrf.mxu0
    %v1581 = vadd.f32 %v108, %v1580
    %1582 = vdwg.mxu0
    %v1583 = vtanh.pop %v1508
    %v1584 = vtanh.pop %v1510
    %v1585 = vtanh.pop %v1579
    %v1586 = vtanh.pop %v1581
    %v1587 = vmul.f32 %v1583, %v654
    %v1588 = vmul.f32 %v1584, %v662
    %v1589 = vmul.f32 %v1585, %v661
    %v1590 = vmul.f32 %v1586, %v663
    %v1591 = vmul.f32 %v1292, -0.001
    %v1592 = vmul.f32 %v1591, %v351
    %v1593 = vadd.f32 %v1592, %v1587
    %v1594 = vadd.f32 %v1593, %v1588
    %v1595 = vadd.f32 %v1594, %v1589
    %v1596 = vadd.f32 %v1595, %v1590
    %v1597 = vadd.f32 %v983, %v1289
    %v1598 = vmul.f32 %v1597, 3.0
    %v1599 = vadd.f32 %v677, %v1598
    %v1600 = vadd.f32 %v1599, %v1596
    %v1601 = vmul.f32 %v1600, 0.125
    %v1602 = vadd.f32 %v346, %v1601
    %s1603 = scalar_lea.vmem [#allocation5], 2
    %1604 = vst [vmem:[%s1603] sm:$0x3] %v1602
    %s1605 = scalar_lea.vmem %s0, 10
    %v1606 = vld [vmem:[%s1605] sm:$0xff]
    %v1607 = vld [vmem:[%s1605 + $0x8] sm:$0x3]
    %1608 = vmatprep.subr.mxu0 0.0
    %1609 = vmatpush1.msra.mxu0 %v54
    %1610 = vmatprep.subr.mxu0 0.0
    %1611 = vmatpush1.msra.mxu0 %v53
    %1612 = vmatprep.subr.mxu0 0.0
    %1613 = vmatpush1.msra.mxu0 %v52
    %1614 = vmatprep.subr.mxu0 0.0
    %1615 = vmatpush1.msra.mxu0 %v51
    %1616 = vmatprep.subr.mxu0 0.0
    %1617 = vmatpush1.msra.mxu0 %v50
    %1618 = vmatprep.subr.mxu0 0.0
    %1619 = vmatpush1.msra.mxu0 %v49
    %1620 = vmatprep.subr.mxu0 0.0
    %1621 = vmatpush1.msra.mxu0 %v48
    %1622 = vmatprep.subr.mxu0 0.0
    %1623 = vmatpush1.msra.mxu0 %v47
    %1624 = vmatprep.subr.mxu0 0.0
    %1625 = vmatpush1.msra.mxu0 %v46
    %1626 = vmatprep.subr.mxu0 0.0
    %1627 = vmatpush1.msra.mxu0 %v45
    %1628 = vmatprep.subr.mxu0 0.0
    %1629 = vmatpush1.msra.mxu0 %v44
    %1630 = vmatprep.subr.mxu0 0.0
    %1631 = vmatpush1.msra.mxu0 %v43
    %1632 = vmatprep.subr.mxu0 0.0
    %1633 = vmatpush1.msra.mxu0 %v42
    %1634 = vmatprep.subr.mxu0 0.0
    %1635 = vmatpush1.msra.mxu0 %v41
    %1636 = vmatprep.subr.mxu0 0.0
    %1637 = vmatpush1.msra.mxu0 %v40
    %1638 = vmatprep.subr.mxu0 0.0
    %1639 = vmatpush1.msra.mxu0 %v39
    %1640 = vmatprep.subr.mxu0 0.0
    %1641 = vmatpush2.msra.mxu0 0.0
    %1642 = vmatprep.subr.mxu0 0.0
    %1643 = vmatpush2.msra.mxu0 0.0
    %1644 = vmatprep.subr.mxu0 0.0
    %1645 = vmatpush2.msra.mxu0 0.0
    %1646 = vmatprep.subr.mxu0 0.0
    %1647 = vmatpush2.msra.mxu0 0.0
    %1648 = vmatprep.subr.mxu0 0.0
    %1649 = vmatpush2.msra.mxu0 0.0
    %1650 = vmatprep.subr.mxu0 0.0
    %1651 = vmatpush2.msra.mxu0 0.0
    %1652 = vmatprep.subr.mxu0 0.0
    %1653 = vmatpush2.msra.mxu0 0.0
    %1654 = vmatprep.subr.mxu0 0.0
    %1655 = vmatpush2.msra.mxu0 0.0
    %1656 = vmatprep.subr.mxu0 0.0
    %1657 = vmatpush2.msra.mxu0 0.0
    %1658 = vmatprep.subr.mxu0 0.0
    %1659 = vmatpush2.msra.mxu0 0.0
    %1660 = vmatprep.subr.mxu0 0.0
    %1661 = vmatpush2.msra.mxu0 0.0
    %1662 = vmatprep.subr.mxu0 0.0
    %1663 = vmatpush2.msra.mxu0 0.0
    %1664 = vmatprep.subr.mxu0 0.0
    %1665 = vmatpush2.msra.mxu0 0.0
    %1666 = vmatprep.subr.mxu0 0.0
    %1667 = vmatpush2.msra.mxu0 0.0
    %1668 = vmatprep.subr.mxu0 0.0
    %1669 = vmatpush2.msra.mxu0 0.0
    %1670 = vmatprep.subr.mxu0 0.0
    %1671 = vmatpush2.msra.mxu0 0.0
    %1672 = vmatprep.mubr.f32.mxu0 0.0
    %1673 = vmatmul.mubr.f32.gmra.mxu0 %v1602
    %v1674 = vpop.f32.mrf.mxu0
    %v1675 = vadd.f32 %v87, %v1674
    %v1676 = vpop.f32.mrf.mxu0
    %1677 = vdwg.mxu0
    %v1678 = vmax.f32 %v1675, 0.0
    %v1680 = vsel %vm201, %v1678, 0
    %1682 = vmatprep.subr.mxu0 0.0
    %1683 = vmatpush1.msra.mxu0 0.0
    %1684 = vmatprep.subr.mxu0 0.0
    %1685 = vmatpush1.msra.mxu0 0.0
    %1686 = vmatprep.subr.mxu0 0.0
    %1687 = vmatpush1.msra.mxu0 0.0
    %1688 = vmatprep.subr.mxu0 0.0
    %1689 = vmatpush1.msra.mxu0 0.0
    %1690 = vmatprep.subr.mxu0 0.0
    %1691 = vmatpush1.msra.mxu0 0.0
    %1692 = vmatprep.subr.mxu0 0.0
    %1693 = vmatpush1.msra.mxu0 0.0
    %1694 = vmatprep.subr.mxu0 0.0
    %1695 = vmatpush1.msra.mxu0 0.0
    %1696 = vmatprep.subr.mxu0 0.0
    %1697 = vmatpush1.msra.mxu0 0.0
    %1698 = vmatprep.subr.mxu0 0.0
    %1699 = vmatpush1.msra.mxu0 0.0
    %1700 = vmatprep.subr.mxu0 0.0
    %1701 = vmatpush1.msra.mxu0 0.0
    %1702 = vmatprep.subr.mxu0 0.0
    %1703 = vmatpush1.msra.mxu0 0.0
    %1704 = vmatprep.subr.mxu0 0.0
    %1705 = vmatpush1.msra.mxu0 0.0
    %1706 = vmatprep.subr.mxu0 0.0
    %1707 = vmatpush1.msra.mxu0 %v59
    %1708 = vmatprep.subr.mxu0 0.0
    %1709 = vmatpush1.msra.mxu0 %v58
    %1710 = vmatprep.subr.mxu0 0.0
    %1711 = vmatpush1.msra.mxu0 %v57
    %1712 = vmatprep.subr.mxu0 0.0
    %1713 = vmatpush1.msra.mxu0 %v56
    %1714 = vmatprep.subr.mxu0 0.0
    %1715 = vmatpush2.msra.mxu0 0.0
    %1716 = vmatprep.subr.mxu0 0.0
    %1717 = vmatpush2.msra.mxu0 0.0
    %1718 = vmatprep.subr.mxu0 0.0
    %1719 = vmatpush2.msra.mxu0 0.0
    %1720 = vmatprep.subr.mxu0 0.0
    %1721 = vmatpush2.msra.mxu0 0.0
    %1722 = vmatprep.subr.mxu0 0.0
    %1723 = vmatpush2.msra.mxu0 0.0
    %1724 = vmatprep.subr.mxu0 0.0
    %1725 = vmatpush2.msra.mxu0 0.0
    %1726 = vmatprep.subr.mxu0 0.0
    %1727 = vmatpush2.msra.mxu0 0.0
    %1728 = vmatprep.subr.mxu0 0.0
    %1729 = vmatpush2.msra.mxu0 0.0
    %1730 = vmatprep.subr.mxu0 0.0
    %1731 = vmatpush2.msra.mxu0 0.0
    %1732 = vmatprep.subr.mxu0 0.0
    %1733 = vmatpush2.msra.mxu0 0.0
    %1734 = vmatprep.subr.mxu0 0.0
    %1735 = vmatpush2.msra.mxu0 0.0
    %1736 = vmatprep.subr.mxu0 0.0
    %1737 = vmatpush2.msra.mxu0 0.0
    %1738 = vmatprep.subr.mxu0 0.0
    %1739 = vmatpush2.msra.mxu0 0.0
    %1740 = vmatprep.subr.mxu0 0.0
    %1741 = vmatpush2.msra.mxu0 0.0
    %1742 = vmatprep.subr.mxu0 0.0
    %1743 = vmatpush2.msra.mxu0 0.0
    %1744 = vmatprep.subr.mxu0 0.0
    %1745 = vmatpush2.msra.mxu0 0.0
    %1746 = vmatprep.mubr.f32.mxu0 0.0
    %1747 = vmatmul.mubr.f32.gmra.mxu0 %v1680
    %v1748 = vpop.f32.mrf.mxu0
    %v1749 = vadd.f32 %v91, %v1748
    %v1750 = vpop.f32.mrf.mxu0
    %1751 = vdwg.mxu0
    %v1752 = vmax.f32 %v1749, 0.0
    %v1754 = vsel %vm201, %v1752, 0
    %1756 = vmatprep.subr.mxu0 0.0
    %1757 = vmatpush1.msra.mxu0 0.0
    %1758 = vmatprep.subr.mxu0 0.0
    %1759 = vmatpush1.msra.mxu0 0.0
    %1760 = vmatprep.subr.mxu0 0.0
    %1761 = vmatpush1.msra.mxu0 0.0
    %1762 = vmatprep.subr.mxu0 0.0
    %1763 = vmatpush1.msra.mxu0 0.0
    %1764 = vmatprep.subr.mxu0 0.0
    %1765 = vmatpush1.msra.mxu0 0.0
    %1766 = vmatprep.subr.mxu0 0.0
    %1767 = vmatpush1.msra.mxu0 0.0
    %1768 = vmatprep.subr.mxu0 0.0
    %1769 = vmatpush1.msra.mxu0 0.0
    %1770 = vmatprep.subr.mxu0 0.0
    %1771 = vmatpush1.msra.mxu0 0.0
    %1772 = vmatprep.subr.mxu0 0.0
    %1773 = vmatpush1.msra.mxu0 0.0
    %1774 = vmatprep.subr.mxu0 0.0
    %1775 = vmatpush1.msra.mxu0 0.0
    %1776 = vmatprep.subr.mxu0 0.0
    %1777 = vmatpush1.msra.mxu0 0.0
    %1778 = vmatprep.subr.mxu0 0.0
    %1779 = vmatpush1.msra.mxu0 0.0
    %1780 = vmatprep.subr.mxu0 %v79
    %1781 = vmatpush1.msra.mxu0 %v78
    %1782 = vmatprep.subr.mxu0 %v75
    %1783 = vmatpush1.msra.mxu0 %v74
    %1784 = vmatprep.subr.mxu0 %v71
    %1785 = vmatpush1.msra.mxu0 %v70
    %1786 = vmatprep.subr.mxu0 %v67
    %1787 = vmatpush1.msra.mxu0 %v66
    %1788 = vmatprep.subr.mxu0 0.0
    %1789 = vmatpush2.msra.mxu0 0.0
    %1790 = vmatprep.subr.mxu0 0.0
    %1791 = vmatpush2.msra.mxu0 0.0
    %1792 = vmatprep.subr.mxu0 0.0
    %1793 = vmatpush2.msra.mxu0 0.0
    %1794 = vmatprep.subr.mxu0 0.0
    %1795 = vmatpush2.msra.mxu0 0.0
    %1796 = vmatprep.subr.mxu0 0.0
    %1797 = vmatpush2.msra.mxu0 0.0
    %1798 = vmatprep.subr.mxu0 0.0
    %1799 = vmatpush2.msra.mxu0 0.0
    %1800 = vmatprep.subr.mxu0 0.0
    %1801 = vmatpush2.msra.mxu0 0.0
    %1802 = vmatprep.subr.mxu0 0.0
    %1803 = vmatpush2.msra.mxu0 0.0
    %1804 = vmatprep.subr.mxu0 0.0
    %1805 = vmatpush2.msra.mxu0 0.0
    %1806 = vmatprep.subr.mxu0 0.0
    %1807 = vmatpush2.msra.mxu0 0.0
    %1808 = vmatprep.subr.mxu0 0.0
    %1809 = vmatpush2.msra.mxu0 0.0
    %1810 = vmatprep.subr.mxu0 0.0
    %1811 = vmatpush2.msra.mxu0 0.0
    %1812 = vmatprep.subr.mxu0 0.0
    %1813 = vmatpush2.msra.mxu0 0.0
    %1814 = vmatprep.subr.mxu0 0.0
    %1815 = vmatpush2.msra.mxu0 0.0
    %1816 = vmatprep.subr.mxu0 0.0
    %1817 = vmatpush2.msra.mxu0 0.0
    %1818 = vmatprep.subr.mxu0 0.0
    %1819 = vmatpush2.msra.mxu0 0.0
    %1820 = vmatprep.mubr.f32.mxu0 0.0
    %1821 = vmatmul.mubr.f32.gmra.mxu0 %v1754
    %v1822 = vpop.f32.mrf.mxu0
    %v1823 = vadd.f32 %v96, %v1822
    %v1824 = vpop.f32.mrf.mxu0
    %v1825 = vadd.f32 %v100, %v1824
    %1826 = vdwg.mxu0
    %1827 = vmatprep.subr.mxu0 0.0
    %1828 = vmatpush1.msra.mxu0 0.0
    %1829 = vmatprep.subr.mxu0 0.0
    %1830 = vmatpush1.msra.mxu0 0.0
    %1831 = vmatprep.subr.mxu0 0.0
    %1832 = vmatpush1.msra.mxu0 0.0
    %1833 = vmatprep.subr.mxu0 0.0
    %1834 = vmatpush1.msra.mxu0 0.0
    %1835 = vmatprep.subr.mxu0 0.0
    %1836 = vmatpush1.msra.mxu0 0.0
    %1837 = vmatprep.subr.mxu0 0.0
    %1838 = vmatpush1.msra.mxu0 0.0
    %1839 = vmatprep.subr.mxu0 0.0
    %1840 = vmatpush1.msra.mxu0 0.0
    %1841 = vmatprep.subr.mxu0 0.0
    %1842 = vmatpush1.msra.mxu0 0.0
    %1843 = vmatprep.subr.mxu0 0.0
    %1844 = vmatpush1.msra.mxu0 0.0
    %1845 = vmatprep.subr.mxu0 0.0
    %1846 = vmatpush1.msra.mxu0 0.0
    %1847 = vmatprep.subr.mxu0 0.0
    %1848 = vmatpush1.msra.mxu0 0.0
    %1849 = vmatprep.subr.mxu0 0.0
    %1850 = vmatpush1.msra.mxu0 0.0
    %1851 = vmatprep.subr.mxu0 %v81
    %1852 = vmatpush1.msra.mxu0 %v80
    %1853 = vmatprep.subr.mxu0 %v77
    %1854 = vmatpush1.msra.mxu0 %v76
    %1855 = vmatprep.subr.mxu0 %v73
    %1856 = vmatpush1.msra.mxu0 %v72
    %1857 = vmatprep.subr.mxu0 %v69
    %1858 = vmatpush1.msra.mxu0 %v68
    %1859 = vmatprep.subr.mxu0 0.0
    %1860 = vmatpush2.msra.mxu0 0.0
    %1861 = vmatprep.subr.mxu0 0.0
    %1862 = vmatpush2.msra.mxu0 0.0
    %1863 = vmatprep.subr.mxu0 0.0
    %1864 = vmatpush2.msra.mxu0 0.0
    %1865 = vmatprep.subr.mxu0 0.0
    %1866 = vmatpush2.msra.mxu0 0.0
    %1867 = vmatprep.subr.mxu0 0.0
    %1868 = vmatpush2.msra.mxu0 0.0
    %1869 = vmatprep.subr.mxu0 0.0
    %1870 = vmatpush2.msra.mxu0 0.0
    %1871 = vmatprep.subr.mxu0 0.0
    %1872 = vmatpush2.msra.mxu0 0.0
    %1873 = vmatprep.subr.mxu0 0.0
    %1874 = vmatpush2.msra.mxu0 0.0
    %1875 = vmatprep.subr.mxu0 0.0
    %1876 = vmatpush2.msra.mxu0 0.0
    %1877 = vmatprep.subr.mxu0 0.0
    %1878 = vmatpush2.msra.mxu0 0.0
    %1879 = vmatprep.subr.mxu0 0.0
    %1880 = vmatpush2.msra.mxu0 0.0
    %1881 = vmatprep.subr.mxu0 0.0
    %1882 = vmatpush2.msra.mxu0 0.0
    %1883 = vmatprep.subr.mxu0 0.0
    %1884 = vmatpush2.msra.mxu0 0.0
    %1885 = vmatprep.subr.mxu0 0.0
    %1886 = vmatpush2.msra.mxu0 0.0
    %1887 = vmatprep.subr.mxu0 0.0
    %1888 = vmatpush2.msra.mxu0 0.0
    %1889 = vmatprep.subr.mxu0 0.0
    %1890 = vmatpush2.msra.mxu0 0.0
    %1891 = vmatprep.mubr.f32.mxu0 0.0
    %1892 = vmatmul.mubr.f32.gmra.mxu0 %v1754
    %v1893 = vpop.f32.mrf.mxu0
    %v1894 = vadd.f32 %v104, %v1893
    %v1895 = vpop.f32.mrf.mxu0
    %v1896 = vadd.f32 %v108, %v1895
    %1897 = vdwg.mxu0
    %v1898 = vtanh.pop %v1823
    %v1899 = vtanh.pop %v1825
    %v1900 = vtanh.pop %v1894
    %v1901 = vtanh.pop %v1896
    %v1903 = vcombine.high %v1606, %v1606
    %v1905 = vunpack.c.l.s4 1983009808
    %v1906 = vunpack.c.0.s8 %v1905
    %v1907 = vlaneseq
    %v1908 = vshrl.u32 %v1907, 7
    %v1909 = vsub.s32 %v1906, %v1908
    %v1910 = vrot.slane %v1606, %v1909
    %v1912 = vunpack.c.l.s4 1983009808
    %v1913 = vunpack.c.0.s8 %v1912
    %v1914 = vlaneseq
    %v1915 = vshrl.u32 %v1914, 7
    %v1916 = vsub.s32 %v1913, %v1915
    %v1917 = vrot.slane %v1903, %v1916
    %v1918 = vcombine.high %v1910, %v1910
    %v1919 = vcombine.high %v1917, %v1917
    %v1924 = vmul.f32 %v1898, %v1910
    %v1925 = vmul.f32 %v1899, %v1918
    %v1926 = vmul.f32 %v1900, %v1917
    %v1927 = vmul.f32 %v1901, %v1919
    %v1928 = vmul.f32 %v1602, -0.001
    %v1929 = vmul.f32 %v1928, %v1607
    %v1930 = vadd.f32 %v1929, %v1924
    %v1931 = vadd.f32 %v1930, %v1925
    %v1932 = vadd.f32 %v1931, %v1926
    %v1933 = vadd.f32 %v1932, %v1927
    %v1934 = vmul.f32 %v1933, 0.33333334
    %v1935 = vadd.f32 %v1602, %v1934
    %1936 = vmatprep.subr.mxu0 0.0
    %1937 = vmatpush1.msra.mxu0 %v54
    %1938 = vmatprep.subr.mxu0 0.0
    %1939 = vmatpush1.msra.mxu0 %v53
    %1940 = vmatprep.subr.mxu0 0.0
    %1941 = vmatpush1.msra.mxu0 %v52
    %1942 = vmatprep.subr.mxu0 0.0
    %1943 = vmatpush1.msra.mxu0 %v51
    %1944 = vmatprep.subr.mxu0 0.0
    %1945 = vmatpush1.msra.mxu0 %v50
    %1946 = vmatprep.subr.mxu0 0.0
    %1947 = vmatpush1.msra.mxu0 %v49
    %1948 = vmatprep.subr.mxu0 0.0
    %1949 = vmatpush1.msra.mxu0 %v48
    %1950 = vmatprep.subr.mxu0 0.0
    %1951 = vmatpush1.msra.mxu0 %v47
    %1952 = vmatprep.subr.mxu0 0.0
    %1953 = vmatpush1.msra.mxu0 %v46
    %1954 = vmatprep.subr.mxu0 0.0
    %1955 = vmatpush1.msra.mxu0 %v45
    %1956 = vmatprep.subr.mxu0 0.0
    %1957 = vmatpush1.msra.mxu0 %v44
    %1958 = vmatprep.subr.mxu0 0.0
    %1959 = vmatpush1.msra.mxu0 %v43
    %1960 = vmatprep.subr.mxu0 0.0
    %1961 = vmatpush1.msra.mxu0 %v42
    %1962 = vmatprep.subr.mxu0 0.0
    %1963 = vmatpush1.msra.mxu0 %v41
    %1964 = vmatprep.subr.mxu0 0.0
    %1965 = vmatpush1.msra.mxu0 %v40
    %1966 = vmatprep.subr.mxu0 0.0
    %1967 = vmatpush1.msra.mxu0 %v39
    %1968 = vmatprep.subr.mxu0 0.0
    %1969 = vmatpush2.msra.mxu0 0.0
    %1970 = vmatprep.subr.mxu0 0.0
    %1971 = vmatpush2.msra.mxu0 0.0
    %1972 = vmatprep.subr.mxu0 0.0
    %1973 = vmatpush2.msra.mxu0 0.0
    %1974 = vmatprep.subr.mxu0 0.0
    %1975 = vmatpush2.msra.mxu0 0.0
    %1976 = vmatprep.subr.mxu0 0.0
    %1977 = vmatpush2.msra.mxu0 0.0
    %1978 = vmatprep.subr.mxu0 0.0
    %1979 = vmatpush2.msra.mxu0 0.0
    %1980 = vmatprep.subr.mxu0 0.0
    %1981 = vmatpush2.msra.mxu0 0.0
    %1982 = vmatprep.subr.mxu0 0.0
    %1983 = vmatpush2.msra.mxu0 0.0
    %1984 = vmatprep.subr.mxu0 0.0
    %1985 = vmatpush2.msra.mxu0 0.0
    %1986 = vmatprep.subr.mxu0 0.0
    %1987 = vmatpush2.msra.mxu0 0.0
    %1988 = vmatprep.subr.mxu0 0.0
    %1989 = vmatpush2.msra.mxu0 0.0
    %1990 = vmatprep.subr.mxu0 0.0
    %1991 = vmatpush2.msra.mxu0 0.0
    %1992 = vmatprep.subr.mxu0 0.0
    %1993 = vmatpush2.msra.mxu0 0.0
    %1994 = vmatprep.subr.mxu0 0.0
    %1995 = vmatpush2.msra.mxu0 0.0
    %1996 = vmatprep.subr.mxu0 0.0
    %1997 = vmatpush2.msra.mxu0 0.0
    %1998 = vmatprep.subr.mxu0 0.0
    %1999 = vmatpush2.msra.mxu0 0.0
    %2000 = vmatprep.mubr.f32.mxu0 0.0
    %2001 = vmatmul.mubr.f32.gmra.mxu0 %v1935
    %v2002 = vpop.f32.mrf.mxu0
    %v2003 = vadd.f32 %v87, %v2002
    %v2004 = vpop.f32.mrf.mxu0
    %2005 = vdwg.mxu0
    %v2006 = vmax.f32 %v2003, 0.0
    %v2008 = vsel %vm201, %v2006, 0
    %2010 = vmatprep.subr.mxu0 0.0
    %2011 = vmatpush1.msra.mxu0 0.0
    %2012 = vmatprep.subr.mxu0 0.0
    %2013 = vmatpush1.msra.mxu0 0.0
    %2014 = vmatprep.subr.mxu0 0.0
    %2015 = vmatpush1.msra.mxu0 0.0
    %2016 = vmatprep.subr.mxu0 0.0
    %2017 = vmatpush1.msra.mxu0 0.0
    %2018 = vmatprep.subr.mxu0 0.0
    %2019 = vmatpush1.msra.mxu0 0.0
    %2020 = vmatprep.subr.mxu0 0.0
    %2021 = vmatpush1.msra.mxu0 0.0
    %2022 = vmatprep.subr.mxu0 0.0
    %2023 = vmatpush1.msra.mxu0 0.0
    %2024 = vmatprep.subr.mxu0 0.0
    %2025 = vmatpush1.msra.mxu0 0.0
    %2026 = vmatprep.subr.mxu0 0.0
    %2027 = vmatpush1.msra.mxu0 0.0
    %2028 = vmatprep.subr.mxu0 0.0
    %2029 = vmatpush1.msra.mxu0 0.0
    %2030 = vmatprep.subr.mxu0 0.0
    %2031 = vmatpush1.msra.mxu0 0.0
    %2032 = vmatprep.subr.mxu0 0.0
    %2033 = vmatpush1.msra.mxu0 0.0
    %2034 = vmatprep.subr.mxu0 0.0
    %2035 = vmatpush1.msra.mxu0 %v59
    %2036 = vmatprep.subr.mxu0 0.0
    %2037 = vmatpush1.msra.mxu0 %v58
    %2038 = vmatprep.subr.mxu0 0.0
    %2039 = vmatpush1.msra.mxu0 %v57
    %2040 = vmatprep.subr.mxu0 0.0
    %2041 = vmatpush1.msra.mxu0 %v56
    %2042 = vmatprep.subr.mxu0 0.0
    %2043 = vmatpush2.msra.mxu0 0.0
    %2044 = vmatprep.subr.mxu0 0.0
    %2045 = vmatpush2.msra.mxu0 0.0
    %2046 = vmatprep.subr.mxu0 0.0
    %2047 = vmatpush2.msra.mxu0 0.0
    %2048 = vmatprep.subr.mxu0 0.0
    %2049 = vmatpush2.msra.mxu0 0.0
    %2050 = vmatprep.subr.mxu0 0.0
    %2051 = vmatpush2.msra.mxu0 0.0
    %2052 = vmatprep.subr.mxu0 0.0
    %2053 = vmatpush2.msra.mxu0 0.0
    %2054 = vmatprep.subr.mxu0 0.0
    %2055 = vmatpush2.msra.mxu0 0.0
    %2056 = vmatprep.subr.mxu0 0.0
    %2057 = vmatpush2.msra.mxu0 0.0
    %2058 = vmatprep.subr.mxu0 0.0
    %2059 = vmatpush2.msra.mxu0 0.0
    %2060 = vmatprep.subr.mxu0 0.0
    %2061 = vmatpush2.msra.mxu0 0.0
    %2062 = vmatprep.subr.mxu0 0.0
    %2063 = vmatpush2.msra.mxu0 0.0
    %2064 = vmatprep.subr.mxu0 0.0
    %2065 = vmatpush2.msra.mxu0 0.0
    %2066 = vmatprep.subr.mxu0 0.0
    %2067 = vmatpush2.msra.mxu0 0.0
    %2068 = vmatprep.subr.mxu0 0.0
    %2069 = vmatpush2.msra.mxu0 0.0
    %2070 = vmatprep.subr.mxu0 0.0
    %2071 = vmatpush2.msra.mxu0 0.0
    %2072 = vmatprep.subr.mxu0 0.0
    %2073 = vmatpush2.msra.mxu0 0.0
    %2074 = vmatprep.mubr.f32.mxu0 0.0
    %2075 = vmatmul.mubr.f32.gmra.mxu0 %v2008
    %v2076 = vpop.f32.mrf.mxu0
    %v2077 = vadd.f32 %v91, %v2076
    %v2078 = vpop.f32.mrf.mxu0
    %2079 = vdwg.mxu0
    %v2080 = vmax.f32 %v2077, 0.0
    %v2082 = vsel %vm201, %v2080, 0
    %2084 = vmatprep.subr.mxu0 0.0
    %2085 = vmatpush1.msra.mxu0 0.0
    %2086 = vmatprep.subr.mxu0 0.0
    %2087 = vmatpush1.msra.mxu0 0.0
    %2088 = vmatprep.subr.mxu0 0.0
    %2089 = vmatpush1.msra.mxu0 0.0
    %2090 = vmatprep.subr.mxu0 0.0
    %2091 = vmatpush1.msra.mxu0 0.0
    %2092 = vmatprep.subr.mxu0 0.0
    %2093 = vmatpush1.msra.mxu0 0.0
    %2094 = vmatprep.subr.mxu0 0.0
    %2095 = vmatpush1.msra.mxu0 0.0
    %2096 = vmatprep.subr.mxu0 0.0
    %2097 = vmatpush1.msra.mxu0 0.0
    %2098 = vmatprep.subr.mxu0 0.0
    %2099 = vmatpush1.msra.mxu0 0.0
    %2100 = vmatprep.subr.mxu0 0.0
    %2101 = vmatpush1.msra.mxu0 0.0
    %2102 = vmatprep.subr.mxu0 0.0
    %2103 = vmatpush1.msra.mxu0 0.0
    %2104 = vmatprep.subr.mxu0 0.0
    %2105 = vmatpush1.msra.mxu0 0.0
    %2106 = vmatprep.subr.mxu0 0.0
    %2107 = vmatpush1.msra.mxu0 0.0
    %2108 = vmatprep.subr.mxu0 %v79
    %2109 = vmatpush1.msra.mxu0 %v78
    %2110 = vmatprep.subr.mxu0 %v75
    %2111 = vmatpush1.msra.mxu0 %v74
    %2112 = vmatprep.subr.mxu0 %v71
    %2113 = vmatpush1.msra.mxu0 %v70
    %2114 = vmatprep.subr.mxu0 %v67
    %2115 = vmatpush1.msra.mxu0 %v66
    %2116 = vmatprep.subr.mxu0 0.0
    %2117 = vmatpush2.msra.mxu0 0.0
    %2118 = vmatprep.subr.mxu0 0.0
    %2119 = vmatpush2.msra.mxu0 0.0
    %2120 = vmatprep.subr.mxu0 0.0
    %2121 = vmatpush2.msra.mxu0 0.0
    %2122 = vmatprep.subr.mxu0 0.0
    %2123 = vmatpush2.msra.mxu0 0.0
    %2124 = vmatprep.subr.mxu0 0.0
    %2125 = vmatpush2.msra.mxu0 0.0
    %2126 = vmatprep.subr.mxu0 0.0
    %2127 = vmatpush2.msra.mxu0 0.0
    %2128 = vmatprep.subr.mxu0 0.0
    %2129 = vmatpush2.msra.mxu0 0.0
    %2130 = vmatprep.subr.mxu0 0.0
    %2131 = vmatpush2.msra.mxu0 0.0
    %2132 = vmatprep.subr.mxu0 0.0
    %2133 = vmatpush2.msra.mxu0 0.0
    %2134 = vmatprep.subr.mxu0 0.0
    %2135 = vmatpush2.msra.mxu0 0.0
    %2136 = vmatprep.subr.mxu0 0.0
    %2137 = vmatpush2.msra.mxu0 0.0
    %2138 = vmatprep.subr.mxu0 0.0
    %2139 = vmatpush2.msra.mxu0 0.0
    %2140 = vmatprep.subr.mxu0 0.0
    %2141 = vmatpush2.msra.mxu0 0.0
    %2142 = vmatprep.subr.mxu0 0.0
    %2143 = vmatpush2.msra.mxu0 0.0
    %2144 = vmatprep.subr.mxu0 0.0
    %2145 = vmatpush2.msra.mxu0 0.0
    %2146 = vmatprep.subr.mxu0 0.0
    %2147 = vmatpush2.msra.mxu0 0.0
    %2148 = vmatprep.mubr.f32.mxu0 0.0
    %2149 = vmatmul.mubr.f32.gmra.mxu0 %v2082
    %v2150 = vpop.f32.mrf.mxu0
    %v2151 = vadd.f32 %v96, %v2150
    %v2152 = vpop.f32.mrf.mxu0
    %v2153 = vadd.f32 %v100, %v2152
    %2154 = vdwg.mxu0
    %2155 = vmatprep.subr.mxu0 0.0
    %2156 = vmatpush1.msra.mxu0 0.0
    %2157 = vmatprep.subr.mxu0 0.0
    %2158 = vmatpush1.msra.mxu0 0.0
    %2159 = vmatprep.subr.mxu0 0.0
    %2160 = vmatpush1.msra.mxu0 0.0
    %2161 = vmatprep.subr.mxu0 0.0
    %2162 = vmatpush1.msra.mxu0 0.0
    %2163 = vmatprep.subr.mxu0 0.0
    %2164 = vmatpush1.msra.mxu0 0.0
    %2165 = vmatprep.subr.mxu0 0.0
    %2166 = vmatpush1.msra.mxu0 0.0
    %2167 = vmatprep.subr.mxu0 0.0
    %2168 = vmatpush1.msra.mxu0 0.0
    %2169 = vmatprep.subr.mxu0 0.0
    %2170 = vmatpush1.msra.mxu0 0.0
    %2171 = vmatprep.subr.mxu0 0.0
    %2172 = vmatpush1.msra.mxu0 0.0
    %2173 = vmatprep.subr.mxu0 0.0
    %2174 = vmatpush1.msra.mxu0 0.0
    %2175 = vmatprep.subr.mxu0 0.0
    %2176 = vmatpush1.msra.mxu0 0.0
    %2177 = vmatprep.subr.mxu0 0.0
    %2178 = vmatpush1.msra.mxu0 0.0
    %2179 = vmatprep.subr.mxu0 %v81
    %2180 = vmatpush1.msra.mxu0 %v80
    %2181 = vmatprep.subr.mxu0 %v77
    %2182 = vmatpush1.msra.mxu0 %v76
    %2183 = vmatprep.subr.mxu0 %v73
    %2184 = vmatpush1.msra.mxu0 %v72
    %2185 = vmatprep.subr.mxu0 %v69
    %2186 = vmatpush1.msra.mxu0 %v68
    %2187 = vmatprep.subr.mxu0 0.0
    %2188 = vmatpush2.msra.mxu0 0.0
    %2189 = vmatprep.subr.mxu0 0.0
    %2190 = vmatpush2.msra.mxu0 0.0
    %2191 = vmatprep.subr.mxu0 0.0
    %2192 = vmatpush2.msra.mxu0 0.0
    %2193 = vmatprep.subr.mxu0 0.0
    %2194 = vmatpush2.msra.mxu0 0.0
    %2195 = vmatprep.subr.mxu0 0.0
    %2196 = vmatpush2.msra.mxu0 0.0
    %2197 = vmatprep.subr.mxu0 0.0
    %2198 = vmatpush2.msra.mxu0 0.0
    %2199 = vmatprep.subr.mxu0 0.0
    %2200 = vmatpush2.msra.mxu0 0.0
    %2201 = vmatprep.subr.mxu0 0.0
    %2202 = vmatpush2.msra.mxu0 0.0
    %2203 = vmatprep.subr.mxu0 0.0
    %2204 = vmatpush2.msra.mxu0 0.0
    %2205 = vmatprep.subr.mxu0 0.0
    %2206 = vmatpush2.msra.mxu0 0.0
    %2207 = vmatprep.subr.mxu0 0.0
    %2208 = vmatpush2.msra.mxu0 0.0
    %2209 = vmatprep.subr.mxu0 0.0
    %2210 = vmatpush2.msra.mxu0 0.0
    %2211 = vmatprep.subr.mxu0 0.0
    %2212 = vmatpush2.msra.mxu0 0.0
    %2213 = vmatprep.subr.mxu0 0.0
    %2214 = vmatpush2.msra.mxu0 0.0
    %2215 = vmatprep.subr.mxu0 0.0
    %2216 = vmatpush2.msra.mxu0 0.0
    %2217 = vmatprep.subr.mxu0 0.0
    %2218 = vmatpush2.msra.mxu0 0.0
    %2219 = vmatprep.mubr.f32.mxu0 0.0
    %2220 = vmatmul.mubr.f32.gmra.mxu0 %v2082
    %v2221 = vpop.f32.mrf.mxu0
    %v2222 = vadd.f32 %v104, %v2221
    %v2223 = vpop.f32.mrf.mxu0
    %v2224 = vadd.f32 %v108, %v2223
    %2225 = vdwg.mxu0
    %v2226 = vtanh.pop %v2151
    %v2227 = vtanh.pop %v2153
    %v2228 = vtanh.pop %v2222
    %v2229 = vtanh.pop %v2224
    %v2230 = vmul.f32 %v2226, %v1910
    %v2231 = vmul.f32 %v2227, %v1918
    %v2232 = vmul.f32 %v2228, %v1917
    %v2233 = vmul.f32 %v2229, %v1919
    %v2234 = vmul.f32 %v1935, -0.001
    %v2235 = vmul.f32 %v2234, %v1607
    %v2236 = vadd.f32 %v2235, %v2230
    %v2237 = vadd.f32 %v2236, %v2231
    %v2238 = vadd.f32 %v2237, %v2232
    %v2239 = vadd.f32 %v2238, %v2233
    %v2240 = vsub.f32 %v2239, %v1934
    %v2241 = vadd.f32 %v1602, %v2240
    %2242 = vmatprep.subr.mxu0 0.0
    %2243 = vmatpush1.msra.mxu0 %v54
    %2244 = vmatprep.subr.mxu0 0.0
    %2245 = vmatpush1.msra.mxu0 %v53
    %2246 = vmatprep.subr.mxu0 0.0
    %2247 = vmatpush1.msra.mxu0 %v52
    %2248 = vmatprep.subr.mxu0 0.0
    %2249 = vmatpush1.msra.mxu0 %v51
    %2250 = vmatprep.subr.mxu0 0.0
    %2251 = vmatpush1.msra.mxu0 %v50
    %2252 = vmatprep.subr.mxu0 0.0
    %2253 = vmatpush1.msra.mxu0 %v49
    %2254 = vmatprep.subr.mxu0 0.0
    %2255 = vmatpush1.msra.mxu0 %v48
    %2256 = vmatprep.subr.mxu0 0.0
    %2257 = vmatpush1.msra.mxu0 %v47
    %2258 = vmatprep.subr.mxu0 0.0
    %2259 = vmatpush1.msra.mxu0 %v46
    %2260 = vmatprep.subr.mxu0 0.0
    %2261 = vmatpush1.msra.mxu0 %v45
    %2262 = vmatprep.subr.mxu0 0.0
    %2263 = vmatpush1.msra.mxu0 %v44
    %2264 = vmatprep.subr.mxu0 0.0
    %2265 = vmatpush1.msra.mxu0 %v43
    %2266 = vmatprep.subr.mxu0 0.0
    %2267 = vmatpush1.msra.mxu0 %v42
    %2268 = vmatprep.subr.mxu0 0.0
    %2269 = vmatpush1.msra.mxu0 %v41
    %2270 = vmatprep.subr.mxu0 0.0
    %2271 = vmatpush1.msra.mxu0 %v40
    %2272 = vmatprep.subr.mxu0 0.0
    %2273 = vmatpush1.msra.mxu0 %v39
    %2274 = vmatprep.subr.mxu0 0.0
    %2275 = vmatpush2.msra.mxu0 0.0
    %2276 = vmatprep.subr.mxu0 0.0
    %2277 = vmatpush2.msra.mxu0 0.0
    %2278 = vmatprep.subr.mxu0 0.0
    %2279 = vmatpush2.msra.mxu0 0.0
    %2280 = vmatprep.subr.mxu0 0.0
    %2281 = vmatpush2.msra.mxu0 0.0
    %2282 = vmatprep.subr.mxu0 0.0
    %2283 = vmatpush2.msra.mxu0 0.0
    %2284 = vmatprep.subr.mxu0 0.0
    %2285 = vmatpush2.msra.mxu0 0.0
    %2286 = vmatprep.subr.mxu0 0.0
    %2287 = vmatpush2.msra.mxu0 0.0
    %2288 = vmatprep.subr.mxu0 0.0
    %2289 = vmatpush2.msra.mxu0 0.0
    %2290 = vmatprep.subr.mxu0 0.0
    %2291 = vmatpush2.msra.mxu0 0.0
    %2292 = vmatprep.subr.mxu0 0.0
    %2293 = vmatpush2.msra.mxu0 0.0
    %2294 = vmatprep.subr.mxu0 0.0
    %2295 = vmatpush2.msra.mxu0 0.0
    %2296 = vmatprep.subr.mxu0 0.0
    %2297 = vmatpush2.msra.mxu0 0.0
    %2298 = vmatprep.subr.mxu0 0.0
    %2299 = vmatpush2.msra.mxu0 0.0
    %2300 = vmatprep.subr.mxu0 0.0
    %2301 = vmatpush2.msra.mxu0 0.0
    %2302 = vmatprep.subr.mxu0 0.0
    %2303 = vmatpush2.msra.mxu0 0.0
    %2304 = vmatprep.subr.mxu0 0.0
    %2305 = vmatpush2.msra.mxu0 0.0
    %2306 = vmatprep.mubr.f32.mxu0 0.0
    %2307 = vmatmul.mubr.f32.gmra.mxu0 %v2241
    %v2308 = vpop.f32.mrf.mxu0
    %v2309 = vadd.f32 %v87, %v2308
    %v2310 = vpop.f32.mrf.mxu0
    %2311 = vdwg.mxu0
    %v2312 = vmax.f32 %v2309, 0.0
    %v2314 = vsel %vm201, %v2312, 0
    %2316 = vmatprep.subr.mxu0 0.0
    %2317 = vmatpush1.msra.mxu0 0.0
    %2318 = vmatprep.subr.mxu0 0.0
    %2319 = vmatpush1.msra.mxu0 0.0
    %2320 = vmatprep.subr.mxu0 0.0
    %2321 = vmatpush1.msra.mxu0 0.0
    %2322 = vmatprep.subr.mxu0 0.0
    %2323 = vmatpush1.msra.mxu0 0.0
    %2324 = vmatprep.subr.mxu0 0.0
    %2325 = vmatpush1.msra.mxu0 0.0
    %2326 = vmatprep.subr.mxu0 0.0
    %2327 = vmatpush1.msra.mxu0 0.0
    %2328 = vmatprep.subr.mxu0 0.0
    %2329 = vmatpush1.msra.mxu0 0.0
    %2330 = vmatprep.subr.mxu0 0.0
    %2331 = vmatpush1.msra.mxu0 0.0
    %2332 = vmatprep.subr.mxu0 0.0
    %2333 = vmatpush1.msra.mxu0 0.0
    %2334 = vmatprep.subr.mxu0 0.0
    %2335 = vmatpush1.msra.mxu0 0.0
    %2336 = vmatprep.subr.mxu0 0.0
    %2337 = vmatpush1.msra.mxu0 0.0
    %2338 = vmatprep.subr.mxu0 0.0
    %2339 = vmatpush1.msra.mxu0 0.0
    %2340 = vmatprep.subr.mxu0 0.0
    %2341 = vmatpush1.msra.mxu0 %v59
    %2342 = vmatprep.subr.mxu0 0.0
    %2343 = vmatpush1.msra.mxu0 %v58
    %2344 = vmatprep.subr.mxu0 0.0
    %2345 = vmatpush1.msra.mxu0 %v57
    %2346 = vmatprep.subr.mxu0 0.0
    %2347 = vmatpush1.msra.mxu0 %v56
    %2348 = vmatprep.subr.mxu0 0.0
    %2349 = vmatpush2.msra.mxu0 0.0
    %2350 = vmatprep.subr.mxu0 0.0
    %2351 = vmatpush2.msra.mxu0 0.0
    %2352 = vmatprep.subr.mxu0 0.0
    %2353 = vmatpush2.msra.mxu0 0.0
    %2354 = vmatprep.subr.mxu0 0.0
    %2355 = vmatpush2.msra.mxu0 0.0
    %2356 = vmatprep.subr.mxu0 0.0
    %2357 = vmatpush2.msra.mxu0 0.0
    %2358 = vmatprep.subr.mxu0 0.0
    %2359 = vmatpush2.msra.mxu0 0.0
    %2360 = vmatprep.subr.mxu0 0.0
    %2361 = vmatpush2.msra.mxu0 0.0
    %2362 = vmatprep.subr.mxu0 0.0
    %2363 = vmatpush2.msra.mxu0 0.0
    %2364 = vmatprep.subr.mxu0 0.0
    %2365 = vmatpush2.msra.mxu0 0.0
    %2366 = vmatprep.subr.mxu0 0.0
    %2367 = vmatpush2.msra.mxu0 0.0
    %2368 = vmatprep.subr.mxu0 0.0
    %2369 = vmatpush2.msra.mxu0 0.0
    %2370 = vmatprep.subr.mxu0 0.0
    %2371 = vmatpush2.msra.mxu0 0.0
    %2372 = vmatprep.subr.mxu0 0.0
    %2373 = vmatpush2.msra.mxu0 0.0
    %2374 = vmatprep.subr.mxu0 0.0
    %2375 = vmatpush2.msra.mxu0 0.0
    %2376 = vmatprep.subr.mxu0 0.0
    %2377 = vmatpush2.msra.mxu0 0.0
    %2378 = vmatprep.subr.mxu0 0.0
    %2379 = vmatpush2.msra.mxu0 0.0
    %2380 = vmatprep.mubr.f32.mxu0 0.0
    %2381 = vmatmul.mubr.f32.gmra.mxu0 %v2314
    %v2382 = vpop.f32.mrf.mxu0
    %v2383 = vadd.f32 %v91, %v2382
    %v2384 = vpop.f32.mrf.mxu0
    %2385 = vdwg.mxu0
    %v2386 = vmax.f32 %v2383, 0.0
    %v2388 = vsel %vm201, %v2386, 0
    %2390 = vmatprep.subr.mxu0 0.0
    %2391 = vmatpush1.msra.mxu0 0.0
    %2392 = vmatprep.subr.mxu0 0.0
    %2393 = vmatpush1.msra.mxu0 0.0
    %2394 = vmatprep.subr.mxu0 0.0
    %2395 = vmatpush1.msra.mxu0 0.0
    %2396 = vmatprep.subr.mxu0 0.0
    %2397 = vmatpush1.msra.mxu0 0.0
    %2398 = vmatprep.subr.mxu0 0.0
    %2399 = vmatpush1.msra.mxu0 0.0
    %2400 = vmatprep.subr.mxu0 0.0
    %2401 = vmatpush1.msra.mxu0 0.0
    %2402 = vmatprep.subr.mxu0 0.0
    %2403 = vmatpush1.msra.mxu0 0.0
    %2404 = vmatprep.subr.mxu0 0.0
    %2405 = vmatpush1.msra.mxu0 0.0
    %2406 = vmatprep.subr.mxu0 0.0
    %2407 = vmatpush1.msra.mxu0 0.0
    %2408 = vmatprep.subr.mxu0 0.0
    %2409 = vmatpush1.msra.mxu0 0.0
    %2410 = vmatprep.subr.mxu0 0.0
    %2411 = vmatpush1.msra.mxu0 0.0
    %2412 = vmatprep.subr.mxu0 0.0
    %2413 = vmatpush1.msra.mxu0 0.0
    %2414 = vmatprep.subr.mxu0 %v79
    %2415 = vmatpush1.msra.mxu0 %v78
    %2416 = vmatprep.subr.mxu0 %v75
    %2417 = vmatpush1.msra.mxu0 %v74
    %2418 = vmatprep.subr.mxu0 %v71
    %2419 = vmatpush1.msra.mxu0 %v70
    %2420 = vmatprep.subr.mxu0 %v67
    %2421 = vmatpush1.msra.mxu0 %v66
    %2422 = vmatprep.subr.mxu0 0.0
    %2423 = vmatpush2.msra.mxu0 0.0
    %2424 = vmatprep.subr.mxu0 0.0
    %2425 = vmatpush2.msra.mxu0 0.0
    %2426 = vmatprep.subr.mxu0 0.0
    %2427 = vmatpush2.msra.mxu0 0.0
    %2428 = vmatprep.subr.mxu0 0.0
    %2429 = vmatpush2.msra.mxu0 0.0
    %2430 = vmatprep.subr.mxu0 0.0
    %2431 = vmatpush2.msra.mxu0 0.0
    %2432 = vmatprep.subr.mxu0 0.0
    %2433 = vmatpush2.msra.mxu0 0.0
    %2434 = vmatprep.subr.mxu0 0.0
    %2435 = vmatpush2.msra.mxu0 0.0
    %2436 = vmatprep.subr.mxu0 0.0
    %2437 = vmatpush2.msra.mxu0 0.0
    %2438 = vmatprep.subr.mxu0 0.0
    %2439 = vmatpush2.msra.mxu0 0.0
    %2440 = vmatprep.subr.mxu0 0.0
    %2441 = vmatpush2.msra.mxu0 0.0
    %2442 = vmatprep.subr.mxu0 0.0
    %2443 = vmatpush2.msra.mxu0 0.0
    %2444 = vmatprep.subr.mxu0 0.0
    %2445 = vmatpush2.msra.mxu0 0.0
    %2446 = vmatprep.subr.mxu0 0.0
    %2447 = vmatpush2.msra.mxu0 0.0
    %2448 = vmatprep.subr.mxu0 0.0
    %2449 = vmatpush2.msra.mxu0 0.0
    %2450 = vmatprep.subr.mxu0 0.0
    %2451 = vmatpush2.msra.mxu0 0.0
    %2452 = vmatprep.subr.mxu0 0.0
    %2453 = vmatpush2.msra.mxu0 0.0
    %2454 = vmatprep.mubr.f32.mxu0 0.0
    %2455 = vmatmul.mubr.f32.gmra.mxu0 %v2388
    %v2456 = vpop.f32.mrf.mxu0
    %v2457 = vadd.f32 %v96, %v2456
    %v2458 = vpop.f32.mrf.mxu0
    %v2459 = vadd.f32 %v100, %v2458
    %2460 = vdwg.mxu0
    %2461 = vmatprep.subr.mxu0 0.0
    %2462 = vmatpush1.msra.mxu0 0.0
    %2463 = vmatprep.subr.mxu0 0.0
    %2464 = vmatpush1.msra.mxu0 0.0
    %2465 = vmatprep.subr.mxu0 0.0
    %2466 = vmatpush1.msra.mxu0 0.0
    %2467 = vmatprep.subr.mxu0 0.0
    %2468 = vmatpush1.msra.mxu0 0.0
    %2469 = vmatprep.subr.mxu0 0.0
    %2470 = vmatpush1.msra.mxu0 0.0
    %2471 = vmatprep.subr.mxu0 0.0
    %2472 = vmatpush1.msra.mxu0 0.0
    %2473 = vmatprep.subr.mxu0 0.0
    %2474 = vmatpush1.msra.mxu0 0.0
    %2475 = vmatprep.subr.mxu0 0.0
    %2476 = vmatpush1.msra.mxu0 0.0
    %2477 = vmatprep.subr.mxu0 0.0
    %2478 = vmatpush1.msra.mxu0 0.0
    %2479 = vmatprep.subr.mxu0 0.0
    %2480 = vmatpush1.msra.mxu0 0.0
    %2481 = vmatprep.subr.mxu0 0.0
    %2482 = vmatpush1.msra.mxu0 0.0
    %2483 = vmatprep.subr.mxu0 0.0
    %2484 = vmatpush1.msra.mxu0 0.0
    %2485 = vmatprep.subr.mxu0 %v81
    %2486 = vmatpush1.msra.mxu0 %v80
    %2487 = vmatprep.subr.mxu0 %v77
    %2488 = vmatpush1.msra.mxu0 %v76
    %2489 = vmatprep.subr.mxu0 %v73
    %2490 = vmatpush1.msra.mxu0 %v72
    %2491 = vmatprep.subr.mxu0 %v69
    %2492 = vmatpush1.msra.mxu0 %v68
    %2493 = vmatprep.subr.mxu0 0.0
    %2494 = vmatpush2.msra.mxu0 0.0
    %2495 = vmatprep.subr.mxu0 0.0
    %2496 = vmatpush2.msra.mxu0 0.0
    %2497 = vmatprep.subr.mxu0 0.0
    %2498 = vmatpush2.msra.mxu0 0.0
    %2499 = vmatprep.subr.mxu0 0.0
    %2500 = vmatpush2.msra.mxu0 0.0
    %2501 = vmatprep.subr.mxu0 0.0
    %2502 = vmatpush2.msra.mxu0 0.0
    %2503 = vmatprep.subr.mxu0 0.0
    %2504 = vmatpush2.msra.mxu0 0.0
    %2505 = vmatprep.subr.mxu0 0.0
    %2506 = vmatpush2.msra.mxu0 0.0
    %2507 = vmatprep.subr.mxu0 0.0
    %2508 = vmatpush2.msra.mxu0 0.0
    %2509 = vmatprep.subr.mxu0 0.0
    %2510 = vmatpush2.msra.mxu0 0.0
    %2511 = vmatprep.subr.mxu0 0.0
    %2512 = vmatpush2.msra.mxu0 0.0
    %2513 = vmatprep.subr.mxu0 0.0
    %2514 = vmatpush2.msra.mxu0 0.0
    %2515 = vmatprep.subr.mxu0 0.0
    %2516 = vmatpush2.msra.mxu0 0.0
    %2517 = vmatprep.subr.mxu0 0.0
    %2518 = vmatpush2.msra.mxu0 0.0
    %2519 = vmatprep.subr.mxu0 0.0
    %2520 = vmatpush2.msra.mxu0 0.0
    %2521 = vmatprep.subr.mxu0 0.0
    %2522 = vmatpush2.msra.mxu0 0.0
    %2523 = vmatprep.subr.mxu0 0.0
    %2524 = vmatpush2.msra.mxu0 0.0
    %2525 = vmatprep.mubr.f32.mxu0 0.0
    %2526 = vmatmul.mubr.f32.gmra.mxu0 %v2388
    %v2527 = vpop.f32.mrf.mxu0
    %v2528 = vadd.f32 %v104, %v2527
    %v2529 = vpop.f32.mrf.mxu0
    %v2530 = vadd.f32 %v108, %v2529
    %2531 = vdwg.mxu0
    %v2532 = vtanh.pop %v2457
    %v2533 = vtanh.pop %v2459
    %v2534 = vtanh.pop %v2528
    %v2535 = vtanh.pop %v2530
    %v2536 = vmul.f32 %v2532, %v1910
    %v2537 = vmul.f32 %v2533, %v1918
    %v2538 = vmul.f32 %v2534, %v1917
    %v2539 = vmul.f32 %v2535, %v1919
    %v2540 = vmul.f32 %v2241, -0.001
    %v2541 = vmul.f32 %v2540, %v1607
    %v2542 = vadd.f32 %v2541, %v2536
    %v2543 = vadd.f32 %v2542, %v2537
    %v2544 = vadd.f32 %v2543, %v2538
    %v2545 = vadd.f32 %v2544, %v2539
    %v2546 = vsub.f32 %v1933, %v2239
    %v2547 = vadd.f32 %v2546, %v2545
    %v2548 = vadd.f32 %v1602, %v2547
    %2549 = vmatprep.subr.mxu0 0.0
    %2550 = vmatpush1.msra.mxu0 %v54
    %2551 = vmatprep.subr.mxu0 0.0
    %2552 = vmatpush1.msra.mxu0 %v53
    %2553 = vmatprep.subr.mxu0 0.0
    %2554 = vmatpush1.msra.mxu0 %v52
    %2555 = vmatprep.subr.mxu0 0.0
    %2556 = vmatpush1.msra.mxu0 %v51
    %2557 = vmatprep.subr.mxu0 0.0
    %2558 = vmatpush1.msra.mxu0 %v50
    %2559 = vmatprep.subr.mxu0 0.0
    %2560 = vmatpush1.msra.mxu0 %v49
    %2561 = vmatprep.subr.mxu0 0.0
    %2562 = vmatpush1.msra.mxu0 %v48
    %2563 = vmatprep.subr.mxu0 0.0
    %2564 = vmatpush1.msra.mxu0 %v47
    %2565 = vmatprep.subr.mxu0 0.0
    %2566 = vmatpush1.msra.mxu0 %v46
    %2567 = vmatprep.subr.mxu0 0.0
    %2568 = vmatpush1.msra.mxu0 %v45
    %2569 = vmatprep.subr.mxu0 0.0
    %2570 = vmatpush1.msra.mxu0 %v44
    %2571 = vmatprep.subr.mxu0 0.0
    %2572 = vmatpush1.msra.mxu0 %v43
    %2573 = vmatprep.subr.mxu0 0.0
    %2574 = vmatpush1.msra.mxu0 %v42
    %2575 = vmatprep.subr.mxu0 0.0
    %2576 = vmatpush1.msra.mxu0 %v41
    %2577 = vmatprep.subr.mxu0 0.0
    %2578 = vmatpush1.msra.mxu0 %v40
    %2579 = vmatprep.subr.mxu0 0.0
    %2580 = vmatpush1.msra.mxu0 %v39
    %2581 = vmatprep.subr.mxu0 0.0
    %2582 = vmatpush2.msra.mxu0 0.0
    %2583 = vmatprep.subr.mxu0 0.0
    %2584 = vmatpush2.msra.mxu0 0.0
    %2585 = vmatprep.subr.mxu0 0.0
    %2586 = vmatpush2.msra.mxu0 0.0
    %2587 = vmatprep.subr.mxu0 0.0
    %2588 = vmatpush2.msra.mxu0 0.0
    %2589 = vmatprep.subr.mxu0 0.0
    %2590 = vmatpush2.msra.mxu0 0.0
    %2591 = vmatprep.subr.mxu0 0.0
    %2592 = vmatpush2.msra.mxu0 0.0
    %2593 = vmatprep.subr.mxu0 0.0
    %2594 = vmatpush2.msra.mxu0 0.0
    %2595 = vmatprep.subr.mxu0 0.0
    %2596 = vmatpush2.msra.mxu0 0.0
    %2597 = vmatprep.subr.mxu0 0.0
    %2598 = vmatpush2.msra.mxu0 0.0
    %2599 = vmatprep.subr.mxu0 0.0
    %2600 = vmatpush2.msra.mxu0 0.0
    %2601 = vmatprep.subr.mxu0 0.0
    %2602 = vmatpush2.msra.mxu0 0.0
    %2603 = vmatprep.subr.mxu0 0.0
    %2604 = vmatpush2.msra.mxu0 0.0
    %2605 = vmatprep.subr.mxu0 0.0
    %2606 = vmatpush2.msra.mxu0 0.0
    %2607 = vmatprep.subr.mxu0 0.0
    %2608 = vmatpush2.msra.mxu0 0.0
    %2609 = vmatprep.subr.mxu0 0.0
    %2610 = vmatpush2.msra.mxu0 0.0
    %2611 = vmatprep.subr.mxu0 0.0
    %2612 = vmatpush2.msra.mxu0 0.0
    %2613 = vmatprep.mubr.f32.mxu0 0.0
    %2614 = vmatmul.mubr.f32.gmra.mxu0 %v2548
    %v2615 = vpop.f32.mrf.mxu0
    %v2616 = vadd.f32 %v87, %v2615
    %v2617 = vpop.f32.mrf.mxu0
    %2618 = vdwg.mxu0
    %v2619 = vmax.f32 %v2616, 0.0
    %v2621 = vsel %vm201, %v2619, 0
    %2623 = vmatprep.subr.mxu0 0.0
    %2624 = vmatpush1.msra.mxu0 0.0
    %2625 = vmatprep.subr.mxu0 0.0
    %2626 = vmatpush1.msra.mxu0 0.0
    %2627 = vmatprep.subr.mxu0 0.0
    %2628 = vmatpush1.msra.mxu0 0.0
    %2629 = vmatprep.subr.mxu0 0.0
    %2630 = vmatpush1.msra.mxu0 0.0
    %2631 = vmatprep.subr.mxu0 0.0
    %2632 = vmatpush1.msra.mxu0 0.0
    %2633 = vmatprep.subr.mxu0 0.0
    %2634 = vmatpush1.msra.mxu0 0.0
    %2635 = vmatprep.subr.mxu0 0.0
    %2636 = vmatpush1.msra.mxu0 0.0
    %2637 = vmatprep.subr.mxu0 0.0
    %2638 = vmatpush1.msra.mxu0 0.0
    %2639 = vmatprep.subr.mxu0 0.0
    %2640 = vmatpush1.msra.mxu0 0.0
    %2641 = vmatprep.subr.mxu0 0.0
    %2642 = vmatpush1.msra.mxu0 0.0
    %2643 = vmatprep.subr.mxu0 0.0
    %2644 = vmatpush1.msra.mxu0 0.0
    %2645 = vmatprep.subr.mxu0 0.0
    %2646 = vmatpush1.msra.mxu0 0.0
    %2647 = vmatprep.subr.mxu0 0.0
    %2648 = vmatpush1.msra.mxu0 %v59
    %2649 = vmatprep.subr.mxu0 0.0
    %2650 = vmatpush1.msra.mxu0 %v58
    %2651 = vmatprep.subr.mxu0 0.0
    %2652 = vmatpush1.msra.mxu0 %v57
    %2653 = vmatprep.subr.mxu0 0.0
    %2654 = vmatpush1.msra.mxu0 %v56
    %2655 = vmatprep.subr.mxu0 0.0
    %2656 = vmatpush2.msra.mxu0 0.0
    %2657 = vmatprep.subr.mxu0 0.0
    %2658 = vmatpush2.msra.mxu0 0.0
    %2659 = vmatprep.subr.mxu0 0.0
    %2660 = vmatpush2.msra.mxu0 0.0
    %2661 = vmatprep.subr.mxu0 0.0
    %2662 = vmatpush2.msra.mxu0 0.0
    %2663 = vmatprep.subr.mxu0 0.0
    %2664 = vmatpush2.msra.mxu0 0.0
    %2665 = vmatprep.subr.mxu0 0.0
    %2666 = vmatpush2.msra.mxu0 0.0
    %2667 = vmatprep.subr.mxu0 0.0
    %2668 = vmatpush2.msra.mxu0 0.0
    %2669 = vmatprep.subr.mxu0 0.0
    %2670 = vmatpush2.msra.mxu0 0.0
    %2671 = vmatprep.subr.mxu0 0.0
    %2672 = vmatpush2.msra.mxu0 0.0
    %2673 = vmatprep.subr.mxu0 0.0
    %2674 = vmatpush2.msra.mxu0 0.0
    %2675 = vmatprep.subr.mxu0 0.0
    %2676 = vmatpush2.msra.mxu0 0.0
    %2677 = vmatprep.subr.mxu0 0.0
    %2678 = vmatpush2.msra.mxu0 0.0
    %2679 = vmatprep.subr.mxu0 0.0
    %2680 = vmatpush2.msra.mxu0 0.0
    %2681 = vmatprep.subr.mxu0 0.0
    %2682 = vmatpush2.msra.mxu0 0.0
    %2683 = vmatprep.subr.mxu0 0.0
    %2684 = vmatpush2.msra.mxu0 0.0
    %2685 = vmatprep.subr.mxu0 0.0
    %2686 = vmatpush2.msra.mxu0 0.0
    %2687 = vmatprep.mubr.f32.mxu0 0.0
    %2688 = vmatmul.mubr.f32.gmra.mxu0 %v2621
    %v2689 = vpop.f32.mrf.mxu0
    %v2690 = vadd.f32 %v91, %v2689
    %v2691 = vpop.f32.mrf.mxu0
    %2692 = vdwg.mxu0
    %v2693 = vmax.f32 %v2690, 0.0
    %v2695 = vsel %vm201, %v2693, 0
    %2697 = vmatprep.subr.mxu0 0.0
    %2698 = vmatpush1.msra.mxu0 0.0
    %2699 = vmatprep.subr.mxu0 0.0
    %2700 = vmatpush1.msra.mxu0 0.0
    %2701 = vmatprep.subr.mxu0 0.0
    %2702 = vmatpush1.msra.mxu0 0.0
    %2703 = vmatprep.subr.mxu0 0.0
    %2704 = vmatpush1.msra.mxu0 0.0
    %2705 = vmatprep.subr.mxu0 0.0
    %2706 = vmatpush1.msra.mxu0 0.0
    %2707 = vmatprep.subr.mxu0 0.0
    %2708 = vmatpush1.msra.mxu0 0.0
    %2709 = vmatprep.subr.mxu0 0.0
    %2710 = vmatpush1.msra.mxu0 0.0
    %2711 = vmatprep.subr.mxu0 0.0
    %2712 = vmatpush1.msra.mxu0 0.0
    %2713 = vmatprep.subr.mxu0 0.0
    %2714 = vmatpush1.msra.mxu0 0.0
    %2715 = vmatprep.subr.mxu0 0.0
    %2716 = vmatpush1.msra.mxu0 0.0
    %2717 = vmatprep.subr.mxu0 0.0
    %2718 = vmatpush1.msra.mxu0 0.0
    %2719 = vmatprep.subr.mxu0 0.0
    %2720 = vmatpush1.msra.mxu0 0.0
    %2721 = vmatprep.subr.mxu0 %v79
    %2722 = vmatpush1.msra.mxu0 %v78
    %2723 = vmatprep.subr.mxu0 %v75
    %2724 = vmatpush1.msra.mxu0 %v74
    %2725 = vmatprep.subr.mxu0 %v71
    %2726 = vmatpush1.msra.mxu0 %v70
    %2727 = vmatprep.subr.mxu0 %v67
    %2728 = vmatpush1.msra.mxu0 %v66
    %2729 = vmatprep.subr.mxu0 0.0
    %2730 = vmatpush2.msra.mxu0 0.0
    %2731 = vmatprep.subr.mxu0 0.0
    %2732 = vmatpush2.msra.mxu0 0.0
    %2733 = vmatprep.subr.mxu0 0.0
    %2734 = vmatpush2.msra.mxu0 0.0
    %2735 = vmatprep.subr.mxu0 0.0
    %2736 = vmatpush2.msra.mxu0 0.0
    %2737 = vmatprep.subr.mxu0 0.0
    %2738 = vmatpush2.msra.mxu0 0.0
    %2739 = vmatprep.subr.mxu0 0.0
    %2740 = vmatpush2.msra.mxu0 0.0
    %2741 = vmatprep.subr.mxu0 0.0
    %2742 = vmatpush2.msra.mxu0 0.0
    %2743 = vmatprep.subr.mxu0 0.0
    %2744 = vmatpush2.msra.mxu0 0.0
    %2745 = vmatprep.subr.mxu0 0.0
    %2746 = vmatpush2.msra.mxu0 0.0
    %2747 = vmatprep.subr.mxu0 0.0
    %2748 = vmatpush2.msra.mxu0 0.0
    %2749 = vmatprep.subr.mxu0 0.0
    %2750 = vmatpush2.msra.mxu0 0.0
    %2751 = vmatprep.subr.mxu0 0.0
    %2752 = vmatpush2.msra.mxu0 0.0
    %2753 = vmatprep.subr.mxu0 0.0
    %2754 = vmatpush2.msra.mxu0 0.0
    %2755 = vmatprep.subr.mxu0 0.0
    %2756 = vmatpush2.msra.mxu0 0.0
    %2757 = vmatprep.subr.mxu0 0.0
    %2758 = vmatpush2.msra.mxu0 0.0
    %2759 = vmatprep.subr.mxu0 0.0
    %2760 = vmatpush2.msra.mxu0 0.0
    %2761 = vmatprep.mubr.f32.mxu0 0.0
    %2762 = vmatmul.mubr.f32.gmra.mxu0 %v2695
    %v2763 = vpop.f32.mrf.mxu0
    %v2764 = vadd.f32 %v96, %v2763
    %v2765 = vpop.f32.mrf.mxu0
    %v2766 = vadd.f32 %v100, %v2765
    %2767 = vdwg.mxu0
    %2768 = vmatprep.subr.mxu0 0.0
    %2769 = vmatpush1.msra.mxu0 0.0
    %2770 = vmatprep.subr.mxu0 0.0
    %2771 = vmatpush1.msra.mxu0 0.0
    %2772 = vmatprep.subr.mxu0 0.0
    %2773 = vmatpush1.msra.mxu0 0.0
    %2774 = vmatprep.subr.mxu0 0.0
    %2775 = vmatpush1.msra.mxu0 0.0
    %2776 = vmatprep.subr.mxu0 0.0
    %2777 = vmatpush1.msra.mxu0 0.0
    %2778 = vmatprep.subr.mxu0 0.0
    %2779 = vmatpush1.msra.mxu0 0.0
    %2780 = vmatprep.subr.mxu0 0.0
    %2781 = vmatpush1.msra.mxu0 0.0
    %2782 = vmatprep.subr.mxu0 0.0
    %2783 = vmatpush1.msra.mxu0 0.0
    %2784 = vmatprep.subr.mxu0 0.0
    %2785 = vmatpush1.msra.mxu0 0.0
    %2786 = vmatprep.subr.mxu0 0.0
    %2787 = vmatpush1.msra.mxu0 0.0
    %2788 = vmatprep.subr.mxu0 0.0
    %2789 = vmatpush1.msra.mxu0 0.0
    %2790 = vmatprep.subr.mxu0 0.0
    %2791 = vmatpush1.msra.mxu0 0.0
    %2792 = vmatprep.subr.mxu0 %v81
    %2793 = vmatpush1.msra.mxu0 %v80
    %2794 = vmatprep.subr.mxu0 %v77
    %2795 = vmatpush1.msra.mxu0 %v76
    %2796 = vmatprep.subr.mxu0 %v73
    %2797 = vmatpush1.msra.mxu0 %v72
    %2798 = vmatprep.subr.mxu0 %v69
    %2799 = vmatpush1.msra.mxu0 %v68
    %2800 = vmatprep.subr.mxu0 0.0
    %2801 = vmatpush2.msra.mxu0 0.0
    %2802 = vmatprep.subr.mxu0 0.0
    %2803 = vmatpush2.msra.mxu0 0.0
    %2804 = vmatprep.subr.mxu0 0.0
    %2805 = vmatpush2.msra.mxu0 0.0
    %2806 = vmatprep.subr.mxu0 0.0
    %2807 = vmatpush2.msra.mxu0 0.0
    %2808 = vmatprep.subr.mxu0 0.0
    %2809 = vmatpush2.msra.mxu0 0.0
    %2810 = vmatprep.subr.mxu0 0.0
    %2811 = vmatpush2.msra.mxu0 0.0
    %2812 = vmatprep.subr.mxu0 0.0
    %2813 = vmatpush2.msra.mxu0 0.0
    %2814 = vmatprep.subr.mxu0 0.0
    %2815 = vmatpush2.msra.mxu0 0.0
    %2816 = vmatprep.subr.mxu0 0.0
    %2817 = vmatpush2.msra.mxu0 0.0
    %2818 = vmatprep.subr.mxu0 0.0
    %2819 = vmatpush2.msra.mxu0 0.0
    %2820 = vmatprep.subr.mxu0 0.0
    %2821 = vmatpush2.msra.mxu0 0.0
    %2822 = vmatprep.subr.mxu0 0.0
    %2823 = vmatpush2.msra.mxu0 0.0
    %2824 = vmatprep.subr.mxu0 0.0
    %2825 = vmatpush2.msra.mxu0 0.0
    %2826 = vmatprep.subr.mxu0 0.0
    %2827 = vmatpush2.msra.mxu0 0.0
    %2828 = vmatprep.subr.mxu0 0.0
    %2829 = vmatpush2.msra.mxu0 0.0
    %2830 = vmatprep.subr.mxu0 0.0
    %2831 = vmatpush2.msra.mxu0 0.0
    %2832 = vmatprep.mubr.f32.mxu0 0.0
    %2833 = vmatmul.mubr.f32.gmra.mxu0 %v2695
    %v2834 = vpop.f32.mrf.mxu0
    %v2835 = vadd.f32 %v104, %v2834
    %v2836 = vpop.f32.mrf.mxu0
    %v2837 = vadd.f32 %v108, %v2836
    %2838 = vdwg.mxu0
    %v2839 = vtanh.pop %v2764
    %v2840 = vtanh.pop %v2766
    %v2841 = vtanh.pop %v2835
    %v2842 = vtanh.pop %v2837
    %v2843 = vmul.f32 %v2839, %v1910
    %v2844 = vmul.f32 %v2840, %v1918
    %v2845 = vmul.f32 %v2841, %v1917
    %v2846 = vmul.f32 %v2842, %v1919
    %v2847 = vmul.f32 %v2548, -0.001
    %v2848 = vmul.f32 %v2847, %v1607
    %v2849 = vadd.f32 %v2848, %v2843
    %v2850 = vadd.f32 %v2849, %v2844
    %v2851 = vadd.f32 %v2850, %v2845
    %v2852 = vadd.f32 %v2851, %v2846
    %v2853 = vadd.f32 %v2239, %v2545
    %v2854 = vmul.f32 %v2853, 3.0
    %v2855 = vadd.f32 %v1933, %v2854
    %v2856 = vadd.f32 %v2855, %v2852
    %v2857 = vmul.f32 %v2856, 0.125
    %v2858 = vadd.f32 %v1602, %v2857
    %s2859 = scalar_lea.vmem [#allocation5], 4
    %2860 = vst [vmem:[%s2859] sm:$0x3] %v2858
    %s2861 = scalar_lea.vmem %s0, 20
    %v2862 = vld [vmem:[%s2861] sm:$0xff]
    %v2863 = vld [vmem:[%s2861 + $0x8] sm:$0x3]
    %2864 = vmatprep.subr.mxu0 0.0
    %2865 = vmatpush1.msra.mxu0 %v54
    %2866 = vmatprep.subr.mxu0 0.0
    %2867 = vmatpush1.msra.mxu0 %v53
    %2868 = vmatprep.subr.mxu0 0.0
    %2869 = vmatpush1.msra.mxu0 %v52
    %2870 = vmatprep.subr.mxu0 0.0
    %2871 = vmatpush1.msra.mxu0 %v51
    %2872 = vmatprep.subr.mxu0 0.0
    %2873 = vmatpush1.msra.mxu0 %v50
    %2874 = vmatprep.subr.mxu0 0.0
    %2875 = vmatpush1.msra.mxu0 %v49
    %2876 = vmatprep.subr.mxu0 0.0
    %2877 = vmatpush1.msra.mxu0 %v48
    %2878 = vmatprep.subr.mxu0 0.0
    %2879 = vmatpush1.msra.mxu0 %v47
    %2880 = vmatprep.subr.mxu0 0.0
    %2881 = vmatpush1.msra.mxu0 %v46
    %2882 = vmatprep.subr.mxu0 0.0
    %2883 = vmatpush1.msra.mxu0 %v45
    %2884 = vmatprep.subr.mxu0 0.0
    %2885 = vmatpush1.msra.mxu0 %v44
    %2886 = vmatprep.subr.mxu0 0.0
    %2887 = vmatpush1.msra.mxu0 %v43
    %2888 = vmatprep.subr.mxu0 0.0
    %2889 = vmatpush1.msra.mxu0 %v42
    %2890 = vmatprep.subr.mxu0 0.0
    %2891 = vmatpush1.msra.mxu0 %v41
    %2892 = vmatprep.subr.mxu0 0.0
    %2893 = vmatpush1.msra.mxu0 %v40
    %2894 = vmatprep.subr.mxu0 0.0
    %2895 = vmatpush1.msra.mxu0 %v39
    %2896 = vmatprep.subr.mxu0 0.0
    %2897 = vmatpush2.msra.mxu0 0.0
    %2898 = vmatprep.subr.mxu0 0.0
    %2899 = vmatpush2.msra.mxu0 0.0
    %2900 = vmatprep.subr.mxu0 0.0
    %2901 = vmatpush2.msra.mxu0 0.0
    %2902 = vmatprep.subr.mxu0 0.0
    %2903 = vmatpush2.msra.mxu0 0.0
    %2904 = vmatprep.subr.mxu0 0.0
    %2905 = vmatpush2.msra.mxu0 0.0
    %2906 = vmatprep.subr.mxu0 0.0
    %2907 = vmatpush2.msra.mxu0 0.0
    %2908 = vmatprep.subr.mxu0 0.0
    %2909 = vmatpush2.msra.mxu0 0.0
    %2910 = vmatprep.subr.mxu0 0.0
    %2911 = vmatpush2.msra.mxu0 0.0
    %2912 = vmatprep.subr.mxu0 0.0
    %2913 = vmatpush2.msra.mxu0 0.0
    %2914 = vmatprep.subr.mxu0 0.0
    %2915 = vmatpush2.msra.mxu0 0.0
    %2916 = vmatprep.subr.mxu0 0.0
    %2917 = vmatpush2.msra.mxu0 0.0
    %2918 = vmatprep.subr.mxu0 0.0
    %2919 = vmatpush2.msra.mxu0 0.0
    %2920 = vmatprep.subr.mxu0 0.0
    %2921 = vmatpush2.msra.mxu0 0.0
    %2922 = vmatprep.subr.mxu0 0.0
    %2923 = vmatpush2.msra.mxu0 0.0
    %2924 = vmatprep.subr.mxu0 0.0
    %2925 = vmatpush2.msra.mxu0 0.0
    %2926 = vmatprep.subr.mxu0 0.0
    %2927 = vmatpush2.msra.mxu0 0.0
    %2928 = vmatprep.mubr.f32.mxu0 0.0
    %2929 = vmatmul.mubr.f32.gmra.mxu0 %v2858
    %v2930 = vpop.f32.mrf.mxu0
    %v2931 = vadd.f32 %v87, %v2930
    %v2932 = vpop.f32.mrf.mxu0
    %2933 = vdwg.mxu0
    %v2934 = vmax.f32 %v2931, 0.0
    %v2936 = vsel %vm201, %v2934, 0
    %2938 = vmatprep.subr.mxu0 0.0
    %2939 = vmatpush1.msra.mxu0 0.0
    %2940 = vmatprep.subr.mxu0 0.0
    %2941 = vmatpush1.msra.mxu0 0.0
    %2942 = vmatprep.subr.mxu0 0.0
    %2943 = vmatpush1.msra.mxu0 0.0
    %2944 = vmatprep.subr.mxu0 0.0
    %2945 = vmatpush1.msra.mxu0 0.0
    %2946 = vmatprep.subr.mxu0 0.0
    %2947 = vmatpush1.msra.mxu0 0.0
    %2948 = vmatprep.subr.mxu0 0.0
    %2949 = vmatpush1.msra.mxu0 0.0
    %2950 = vmatprep.subr.mxu0 0.0
    %2951 = vmatpush1.msra.mxu0 0.0
    %2952 = vmatprep.subr.mxu0 0.0
    %2953 = vmatpush1.msra.mxu0 0.0
    %2954 = vmatprep.subr.mxu0 0.0
    %2955 = vmatpush1.msra.mxu0 0.0
    %2956 = vmatprep.subr.mxu0 0.0
    %2957 = vmatpush1.msra.mxu0 0.0
    %2958 = vmatprep.subr.mxu0 0.0
    %2959 = vmatpush1.msra.mxu0 0.0
    %2960 = vmatprep.subr.mxu0 0.0
    %2961 = vmatpush1.msra.mxu0 0.0
    %2962 = vmatprep.subr.mxu0 0.0
    %2963 = vmatpush1.msra.mxu0 %v59
    %2964 = vmatprep.subr.mxu0 0.0
    %2965 = vmatpush1.msra.mxu0 %v58
    %2966 = vmatprep.subr.mxu0 0.0
    %2967 = vmatpush1.msra.mxu0 %v57
    %2968 = vmatprep.subr.mxu0 0.0
    %2969 = vmatpush1.msra.mxu0 %v56
    %2970 = vmatprep.subr.mxu0 0.0
    %2971 = vmatpush2.msra.mxu0 0.0
    %2972 = vmatprep.subr.mxu0 0.0
    %2973 = vmatpush2.msra.mxu0 0.0
    %2974 = vmatprep.subr.mxu0 0.0
    %2975 = vmatpush2.msra.mxu0 0.0
    %2976 = vmatprep.subr.mxu0 0.0
    %2977 = vmatpush2.msra.mxu0 0.0
    %2978 = vmatprep.subr.mxu0 0.0
    %2979 = vmatpush2.msra.mxu0 0.0
    %2980 = vmatprep.subr.mxu0 0.0
    %2981 = vmatpush2.msra.mxu0 0.0
    %2982 = vmatprep.subr.mxu0 0.0
    %2983 = vmatpush2.msra.mxu0 0.0
    %2984 = vmatprep.subr.mxu0 0.0
    %2985 = vmatpush2.msra.mxu0 0.0
    %2986 = vmatprep.subr.mxu0 0.0
    %2987 = vmatpush2.msra.mxu0 0.0
    %2988 = vmatprep.subr.mxu0 0.0
    %2989 = vmatpush2.msra.mxu0 0.0
    %2990 = vmatprep.subr.mxu0 0.0
    %2991 = vmatpush2.msra.mxu0 0.0
    %2992 = vmatprep.subr.mxu0 0.0
    %2993 = vmatpush2.msra.mxu0 0.0
    %2994 = vmatprep.subr.mxu0 0.0
    %2995 = vmatpush2.msra.mxu0 0.0
    %2996 = vmatprep.subr.mxu0 0.0
    %2997 = vmatpush2.msra.mxu0 0.0
    %2998 = vmatprep.subr.mxu0 0.0
    %2999 = vmatpush2.msra.mxu0 0.0
    %3000 = vmatprep.subr.mxu0 0.0
    %3001 = vmatpush2.msra.mxu0 0.0
    %3002 = vmatprep.mubr.f32.mxu0 0.0
    %3003 = vmatmul.mubr.f32.gmra.mxu0 %v2936
    %v3004 = vpop.f32.mrf.mxu0
    %v3005 = vadd.f32 %v91, %v3004
    %v3006 = vpop.f32.mrf.mxu0
    %3007 = vdwg.mxu0
    %v3008 = vmax.f32 %v3005, 0.0
    %v3010 = vsel %vm201, %v3008, 0
    %3012 = vmatprep.subr.mxu0 0.0
    %3013 = vmatpush1.msra.mxu0 0.0
    %3014 = vmatprep.subr.mxu0 0.0
    %3015 = vmatpush1.msra.mxu0 0.0
    %3016 = vmatprep.subr.mxu0 0.0
    %3017 = vmatpush1.msra.mxu0 0.0
    %3018 = vmatprep.subr.mxu0 0.0
    %3019 = vmatpush1.msra.mxu0 0.0
    %3020 = vmatprep.subr.mxu0 0.0
    %3021 = vmatpush1.msra.mxu0 0.0
    %3022 = vmatprep.subr.mxu0 0.0
    %3023 = vmatpush1.msra.mxu0 0.0
    %3024 = vmatprep.subr.mxu0 0.0
    %3025 = vmatpush1.msra.mxu0 0.0
    %3026 = vmatprep.subr.mxu0 0.0
    %3027 = vmatpush1.msra.mxu0 0.0
    %3028 = vmatprep.subr.mxu0 0.0
    %3029 = vmatpush1.msra.mxu0 0.0
    %3030 = vmatprep.subr.mxu0 0.0
    %3031 = vmatpush1.msra.mxu0 0.0
    %3032 = vmatprep.subr.mxu0 0.0
    %3033 = vmatpush1.msra.mxu0 0.0
    %3034 = vmatprep.subr.mxu0 0.0
    %3035 = vmatpush1.msra.mxu0 0.0
    %3036 = vmatprep.subr.mxu0 %v79
    %3037 = vmatpush1.msra.mxu0 %v78
    %3038 = vmatprep.subr.mxu0 %v75
    %3039 = vmatpush1.msra.mxu0 %v74
    %3040 = vmatprep.subr.mxu0 %v71
    %3041 = vmatpush1.msra.mxu0 %v70
    %3042 = vmatprep.subr.mxu0 %v67
    %3043 = vmatpush1.msra.mxu0 %v66
    %3044 = vmatprep.subr.mxu0 0.0
    %3045 = vmatpush2.msra.mxu0 0.0
    %3046 = vmatprep.subr.mxu0 0.0
    %3047 = vmatpush2.msra.mxu0 0.0
    %3048 = vmatprep.subr.mxu0 0.0
    %3049 = vmatpush2.msra.mxu0 0.0
    %3050 = vmatprep.subr.mxu0 0.0
    %3051 = vmatpush2.msra.mxu0 0.0
    %3052 = vmatprep.subr.mxu0 0.0
    %3053 = vmatpush2.msra.mxu0 0.0
    %3054 = vmatprep.subr.mxu0 0.0
    %3055 = vmatpush2.msra.mxu0 0.0
    %3056 = vmatprep.subr.mxu0 0.0
    %3057 = vmatpush2.msra.mxu0 0.0
    %3058 = vmatprep.subr.mxu0 0.0
    %3059 = vmatpush2.msra.mxu0 0.0
    %3060 = vmatprep.subr.mxu0 0.0
    %3061 = vmatpush2.msra.mxu0 0.0
    %3062 = vmatprep.subr.mxu0 0.0
    %3063 = vmatpush2.msra.mxu0 0.0
    %3064 = vmatprep.subr.mxu0 0.0
    %3065 = vmatpush2.msra.mxu0 0.0
    %3066 = vmatprep.subr.mxu0 0.0
    %3067 = vmatpush2.msra.mxu0 0.0
    %3068 = vmatprep.subr.mxu0 0.0
    %3069 = vmatpush2.msra.mxu0 0.0
    %3070 = vmatprep.subr.mxu0 0.0
    %3071 = vmatpush2.msra.mxu0 0.0
    %3072 = vmatprep.subr.mxu0 0.0
    %3073 = vmatpush2.msra.mxu0 0.0
    %3074 = vmatprep.subr.mxu0 0.0
    %3075 = vmatpush2.msra.mxu0 0.0
    %3076 = vmatprep.mubr.f32.mxu0 0.0
    %3077 = vmatmul.mubr.f32.gmra.mxu0 %v3010
    %v3078 = vpop.f32.mrf.mxu0
    %v3079 = vadd.f32 %v96, %v3078
    %v3080 = vpop.f32.mrf.mxu0
    %v3081 = vadd.f32 %v100, %v3080
    %3082 = vdwg.mxu0
    %3083 = vmatprep.subr.mxu0 0.0
    %3084 = vmatpush1.msra.mxu0 0.0
    %3085 = vmatprep.subr.mxu0 0.0
    %3086 = vmatpush1.msra.mxu0 0.0
    %3087 = vmatprep.subr.mxu0 0.0
    %3088 = vmatpush1.msra.mxu0 0.0
    %3089 = vmatprep.subr.mxu0 0.0
    %3090 = vmatpush1.msra.mxu0 0.0
    %3091 = vmatprep.subr.mxu0 0.0
    %3092 = vmatpush1.msra.mxu0 0.0
    %3093 = vmatprep.subr.mxu0 0.0
    %3094 = vmatpush1.msra.mxu0 0.0
    %3095 = vmatprep.subr.mxu0 0.0
    %3096 = vmatpush1.msra.mxu0 0.0
    %3097 = vmatprep.subr.mxu0 0.0
    %3098 = vmatpush1.msra.mxu0 0.0
    %3099 = vmatprep.subr.mxu0 0.0
    %3100 = vmatpush1.msra.mxu0 0.0
    %3101 = vmatprep.subr.mxu0 0.0
    %3102 = vmatpush1.msra.mxu0 0.0
    %3103 = vmatprep.subr.mxu0 0.0
    %3104 = vmatpush1.msra.mxu0 0.0
    %3105 = vmatprep.subr.mxu0 0.0
    %3106 = vmatpush1.msra.mxu0 0.0
    %3107 = vmatprep.subr.mxu0 %v81
    %3108 = vmatpush1.msra.mxu0 %v80
    %3109 = vmatprep.subr.mxu0 %v77
    %3110 = vmatpush1.msra.mxu0 %v76
    %3111 = vmatprep.subr.mxu0 %v73
    %3112 = vmatpush1.msra.mxu0 %v72
    %3113 = vmatprep.subr.mxu0 %v69
    %3114 = vmatpush1.msra.mxu0 %v68
    %3115 = vmatprep.subr.mxu0 0.0
    %3116 = vmatpush2.msra.mxu0 0.0
    %3117 = vmatprep.subr.mxu0 0.0
    %3118 = vmatpush2.msra.mxu0 0.0
    %3119 = vmatprep.subr.mxu0 0.0
    %3120 = vmatpush2.msra.mxu0 0.0
    %3121 = vmatprep.subr.mxu0 0.0
    %3122 = vmatpush2.msra.mxu0 0.0
    %3123 = vmatprep.subr.mxu0 0.0
    %3124 = vmatpush2.msra.mxu0 0.0
    %3125 = vmatprep.subr.mxu0 0.0
    %3126 = vmatpush2.msra.mxu0 0.0
    %3127 = vmatprep.subr.mxu0 0.0
    %3128 = vmatpush2.msra.mxu0 0.0
    %3129 = vmatprep.subr.mxu0 0.0
    %3130 = vmatpush2.msra.mxu0 0.0
    %3131 = vmatprep.subr.mxu0 0.0
    %3132 = vmatpush2.msra.mxu0 0.0
    %3133 = vmatprep.subr.mxu0 0.0
    %3134 = vmatpush2.msra.mxu0 0.0
    %3135 = vmatprep.subr.mxu0 0.0
    %3136 = vmatpush2.msra.mxu0 0.0
    %3137 = vmatprep.subr.mxu0 0.0
    %3138 = vmatpush2.msra.mxu0 0.0
    %3139 = vmatprep.subr.mxu0 0.0
    %3140 = vmatpush2.msra.mxu0 0.0
    %3141 = vmatprep.subr.mxu0 0.0
    %3142 = vmatpush2.msra.mxu0 0.0
    %3143 = vmatprep.subr.mxu0 0.0
    %3144 = vmatpush2.msra.mxu0 0.0
    %3145 = vmatprep.subr.mxu0 0.0
    %3146 = vmatpush2.msra.mxu0 0.0
    %3147 = vmatprep.mubr.f32.mxu0 0.0
    %3148 = vmatmul.mubr.f32.gmra.mxu0 %v3010
    %v3149 = vpop.f32.mrf.mxu0
    %v3150 = vadd.f32 %v104, %v3149
    %v3151 = vpop.f32.mrf.mxu0
    %v3152 = vadd.f32 %v108, %v3151
    %3153 = vdwg.mxu0
    %v3154 = vtanh.pop %v3079
    %v3155 = vtanh.pop %v3081
    %v3156 = vtanh.pop %v3150
    %v3157 = vtanh.pop %v3152
    %v3159 = vcombine.high %v2862, %v2862
    %v3161 = vunpack.c.l.s4 1983009808
    %v3162 = vunpack.c.0.s8 %v3161
    %v3163 = vlaneseq
    %v3164 = vshrl.u32 %v3163, 7
    %v3165 = vsub.s32 %v3162, %v3164
    %v3166 = vrot.slane %v2862, %v3165
    %v3168 = vunpack.c.l.s4 1983009808
    %v3169 = vunpack.c.0.s8 %v3168
    %v3170 = vlaneseq
    %v3171 = vshrl.u32 %v3170, 7
    %v3172 = vsub.s32 %v3169, %v3171
    %v3173 = vrot.slane %v3159, %v3172
    %v3174 = vcombine.high %v3166, %v3166
    %v3175 = vcombine.high %v3173, %v3173
    %v3180 = vmul.f32 %v3154, %v3166
    %v3181 = vmul.f32 %v3155, %v3174
    %v3182 = vmul.f32 %v3156, %v3173
    %v3183 = vmul.f32 %v3157, %v3175
    %v3184 = vmul.f32 %v2858, -0.001
    %v3185 = vmul.f32 %v3184, %v2863
    %v3186 = vadd.f32 %v3185, %v3180
    %v3187 = vadd.f32 %v3186, %v3181
    %v3188 = vadd.f32 %v3187, %v3182
    %v3189 = vadd.f32 %v3188, %v3183
    %v3190 = vmul.f32 %v3189, 0.33333334
    %v3191 = vadd.f32 %v2858, %v3190
    %3192 = vmatprep.subr.mxu0 0.0
    %3193 = vmatpush1.msra.mxu0 %v54
    %3194 = vmatprep.subr.mxu0 0.0
    %3195 = vmatpush1.msra.mxu0 %v53
    %3196 = vmatprep.subr.mxu0 0.0
    %3197 = vmatpush1.msra.mxu0 %v52
    %3198 = vmatprep.subr.mxu0 0.0
    %3199 = vmatpush1.msra.mxu0 %v51
    %3200 = vmatprep.subr.mxu0 0.0
    %3201 = vmatpush1.msra.mxu0 %v50
    %3202 = vmatprep.subr.mxu0 0.0
    %3203 = vmatpush1.msra.mxu0 %v49
    %3204 = vmatprep.subr.mxu0 0.0
    %3205 = vmatpush1.msra.mxu0 %v48
    %3206 = vmatprep.subr.mxu0 0.0
    %3207 = vmatpush1.msra.mxu0 %v47
    %3208 = vmatprep.subr.mxu0 0.0
    %3209 = vmatpush1.msra.mxu0 %v46
    %3210 = vmatprep.subr.mxu0 0.0
    %3211 = vmatpush1.msra.mxu0 %v45
    %3212 = vmatprep.subr.mxu0 0.0
    %3213 = vmatpush1.msra.mxu0 %v44
    %3214 = vmatprep.subr.mxu0 0.0
    %3215 = vmatpush1.msra.mxu0 %v43
    %3216 = vmatprep.subr.mxu0 0.0
    %3217 = vmatpush1.msra.mxu0 %v42
    %3218 = vmatprep.subr.mxu0 0.0
    %3219 = vmatpush1.msra.mxu0 %v41
    %3220 = vmatprep.subr.mxu0 0.0
    %3221 = vmatpush1.msra.mxu0 %v40
    %3222 = vmatprep.subr.mxu0 0.0
    %3223 = vmatpush1.msra.mxu0 %v39
    %3224 = vmatprep.subr.mxu0 0.0
    %3225 = vmatpush2.msra.mxu0 0.0
    %3226 = vmatprep.subr.mxu0 0.0
    %3227 = vmatpush2.msra.mxu0 0.0
    %3228 = vmatprep.subr.mxu0 0.0
    %3229 = vmatpush2.msra.mxu0 0.0
    %3230 = vmatprep.subr.mxu0 0.0
    %3231 = vmatpush2.msra.mxu0 0.0
    %3232 = vmatprep.subr.mxu0 0.0
    %3233 = vmatpush2.msra.mxu0 0.0
    %3234 = vmatprep.subr.mxu0 0.0
    %3235 = vmatpush2.msra.mxu0 0.0
    %3236 = vmatprep.subr.mxu0 0.0
    %3237 = vmatpush2.msra.mxu0 0.0
    %3238 = vmatprep.subr.mxu0 0.0
    %3239 = vmatpush2.msra.mxu0 0.0
    %3240 = vmatprep.subr.mxu0 0.0
    %3241 = vmatpush2.msra.mxu0 0.0
    %3242 = vmatprep.subr.mxu0 0.0
    %3243 = vmatpush2.msra.mxu0 0.0
    %3244 = vmatprep.subr.mxu0 0.0
    %3245 = vmatpush2.msra.mxu0 0.0
    %3246 = vmatprep.subr.mxu0 0.0
    %3247 = vmatpush2.msra.mxu0 0.0
    %3248 = vmatprep.subr.mxu0 0.0
    %3249 = vmatpush2.msra.mxu0 0.0
    %3250 = vmatprep.subr.mxu0 0.0
    %3251 = vmatpush2.msra.mxu0 0.0
    %3252 = vmatprep.subr.mxu0 0.0
    %3253 = vmatpush2.msra.mxu0 0.0
    %3254 = vmatprep.subr.mxu0 0.0
    %3255 = vmatpush2.msra.mxu0 0.0
    %3256 = vmatprep.mubr.f32.mxu0 0.0
    %3257 = vmatmul.mubr.f32.gmra.mxu0 %v3191
    %v3258 = vpop.f32.mrf.mxu0
    %v3259 = vadd.f32 %v87, %v3258
    %v3260 = vpop.f32.mrf.mxu0
    %3261 = vdwg.mxu0
    %v3262 = vmax.f32 %v3259, 0.0
    %v3264 = vsel %vm201, %v3262, 0
    %3266 = vmatprep.subr.mxu0 0.0
    %3267 = vmatpush1.msra.mxu0 0.0
    %3268 = vmatprep.subr.mxu0 0.0
    %3269 = vmatpush1.msra.mxu0 0.0
    %3270 = vmatprep.subr.mxu0 0.0
    %3271 = vmatpush1.msra.mxu0 0.0
    %3272 = vmatprep.subr.mxu0 0.0
    %3273 = vmatpush1.msra.mxu0 0.0
    %3274 = vmatprep.subr.mxu0 0.0
    %3275 = vmatpush1.msra.mxu0 0.0
    %3276 = vmatprep.subr.mxu0 0.0
    %3277 = vmatpush1.msra.mxu0 0.0
    %3278 = vmatprep.subr.mxu0 0.0
    %3279 = vmatpush1.msra.mxu0 0.0
    %3280 = vmatprep.subr.mxu0 0.0
    %3281 = vmatpush1.msra.mxu0 0.0
    %3282 = vmatprep.subr.mxu0 0.0
    %3283 = vmatpush1.msra.mxu0 0.0
    %3284 = vmatprep.subr.mxu0 0.0
    %3285 = vmatpush1.msra.mxu0 0.0
    %3286 = vmatprep.subr.mxu0 0.0
    %3287 = vmatpush1.msra.mxu0 0.0
    %3288 = vmatprep.subr.mxu0 0.0
    %3289 = vmatpush1.msra.mxu0 0.0
    %3290 = vmatprep.subr.mxu0 0.0
    %3291 = vmatpush1.msra.mxu0 %v59
    %3292 = vmatprep.subr.mxu0 0.0
    %3293 = vmatpush1.msra.mxu0 %v58
    %3294 = vmatprep.subr.mxu0 0.0
    %3295 = vmatpush1.msra.mxu0 %v57
    %3296 = vmatprep.subr.mxu0 0.0
    %3297 = vmatpush1.msra.mxu0 %v56
    %3298 = vmatprep.subr.mxu0 0.0
    %3299 = vmatpush2.msra.mxu0 0.0
    %3300 = vmatprep.subr.mxu0 0.0
    %3301 = vmatpush2.msra.mxu0 0.0
    %3302 = vmatprep.subr.mxu0 0.0
    %3303 = vmatpush2.msra.mxu0 0.0
    %3304 = vmatprep.subr.mxu0 0.0
    %3305 = vmatpush2.msra.mxu0 0.0
    %3306 = vmatprep.subr.mxu0 0.0
    %3307 = vmatpush2.msra.mxu0 0.0
    %3308 = vmatprep.subr.mxu0 0.0
    %3309 = vmatpush2.msra.mxu0 0.0
    %3310 = vmatprep.subr.mxu0 0.0
    %3311 = vmatpush2.msra.mxu0 0.0
    %3312 = vmatprep.subr.mxu0 0.0
    %3313 = vmatpush2.msra.mxu0 0.0
    %3314 = vmatprep.subr.mxu0 0.0
    %3315 = vmatpush2.msra.mxu0 0.0
    %3316 = vmatprep.subr.mxu0 0.0
    %3317 = vmatpush2.msra.mxu0 0.0
    %3318 = vmatprep.subr.mxu0 0.0
    %3319 = vmatpush2.msra.mxu0 0.0
    %3320 = vmatprep.subr.mxu0 0.0
    %3321 = vmatpush2.msra.mxu0 0.0
    %3322 = vmatprep.subr.mxu0 0.0
    %3323 = vmatpush2.msra.mxu0 0.0
    %3324 = vmatprep.subr.mxu0 0.0
    %3325 = vmatpush2.msra.mxu0 0.0
    %3326 = vmatprep.subr.mxu0 0.0
    %3327 = vmatpush2.msra.mxu0 0.0
    %3328 = vmatprep.subr.mxu0 0.0
    %3329 = vmatpush2.msra.mxu0 0.0
    %3330 = vmatprep.mubr.f32.mxu0 0.0
    %3331 = vmatmul.mubr.f32.gmra.mxu0 %v3264
    %v3332 = vpop.f32.mrf.mxu0
    %v3333 = vadd.f32 %v91, %v3332
    %v3334 = vpop.f32.mrf.mxu0
    %3335 = vdwg.mxu0
    %v3336 = vmax.f32 %v3333, 0.0
    %v3338 = vsel %vm201, %v3336, 0
    %3340 = vmatprep.subr.mxu0 0.0
    %3341 = vmatpush1.msra.mxu0 0.0
    %3342 = vmatprep.subr.mxu0 0.0
    %3343 = vmatpush1.msra.mxu0 0.0
    %3344 = vmatprep.subr.mxu0 0.0
    %3345 = vmatpush1.msra.mxu0 0.0
    %3346 = vmatprep.subr.mxu0 0.0
    %3347 = vmatpush1.msra.mxu0 0.0
    %3348 = vmatprep.subr.mxu0 0.0
    %3349 = vmatpush1.msra.mxu0 0.0
    %3350 = vmatprep.subr.mxu0 0.0
    %3351 = vmatpush1.msra.mxu0 0.0
    %3352 = vmatprep.subr.mxu0 0.0
    %3353 = vmatpush1.msra.mxu0 0.0
    %3354 = vmatprep.subr.mxu0 0.0
    %3355 = vmatpush1.msra.mxu0 0.0
    %3356 = vmatprep.subr.mxu0 0.0
    %3357 = vmatpush1.msra.mxu0 0.0
    %3358 = vmatprep.subr.mxu0 0.0
    %3359 = vmatpush1.msra.mxu0 0.0
    %3360 = vmatprep.subr.mxu0 0.0
    %3361 = vmatpush1.msra.mxu0 0.0
    %3362 = vmatprep.subr.mxu0 0.0
    %3363 = vmatpush1.msra.mxu0 0.0
    %3364 = vmatprep.subr.mxu0 %v79
    %3365 = vmatpush1.msra.mxu0 %v78
    %3366 = vmatprep.subr.mxu0 %v75
    %3367 = vmatpush1.msra.mxu0 %v74
    %3368 = vmatprep.subr.mxu0 %v71
    %3369 = vmatpush1.msra.mxu0 %v70
    %3370 = vmatprep.subr.mxu0 %v67
    %3371 = vmatpush1.msra.mxu0 %v66
    %3372 = vmatprep.subr.mxu0 0.0
    %3373 = vmatpush2.msra.mxu0 0.0
    %3374 = vmatprep.subr.mxu0 0.0
    %3375 = vmatpush2.msra.mxu0 0.0
    %3376 = vmatprep.subr.mxu0 0.0
    %3377 = vmatpush2.msra.mxu0 0.0
    %3378 = vmatprep.subr.mxu0 0.0
    %3379 = vmatpush2.msra.mxu0 0.0
    %3380 = vmatprep.subr.mxu0 0.0
    %3381 = vmatpush2.msra.mxu0 0.0
    %3382 = vmatprep.subr.mxu0 0.0
    %3383 = vmatpush2.msra.mxu0 0.0
    %3384 = vmatprep.subr.mxu0 0.0
    %3385 = vmatpush2.msra.mxu0 0.0
    %3386 = vmatprep.subr.mxu0 0.0
    %3387 = vmatpush2.msra.mxu0 0.0
    %3388 = vmatprep.subr.mxu0 0.0
    %3389 = vmatpush2.msra.mxu0 0.0
    %3390 = vmatprep.subr.mxu0 0.0
    %3391 = vmatpush2.msra.mxu0 0.0
    %3392 = vmatprep.subr.mxu0 0.0
    %3393 = vmatpush2.msra.mxu0 0.0
    %3394 = vmatprep.subr.mxu0 0.0
    %3395 = vmatpush2.msra.mxu0 0.0
    %3396 = vmatprep.subr.mxu0 0.0
    %3397 = vmatpush2.msra.mxu0 0.0
    %3398 = vmatprep.subr.mxu0 0.0
    %3399 = vmatpush2.msra.mxu0 0.0
    %3400 = vmatprep.subr.mxu0 0.0
    %3401 = vmatpush2.msra.mxu0 0.0
    %3402 = vmatprep.subr.mxu0 0.0
    %3403 = vmatpush2.msra.mxu0 0.0
    %3404 = vmatprep.mubr.f32.mxu0 0.0
    %3405 = vmatmul.mubr.f32.gmra.mxu0 %v3338
    %v3406 = vpop.f32.mrf.mxu0
    %v3407 = vadd.f32 %v96, %v3406
    %v3408 = vpop.f32.mrf.mxu0
    %v3409 = vadd.f32 %v100, %v3408
    %3410 = vdwg.mxu0
    %3411 = vmatprep.subr.mxu0 0.0
    %3412 = vmatpush1.msra.mxu0 0.0
    %3413 = vmatprep.subr.mxu0 0.0
    %3414 = vmatpush1.msra.mxu0 0.0
    %3415 = vmatprep.subr.mxu0 0.0
    %3416 = vmatpush1.msra.mxu0 0.0
    %3417 = vmatprep.subr.mxu0 0.0
    %3418 = vmatpush1.msra.mxu0 0.0
    %3419 = vmatprep.subr.mxu0 0.0
    %3420 = vmatpush1.msra.mxu0 0.0
    %3421 = vmatprep.subr.mxu0 0.0
    %3422 = vmatpush1.msra.mxu0 0.0
    %3423 = vmatprep.subr.mxu0 0.0
    %3424 = vmatpush1.msra.mxu0 0.0
    %3425 = vmatprep.subr.mxu0 0.0
    %3426 = vmatpush1.msra.mxu0 0.0
    %3427 = vmatprep.subr.mxu0 0.0
    %3428 = vmatpush1.msra.mxu0 0.0
    %3429 = vmatprep.subr.mxu0 0.0
    %3430 = vmatpush1.msra.mxu0 0.0
    %3431 = vmatprep.subr.mxu0 0.0
    %3432 = vmatpush1.msra.mxu0 0.0
    %3433 = vmatprep.subr.mxu0 0.0
    %3434 = vmatpush1.msra.mxu0 0.0
    %3435 = vmatprep.subr.mxu0 %v81
    %3436 = vmatpush1.msra.mxu0 %v80
    %3437 = vmatprep.subr.mxu0 %v77
    %3438 = vmatpush1.msra.mxu0 %v76
    %3439 = vmatprep.subr.mxu0 %v73
    %3440 = vmatpush1.msra.mxu0 %v72
    %3441 = vmatprep.subr.mxu0 %v69
    %3442 = vmatpush1.msra.mxu0 %v68
    %3443 = vmatprep.subr.mxu0 0.0
    %3444 = vmatpush2.msra.mxu0 0.0
    %3445 = vmatprep.subr.mxu0 0.0
    %3446 = vmatpush2.msra.mxu0 0.0
    %3447 = vmatprep.subr.mxu0 0.0
    %3448 = vmatpush2.msra.mxu0 0.0
    %3449 = vmatprep.subr.mxu0 0.0
    %3450 = vmatpush2.msra.mxu0 0.0
    %3451 = vmatprep.subr.mxu0 0.0
    %3452 = vmatpush2.msra.mxu0 0.0
    %3453 = vmatprep.subr.mxu0 0.0
    %3454 = vmatpush2.msra.mxu0 0.0
    %3455 = vmatprep.subr.mxu0 0.0
    %3456 = vmatpush2.msra.mxu0 0.0
    %3457 = vmatprep.subr.mxu0 0.0
    %3458 = vmatpush2.msra.mxu0 0.0
    %3459 = vmatprep.subr.mxu0 0.0
    %3460 = vmatpush2.msra.mxu0 0.0
    %3461 = vmatprep.subr.mxu0 0.0
    %3462 = vmatpush2.msra.mxu0 0.0
    %3463 = vmatprep.subr.mxu0 0.0
    %3464 = vmatpush2.msra.mxu0 0.0
    %3465 = vmatprep.subr.mxu0 0.0
    %3466 = vmatpush2.msra.mxu0 0.0
    %3467 = vmatprep.subr.mxu0 0.0
    %3468 = vmatpush2.msra.mxu0 0.0
    %3469 = vmatprep.subr.mxu0 0.0
    %3470 = vmatpush2.msra.mxu0 0.0
    %3471 = vmatprep.subr.mxu0 0.0
    %3472 = vmatpush2.msra.mxu0 0.0
    %3473 = vmatprep.subr.mxu0 0.0
    %3474 = vmatpush2.msra.mxu0 0.0
    %3475 = vmatprep.mubr.f32.mxu0 0.0
    %3476 = vmatmul.mubr.f32.gmra.mxu0 %v3338
    %v3477 = vpop.f32.mrf.mxu0
    %v3478 = vadd.f32 %v104, %v3477
    %v3479 = vpop.f32.mrf.mxu0
    %v3480 = vadd.f32 %v108, %v3479
    %3481 = vdwg.mxu0
    %v3482 = vtanh.pop %v3407
    %v3483 = vtanh.pop %v3409
    %v3484 = vtanh.pop %v3478
    %v3485 = vtanh.pop %v3480
    %v3486 = vmul.f32 %v3482, %v3166
    %v3487 = vmul.f32 %v3483, %v3174
    %v3488 = vmul.f32 %v3484, %v3173
    %v3489 = vmul.f32 %v3485, %v3175
    %v3490 = vmul.f32 %v3191, -0.001
    %v3491 = vmul.f32 %v3490, %v2863
    %v3492 = vadd.f32 %v3491, %v3486
    %v3493 = vadd.f32 %v3492, %v3487
    %v3494 = vadd.f32 %v3493, %v3488
    %v3495 = vadd.f32 %v3494, %v3489
    %v3496 = vsub.f32 %v3495, %v3190
    %v3497 = vadd.f32 %v2858, %v3496
    %3498 = vmatprep.subr.mxu0 0.0
    %3499 = vmatpush1.msra.mxu0 %v54
    %3500 = vmatprep.subr.mxu0 0.0
    %3501 = vmatpush1.msra.mxu0 %v53
    %3502 = vmatprep.subr.mxu0 0.0
    %3503 = vmatpush1.msra.mxu0 %v52
    %3504 = vmatprep.subr.mxu0 0.0
    %3505 = vmatpush1.msra.mxu0 %v51
    %3506 = vmatprep.subr.mxu0 0.0
    %3507 = vmatpush1.msra.mxu0 %v50
    %3508 = vmatprep.subr.mxu0 0.0
    %3509 = vmatpush1.msra.mxu0 %v49
    %3510 = vmatprep.subr.mxu0 0.0
    %3511 = vmatpush1.msra.mxu0 %v48
    %3512 = vmatprep.subr.mxu0 0.0
    %3513 = vmatpush1.msra.mxu0 %v47
    %3514 = vmatprep.subr.mxu0 0.0
    %3515 = vmatpush1.msra.mxu0 %v46
    %3516 = vmatprep.subr.mxu0 0.0
    %3517 = vmatpush1.msra.mxu0 %v45
    %3518 = vmatprep.subr.mxu0 0.0
    %3519 = vmatpush1.msra.mxu0 %v44
    %3520 = vmatprep.subr.mxu0 0.0
    %3521 = vmatpush1.msra.mxu0 %v43
    %3522 = vmatprep.subr.mxu0 0.0
    %3523 = vmatpush1.msra.mxu0 %v42
    %3524 = vmatprep.subr.mxu0 0.0
    %3525 = vmatpush1.msra.mxu0 %v41
    %3526 = vmatprep.subr.mxu0 0.0
    %3527 = vmatpush1.msra.mxu0 %v40
    %3528 = vmatprep.subr.mxu0 0.0
    %3529 = vmatpush1.msra.mxu0 %v39
    %3530 = vmatprep.subr.mxu0 0.0
    %3531 = vmatpush2.msra.mxu0 0.0
    %3532 = vmatprep.subr.mxu0 0.0
    %3533 = vmatpush2.msra.mxu0 0.0
    %3534 = vmatprep.subr.mxu0 0.0
    %3535 = vmatpush2.msra.mxu0 0.0
    %3536 = vmatprep.subr.mxu0 0.0
    %3537 = vmatpush2.msra.mxu0 0.0
    %3538 = vmatprep.subr.mxu0 0.0
    %3539 = vmatpush2.msra.mxu0 0.0
    %3540 = vmatprep.subr.mxu0 0.0
    %3541 = vmatpush2.msra.mxu0 0.0
    %3542 = vmatprep.subr.mxu0 0.0
    %3543 = vmatpush2.msra.mxu0 0.0
    %3544 = vmatprep.subr.mxu0 0.0
    %3545 = vmatpush2.msra.mxu0 0.0
    %3546 = vmatprep.subr.mxu0 0.0
    %3547 = vmatpush2.msra.mxu0 0.0
    %3548 = vmatprep.subr.mxu0 0.0
    %3549 = vmatpush2.msra.mxu0 0.0
    %3550 = vmatprep.subr.mxu0 0.0
    %3551 = vmatpush2.msra.mxu0 0.0
    %3552 = vmatprep.subr.mxu0 0.0
    %3553 = vmatpush2.msra.mxu0 0.0
    %3554 = vmatprep.subr.mxu0 0.0
    %3555 = vmatpush2.msra.mxu0 0.0
    %3556 = vmatprep.subr.mxu0 0.0
    %3557 = vmatpush2.msra.mxu0 0.0
    %3558 = vmatprep.subr.mxu0 0.0
    %3559 = vmatpush2.msra.mxu0 0.0
    %3560 = vmatprep.subr.mxu0 0.0
    %3561 = vmatpush2.msra.mxu0 0.0
    %3562 = vmatprep.mubr.f32.mxu0 0.0
    %3563 = vmatmul.mubr.f32.gmra.mxu0 %v3497
    %v3564 = vpop.f32.mrf.mxu0
    %v3565 = vadd.f32 %v87, %v3564
    %v3566 = vpop.f32.mrf.mxu0
    %3567 = vdwg.mxu0
    %v3568 = vmax.f32 %v3565, 0.0
    %v3570 = vsel %vm201, %v3568, 0
    %3572 = vmatprep.subr.mxu0 0.0
    %3573 = vmatpush1.msra.mxu0 0.0
    %3574 = vmatprep.subr.mxu0 0.0
    %3575 = vmatpush1.msra.mxu0 0.0
    %3576 = vmatprep.subr.mxu0 0.0
    %3577 = vmatpush1.msra.mxu0 0.0
    %3578 = vmatprep.subr.mxu0 0.0
    %3579 = vmatpush1.msra.mxu0 0.0
    %3580 = vmatprep.subr.mxu0 0.0
    %3581 = vmatpush1.msra.mxu0 0.0
    %3582 = vmatprep.subr.mxu0 0.0
    %3583 = vmatpush1.msra.mxu0 0.0
    %3584 = vmatprep.subr.mxu0 0.0
    %3585 = vmatpush1.msra.mxu0 0.0
    %3586 = vmatprep.subr.mxu0 0.0
    %3587 = vmatpush1.msra.mxu0 0.0
    %3588 = vmatprep.subr.mxu0 0.0
    %3589 = vmatpush1.msra.mxu0 0.0
    %3590 = vmatprep.subr.mxu0 0.0
    %3591 = vmatpush1.msra.mxu0 0.0
    %3592 = vmatprep.subr.mxu0 0.0
    %3593 = vmatpush1.msra.mxu0 0.0
    %3594 = vmatprep.subr.mxu0 0.0
    %3595 = vmatpush1.msra.mxu0 0.0
    %3596 = vmatprep.subr.mxu0 0.0
    %3597 = vmatpush1.msra.mxu0 %v59
    %3598 = vmatprep.subr.mxu0 0.0
    %3599 = vmatpush1.msra.mxu0 %v58
    %3600 = vmatprep.subr.mxu0 0.0
    %3601 = vmatpush1.msra.mxu0 %v57
    %3602 = vmatprep.subr.mxu0 0.0
    %3603 = vmatpush1.msra.mxu0 %v56
    %3604 = vmatprep.subr.mxu0 0.0
    %3605 = vmatpush2.msra.mxu0 0.0
    %3606 = vmatprep.subr.mxu0 0.0
    %3607 = vmatpush2.msra.mxu0 0.0
    %3608 = vmatprep.subr.mxu0 0.0
    %3609 = vmatpush2.msra.mxu0 0.0
    %3610 = vmatprep.subr.mxu0 0.0
    %3611 = vmatpush2.msra.mxu0 0.0
    %3612 = vmatprep.subr.mxu0 0.0
    %3613 = vmatpush2.msra.mxu0 0.0
    %3614 = vmatprep.subr.mxu0 0.0
    %3615 = vmatpush2.msra.mxu0 0.0
    %3616 = vmatprep.subr.mxu0 0.0
    %3617 = vmatpush2.msra.mxu0 0.0
    %3618 = vmatprep.subr.mxu0 0.0
    %3619 = vmatpush2.msra.mxu0 0.0
    %3620 = vmatprep.subr.mxu0 0.0
    %3621 = vmatpush2.msra.mxu0 0.0
    %3622 = vmatprep.subr.mxu0 0.0
    %3623 = vmatpush2.msra.mxu0 0.0
    %3624 = vmatprep.subr.mxu0 0.0
    %3625 = vmatpush2.msra.mxu0 0.0
    %3626 = vmatprep.subr.mxu0 0.0
    %3627 = vmatpush2.msra.mxu0 0.0
    %3628 = vmatprep.subr.mxu0 0.0
    %3629 = vmatpush2.msra.mxu0 0.0
    %3630 = vmatprep.subr.mxu0 0.0
    %3631 = vmatpush2.msra.mxu0 0.0
    %3632 = vmatprep.subr.mxu0 0.0
    %3633 = vmatpush2.msra.mxu0 0.0
    %3634 = vmatprep.subr.mxu0 0.0
    %3635 = vmatpush2.msra.mxu0 0.0
    %3636 = vmatprep.mubr.f32.mxu0 0.0
    %3637 = vmatmul.mubr.f32.gmra.mxu0 %v3570
    %v3638 = vpop.f32.mrf.mxu0
    %v3639 = vadd.f32 %v91, %v3638
    %v3640 = vpop.f32.mrf.mxu0
    %3641 = vdwg.mxu0
    %v3642 = vmax.f32 %v3639, 0.0
    %v3644 = vsel %vm201, %v3642, 0
    %3646 = vmatprep.subr.mxu0 0.0
    %3647 = vmatpush1.msra.mxu0 0.0
    %3648 = vmatprep.subr.mxu0 0.0
    %3649 = vmatpush1.msra.mxu0 0.0
    %3650 = vmatprep.subr.mxu0 0.0
    %3651 = vmatpush1.msra.mxu0 0.0
    %3652 = vmatprep.subr.mxu0 0.0
    %3653 = vmatpush1.msra.mxu0 0.0
    %3654 = vmatprep.subr.mxu0 0.0
    %3655 = vmatpush1.msra.mxu0 0.0
    %3656 = vmatprep.subr.mxu0 0.0
    %3657 = vmatpush1.msra.mxu0 0.0
    %3658 = vmatprep.subr.mxu0 0.0
    %3659 = vmatpush1.msra.mxu0 0.0
    %3660 = vmatprep.subr.mxu0 0.0
    %3661 = vmatpush1.msra.mxu0 0.0
    %3662 = vmatprep.subr.mxu0 0.0
    %3663 = vmatpush1.msra.mxu0 0.0
    %3664 = vmatprep.subr.mxu0 0.0
    %3665 = vmatpush1.msra.mxu0 0.0
    %3666 = vmatprep.subr.mxu0 0.0
    %3667 = vmatpush1.msra.mxu0 0.0
    %3668 = vmatprep.subr.mxu0 0.0
    %3669 = vmatpush1.msra.mxu0 0.0
    %3670 = vmatprep.subr.mxu0 %v79
    %3671 = vmatpush1.msra.mxu0 %v78
    %3672 = vmatprep.subr.mxu0 %v75
    %3673 = vmatpush1.msra.mxu0 %v74
    %3674 = vmatprep.subr.mxu0 %v71
    %3675 = vmatpush1.msra.mxu0 %v70
    %3676 = vmatprep.subr.mxu0 %v67
    %3677 = vmatpush1.msra.mxu0 %v66
    %3678 = vmatprep.subr.mxu0 0.0
    %3679 = vmatpush2.msra.mxu0 0.0
    %3680 = vmatprep.subr.mxu0 0.0
    %3681 = vmatpush2.msra.mxu0 0.0
    %3682 = vmatprep.subr.mxu0 0.0
    %3683 = vmatpush2.msra.mxu0 0.0
    %3684 = vmatprep.subr.mxu0 0.0
    %3685 = vmatpush2.msra.mxu0 0.0
    %3686 = vmatprep.subr.mxu0 0.0
    %3687 = vmatpush2.msra.mxu0 0.0
    %3688 = vmatprep.subr.mxu0 0.0
    %3689 = vmatpush2.msra.mxu0 0.0
    %3690 = vmatprep.subr.mxu0 0.0
    %3691 = vmatpush2.msra.mxu0 0.0
    %3692 = vmatprep.subr.mxu0 0.0
    %3693 = vmatpush2.msra.mxu0 0.0
    %3694 = vmatprep.subr.mxu0 0.0
    %3695 = vmatpush2.msra.mxu0 0.0
    %3696 = vmatprep.subr.mxu0 0.0
    %3697 = vmatpush2.msra.mxu0 0.0
    %3698 = vmatprep.subr.mxu0 0.0
    %3699 = vmatpush2.msra.mxu0 0.0
    %3700 = vmatprep.subr.mxu0 0.0
    %3701 = vmatpush2.msra.mxu0 0.0
    %3702 = vmatprep.subr.mxu0 0.0
    %3703 = vmatpush2.msra.mxu0 0.0
    %3704 = vmatprep.subr.mxu0 0.0
    %3705 = vmatpush2.msra.mxu0 0.0
    %3706 = vmatprep.subr.mxu0 0.0
    %3707 = vmatpush2.msra.mxu0 0.0
    %3708 = vmatprep.subr.mxu0 0.0
    %3709 = vmatpush2.msra.mxu0 0.0
    %3710 = vmatprep.mubr.f32.mxu0 0.0
    %3711 = vmatmul.mubr.f32.gmra.mxu0 %v3644
    %v3712 = vpop.f32.mrf.mxu0
    %v3713 = vadd.f32 %v96, %v3712
    %v3714 = vpop.f32.mrf.mxu0
    %v3715 = vadd.f32 %v100, %v3714
    %3716 = vdwg.mxu0
    %3717 = vmatprep.subr.mxu0 0.0
    %3718 = vmatpush1.msra.mxu0 0.0
    %3719 = vmatprep.subr.mxu0 0.0
    %3720 = vmatpush1.msra.mxu0 0.0
    %3721 = vmatprep.subr.mxu0 0.0
    %3722 = vmatpush1.msra.mxu0 0.0
    %3723 = vmatprep.subr.mxu0 0.0
    %3724 = vmatpush1.msra.mxu0 0.0
    %3725 = vmatprep.subr.mxu0 0.0
    %3726 = vmatpush1.msra.mxu0 0.0
    %3727 = vmatprep.subr.mxu0 0.0
    %3728 = vmatpush1.msra.mxu0 0.0
    %3729 = vmatprep.subr.mxu0 0.0
    %3730 = vmatpush1.msra.mxu0 0.0
    %3731 = vmatprep.subr.mxu0 0.0
    %3732 = vmatpush1.msra.mxu0 0.0
    %3733 = vmatprep.subr.mxu0 0.0
    %3734 = vmatpush1.msra.mxu0 0.0
    %3735 = vmatprep.subr.mxu0 0.0
    %3736 = vmatpush1.msra.mxu0 0.0
    %3737 = vmatprep.subr.mxu0 0.0
    %3738 = vmatpush1.msra.mxu0 0.0
    %3739 = vmatprep.subr.mxu0 0.0
    %3740 = vmatpush1.msra.mxu0 0.0
    %3741 = vmatprep.subr.mxu0 %v81
    %3742 = vmatpush1.msra.mxu0 %v80
    %3743 = vmatprep.subr.mxu0 %v77
    %3744 = vmatpush1.msra.mxu0 %v76
    %3745 = vmatprep.subr.mxu0 %v73
    %3746 = vmatpush1.msra.mxu0 %v72
    %3747 = vmatprep.subr.mxu0 %v69
    %3748 = vmatpush1.msra.mxu0 %v68
    %3749 = vmatprep.subr.mxu0 0.0
    %3750 = vmatpush2.msra.mxu0 0.0
    %3751 = vmatprep.subr.mxu0 0.0
    %3752 = vmatpush2.msra.mxu0 0.0
    %3753 = vmatprep.subr.mxu0 0.0
    %3754 = vmatpush2.msra.mxu0 0.0
    %3755 = vmatprep.subr.mxu0 0.0
    %3756 = vmatpush2.msra.mxu0 0.0
    %3757 = vmatprep.subr.mxu0 0.0
    %3758 = vmatpush2.msra.mxu0 0.0
    %3759 = vmatprep.subr.mxu0 0.0
    %3760 = vmatpush2.msra.mxu0 0.0
    %3761 = vmatprep.subr.mxu0 0.0
    %3762 = vmatpush2.msra.mxu0 0.0
    %3763 = vmatprep.subr.mxu0 0.0
    %3764 = vmatpush2.msra.mxu0 0.0
    %3765 = vmatprep.subr.mxu0 0.0
    %3766 = vmatpush2.msra.mxu0 0.0
    %3767 = vmatprep.subr.mxu0 0.0
    %3768 = vmatpush2.msra.mxu0 0.0
    %3769 = vmatprep.subr.mxu0 0.0
    %3770 = vmatpush2.msra.mxu0 0.0
    %3771 = vmatprep.subr.mxu0 0.0
    %3772 = vmatpush2.msra.mxu0 0.0
    %3773 = vmatprep.subr.mxu0 0.0
    %3774 = vmatpush2.msra.mxu0 0.0
    %3775 = vmatprep.subr.mxu0 0.0
    %3776 = vmatpush2.msra.mxu0 0.0
    %3777 = vmatprep.subr.mxu0 0.0
    %3778 = vmatpush2.msra.mxu0 0.0
    %3779 = vmatprep.subr.mxu0 0.0
    %3780 = vmatpush2.msra.mxu0 0.0
    %3781 = vmatprep.mubr.f32.mxu0 0.0
    %3782 = vmatmul.mubr.f32.gmra.mxu0 %v3644
    %v3783 = vpop.f32.mrf.mxu0
    %v3784 = vadd.f32 %v104, %v3783
    %v3785 = vpop.f32.mrf.mxu0
    %v3786 = vadd.f32 %v108, %v3785
    %3787 = vdwg.mxu0
    %v3788 = vtanh.pop %v3713
    %v3789 = vtanh.pop %v3715
    %v3790 = vtanh.pop %v3784
    %v3791 = vtanh.pop %v3786
    %v3792 = vmul.f32 %v3788, %v3166
    %v3793 = vmul.f32 %v3789, %v3174
    %v3794 = vmul.f32 %v3790, %v3173
    %v3795 = vmul.f32 %v3791, %v3175
    %v3796 = vmul.f32 %v3497, -0.001
    %v3797 = vmul.f32 %v3796, %v2863
    %v3798 = vadd.f32 %v3797, %v3792
    %v3799 = vadd.f32 %v3798, %v3793
    %v3800 = vadd.f32 %v3799, %v3794
    %v3801 = vadd.f32 %v3800, %v3795
    %v3802 = vsub.f32 %v3189, %v3495
    %v3803 = vadd.f32 %v3802, %v3801
    %v3804 = vadd.f32 %v2858, %v3803
    %3805 = vmatprep.subr.mxu0 0.0
    %3806 = vmatpush1.msra.mxu0 %v54
    %3807 = vmatprep.subr.mxu0 0.0
    %3808 = vmatpush1.msra.mxu0 %v53
    %3809 = vmatprep.subr.mxu0 0.0
    %3810 = vmatpush1.msra.mxu0 %v52
    %3811 = vmatprep.subr.mxu0 0.0
    %3812 = vmatpush1.msra.mxu0 %v51
    %3813 = vmatprep.subr.mxu0 0.0
    %3814 = vmatpush1.msra.mxu0 %v50
    %3815 = vmatprep.subr.mxu0 0.0
    %3816 = vmatpush1.msra.mxu0 %v49
    %3817 = vmatprep.subr.mxu0 0.0
    %3818 = vmatpush1.msra.mxu0 %v48
    %3819 = vmatprep.subr.mxu0 0.0
    %3820 = vmatpush1.msra.mxu0 %v47
    %3821 = vmatprep.subr.mxu0 0.0
    %3822 = vmatpush1.msra.mxu0 %v46
    %3823 = vmatprep.subr.mxu0 0.0
    %3824 = vmatpush1.msra.mxu0 %v45
    %3825 = vmatprep.subr.mxu0 0.0
    %3826 = vmatpush1.msra.mxu0 %v44
    %3827 = vmatprep.subr.mxu0 0.0
    %3828 = vmatpush1.msra.mxu0 %v43
    %3829 = vmatprep.subr.mxu0 0.0
    %3830 = vmatpush1.msra.mxu0 %v42
    %3831 = vmatprep.subr.mxu0 0.0
    %3832 = vmatpush1.msra.mxu0 %v41
    %3833 = vmatprep.subr.mxu0 0.0
    %3834 = vmatpush1.msra.mxu0 %v40
    %3835 = vmatprep.subr.mxu0 0.0
    %3836 = vmatpush1.msra.mxu0 %v39
    %3837 = vmatprep.subr.mxu0 0.0
    %3838 = vmatpush2.msra.mxu0 0.0
    %3839 = vmatprep.subr.mxu0 0.0
    %3840 = vmatpush2.msra.mxu0 0.0
    %3841 = vmatprep.subr.mxu0 0.0
    %3842 = vmatpush2.msra.mxu0 0.0
    %3843 = vmatprep.subr.mxu0 0.0
    %3844 = vmatpush2.msra.mxu0 0.0
    %3845 = vmatprep.subr.mxu0 0.0
    %3846 = vmatpush2.msra.mxu0 0.0
    %3847 = vmatprep.subr.mxu0 0.0
    %3848 = vmatpush2.msra.mxu0 0.0
    %3849 = vmatprep.subr.mxu0 0.0
    %3850 = vmatpush2.msra.mxu0 0.0
    %3851 = vmatprep.subr.mxu0 0.0
    %3852 = vmatpush2.msra.mxu0 0.0
    %3853 = vmatprep.subr.mxu0 0.0
    %3854 = vmatpush2.msra.mxu0 0.0
    %3855 = vmatprep.subr.mxu0 0.0
    %3856 = vmatpush2.msra.mxu0 0.0
    %3857 = vmatprep.subr.mxu0 0.0
    %3858 = vmatpush2.msra.mxu0 0.0
    %3859 = vmatprep.subr.mxu0 0.0
    %3860 = vmatpush2.msra.mxu0 0.0
    %3861 = vmatprep.subr.mxu0 0.0
    %3862 = vmatpush2.msra.mxu0 0.0
    %3863 = vmatprep.subr.mxu0 0.0
    %3864 = vmatpush2.msra.mxu0 0.0
    %3865 = vmatprep.subr.mxu0 0.0
    %3866 = vmatpush2.msra.mxu0 0.0
    %3867 = vmatprep.subr.mxu0 0.0
    %3868 = vmatpush2.msra.mxu0 0.0
    %3869 = vmatprep.mubr.f32.mxu0 0.0
    %3870 = vmatmul.mubr.f32.gmra.mxu0 %v3804
    %v3871 = vpop.f32.mrf.mxu0
    %v3872 = vadd.f32 %v87, %v3871
    %v3873 = vpop.f32.mrf.mxu0
    %3874 = vdwg.mxu0
    %v3875 = vmax.f32 %v3872, 0.0
    %v3877 = vsel %vm201, %v3875, 0
    %3879 = vmatprep.subr.mxu0 0.0
    %3880 = vmatpush1.msra.mxu0 0.0
    %3881 = vmatprep.subr.mxu0 0.0
    %3882 = vmatpush1.msra.mxu0 0.0
    %3883 = vmatprep.subr.mxu0 0.0
    %3884 = vmatpush1.msra.mxu0 0.0
    %3885 = vmatprep.subr.mxu0 0.0
    %3886 = vmatpush1.msra.mxu0 0.0
    %3887 = vmatprep.subr.mxu0 0.0
    %3888 = vmatpush1.msra.mxu0 0.0
    %3889 = vmatprep.subr.mxu0 0.0
    %3890 = vmatpush1.msra.mxu0 0.0
    %3891 = vmatprep.subr.mxu0 0.0
    %3892 = vmatpush1.msra.mxu0 0.0
    %3893 = vmatprep.subr.mxu0 0.0
    %3894 = vmatpush1.msra.mxu0 0.0
    %3895 = vmatprep.subr.mxu0 0.0
    %3896 = vmatpush1.msra.mxu0 0.0
    %3897 = vmatprep.subr.mxu0 0.0
    %3898 = vmatpush1.msra.mxu0 0.0
    %3899 = vmatprep.subr.mxu0 0.0
    %3900 = vmatpush1.msra.mxu0 0.0
    %3901 = vmatprep.subr.mxu0 0.0
    %3902 = vmatpush1.msra.mxu0 0.0
    %3903 = vmatprep.subr.mxu0 0.0
    %3904 = vmatpush1.msra.mxu0 %v59
    %3905 = vmatprep.subr.mxu0 0.0
    %3906 = vmatpush1.msra.mxu0 %v58
    %3907 = vmatprep.subr.mxu0 0.0
    %3908 = vmatpush1.msra.mxu0 %v57
    %3909 = vmatprep.subr.mxu0 0.0
    %3910 = vmatpush1.msra.mxu0 %v56
    %3911 = vmatprep.subr.mxu0 0.0
    %3912 = vmatpush2.msra.mxu0 0.0
    %3913 = vmatprep.subr.mxu0 0.0
    %3914 = vmatpush2.msra.mxu0 0.0
    %3915 = vmatprep.subr.mxu0 0.0
    %3916 = vmatpush2.msra.mxu0 0.0
    %3917 = vmatprep.subr.mxu0 0.0
    %3918 = vmatpush2.msra.mxu0 0.0
    %3919 = vmatprep.subr.mxu0 0.0
    %3920 = vmatpush2.msra.mxu0 0.0
    %3921 = vmatprep.subr.mxu0 0.0
    %3922 = vmatpush2.msra.mxu0 0.0
    %3923 = vmatprep.subr.mxu0 0.0
    %3924 = vmatpush2.msra.mxu0 0.0
    %3925 = vmatprep.subr.mxu0 0.0
    %3926 = vmatpush2.msra.mxu0 0.0
    %3927 = vmatprep.subr.mxu0 0.0
    %3928 = vmatpush2.msra.mxu0 0.0
    %3929 = vmatprep.subr.mxu0 0.0
    %3930 = vmatpush2.msra.mxu0 0.0
    %3931 = vmatprep.subr.mxu0 0.0
    %3932 = vmatpush2.msra.mxu0 0.0
    %3933 = vmatprep.subr.mxu0 0.0
    %3934 = vmatpush2.msra.mxu0 0.0
    %3935 = vmatprep.subr.mxu0 0.0
    %3936 = vmatpush2.msra.mxu0 0.0
    %3937 = vmatprep.subr.mxu0 0.0
    %3938 = vmatpush2.msra.mxu0 0.0
    %3939 = vmatprep.subr.mxu0 0.0
    %3940 = vmatpush2.msra.mxu0 0.0
    %3941 = vmatprep.subr.mxu0 0.0
    %3942 = vmatpush2.msra.mxu0 0.0
    %3943 = vmatprep.mubr.f32.mxu0 0.0
    %3944 = vmatmul.mubr.f32.gmra.mxu0 %v3877
    %v3945 = vpop.f32.mrf.mxu0
    %v3946 = vadd.f32 %v91, %v3945
    %v3947 = vpop.f32.mrf.mxu0
    %3948 = vdwg.mxu0
    %v3949 = vmax.f32 %v3946, 0.0
    %v3951 = vsel %vm201, %v3949, 0
    %3953 = vmatprep.subr.mxu0 0.0
    %3954 = vmatpush1.msra.mxu0 0.0
    %3955 = vmatprep.subr.mxu0 0.0
    %3956 = vmatpush1.msra.mxu0 0.0
    %3957 = vmatprep.subr.mxu0 0.0
    %3958 = vmatpush1.msra.mxu0 0.0
    %3959 = vmatprep.subr.mxu0 0.0
    %3960 = vmatpush1.msra.mxu0 0.0
    %3961 = vmatprep.subr.mxu0 0.0
    %3962 = vmatpush1.msra.mxu0 0.0
    %3963 = vmatprep.subr.mxu0 0.0
    %3964 = vmatpush1.msra.mxu0 0.0
    %3965 = vmatprep.subr.mxu0 0.0
    %3966 = vmatpush1.msra.mxu0 0.0
    %3967 = vmatprep.subr.mxu0 0.0
    %3968 = vmatpush1.msra.mxu0 0.0
    %3969 = vmatprep.subr.mxu0 0.0
    %3970 = vmatpush1.msra.mxu0 0.0
    %3971 = vmatprep.subr.mxu0 0.0
    %3972 = vmatpush1.msra.mxu0 0.0
    %3973 = vmatprep.subr.mxu0 0.0
    %3974 = vmatpush1.msra.mxu0 0.0
    %3975 = vmatprep.subr.mxu0 0.0
    %3976 = vmatpush1.msra.mxu0 0.0
    %3977 = vmatprep.subr.mxu0 %v79
    %3978 = vmatpush1.msra.mxu0 %v78
    %3979 = vmatprep.subr.mxu0 %v75
    %3980 = vmatpush1.msra.mxu0 %v74
    %3981 = vmatprep.subr.mxu0 %v71
    %3982 = vmatpush1.msra.mxu0 %v70
    %3983 = vmatprep.subr.mxu0 %v67
    %3984 = vmatpush1.msra.mxu0 %v66
    %3985 = vmatprep.subr.mxu0 0.0
    %3986 = vmatpush2.msra.mxu0 0.0
    %3987 = vmatprep.subr.mxu0 0.0
    %3988 = vmatpush2.msra.mxu0 0.0
    %3989 = vmatprep.subr.mxu0 0.0
    %3990 = vmatpush2.msra.mxu0 0.0
    %3991 = vmatprep.subr.mxu0 0.0
    %3992 = vmatpush2.msra.mxu0 0.0
    %3993 = vmatprep.subr.mxu0 0.0
    %3994 = vmatpush2.msra.mxu0 0.0
    %3995 = vmatprep.subr.mxu0 0.0
    %3996 = vmatpush2.msra.mxu0 0.0
    %3997 = vmatprep.subr.mxu0 0.0
    %3998 = vmatpush2.msra.mxu0 0.0
    %3999 = vmatprep.subr.mxu0 0.0
    %4000 = vmatpush2.msra.mxu0 0.0
    %4001 = vmatprep.subr.mxu0 0.0
    %4002 = vmatpush2.msra.mxu0 0.0
    %4003 = vmatprep.subr.mxu0 0.0
    %4004 = vmatpush2.msra.mxu0 0.0
    %4005 = vmatprep.subr.mxu0 0.0
    %4006 = vmatpush2.msra.mxu0 0.0
    %4007 = vmatprep.subr.mxu0 0.0
    %4008 = vmatpush2.msra.mxu0 0.0
    %4009 = vmatprep.subr.mxu0 0.0
    %4010 = vmatpush2.msra.mxu0 0.0
    %4011 = vmatprep.subr.mxu0 0.0
    %4012 = vmatpush2.msra.mxu0 0.0
    %4013 = vmatprep.subr.mxu0 0.0
    %4014 = vmatpush2.msra.mxu0 0.0
    %4015 = vmatprep.subr.mxu0 0.0
    %4016 = vmatpush2.msra.mxu0 0.0
    %4017 = vmatprep.mubr.f32.mxu0 0.0
    %4018 = vmatmul.mubr.f32.gmra.mxu0 %v3951
    %v4019 = vpop.f32.mrf.mxu0
    %v4020 = vadd.f32 %v96, %v4019
    %v4021 = vpop.f32.mrf.mxu0
    %v4022 = vadd.f32 %v100, %v4021
    %4023 = vdwg.mxu0
    %4024 = vmatprep.subr.mxu0 0.0
    %4025 = vmatpush1.msra.mxu0 0.0
    %4026 = vmatprep.subr.mxu0 0.0
    %4027 = vmatpush1.msra.mxu0 0.0
    %4028 = vmatprep.subr.mxu0 0.0
    %4029 = vmatpush1.msra.mxu0 0.0
    %4030 = vmatprep.subr.mxu0 0.0
    %4031 = vmatpush1.msra.mxu0 0.0
    %4032 = vmatprep.subr.mxu0 0.0
    %4033 = vmatpush1.msra.mxu0 0.0
    %4034 = vmatprep.subr.mxu0 0.0
    %4035 = vmatpush1.msra.mxu0 0.0
    %4036 = vmatprep.subr.mxu0 0.0
    %4037 = vmatpush1.msra.mxu0 0.0
    %4038 = vmatprep.subr.mxu0 0.0
    %4039 = vmatpush1.msra.mxu0 0.0
    %4040 = vmatprep.subr.mxu0 0.0
    %4041 = vmatpush1.msra.mxu0 0.0
    %4042 = vmatprep.subr.mxu0 0.0
    %4043 = vmatpush1.msra.mxu0 0.0
    %4044 = vmatprep.subr.mxu0 0.0
    %4045 = vmatpush1.msra.mxu0 0.0
    %4046 = vmatprep.subr.mxu0 0.0
    %4047 = vmatpush1.msra.mxu0 0.0
    %4048 = vmatprep.subr.mxu0 %v81
    %4049 = vmatpush1.msra.mxu0 %v80
    %4050 = vmatprep.subr.mxu0 %v77
    %4051 = vmatpush1.msra.mxu0 %v76
    %4052 = vmatprep.subr.mxu0 %v73
    %4053 = vmatpush1.msra.mxu0 %v72
    %4054 = vmatprep.subr.mxu0 %v69
    %4055 = vmatpush1.msra.mxu0 %v68
    %4056 = vmatprep.subr.mxu0 0.0
    %4057 = vmatpush2.msra.mxu0 0.0
    %4058 = vmatprep.subr.mxu0 0.0
    %4059 = vmatpush2.msra.mxu0 0.0
    %4060 = vmatprep.subr.mxu0 0.0
    %4061 = vmatpush2.msra.mxu0 0.0
    %4062 = vmatprep.subr.mxu0 0.0
    %4063 = vmatpush2.msra.mxu0 0.0
    %4064 = vmatprep.subr.mxu0 0.0
    %4065 = vmatpush2.msra.mxu0 0.0
    %4066 = vmatprep.subr.mxu0 0.0
    %4067 = vmatpush2.msra.mxu0 0.0
    %4068 = vmatprep.subr.mxu0 0.0
    %4069 = vmatpush2.msra.mxu0 0.0
    %4070 = vmatprep.subr.mxu0 0.0
    %4071 = vmatpush2.msra.mxu0 0.0
    %4072 = vmatprep.subr.mxu0 0.0
    %4073 = vmatpush2.msra.mxu0 0.0
    %4074 = vmatprep.subr.mxu0 0.0
    %4075 = vmatpush2.msra.mxu0 0.0
    %4076 = vmatprep.subr.mxu0 0.0
    %4077 = vmatpush2.msra.mxu0 0.0
    %4078 = vmatprep.subr.mxu0 0.0
    %4079 = vmatpush2.msra.mxu0 0.0
    %4080 = vmatprep.subr.mxu0 0.0
    %4081 = vmatpush2.msra.mxu0 0.0
    %4082 = vmatprep.subr.mxu0 0.0
    %4083 = vmatpush2.msra.mxu0 0.0
    %4084 = vmatprep.subr.mxu0 0.0
    %4085 = vmatpush2.msra.mxu0 0.0
    %4086 = vmatprep.subr.mxu0 0.0
    %4087 = vmatpush2.msra.mxu0 0.0
    %4088 = vmatprep.mubr.f32.mxu0 0.0
    %4089 = vmatmul.mubr.f32.gmra.mxu0 %v3951
    %v4090 = vpop.f32.mrf.mxu0
    %v4091 = vadd.f32 %v104, %v4090
    %v4092 = vpop.f32.mrf.mxu0
    %v4093 = vadd.f32 %v108, %v4092
    %4094 = vdwg.mxu0
    %v4095 = vtanh.pop %v4020
    %v4096 = vtanh.pop %v4022
    %v4097 = vtanh.pop %v4091
    %v4098 = vtanh.pop %v4093
    %v4099 = vmul.f32 %v4095, %v3166
    %v4100 = vmul.f32 %v4096, %v3174
    %v4101 = vmul.f32 %v4097, %v3173
    %v4102 = vmul.f32 %v4098, %v3175
    %v4103 = vmul.f32 %v3804, -0.001
    %v4104 = vmul.f32 %v4103, %v2863
    %v4105 = vadd.f32 %v4104, %v4099
    %v4106 = vadd.f32 %v4105, %v4100
    %v4107 = vadd.f32 %v4106, %v4101
    %v4108 = vadd.f32 %v4107, %v4102
    %v4109 = vadd.f32 %v3495, %v3801
    %v4110 = vmul.f32 %v4109, 3.0
    %v4111 = vadd.f32 %v3189, %v4110
    %v4112 = vadd.f32 %v4111, %v4108
    %v4113 = vmul.f32 %v4112, 0.125
    %v4114 = vadd.f32 %v2858, %v4113
    %s4115 = scalar_lea.vmem [#allocation5], 6
    %4116 = vst [vmem:[%s4115] sm:$0x3] %v4114
    %s4117 = scalar_lea.vmem %s0, 30
    %v4118 = vld [vmem:[%s4117] sm:$0xff]
    %v4119 = vld [vmem:[%s4117 + $0x8] sm:$0x3]
    %4120 = vmatprep.subr.mxu0 0.0
    %4121 = vmatpush1.msra.mxu0 %v54
    %4122 = vmatprep.subr.mxu0 0.0
    %4123 = vmatpush1.msra.mxu0 %v53
    %4124 = vmatprep.subr.mxu0 0.0
    %4125 = vmatpush1.msra.mxu0 %v52
    %4126 = vmatprep.subr.mxu0 0.0
    %4127 = vmatpush1.msra.mxu0 %v51
    %4128 = vmatprep.subr.mxu0 0.0
    %4129 = vmatpush1.msra.mxu0 %v50
    %4130 = vmatprep.subr.mxu0 0.0
    %4131 = vmatpush1.msra.mxu0 %v49
    %4132 = vmatprep.subr.mxu0 0.0
    %4133 = vmatpush1.msra.mxu0 %v48
    %4134 = vmatprep.subr.mxu0 0.0
    %4135 = vmatpush1.msra.mxu0 %v47
    %4136 = vmatprep.subr.mxu0 0.0
    %4137 = vmatpush1.msra.mxu0 %v46
    %4138 = vmatprep.subr.mxu0 0.0
    %4139 = vmatpush1.msra.mxu0 %v45
    %4140 = vmatprep.subr.mxu0 0.0
    %4141 = vmatpush1.msra.mxu0 %v44
    %4142 = vmatprep.subr.mxu0 0.0
    %4143 = vmatpush1.msra.mxu0 %v43
    %4144 = vmatprep.subr.mxu0 0.0
    %4145 = vmatpush1.msra.mxu0 %v42
    %4146 = vmatprep.subr.mxu0 0.0
    %4147 = vmatpush1.msra.mxu0 %v41
    %4148 = vmatprep.subr.mxu0 0.0
    %4149 = vmatpush1.msra.mxu0 %v40
    %4150 = vmatprep.subr.mxu0 0.0
    %4151 = vmatpush1.msra.mxu0 %v39
    %4152 = vmatprep.subr.mxu0 0.0
    %4153 = vmatpush2.msra.mxu0 0.0
    %4154 = vmatprep.subr.mxu0 0.0
    %4155 = vmatpush2.msra.mxu0 0.0
    %4156 = vmatprep.subr.mxu0 0.0
    %4157 = vmatpush2.msra.mxu0 0.0
    %4158 = vmatprep.subr.mxu0 0.0
    %4159 = vmatpush2.msra.mxu0 0.0
    %4160 = vmatprep.subr.mxu0 0.0
    %4161 = vmatpush2.msra.mxu0 0.0
    %4162 = vmatprep.subr.mxu0 0.0
    %4163 = vmatpush2.msra.mxu0 0.0
    %4164 = vmatprep.subr.mxu0 0.0
    %4165 = vmatpush2.msra.mxu0 0.0
    %4166 = vmatprep.subr.mxu0 0.0
    %4167 = vmatpush2.msra.mxu0 0.0
    %4168 = vmatprep.subr.mxu0 0.0
    %4169 = vmatpush2.msra.mxu0 0.0
    %4170 = vmatprep.subr.mxu0 0.0
    %4171 = vmatpush2.msra.mxu0 0.0
    %4172 = vmatprep.subr.mxu0 0.0
    %4173 = vmatpush2.msra.mxu0 0.0
    %4174 = vmatprep.subr.mxu0 0.0
    %4175 = vmatpush2.msra.mxu0 0.0
    %4176 = vmatprep.subr.mxu0 0.0
    %4177 = vmatpush2.msra.mxu0 0.0
    %4178 = vmatprep.subr.mxu0 0.0
    %4179 = vmatpush2.msra.mxu0 0.0
    %4180 = vmatprep.subr.mxu0 0.0
    %4181 = vmatpush2.msra.mxu0 0.0
    %4182 = vmatprep.subr.mxu0 0.0
    %4183 = vmatpush2.msra.mxu0 0.0
    %4184 = vmatprep.mubr.f32.mxu0 0.0
    %4185 = vmatmul.mubr.f32.gmra.mxu0 %v4114
    %v4186 = vpop.f32.mrf.mxu0
    %v4187 = vadd.f32 %v87, %v4186
    %v4188 = vpop.f32.mrf.mxu0
    %4189 = vdwg.mxu0
    %v4190 = vmax.f32 %v4187, 0.0
    %v4192 = vsel %vm201, %v4190, 0
    %4194 = vmatprep.subr.mxu0 0.0
    %4195 = vmatpush1.msra.mxu0 0.0
    %4196 = vmatprep.subr.mxu0 0.0
    %4197 = vmatpush1.msra.mxu0 0.0
    %4198 = vmatprep.subr.mxu0 0.0
    %4199 = vmatpush1.msra.mxu0 0.0
    %4200 = vmatprep.subr.mxu0 0.0
    %4201 = vmatpush1.msra.mxu0 0.0
    %4202 = vmatprep.subr.mxu0 0.0
    %4203 = vmatpush1.msra.mxu0 0.0
    %4204 = vmatprep.subr.mxu0 0.0
    %4205 = vmatpush1.msra.mxu0 0.0
    %4206 = vmatprep.subr.mxu0 0.0
    %4207 = vmatpush1.msra.mxu0 0.0
    %4208 = vmatprep.subr.mxu0 0.0
    %4209 = vmatpush1.msra.mxu0 0.0
    %4210 = vmatprep.subr.mxu0 0.0
    %4211 = vmatpush1.msra.mxu0 0.0
    %4212 = vmatprep.subr.mxu0 0.0
    %4213 = vmatpush1.msra.mxu0 0.0
    %4214 = vmatprep.subr.mxu0 0.0
    %4215 = vmatpush1.msra.mxu0 0.0
    %4216 = vmatprep.subr.mxu0 0.0
    %4217 = vmatpush1.msra.mxu0 0.0
    %4218 = vmatprep.subr.mxu0 0.0
    %4219 = vmatpush1.msra.mxu0 %v59
    %4220 = vmatprep.subr.mxu0 0.0
    %4221 = vmatpush1.msra.mxu0 %v58
    %4222 = vmatprep.subr.mxu0 0.0
    %4223 = vmatpush1.msra.mxu0 %v57
    %4224 = vmatprep.subr.mxu0 0.0
    %4225 = vmatpush1.msra.mxu0 %v56
    %4226 = vmatprep.subr.mxu0 0.0
    %4227 = vmatpush2.msra.mxu0 0.0
    %4228 = vmatprep.subr.mxu0 0.0
    %4229 = vmatpush2.msra.mxu0 0.0
    %4230 = vmatprep.subr.mxu0 0.0
    %4231 = vmatpush2.msra.mxu0 0.0
    %4232 = vmatprep.subr.mxu0 0.0
    %4233 = vmatpush2.msra.mxu0 0.0
    %4234 = vmatprep.subr.mxu0 0.0
    %4235 = vmatpush2.msra.mxu0 0.0
    %4236 = vmatprep.subr.mxu0 0.0
    %4237 = vmatpush2.msra.mxu0 0.0
    %4238 = vmatprep.subr.mxu0 0.0
    %4239 = vmatpush2.msra.mxu0 0.0
    %4240 = vmatprep.subr.mxu0 0.0
    %4241 = vmatpush2.msra.mxu0 0.0
    %4242 = vmatprep.subr.mxu0 0.0
    %4243 = vmatpush2.msra.mxu0 0.0
    %4244 = vmatprep.subr.mxu0 0.0
    %4245 = vmatpush2.msra.mxu0 0.0
    %4246 = vmatprep.subr.mxu0 0.0
    %4247 = vmatpush2.msra.mxu0 0.0
    %4248 = vmatprep.subr.mxu0 0.0
    %4249 = vmatpush2.msra.mxu0 0.0
    %4250 = vmatprep.subr.mxu0 0.0
    %4251 = vmatpush2.msra.mxu0 0.0
    %4252 = vmatprep.subr.mxu0 0.0
    %4253 = vmatpush2.msra.mxu0 0.0
    %4254 = vmatprep.subr.mxu0 0.0
    %4255 = vmatpush2.msra.mxu0 0.0
    %4256 = vmatprep.subr.mxu0 0.0
    %4257 = vmatpush2.msra.mxu0 0.0
    %4258 = vmatprep.mubr.f32.mxu0 0.0
    %4259 = vmatmul.mubr.f32.gmra.mxu0 %v4192
    %v4260 = vpop.f32.mrf.mxu0
    %v4261 = vadd.f32 %v91, %v4260
    %v4262 = vpop.f32.mrf.mxu0
    %4263 = vdwg.mxu0
    %v4264 = vmax.f32 %v4261, 0.0
    %v4266 = vsel %vm201, %v4264, 0
    %4268 = vmatprep.subr.mxu0 0.0
    %4269 = vmatpush1.msra.mxu0 0.0
    %4270 = vmatprep.subr.mxu0 0.0
    %4271 = vmatpush1.msra.mxu0 0.0
    %4272 = vmatprep.subr.mxu0 0.0
    %4273 = vmatpush1.msra.mxu0 0.0
    %4274 = vmatprep.subr.mxu0 0.0
    %4275 = vmatpush1.msra.mxu0 0.0
    %4276 = vmatprep.subr.mxu0 0.0
    %4277 = vmatpush1.msra.mxu0 0.0
    %4278 = vmatprep.subr.mxu0 0.0
    %4279 = vmatpush1.msra.mxu0 0.0
    %4280 = vmatprep.subr.mxu0 0.0
    %4281 = vmatpush1.msra.mxu0 0.0
    %4282 = vmatprep.subr.mxu0 0.0
    %4283 = vmatpush1.msra.mxu0 0.0
    %4284 = vmatprep.subr.mxu0 0.0
    %4285 = vmatpush1.msra.mxu0 0.0
    %4286 = vmatprep.subr.mxu0 0.0
    %4287 = vmatpush1.msra.mxu0 0.0
    %4288 = vmatprep.subr.mxu0 0.0
    %4289 = vmatpush1.msra.mxu0 0.0
    %4290 = vmatprep.subr.mxu0 0.0
    %4291 = vmatpush1.msra.mxu0 0.0
    %4292 = vmatprep.subr.mxu0 %v79
    %4293 = vmatpush1.msra.mxu0 %v78
    %4294 = vmatprep.subr.mxu0 %v75
    %4295 = vmatpush1.msra.mxu0 %v74
    %4296 = vmatprep.subr.mxu0 %v71
    %4297 = vmatpush1.msra.mxu0 %v70
    %4298 = vmatprep.subr.mxu0 %v67
    %4299 = vmatpush1.msra.mxu0 %v66
    %4300 = vmatprep.subr.mxu0 0.0
    %4301 = vmatpush2.msra.mxu0 0.0
    %4302 = vmatprep.subr.mxu0 0.0
    %4303 = vmatpush2.msra.mxu0 0.0
    %4304 = vmatprep.subr.mxu0 0.0
    %4305 = vmatpush2.msra.mxu0 0.0
    %4306 = vmatprep.subr.mxu0 0.0
    %4307 = vmatpush2.msra.mxu0 0.0
    %4308 = vmatprep.subr.mxu0 0.0
    %4309 = vmatpush2.msra.mxu0 0.0
    %4310 = vmatprep.subr.mxu0 0.0
    %4311 = vmatpush2.msra.mxu0 0.0
    %4312 = vmatprep.subr.mxu0 0.0
    %4313 = vmatpush2.msra.mxu0 0.0
    %4314 = vmatprep.subr.mxu0 0.0
    %4315 = vmatpush2.msra.mxu0 0.0
    %4316 = vmatprep.subr.mxu0 0.0
    %4317 = vmatpush2.msra.mxu0 0.0
    %4318 = vmatprep.subr.mxu0 0.0
    %4319 = vmatpush2.msra.mxu0 0.0
    %4320 = vmatprep.subr.mxu0 0.0
    %4321 = vmatpush2.msra.mxu0 0.0
    %4322 = vmatprep.subr.mxu0 0.0
    %4323 = vmatpush2.msra.mxu0 0.0
    %4324 = vmatprep.subr.mxu0 0.0
    %4325 = vmatpush2.msra.mxu0 0.0
    %4326 = vmatprep.subr.mxu0 0.0
    %4327 = vmatpush2.msra.mxu0 0.0
    %4328 = vmatprep.subr.mxu0 0.0
    %4329 = vmatpush2.msra.mxu0 0.0
    %4330 = vmatprep.subr.mxu0 0.0
    %4331 = vmatpush2.msra.mxu0 0.0
    %4332 = vmatprep.mubr.f32.mxu0 0.0
    %4333 = vmatmul.mubr.f32.gmra.mxu0 %v4266
    %v4334 = vpop.f32.mrf.mxu0
    %v4335 = vadd.f32 %v96, %v4334
    %v4336 = vpop.f32.mrf.mxu0
    %v4337 = vadd.f32 %v100, %v4336
    %4338 = vdwg.mxu0
    %4339 = vmatprep.subr.mxu0 0.0
    %4340 = vmatpush1.msra.mxu0 0.0
    %4341 = vmatprep.subr.mxu0 0.0
    %4342 = vmatpush1.msra.mxu0 0.0
    %4343 = vmatprep.subr.mxu0 0.0
    %4344 = vmatpush1.msra.mxu0 0.0
    %4345 = vmatprep.subr.mxu0 0.0
    %4346 = vmatpush1.msra.mxu0 0.0
    %4347 = vmatprep.subr.mxu0 0.0
    %4348 = vmatpush1.msra.mxu0 0.0
    %4349 = vmatprep.subr.mxu0 0.0
    %4350 = vmatpush1.msra.mxu0 0.0
    %4351 = vmatprep.subr.mxu0 0.0
    %4352 = vmatpush1.msra.mxu0 0.0
    %4353 = vmatprep.subr.mxu0 0.0
    %4354 = vmatpush1.msra.mxu0 0.0
    %4355 = vmatprep.subr.mxu0 0.0
    %4356 = vmatpush1.msra.mxu0 0.0
    %4357 = vmatprep.subr.mxu0 0.0
    %4358 = vmatpush1.msra.mxu0 0.0
    %4359 = vmatprep.subr.mxu0 0.0
    %4360 = vmatpush1.msra.mxu0 0.0
    %4361 = vmatprep.subr.mxu0 0.0
    %4362 = vmatpush1.msra.mxu0 0.0
    %4363 = vmatprep.subr.mxu0 %v81
    %4364 = vmatpush1.msra.mxu0 %v80
    %4365 = vmatprep.subr.mxu0 %v77
    %4366 = vmatpush1.msra.mxu0 %v76
    %4367 = vmatprep.subr.mxu0 %v73
    %4368 = vmatpush1.msra.mxu0 %v72
    %4369 = vmatprep.subr.mxu0 %v69
    %4370 = vmatpush1.msra.mxu0 %v68
    %4371 = vmatprep.subr.mxu0 0.0
    %4372 = vmatpush2.msra.mxu0 0.0
    %4373 = vmatprep.subr.mxu0 0.0
    %4374 = vmatpush2.msra.mxu0 0.0
    %4375 = vmatprep.subr.mxu0 0.0
    %4376 = vmatpush2.msra.mxu0 0.0
    %4377 = vmatprep.subr.mxu0 0.0
    %4378 = vmatpush2.msra.mxu0 0.0
    %4379 = vmatprep.subr.mxu0 0.0
    %4380 = vmatpush2.msra.mxu0 0.0
    %4381 = vmatprep.subr.mxu0 0.0
    %4382 = vmatpush2.msra.mxu0 0.0
    %4383 = vmatprep.subr.mxu0 0.0
    %4384 = vmatpush2.msra.mxu0 0.0
    %4385 = vmatprep.subr.mxu0 0.0
    %4386 = vmatpush2.msra.mxu0 0.0
    %4387 = vmatprep.subr.mxu0 0.0
    %4388 = vmatpush2.msra.mxu0 0.0
    %4389 = vmatprep.subr.mxu0 0.0
    %4390 = vmatpush2.msra.mxu0 0.0
    %4391 = vmatprep.subr.mxu0 0.0
    %4392 = vmatpush2.msra.mxu0 0.0
    %4393 = vmatprep.subr.mxu0 0.0
    %4394 = vmatpush2.msra.mxu0 0.0
    %4395 = vmatprep.subr.mxu0 0.0
    %4396 = vmatpush2.msra.mxu0 0.0
    %4397 = vmatprep.subr.mxu0 0.0
    %4398 = vmatpush2.msra.mxu0 0.0
    %4399 = vmatprep.subr.mxu0 0.0
    %4400 = vmatpush2.msra.mxu0 0.0
    %4401 = vmatprep.subr.mxu0 0.0
    %4402 = vmatpush2.msra.mxu0 0.0
    %4403 = vmatprep.mubr.f32.mxu0 0.0
    %4404 = vmatmul.mubr.f32.gmra.mxu0 %v4266
    %v4405 = vpop.f32.mrf.mxu0
    %v4406 = vadd.f32 %v104, %v4405
    %v4407 = vpop.f32.mrf.mxu0
    %v4408 = vadd.f32 %v108, %v4407
    %4409 = vdwg.mxu0
    %v4410 = vtanh.pop %v4335
    %v4411 = vtanh.pop %v4337
    %v4412 = vtanh.pop %v4406
    %v4413 = vtanh.pop %v4408
    %v4415 = vcombine.high %v4118, %v4118
    %v4417 = vunpack.c.l.s4 1983009808
    %v4418 = vunpack.c.0.s8 %v4417
    %v4419 = vlaneseq
    %v4420 = vshrl.u32 %v4419, 7
    %v4421 = vsub.s32 %v4418, %v4420
    %v4422 = vrot.slane %v4118, %v4421
    %v4424 = vunpack.c.l.s4 1983009808
    %v4425 = vunpack.c.0.s8 %v4424
    %v4426 = vlaneseq
    %v4427 = vshrl.u32 %v4426, 7
    %v4428 = vsub.s32 %v4425, %v4427
    %v4429 = vrot.slane %v4415, %v4428
    %v4430 = vcombine.high %v4422, %v4422
    %v4431 = vcombine.high %v4429, %v4429
    %v4436 = vmul.f32 %v4410, %v4422
    %v4437 = vmul.f32 %v4411, %v4430
    %v4438 = vmul.f32 %v4412, %v4429
    %v4439 = vmul.f32 %v4413, %v4431
    %v4440 = vmul.f32 %v4114, -0.001
    %v4441 = vmul.f32 %v4440, %v4119
    %v4442 = vadd.f32 %v4441, %v4436
    %v4443 = vadd.f32 %v4442, %v4437
    %v4444 = vadd.f32 %v4443, %v4438
    %v4445 = vadd.f32 %v4444, %v4439
    %v4446 = vmul.f32 %v4445, 0.33333334
    %v4447 = vadd.f32 %v4114, %v4446
    %4448 = vmatprep.subr.mxu0 0.0
    %4449 = vmatpush1.msra.mxu0 %v54
    %4450 = vmatprep.subr.mxu0 0.0
    %4451 = vmatpush1.msra.mxu0 %v53
    %4452 = vmatprep.subr.mxu0 0.0
    %4453 = vmatpush1.msra.mxu0 %v52
    %4454 = vmatprep.subr.mxu0 0.0
    %4455 = vmatpush1.msra.mxu0 %v51
    %4456 = vmatprep.subr.mxu0 0.0
    %4457 = vmatpush1.msra.mxu0 %v50
    %4458 = vmatprep.subr.mxu0 0.0
    %4459 = vmatpush1.msra.mxu0 %v49
    %4460 = vmatprep.subr.mxu0 0.0
    %4461 = vmatpush1.msra.mxu0 %v48
    %4462 = vmatprep.subr.mxu0 0.0
    %4463 = vmatpush1.msra.mxu0 %v47
    %4464 = vmatprep.subr.mxu0 0.0
    %4465 = vmatpush1.msra.mxu0 %v46
    %4466 = vmatprep.subr.mxu0 0.0
    %4467 = vmatpush1.msra.mxu0 %v45
    %4468 = vmatprep.subr.mxu0 0.0
    %4469 = vmatpush1.msra.mxu0 %v44
    %4470 = vmatprep.subr.mxu0 0.0
    %4471 = vmatpush1.msra.mxu0 %v43
    %4472 = vmatprep.subr.mxu0 0.0
    %4473 = vmatpush1.msra.mxu0 %v42
    %4474 = vmatprep.subr.mxu0 0.0
    %4475 = vmatpush1.msra.mxu0 %v41
    %4476 = vmatprep.subr.mxu0 0.0
    %4477 = vmatpush1.msra.mxu0 %v40
    %4478 = vmatprep.subr.mxu0 0.0
    %4479 = vmatpush1.msra.mxu0 %v39
    %4480 = vmatprep.subr.mxu0 0.0
    %4481 = vmatpush2.msra.mxu0 0.0
    %4482 = vmatprep.subr.mxu0 0.0
    %4483 = vmatpush2.msra.mxu0 0.0
    %4484 = vmatprep.subr.mxu0 0.0
    %4485 = vmatpush2.msra.mxu0 0.0
    %4486 = vmatprep.subr.mxu0 0.0
    %4487 = vmatpush2.msra.mxu0 0.0
    %4488 = vmatprep.subr.mxu0 0.0
    %4489 = vmatpush2.msra.mxu0 0.0
    %4490 = vmatprep.subr.mxu0 0.0
    %4491 = vmatpush2.msra.mxu0 0.0
    %4492 = vmatprep.subr.mxu0 0.0
    %4493 = vmatpush2.msra.mxu0 0.0
    %4494 = vmatprep.subr.mxu0 0.0
    %4495 = vmatpush2.msra.mxu0 0.0
    %4496 = vmatprep.subr.mxu0 0.0
    %4497 = vmatpush2.msra.mxu0 0.0
    %4498 = vmatprep.subr.mxu0 0.0
    %4499 = vmatpush2.msra.mxu0 0.0
    %4500 = vmatprep.subr.mxu0 0.0
    %4501 = vmatpush2.msra.mxu0 0.0
    %4502 = vmatprep.subr.mxu0 0.0
    %4503 = vmatpush2.msra.mxu0 0.0
    %4504 = vmatprep.subr.mxu0 0.0
    %4505 = vmatpush2.msra.mxu0 0.0
    %4506 = vmatprep.subr.mxu0 0.0
    %4507 = vmatpush2.msra.mxu0 0.0
    %4508 = vmatprep.subr.mxu0 0.0
    %4509 = vmatpush2.msra.mxu0 0.0
    %4510 = vmatprep.subr.mxu0 0.0
    %4511 = vmatpush2.msra.mxu0 0.0
    %4512 = vmatprep.mubr.f32.mxu0 0.0
    %4513 = vmatmul.mubr.f32.gmra.mxu0 %v4447
    %v4514 = vpop.f32.mrf.mxu0
    %v4515 = vadd.f32 %v87, %v4514
    %v4516 = vpop.f32.mrf.mxu0
    %4517 = vdwg.mxu0
    %v4518 = vmax.f32 %v4515, 0.0
    %v4520 = vsel %vm201, %v4518, 0
    %4522 = vmatprep.subr.mxu0 0.0
    %4523 = vmatpush1.msra.mxu0 0.0
    %4524 = vmatprep.subr.mxu0 0.0
    %4525 = vmatpush1.msra.mxu0 0.0
    %4526 = vmatprep.subr.mxu0 0.0
    %4527 = vmatpush1.msra.mxu0 0.0
    %4528 = vmatprep.subr.mxu0 0.0
    %4529 = vmatpush1.msra.mxu0 0.0
    %4530 = vmatprep.subr.mxu0 0.0
    %4531 = vmatpush1.msra.mxu0 0.0
    %4532 = vmatprep.subr.mxu0 0.0
    %4533 = vmatpush1.msra.mxu0 0.0
    %4534 = vmatprep.subr.mxu0 0.0
    %4535 = vmatpush1.msra.mxu0 0.0
    %4536 = vmatprep.subr.mxu0 0.0
    %4537 = vmatpush1.msra.mxu0 0.0
    %4538 = vmatprep.subr.mxu0 0.0
    %4539 = vmatpush1.msra.mxu0 0.0
    %4540 = vmatprep.subr.mxu0 0.0
    %4541 = vmatpush1.msra.mxu0 0.0
    %4542 = vmatprep.subr.mxu0 0.0
    %4543 = vmatpush1.msra.mxu0 0.0
    %4544 = vmatprep.subr.mxu0 0.0
    %4545 = vmatpush1.msra.mxu0 0.0
    %4546 = vmatprep.subr.mxu0 0.0
    %4547 = vmatpush1.msra.mxu0 %v59
    %4548 = vmatprep.subr.mxu0 0.0
    %4549 = vmatpush1.msra.mxu0 %v58
    %4550 = vmatprep.subr.mxu0 0.0
    %4551 = vmatpush1.msra.mxu0 %v57
    %4552 = vmatprep.subr.mxu0 0.0
    %4553 = vmatpush1.msra.mxu0 %v56
    %4554 = vmatprep.subr.mxu0 0.0
    %4555 = vmatpush2.msra.mxu0 0.0
    %4556 = vmatprep.subr.mxu0 0.0
    %4557 = vmatpush2.msra.mxu0 0.0
    %4558 = vmatprep.subr.mxu0 0.0
    %4559 = vmatpush2.msra.mxu0 0.0
    %4560 = vmatprep.subr.mxu0 0.0
    %4561 = vmatpush2.msra.mxu0 0.0
    %4562 = vmatprep.subr.mxu0 0.0
    %4563 = vmatpush2.msra.mxu0 0.0
    %4564 = vmatprep.subr.mxu0 0.0
    %4565 = vmatpush2.msra.mxu0 0.0
    %4566 = vmatprep.subr.mxu0 0.0
    %4567 = vmatpush2.msra.mxu0 0.0
    %4568 = vmatprep.subr.mxu0 0.0
    %4569 = vmatpush2.msra.mxu0 0.0
    %4570 = vmatprep.subr.mxu0 0.0
    %4571 = vmatpush2.msra.mxu0 0.0
    %4572 = vmatprep.subr.mxu0 0.0
    %4573 = vmatpush2.msra.mxu0 0.0
    %4574 = vmatprep.subr.mxu0 0.0
    %4575 = vmatpush2.msra.mxu0 0.0
    %4576 = vmatprep.subr.mxu0 0.0
    %4577 = vmatpush2.msra.mxu0 0.0
    %4578 = vmatprep.subr.mxu0 0.0
    %4579 = vmatpush2.msra.mxu0 0.0
    %4580 = vmatprep.subr.mxu0 0.0
    %4581 = vmatpush2.msra.mxu0 0.0
    %4582 = vmatprep.subr.mxu0 0.0
    %4583 = vmatpush2.msra.mxu0 0.0
    %4584 = vmatprep.subr.mxu0 0.0
    %4585 = vmatpush2.msra.mxu0 0.0
    %4586 = vmatprep.mubr.f32.mxu0 0.0
    %4587 = vmatmul.mubr.f32.gmra.mxu0 %v4520
    %v4588 = vpop.f32.mrf.mxu0
    %v4589 = vadd.f32 %v91, %v4588
    %v4590 = vpop.f32.mrf.mxu0
    %4591 = vdwg.mxu0
    %v4592 = vmax.f32 %v4589, 0.0
    %v4594 = vsel %vm201, %v4592, 0
    %4596 = vmatprep.subr.mxu0 0.0
    %4597 = vmatpush1.msra.mxu0 0.0
    %4598 = vmatprep.subr.mxu0 0.0
    %4599 = vmatpush1.msra.mxu0 0.0
    %4600 = vmatprep.subr.mxu0 0.0
    %4601 = vmatpush1.msra.mxu0 0.0
    %4602 = vmatprep.subr.mxu0 0.0
    %4603 = vmatpush1.msra.mxu0 0.0
    %4604 = vmatprep.subr.mxu0 0.0
    %4605 = vmatpush1.msra.mxu0 0.0
    %4606 = vmatprep.subr.mxu0 0.0
    %4607 = vmatpush1.msra.mxu0 0.0
    %4608 = vmatprep.subr.mxu0 0.0
    %4609 = vmatpush1.msra.mxu0 0.0
    %4610 = vmatprep.subr.mxu0 0.0
    %4611 = vmatpush1.msra.mxu0 0.0
    %4612 = vmatprep.subr.mxu0 0.0
    %4613 = vmatpush1.msra.mxu0 0.0
    %4614 = vmatprep.subr.mxu0 0.0
    %4615 = vmatpush1.msra.mxu0 0.0
    %4616 = vmatprep.subr.mxu0 0.0
    %4617 = vmatpush1.msra.mxu0 0.0
    %4618 = vmatprep.subr.mxu0 0.0
    %4619 = vmatpush1.msra.mxu0 0.0
    %4620 = vmatprep.subr.mxu0 %v79
    %4621 = vmatpush1.msra.mxu0 %v78
    %4622 = vmatprep.subr.mxu0 %v75
    %4623 = vmatpush1.msra.mxu0 %v74
    %4624 = vmatprep.subr.mxu0 %v71
    %4625 = vmatpush1.msra.mxu0 %v70
    %4626 = vmatprep.subr.mxu0 %v67
    %4627 = vmatpush1.msra.mxu0 %v66
    %4628 = vmatprep.subr.mxu0 0.0
    %4629 = vmatpush2.msra.mxu0 0.0
    %4630 = vmatprep.subr.mxu0 0.0
    %4631 = vmatpush2.msra.mxu0 0.0
    %4632 = vmatprep.subr.mxu0 0.0
    %4633 = vmatpush2.msra.mxu0 0.0
    %4634 = vmatprep.subr.mxu0 0.0
    %4635 = vmatpush2.msra.mxu0 0.0
    %4636 = vmatprep.subr.mxu0 0.0
    %4637 = vmatpush2.msra.mxu0 0.0
    %4638 = vmatprep.subr.mxu0 0.0
    %4639 = vmatpush2.msra.mxu0 0.0
    %4640 = vmatprep.subr.mxu0 0.0
    %4641 = vmatpush2.msra.mxu0 0.0
    %4642 = vmatprep.subr.mxu0 0.0
    %4643 = vmatpush2.msra.mxu0 0.0
    %4644 = vmatprep.subr.mxu0 0.0
    %4645 = vmatpush2.msra.mxu0 0.0
    %4646 = vmatprep.subr.mxu0 0.0
    %4647 = vmatpush2.msra.mxu0 0.0
    %4648 = vmatprep.subr.mxu0 0.0
    %4649 = vmatpush2.msra.mxu0 0.0
    %4650 = vmatprep.subr.mxu0 0.0
    %4651 = vmatpush2.msra.mxu0 0.0
    %4652 = vmatprep.subr.mxu0 0.0
    %4653 = vmatpush2.msra.mxu0 0.0
    %4654 = vmatprep.subr.mxu0 0.0
    %4655 = vmatpush2.msra.mxu0 0.0
    %4656 = vmatprep.subr.mxu0 0.0
    %4657 = vmatpush2.msra.mxu0 0.0
    %4658 = vmatprep.subr.mxu0 0.0
    %4659 = vmatpush2.msra.mxu0 0.0
    %4660 = vmatprep.mubr.f32.mxu0 0.0
    %4661 = vmatmul.mubr.f32.gmra.mxu0 %v4594
    %v4662 = vpop.f32.mrf.mxu0
    %v4663 = vadd.f32 %v96, %v4662
    %v4664 = vpop.f32.mrf.mxu0
    %v4665 = vadd.f32 %v100, %v4664
    %4666 = vdwg.mxu0
    %4667 = vmatprep.subr.mxu0 0.0
    %4668 = vmatpush1.msra.mxu0 0.0
    %4669 = vmatprep.subr.mxu0 0.0
    %4670 = vmatpush1.msra.mxu0 0.0
    %4671 = vmatprep.subr.mxu0 0.0
    %4672 = vmatpush1.msra.mxu0 0.0
    %4673 = vmatprep.subr.mxu0 0.0
    %4674 = vmatpush1.msra.mxu0 0.0
    %4675 = vmatprep.subr.mxu0 0.0
    %4676 = vmatpush1.msra.mxu0 0.0
    %4677 = vmatprep.subr.mxu0 0.0
    %4678 = vmatpush1.msra.mxu0 0.0
    %4679 = vmatprep.subr.mxu0 0.0
    %4680 = vmatpush1.msra.mxu0 0.0
    %4681 = vmatprep.subr.mxu0 0.0
    %4682 = vmatpush1.msra.mxu0 0.0
    %4683 = vmatprep.subr.mxu0 0.0
    %4684 = vmatpush1.msra.mxu0 0.0
    %4685 = vmatprep.subr.mxu0 0.0
    %4686 = vmatpush1.msra.mxu0 0.0
    %4687 = vmatprep.subr.mxu0 0.0
    %4688 = vmatpush1.msra.mxu0 0.0
    %4689 = vmatprep.subr.mxu0 0.0
    %4690 = vmatpush1.msra.mxu0 0.0
    %4691 = vmatprep.subr.mxu0 %v81
    %4692 = vmatpush1.msra.mxu0 %v80
    %4693 = vmatprep.subr.mxu0 %v77
    %4694 = vmatpush1.msra.mxu0 %v76
    %4695 = vmatprep.subr.mxu0 %v73
    %4696 = vmatpush1.msra.mxu0 %v72
    %4697 = vmatprep.subr.mxu0 %v69
    %4698 = vmatpush1.msra.mxu0 %v68
    %4699 = vmatprep.subr.mxu0 0.0
    %4700 = vmatpush2.msra.mxu0 0.0
    %4701 = vmatprep.subr.mxu0 0.0
    %4702 = vmatpush2.msra.mxu0 0.0
    %4703 = vmatprep.subr.mxu0 0.0
    %4704 = vmatpush2.msra.mxu0 0.0
    %4705 = vmatprep.subr.mxu0 0.0
    %4706 = vmatpush2.msra.mxu0 0.0
    %4707 = vmatprep.subr.mxu0 0.0
    %4708 = vmatpush2.msra.mxu0 0.0
    %4709 = vmatprep.subr.mxu0 0.0
    %4710 = vmatpush2.msra.mxu0 0.0
    %4711 = vmatprep.subr.mxu0 0.0
    %4712 = vmatpush2.msra.mxu0 0.0
    %4713 = vmatprep.subr.mxu0 0.0
    %4714 = vmatpush2.msra.mxu0 0.0
    %4715 = vmatprep.subr.mxu0 0.0
    %4716 = vmatpush2.msra.mxu0 0.0
    %4717 = vmatprep.subr.mxu0 0.0
    %4718 = vmatpush2.msra.mxu0 0.0
    %4719 = vmatprep.subr.mxu0 0.0
    %4720 = vmatpush2.msra.mxu0 0.0
    %4721 = vmatprep.subr.mxu0 0.0
    %4722 = vmatpush2.msra.mxu0 0.0
    %4723 = vmatprep.subr.mxu0 0.0
    %4724 = vmatpush2.msra.mxu0 0.0
    %4725 = vmatprep.subr.mxu0 0.0
    %4726 = vmatpush2.msra.mxu0 0.0
    %4727 = vmatprep.subr.mxu0 0.0
    %4728 = vmatpush2.msra.mxu0 0.0
    %4729 = vmatprep.subr.mxu0 0.0
    %4730 = vmatpush2.msra.mxu0 0.0
    %4731 = vmatprep.mubr.f32.mxu0 0.0
    %4732 = vmatmul.mubr.f32.gmra.mxu0 %v4594
    %v4733 = vpop.f32.mrf.mxu0
    %v4734 = vadd.f32 %v104, %v4733
    %v4735 = vpop.f32.mrf.mxu0
    %v4736 = vadd.f32 %v108, %v4735
    %4737 = vdwg.mxu0
    %v4738 = vtanh.pop %v4663
    %v4739 = vtanh.pop %v4665
    %v4740 = vtanh.pop %v4734
    %v4741 = vtanh.pop %v4736
    %v4742 = vmul.f32 %v4738, %v4422
    %v4743 = vmul.f32 %v4739, %v4430
    %v4744 = vmul.f32 %v4740, %v4429
    %v4745 = vmul.f32 %v4741, %v4431
    %v4746 = vmul.f32 %v4447, -0.001
    %v4747 = vmul.f32 %v4746, %v4119
    %v4748 = vadd.f32 %v4747, %v4742
    %v4749 = vadd.f32 %v4748, %v4743
    %v4750 = vadd.f32 %v4749, %v4744
    %v4751 = vadd.f32 %v4750, %v4745
    %v4752 = vsub.f32 %v4751, %v4446
    %v4753 = vadd.f32 %v4114, %v4752
    %4754 = vmatprep.subr.mxu0 0.0
    %4755 = vmatpush1.msra.mxu0 %v54
    %4756 = vmatprep.subr.mxu0 0.0
    %4757 = vmatpush1.msra.mxu0 %v53
    %4758 = vmatprep.subr.mxu0 0.0
    %4759 = vmatpush1.msra.mxu0 %v52
    %4760 = vmatprep.subr.mxu0 0.0
    %4761 = vmatpush1.msra.mxu0 %v51
    %4762 = vmatprep.subr.mxu0 0.0
    %4763 = vmatpush1.msra.mxu0 %v50
    %4764 = vmatprep.subr.mxu0 0.0
    %4765 = vmatpush1.msra.mxu0 %v49
    %4766 = vmatprep.subr.mxu0 0.0
    %4767 = vmatpush1.msra.mxu0 %v48
    %4768 = vmatprep.subr.mxu0 0.0
    %4769 = vmatpush1.msra.mxu0 %v47
    %4770 = vmatprep.subr.mxu0 0.0
    %4771 = vmatpush1.msra.mxu0 %v46
    %4772 = vmatprep.subr.mxu0 0.0
    %4773 = vmatpush1.msra.mxu0 %v45
    %4774 = vmatprep.subr.mxu0 0.0
    %4775 = vmatpush1.msra.mxu0 %v44
    %4776 = vmatprep.subr.mxu0 0.0
    %4777 = vmatpush1.msra.mxu0 %v43
    %4778 = vmatprep.subr.mxu0 0.0
    %4779 = vmatpush1.msra.mxu0 %v42
    %4780 = vmatprep.subr.mxu0 0.0
    %4781 = vmatpush1.msra.mxu0 %v41
    %4782 = vmatprep.subr.mxu0 0.0
    %4783 = vmatpush1.msra.mxu0 %v40
    %4784 = vmatprep.subr.mxu0 0.0
    %4785 = vmatpush1.msra.mxu0 %v39
    %4786 = vmatprep.subr.mxu0 0.0
    %4787 = vmatpush2.msra.mxu0 0.0
    %4788 = vmatprep.subr.mxu0 0.0
    %4789 = vmatpush2.msra.mxu0 0.0
    %4790 = vmatprep.subr.mxu0 0.0
    %4791 = vmatpush2.msra.mxu0 0.0
    %4792 = vmatprep.subr.mxu0 0.0
    %4793 = vmatpush2.msra.mxu0 0.0
    %4794 = vmatprep.subr.mxu0 0.0
    %4795 = vmatpush2.msra.mxu0 0.0
    %4796 = vmatprep.subr.mxu0 0.0
    %4797 = vmatpush2.msra.mxu0 0.0
    %4798 = vmatprep.subr.mxu0 0.0
    %4799 = vmatpush2.msra.mxu0 0.0
    %4800 = vmatprep.subr.mxu0 0.0
    %4801 = vmatpush2.msra.mxu0 0.0
    %4802 = vmatprep.subr.mxu0 0.0
    %4803 = vmatpush2.msra.mxu0 0.0
    %4804 = vmatprep.subr.mxu0 0.0
    %4805 = vmatpush2.msra.mxu0 0.0
    %4806 = vmatprep.subr.mxu0 0.0
    %4807 = vmatpush2.msra.mxu0 0.0
    %4808 = vmatprep.subr.mxu0 0.0
    %4809 = vmatpush2.msra.mxu0 0.0
    %4810 = vmatprep.subr.mxu0 0.0
    %4811 = vmatpush2.msra.mxu0 0.0
    %4812 = vmatprep.subr.mxu0 0.0
    %4813 = vmatpush2.msra.mxu0 0.0
    %4814 = vmatprep.subr.mxu0 0.0
    %4815 = vmatpush2.msra.mxu0 0.0
    %4816 = vmatprep.subr.mxu0 0.0
    %4817 = vmatpush2.msra.mxu0 0.0
    %4818 = vmatprep.mubr.f32.mxu0 0.0
    %4819 = vmatmul.mubr.f32.gmra.mxu0 %v4753
    %v4820 = vpop.f32.mrf.mxu0
    %v4821 = vadd.f32 %v87, %v4820
    %v4822 = vpop.f32.mrf.mxu0
    %4823 = vdwg.mxu0
    %v4824 = vmax.f32 %v4821, 0.0
    %v4826 = vsel %vm201, %v4824, 0
    %4828 = vmatprep.subr.mxu0 0.0
    %4829 = vmatpush1.msra.mxu0 0.0
    %4830 = vmatprep.subr.mxu0 0.0
    %4831 = vmatpush1.msra.mxu0 0.0
    %4832 = vmatprep.subr.mxu0 0.0
    %4833 = vmatpush1.msra.mxu0 0.0
    %4834 = vmatprep.subr.mxu0 0.0
    %4835 = vmatpush1.msra.mxu0 0.0
    %4836 = vmatprep.subr.mxu0 0.0
    %4837 = vmatpush1.msra.mxu0 0.0
    %4838 = vmatprep.subr.mxu0 0.0
    %4839 = vmatpush1.msra.mxu0 0.0
    %4840 = vmatprep.subr.mxu0 0.0
    %4841 = vmatpush1.msra.mxu0 0.0
    %4842 = vmatprep.subr.mxu0 0.0
    %4843 = vmatpush1.msra.mxu0 0.0
    %4844 = vmatprep.subr.mxu0 0.0
    %4845 = vmatpush1.msra.mxu0 0.0
    %4846 = vmatprep.subr.mxu0 0.0
    %4847 = vmatpush1.msra.mxu0 0.0
    %4848 = vmatprep.subr.mxu0 0.0
    %4849 = vmatpush1.msra.mxu0 0.0
    %4850 = vmatprep.subr.mxu0 0.0
    %4851 = vmatpush1.msra.mxu0 0.0
    %4852 = vmatprep.subr.mxu0 0.0
    %4853 = vmatpush1.msra.mxu0 %v59
    %4854 = vmatprep.subr.mxu0 0.0
    %4855 = vmatpush1.msra.mxu0 %v58
    %4856 = vmatprep.subr.mxu0 0.0
    %4857 = vmatpush1.msra.mxu0 %v57
    %4858 = vmatprep.subr.mxu0 0.0
    %4859 = vmatpush1.msra.mxu0 %v56
    %4860 = vmatprep.subr.mxu0 0.0
    %4861 = vmatpush2.msra.mxu0 0.0
    %4862 = vmatprep.subr.mxu0 0.0
    %4863 = vmatpush2.msra.mxu0 0.0
    %4864 = vmatprep.subr.mxu0 0.0
    %4865 = vmatpush2.msra.mxu0 0.0
    %4866 = vmatprep.subr.mxu0 0.0
    %4867 = vmatpush2.msra.mxu0 0.0
    %4868 = vmatprep.subr.mxu0 0.0
    %4869 = vmatpush2.msra.mxu0 0.0
    %4870 = vmatprep.subr.mxu0 0.0
    %4871 = vmatpush2.msra.mxu0 0.0
    %4872 = vmatprep.subr.mxu0 0.0
    %4873 = vmatpush2.msra.mxu0 0.0
    %4874 = vmatprep.subr.mxu0 0.0
    %4875 = vmatpush2.msra.mxu0 0.0
    %4876 = vmatprep.subr.mxu0 0.0
    %4877 = vmatpush2.msra.mxu0 0.0
    %4878 = vmatprep.subr.mxu0 0.0
    %4879 = vmatpush2.msra.mxu0 0.0
    %4880 = vmatprep.subr.mxu0 0.0
    %4881 = vmatpush2.msra.mxu0 0.0
    %4882 = vmatprep.subr.mxu0 0.0
    %4883 = vmatpush2.msra.mxu0 0.0
    %4884 = vmatprep.subr.mxu0 0.0
    %4885 = vmatpush2.msra.mxu0 0.0
    %4886 = vmatprep.subr.mxu0 0.0
    %4887 = vmatpush2.msra.mxu0 0.0
    %4888 = vmatprep.subr.mxu0 0.0
    %4889 = vmatpush2.msra.mxu0 0.0
    %4890 = vmatprep.subr.mxu0 0.0
    %4891 = vmatpush2.msra.mxu0 0.0
    %4892 = vmatprep.mubr.f32.mxu0 0.0
    %4893 = vmatmul.mubr.f32.gmra.mxu0 %v4826
    %v4894 = vpop.f32.mrf.mxu0
    %v4895 = vadd.f32 %v91, %v4894
    %v4896 = vpop.f32.mrf.mxu0
    %4897 = vdwg.mxu0
    %v4898 = vmax.f32 %v4895, 0.0
    %v4900 = vsel %vm201, %v4898, 0
    %4902 = vmatprep.subr.mxu0 0.0
    %4903 = vmatpush1.msra.mxu0 0.0
    %4904 = vmatprep.subr.mxu0 0.0
    %4905 = vmatpush1.msra.mxu0 0.0
    %4906 = vmatprep.subr.mxu0 0.0
    %4907 = vmatpush1.msra.mxu0 0.0
    %4908 = vmatprep.subr.mxu0 0.0
    %4909 = vmatpush1.msra.mxu0 0.0
    %4910 = vmatprep.subr.mxu0 0.0
    %4911 = vmatpush1.msra.mxu0 0.0
    %4912 = vmatprep.subr.mxu0 0.0
    %4913 = vmatpush1.msra.mxu0 0.0
    %4914 = vmatprep.subr.mxu0 0.0
    %4915 = vmatpush1.msra.mxu0 0.0
    %4916 = vmatprep.subr.mxu0 0.0
    %4917 = vmatpush1.msra.mxu0 0.0
    %4918 = vmatprep.subr.mxu0 0.0
    %4919 = vmatpush1.msra.mxu0 0.0
    %4920 = vmatprep.subr.mxu0 0.0
    %4921 = vmatpush1.msra.mxu0 0.0
    %4922 = vmatprep.subr.mxu0 0.0
    %4923 = vmatpush1.msra.mxu0 0.0
    %4924 = vmatprep.subr.mxu0 0.0
    %4925 = vmatpush1.msra.mxu0 0.0
    %4926 = vmatprep.subr.mxu0 %v79
    %4927 = vmatpush1.msra.mxu0 %v78
    %4928 = vmatprep.subr.mxu0 %v75
    %4929 = vmatpush1.msra.mxu0 %v74
    %4930 = vmatprep.subr.mxu0 %v71
    %4931 = vmatpush1.msra.mxu0 %v70
    %4932 = vmatprep.subr.mxu0 %v67
    %4933 = vmatpush1.msra.mxu0 %v66
    %4934 = vmatprep.subr.mxu0 0.0
    %4935 = vmatpush2.msra.mxu0 0.0
    %4936 = vmatprep.subr.mxu0 0.0
    %4937 = vmatpush2.msra.mxu0 0.0
    %4938 = vmatprep.subr.mxu0 0.0
    %4939 = vmatpush2.msra.mxu0 0.0
    %4940 = vmatprep.subr.mxu0 0.0
    %4941 = vmatpush2.msra.mxu0 0.0
    %4942 = vmatprep.subr.mxu0 0.0
    %4943 = vmatpush2.msra.mxu0 0.0
    %4944 = vmatprep.subr.mxu0 0.0
    %4945 = vmatpush2.msra.mxu0 0.0
    %4946 = vmatprep.subr.mxu0 0.0
    %4947 = vmatpush2.msra.mxu0 0.0
    %4948 = vmatprep.subr.mxu0 0.0
    %4949 = vmatpush2.msra.mxu0 0.0
    %4950 = vmatprep.subr.mxu0 0.0
    %4951 = vmatpush2.msra.mxu0 0.0
    %4952 = vmatprep.subr.mxu0 0.0
    %4953 = vmatpush2.msra.mxu0 0.0
    %4954 = vmatprep.subr.mxu0 0.0
    %4955 = vmatpush2.msra.mxu0 0.0
    %4956 = vmatprep.subr.mxu0 0.0
    %4957 = vmatpush2.msra.mxu0 0.0
    %4958 = vmatprep.subr.mxu0 0.0
    %4959 = vmatpush2.msra.mxu0 0.0
    %4960 = vmatprep.subr.mxu0 0.0
    %4961 = vmatpush2.msra.mxu0 0.0
    %4962 = vmatprep.subr.mxu0 0.0
    %4963 = vmatpush2.msra.mxu0 0.0
    %4964 = vmatprep.subr.mxu0 0.0
    %4965 = vmatpush2.msra.mxu0 0.0
    %4966 = vmatprep.mubr.f32.mxu0 0.0
    %4967 = vmatmul.mubr.f32.gmra.mxu0 %v4900
    %v4968 = vpop.f32.mrf.mxu0
    %v4969 = vadd.f32 %v96, %v4968
    %v4970 = vpop.f32.mrf.mxu0
    %v4971 = vadd.f32 %v100, %v4970
    %4972 = vdwg.mxu0
    %4973 = vmatprep.subr.mxu0 0.0
    %4974 = vmatpush1.msra.mxu0 0.0
    %4975 = vmatprep.subr.mxu0 0.0
    %4976 = vmatpush1.msra.mxu0 0.0
    %4977 = vmatprep.subr.mxu0 0.0
    %4978 = vmatpush1.msra.mxu0 0.0
    %4979 = vmatprep.subr.mxu0 0.0
    %4980 = vmatpush1.msra.mxu0 0.0
    %4981 = vmatprep.subr.mxu0 0.0
    %4982 = vmatpush1.msra.mxu0 0.0
    %4983 = vmatprep.subr.mxu0 0.0
    %4984 = vmatpush1.msra.mxu0 0.0
    %4985 = vmatprep.subr.mxu0 0.0
    %4986 = vmatpush1.msra.mxu0 0.0
    %4987 = vmatprep.subr.mxu0 0.0
    %4988 = vmatpush1.msra.mxu0 0.0
    %4989 = vmatprep.subr.mxu0 0.0
    %4990 = vmatpush1.msra.mxu0 0.0
    %4991 = vmatprep.subr.mxu0 0.0
    %4992 = vmatpush1.msra.mxu0 0.0
    %4993 = vmatprep.subr.mxu0 0.0
    %4994 = vmatpush1.msra.mxu0 0.0
    %4995 = vmatprep.subr.mxu0 0.0
    %4996 = vmatpush1.msra.mxu0 0.0
    %4997 = vmatprep.subr.mxu0 %v81
    %4998 = vmatpush1.msra.mxu0 %v80
    %4999 = vmatprep.subr.mxu0 %v77
    %5000 = vmatpush1.msra.mxu0 %v76
    %5001 = vmatprep.subr.mxu0 %v73
    %5002 = vmatpush1.msra.mxu0 %v72
    %5003 = vmatprep.subr.mxu0 %v69
    %5004 = vmatpush1.msra.mxu0 %v68
    %5005 = vmatprep.subr.mxu0 0.0
    %5006 = vmatpush2.msra.mxu0 0.0
    %5007 = vmatprep.subr.mxu0 0.0
    %5008 = vmatpush2.msra.mxu0 0.0
    %5009 = vmatprep.subr.mxu0 0.0
    %5010 = vmatpush2.msra.mxu0 0.0
    %5011 = vmatprep.subr.mxu0 0.0
    %5012 = vmatpush2.msra.mxu0 0.0
    %5013 = vmatprep.subr.mxu0 0.0
    %5014 = vmatpush2.msra.mxu0 0.0
    %5015 = vmatprep.subr.mxu0 0.0
    %5016 = vmatpush2.msra.mxu0 0.0
    %5017 = vmatprep.subr.mxu0 0.0
    %5018 = vmatpush2.msra.mxu0 0.0
    %5019 = vmatprep.subr.mxu0 0.0
    %5020 = vmatpush2.msra.mxu0 0.0
    %5021 = vmatprep.subr.mxu0 0.0
    %5022 = vmatpush2.msra.mxu0 0.0
    %5023 = vmatprep.subr.mxu0 0.0
    %5024 = vmatpush2.msra.mxu0 0.0
    %5025 = vmatprep.subr.mxu0 0.0
    %5026 = vmatpush2.msra.mxu0 0.0
    %5027 = vmatprep.subr.mxu0 0.0
    %5028 = vmatpush2.msra.mxu0 0.0
    %5029 = vmatprep.subr.mxu0 0.0
    %5030 = vmatpush2.msra.mxu0 0.0
    %5031 = vmatprep.subr.mxu0 0.0
    %5032 = vmatpush2.msra.mxu0 0.0
    %5033 = vmatprep.subr.mxu0 0.0
    %5034 = vmatpush2.msra.mxu0 0.0
    %5035 = vmatprep.subr.mxu0 0.0
    %5036 = vmatpush2.msra.mxu0 0.0
    %5037 = vmatprep.mubr.f32.mxu0 0.0
    %5038 = vmatmul.mubr.f32.gmra.mxu0 %v4900
    %v5039 = vpop.f32.mrf.mxu0
    %v5040 = vadd.f32 %v104, %v5039
    %v5041 = vpop.f32.mrf.mxu0
    %v5042 = vadd.f32 %v108, %v5041
    %5043 = vdwg.mxu0
    %v5044 = vtanh.pop %v4969
    %v5045 = vtanh.pop %v4971
    %v5046 = vtanh.pop %v5040
    %v5047 = vtanh.pop %v5042
    %v5048 = vmul.f32 %v5044, %v4422
    %v5049 = vmul.f32 %v5045, %v4430
    %v5050 = vmul.f32 %v5046, %v4429
    %v5051 = vmul.f32 %v5047, %v4431
    %v5052 = vmul.f32 %v4753, -0.001
    %v5053 = vmul.f32 %v5052, %v4119
    %v5054 = vadd.f32 %v5053, %v5048
    %v5055 = vadd.f32 %v5054, %v5049
    %v5056 = vadd.f32 %v5055, %v5050
    %v5057 = vadd.f32 %v5056, %v5051
    %v5058 = vsub.f32 %v4445, %v4751
    %v5059 = vadd.f32 %v5058, %v5057
    %v5060 = vadd.f32 %v4114, %v5059
    %5061 = vmatprep.subr.mxu0 0.0
    %5062 = vmatpush1.msra.mxu0 %v54
    %5063 = vmatprep.subr.mxu0 0.0
    %5064 = vmatpush1.msra.mxu0 %v53
    %5065 = vmatprep.subr.mxu0 0.0
    %5066 = vmatpush1.msra.mxu0 %v52
    %5067 = vmatprep.subr.mxu0 0.0
    %5068 = vmatpush1.msra.mxu0 %v51
    %5069 = vmatprep.subr.mxu0 0.0
    %5070 = vmatpush1.msra.mxu0 %v50
    %5071 = vmatprep.subr.mxu0 0.0
    %5072 = vmatpush1.msra.mxu0 %v49
    %5073 = vmatprep.subr.mxu0 0.0
    %5074 = vmatpush1.msra.mxu0 %v48
    %5075 = vmatprep.subr.mxu0 0.0
    %5076 = vmatpush1.msra.mxu0 %v47
    %5077 = vmatprep.subr.mxu0 0.0
    %5078 = vmatpush1.msra.mxu0 %v46
    %5079 = vmatprep.subr.mxu0 0.0
    %5080 = vmatpush1.msra.mxu0 %v45
    %5081 = vmatprep.subr.mxu0 0.0
    %5082 = vmatpush1.msra.mxu0 %v44
    %5083 = vmatprep.subr.mxu0 0.0
    %5084 = vmatpush1.msra.mxu0 %v43
    %5085 = vmatprep.subr.mxu0 0.0
    %5086 = vmatpush1.msra.mxu0 %v42
    %5087 = vmatprep.subr.mxu0 0.0
    %5088 = vmatpush1.msra.mxu0 %v41
    %5089 = vmatprep.subr.mxu0 0.0
    %5090 = vmatpush1.msra.mxu0 %v40
    %5091 = vmatprep.subr.mxu0 0.0
    %5092 = vmatpush1.msra.mxu0 %v39
    %5093 = vmatprep.subr.mxu0 0.0
    %5094 = vmatpush2.msra.mxu0 0.0
    %5095 = vmatprep.subr.mxu0 0.0
    %5096 = vmatpush2.msra.mxu0 0.0
    %5097 = vmatprep.subr.mxu0 0.0
    %5098 = vmatpush2.msra.mxu0 0.0
    %5099 = vmatprep.subr.mxu0 0.0
    %5100 = vmatpush2.msra.mxu0 0.0
    %5101 = vmatprep.subr.mxu0 0.0
    %5102 = vmatpush2.msra.mxu0 0.0
    %5103 = vmatprep.subr.mxu0 0.0
    %5104 = vmatpush2.msra.mxu0 0.0
    %5105 = vmatprep.subr.mxu0 0.0
    %5106 = vmatpush2.msra.mxu0 0.0
    %5107 = vmatprep.subr.mxu0 0.0
    %5108 = vmatpush2.msra.mxu0 0.0
    %5109 = vmatprep.subr.mxu0 0.0
    %5110 = vmatpush2.msra.mxu0 0.0
    %5111 = vmatprep.subr.mxu0 0.0
    %5112 = vmatpush2.msra.mxu0 0.0
    %5113 = vmatprep.subr.mxu0 0.0
    %5114 = vmatpush2.msra.mxu0 0.0
    %5115 = vmatprep.subr.mxu0 0.0
    %5116 = vmatpush2.msra.mxu0 0.0
    %5117 = vmatprep.subr.mxu0 0.0
    %5118 = vmatpush2.msra.mxu0 0.0
    %5119 = vmatprep.subr.mxu0 0.0
    %5120 = vmatpush2.msra.mxu0 0.0
    %5121 = vmatprep.subr.mxu0 0.0
    %5122 = vmatpush2.msra.mxu0 0.0
    %5123 = vmatprep.subr.mxu0 0.0
    %5124 = vmatpush2.msra.mxu0 0.0
    %5125 = vmatprep.mubr.f32.mxu0 0.0
    %5126 = vmatmul.mubr.f32.gmra.mxu0 %v5060
    %v5127 = vpop.f32.mrf.mxu0
    %v5128 = vadd.f32 %v87, %v5127
    %v5129 = vpop.f32.mrf.mxu0
    %5130 = vdwg.mxu0
    %v5131 = vmax.f32 %v5128, 0.0
    %v5133 = vsel %vm201, %v5131, 0
    %5135 = vmatprep.subr.mxu0 0.0
    %5136 = vmatpush1.msra.mxu0 0.0
    %5137 = vmatprep.subr.mxu0 0.0
    %5138 = vmatpush1.msra.mxu0 0.0
    %5139 = vmatprep.subr.mxu0 0.0
    %5140 = vmatpush1.msra.mxu0 0.0
    %5141 = vmatprep.subr.mxu0 0.0
    %5142 = vmatpush1.msra.mxu0 0.0
    %5143 = vmatprep.subr.mxu0 0.0
    %5144 = vmatpush1.msra.mxu0 0.0
    %5145 = vmatprep.subr.mxu0 0.0
    %5146 = vmatpush1.msra.mxu0 0.0
    %5147 = vmatprep.subr.mxu0 0.0
    %5148 = vmatpush1.msra.mxu0 0.0
    %5149 = vmatprep.subr.mxu0 0.0
    %5150 = vmatpush1.msra.mxu0 0.0
    %5151 = vmatprep.subr.mxu0 0.0
    %5152 = vmatpush1.msra.mxu0 0.0
    %5153 = vmatprep.subr.mxu0 0.0
    %5154 = vmatpush1.msra.mxu0 0.0
    %5155 = vmatprep.subr.mxu0 0.0
    %5156 = vmatpush1.msra.mxu0 0.0
    %5157 = vmatprep.subr.mxu0 0.0
    %5158 = vmatpush1.msra.mxu0 0.0
    %5159 = vmatprep.subr.mxu0 0.0
    %5160 = vmatpush1.msra.mxu0 %v59
    %5161 = vmatprep.subr.mxu0 0.0
    %5162 = vmatpush1.msra.mxu0 %v58
    %5163 = vmatprep.subr.mxu0 0.0
    %5164 = vmatpush1.msra.mxu0 %v57
    %5165 = vmatprep.subr.mxu0 0.0
    %5166 = vmatpush1.msra.mxu0 %v56
    %5167 = vmatprep.subr.mxu0 0.0
    %5168 = vmatpush2.msra.mxu0 0.0
    %5169 = vmatprep.subr.mxu0 0.0
    %5170 = vmatpush2.msra.mxu0 0.0
    %5171 = vmatprep.subr.mxu0 0.0
    %5172 = vmatpush2.msra.mxu0 0.0
    %5173 = vmatprep.subr.mxu0 0.0
    %5174 = vmatpush2.msra.mxu0 0.0
    %5175 = vmatprep.subr.mxu0 0.0
    %5176 = vmatpush2.msra.mxu0 0.0
    %5177 = vmatprep.subr.mxu0 0.0
    %5178 = vmatpush2.msra.mxu0 0.0
    %5179 = vmatprep.subr.mxu0 0.0
    %5180 = vmatpush2.msra.mxu0 0.0
    %5181 = vmatprep.subr.mxu0 0.0
    %5182 = vmatpush2.msra.mxu0 0.0
    %5183 = vmatprep.subr.mxu0 0.0
    %5184 = vmatpush2.msra.mxu0 0.0
    %5185 = vmatprep.subr.mxu0 0.0
    %5186 = vmatpush2.msra.mxu0 0.0
    %5187 = vmatprep.subr.mxu0 0.0
    %5188 = vmatpush2.msra.mxu0 0.0
    %5189 = vmatprep.subr.mxu0 0.0
    %5190 = vmatpush2.msra.mxu0 0.0
    %5191 = vmatprep.subr.mxu0 0.0
    %5192 = vmatpush2.msra.mxu0 0.0
    %5193 = vmatprep.subr.mxu0 0.0
    %5194 = vmatpush2.msra.mxu0 0.0
    %5195 = vmatprep.subr.mxu0 0.0
    %5196 = vmatpush2.msra.mxu0 0.0
    %5197 = vmatprep.subr.mxu0 0.0
    %5198 = vmatpush2.msra.mxu0 0.0
    %5199 = vmatprep.mubr.f32.mxu0 0.0
    %5200 = vmatmul.mubr.f32.gmra.mxu0 %v5133
    %v5201 = vpop.f32.mrf.mxu0
    %v5202 = vadd.f32 %v91, %v5201
    %v5203 = vpop.f32.mrf.mxu0
    %5204 = vdwg.mxu0
    %v5205 = vmax.f32 %v5202, 0.0
    %v5207 = vsel %vm201, %v5205, 0
    %5209 = vmatprep.subr.mxu0 0.0
    %5210 = vmatpush1.msra.mxu0 0.0
    %5211 = vmatprep.subr.mxu0 0.0
    %5212 = vmatpush1.msra.mxu0 0.0
    %5213 = vmatprep.subr.mxu0 0.0
    %5214 = vmatpush1.msra.mxu0 0.0
    %5215 = vmatprep.subr.mxu0 0.0
    %5216 = vmatpush1.msra.mxu0 0.0
    %5217 = vmatprep.subr.mxu0 0.0
    %5218 = vmatpush1.msra.mxu0 0.0
    %5219 = vmatprep.subr.mxu0 0.0
    %5220 = vmatpush1.msra.mxu0 0.0
    %5221 = vmatprep.subr.mxu0 0.0
    %5222 = vmatpush1.msra.mxu0 0.0
    %5223 = vmatprep.subr.mxu0 0.0
    %5224 = vmatpush1.msra.mxu0 0.0
    %5225 = vmatprep.subr.mxu0 0.0
    %5226 = vmatpush1.msra.mxu0 0.0
    %5227 = vmatprep.subr.mxu0 0.0
    %5228 = vmatpush1.msra.mxu0 0.0
    %5229 = vmatprep.subr.mxu0 0.0
    %5230 = vmatpush1.msra.mxu0 0.0
    %5231 = vmatprep.subr.mxu0 0.0
    %5232 = vmatpush1.msra.mxu0 0.0
    %5233 = vmatprep.subr.mxu0 %v79
    %5234 = vmatpush1.msra.mxu0 %v78
    %5235 = vmatprep.subr.mxu0 %v75
    %5236 = vmatpush1.msra.mxu0 %v74
    %5237 = vmatprep.subr.mxu0 %v71
    %5238 = vmatpush1.msra.mxu0 %v70
    %5239 = vmatprep.subr.mxu0 %v67
    %5240 = vmatpush1.msra.mxu0 %v66
    %5241 = vmatprep.subr.mxu0 0.0
    %5242 = vmatpush2.msra.mxu0 0.0
    %5243 = vmatprep.subr.mxu0 0.0
    %5244 = vmatpush2.msra.mxu0 0.0
    %5245 = vmatprep.subr.mxu0 0.0
    %5246 = vmatpush2.msra.mxu0 0.0
    %5247 = vmatprep.subr.mxu0 0.0
    %5248 = vmatpush2.msra.mxu0 0.0
    %5249 = vmatprep.subr.mxu0 0.0
    %5250 = vmatpush2.msra.mxu0 0.0
    %5251 = vmatprep.subr.mxu0 0.0
    %5252 = vmatpush2.msra.mxu0 0.0
    %5253 = vmatprep.subr.mxu0 0.0
    %5254 = vmatpush2.msra.mxu0 0.0
    %5255 = vmatprep.subr.mxu0 0.0
    %5256 = vmatpush2.msra.mxu0 0.0
    %5257 = vmatprep.subr.mxu0 0.0
    %5258 = vmatpush2.msra.mxu0 0.0
    %5259 = vmatprep.subr.mxu0 0.0
    %5260 = vmatpush2.msra.mxu0 0.0
    %5261 = vmatprep.subr.mxu0 0.0
    %5262 = vmatpush2.msra.mxu0 0.0
    %5263 = vmatprep.subr.mxu0 0.0
    %5264 = vmatpush2.msra.mxu0 0.0
    %5265 = vmatprep.subr.mxu0 0.0
    %5266 = vmatpush2.msra.mxu0 0.0
    %5267 = vmatprep.subr.mxu0 0.0
    %5268 = vmatpush2.msra.mxu0 0.0
    %5269 = vmatprep.subr.mxu0 0.0
    %5270 = vmatpush2.msra.mxu0 0.0
    %5271 = vmatprep.subr.mxu0 0.0
    %5272 = vmatpush2.msra.mxu0 0.0
    %5273 = vmatprep.mubr.f32.mxu0 0.0
    %5274 = vmatmul.mubr.f32.gmra.mxu0 %v5207
    %v5275 = vpop.f32.mrf.mxu0
    %v5276 = vadd.f32 %v96, %v5275
    %v5277 = vpop.f32.mrf.mxu0
    %v5278 = vadd.f32 %v100, %v5277
    %5279 = vdwg.mxu0
    %5280 = vmatprep.subr.mxu0 0.0
    %5281 = vmatpush1.msra.mxu0 0.0
    %5282 = vmatprep.subr.mxu0 0.0
    %5283 = vmatpush1.msra.mxu0 0.0
    %5284 = vmatprep.subr.mxu0 0.0
    %5285 = vmatpush1.msra.mxu0 0.0
    %5286 = vmatprep.subr.mxu0 0.0
    %5287 = vmatpush1.msra.mxu0 0.0
    %5288 = vmatprep.subr.mxu0 0.0
    %5289 = vmatpush1.msra.mxu0 0.0
    %5290 = vmatprep.subr.mxu0 0.0
    %5291 = vmatpush1.msra.mxu0 0.0
    %5292 = vmatprep.subr.mxu0 0.0
    %5293 = vmatpush1.msra.mxu0 0.0
    %5294 = vmatprep.subr.mxu0 0.0
    %5295 = vmatpush1.msra.mxu0 0.0
    %5296 = vmatprep.subr.mxu0 0.0
    %5297 = vmatpush1.msra.mxu0 0.0
    %5298 = vmatprep.subr.mxu0 0.0
    %5299 = vmatpush1.msra.mxu0 0.0
    %5300 = vmatprep.subr.mxu0 0.0
    %5301 = vmatpush1.msra.mxu0 0.0
    %5302 = vmatprep.subr.mxu0 0.0
    %5303 = vmatpush1.msra.mxu0 0.0
    %5304 = vmatprep.subr.mxu0 %v81
    %5305 = vmatpush1.msra.mxu0 %v80
    %5306 = vmatprep.subr.mxu0 %v77
    %5307 = vmatpush1.msra.mxu0 %v76
    %5308 = vmatprep.subr.mxu0 %v73
    %5309 = vmatpush1.msra.mxu0 %v72
    %5310 = vmatprep.subr.mxu0 %v69
    %5311 = vmatpush1.msra.mxu0 %v68
    %5312 = vmatprep.subr.mxu0 0.0
    %5313 = vmatpush2.msra.mxu0 0.0
    %5314 = vmatprep.subr.mxu0 0.0
    %5315 = vmatpush2.msra.mxu0 0.0
    %5316 = vmatprep.subr.mxu0 0.0
    %5317 = vmatpush2.msra.mxu0 0.0
    %5318 = vmatprep.subr.mxu0 0.0
    %5319 = vmatpush2.msra.mxu0 0.0
    %5320 = vmatprep.subr.mxu0 0.0
    %5321 = vmatpush2.msra.mxu0 0.0
    %5322 = vmatprep.subr.mxu0 0.0
    %5323 = vmatpush2.msra.mxu0 0.0
    %5324 = vmatprep.subr.mxu0 0.0
    %5325 = vmatpush2.msra.mxu0 0.0
    %5326 = vmatprep.subr.mxu0 0.0
    %5327 = vmatpush2.msra.mxu0 0.0
    %5328 = vmatprep.subr.mxu0 0.0
    %5329 = vmatpush2.msra.mxu0 0.0
    %5330 = vmatprep.subr.mxu0 0.0
    %5331 = vmatpush2.msra.mxu0 0.0
    %5332 = vmatprep.subr.mxu0 0.0
    %5333 = vmatpush2.msra.mxu0 0.0
    %5334 = vmatprep.subr.mxu0 0.0
    %5335 = vmatpush2.msra.mxu0 0.0
    %5336 = vmatprep.subr.mxu0 0.0
    %5337 = vmatpush2.msra.mxu0 0.0
    %5338 = vmatprep.subr.mxu0 0.0
    %5339 = vmatpush2.msra.mxu0 0.0
    %5340 = vmatprep.subr.mxu0 0.0
    %5341 = vmatpush2.msra.mxu0 0.0
    %5342 = vmatprep.subr.mxu0 0.0
    %5343 = vmatpush2.msra.mxu0 0.0
    %5344 = vmatprep.mubr.f32.mxu0 0.0
    %5345 = vmatmul.mubr.f32.gmra.mxu0 %v5207
    %v5346 = vpop.f32.mrf.mxu0
    %v5347 = vadd.f32 %v104, %v5346
    %v5348 = vpop.f32.mrf.mxu0
    %v5349 = vadd.f32 %v108, %v5348
    %5350 = vdwg.mxu0
    %v5351 = vtanh.pop %v5276
    %v5352 = vtanh.pop %v5278
    %v5353 = vtanh.pop %v5347
    %v5354 = vtanh.pop %v5349
    %v5355 = vmul.f32 %v5351, %v4422
    %v5356 = vmul.f32 %v5352, %v4430
    %v5357 = vmul.f32 %v5353, %v4429
    %v5358 = vmul.f32 %v5354, %v4431
    %v5359 = vmul.f32 %v5060, -0.001
    %v5360 = vmul.f32 %v5359, %v4119
    %v5361 = vadd.f32 %v5360, %v5355
    %v5362 = vadd.f32 %v5361, %v5356
    %v5363 = vadd.f32 %v5362, %v5357
    %v5364 = vadd.f32 %v5363, %v5358
    %v5365 = vadd.f32 %v4751, %v5057
    %v5366 = vmul.f32 %v5365, 3.0
    %v5367 = vadd.f32 %v4445, %v5366
    %v5368 = vadd.f32 %v5367, %v5364
    %v5369 = vmul.f32 %v5368, 0.125
    %v5370 = vadd.f32 %v4114, %v5369
    %s5371 = scalar_lea.vmem [#allocation5], 8
    %5372 = vst [vmem:[%s5371] sm:$0x3] %v5370
    %s5373 = scalar_lea.vmem %s0, 40
    %v5374 = vld [vmem:[%s5373] sm:$0xff]
    %v5375 = vld [vmem:[%s5373 + $0x8] sm:$0x3]
    %5376 = vmatprep.subr.mxu0 0.0
    %5377 = vmatpush1.msra.mxu0 %v54
    %5378 = vmatprep.subr.mxu0 0.0
    %5379 = vmatpush1.msra.mxu0 %v53
    %5380 = vmatprep.subr.mxu0 0.0
    %5381 = vmatpush1.msra.mxu0 %v52
    %5382 = vmatprep.subr.mxu0 0.0
    %5383 = vmatpush1.msra.mxu0 %v51
    %5384 = vmatprep.subr.mxu0 0.0
    %5385 = vmatpush1.msra.mxu0 %v50
    %5386 = vmatprep.subr.mxu0 0.0
    %5387 = vmatpush1.msra.mxu0 %v49
    %5388 = vmatprep.subr.mxu0 0.0
    %5389 = vmatpush1.msra.mxu0 %v48
    %5390 = vmatprep.subr.mxu0 0.0
    %5391 = vmatpush1.msra.mxu0 %v47
    %5392 = vmatprep.subr.mxu0 0.0
    %5393 = vmatpush1.msra.mxu0 %v46
    %5394 = vmatprep.subr.mxu0 0.0
    %5395 = vmatpush1.msra.mxu0 %v45
    %5396 = vmatprep.subr.mxu0 0.0
    %5397 = vmatpush1.msra.mxu0 %v44
    %5398 = vmatprep.subr.mxu0 0.0
    %5399 = vmatpush1.msra.mxu0 %v43
    %5400 = vmatprep.subr.mxu0 0.0
    %5401 = vmatpush1.msra.mxu0 %v42
    %5402 = vmatprep.subr.mxu0 0.0
    %5403 = vmatpush1.msra.mxu0 %v41
    %5404 = vmatprep.subr.mxu0 0.0
    %5405 = vmatpush1.msra.mxu0 %v40
    %5406 = vmatprep.subr.mxu0 0.0
    %5407 = vmatpush1.msra.mxu0 %v39
    %5408 = vmatprep.subr.mxu0 0.0
    %5409 = vmatpush2.msra.mxu0 0.0
    %5410 = vmatprep.subr.mxu0 0.0
    %5411 = vmatpush2.msra.mxu0 0.0
    %5412 = vmatprep.subr.mxu0 0.0
    %5413 = vmatpush2.msra.mxu0 0.0
    %5414 = vmatprep.subr.mxu0 0.0
    %5415 = vmatpush2.msra.mxu0 0.0
    %5416 = vmatprep.subr.mxu0 0.0
    %5417 = vmatpush2.msra.mxu0 0.0
    %5418 = vmatprep.subr.mxu0 0.0
    %5419 = vmatpush2.msra.mxu0 0.0
    %5420 = vmatprep.subr.mxu0 0.0
    %5421 = vmatpush2.msra.mxu0 0.0
    %5422 = vmatprep.subr.mxu0 0.0
    %5423 = vmatpush2.msra.mxu0 0.0
    %5424 = vmatprep.subr.mxu0 0.0
    %5425 = vmatpush2.msra.mxu0 0.0
    %5426 = vmatprep.subr.mxu0 0.0
    %5427 = vmatpush2.msra.mxu0 0.0
    %5428 = vmatprep.subr.mxu0 0.0
    %5429 = vmatpush2.msra.mxu0 0.0
    %5430 = vmatprep.subr.mxu0 0.0
    %5431 = vmatpush2.msra.mxu0 0.0
    %5432 = vmatprep.subr.mxu0 0.0
    %5433 = vmatpush2.msra.mxu0 0.0
    %5434 = vmatprep.subr.mxu0 0.0
    %5435 = vmatpush2.msra.mxu0 0.0
    %5436 = vmatprep.subr.mxu0 0.0
    %5437 = vmatpush2.msra.mxu0 0.0
    %5438 = vmatprep.subr.mxu0 0.0
    %5439 = vmatpush2.msra.mxu0 0.0
    %5440 = vmatprep.mubr.f32.mxu0 0.0
    %5441 = vmatmul.mubr.f32.gmra.mxu0 %v5370
    %v5442 = vpop.f32.mrf.mxu0
    %v5443 = vadd.f32 %v87, %v5442
    %v5444 = vpop.f32.mrf.mxu0
    %5445 = vdwg.mxu0
    %v5446 = vmax.f32 %v5443, 0.0
    %v5448 = vsel %vm201, %v5446, 0
    %5450 = vmatprep.subr.mxu0 0.0
    %5451 = vmatpush1.msra.mxu0 0.0
    %5452 = vmatprep.subr.mxu0 0.0
    %5453 = vmatpush1.msra.mxu0 0.0
    %5454 = vmatprep.subr.mxu0 0.0
    %5455 = vmatpush1.msra.mxu0 0.0
    %5456 = vmatprep.subr.mxu0 0.0
    %5457 = vmatpush1.msra.mxu0 0.0
    %5458 = vmatprep.subr.mxu0 0.0
    %5459 = vmatpush1.msra.mxu0 0.0
    %5460 = vmatprep.subr.mxu0 0.0
    %5461 = vmatpush1.msra.mxu0 0.0
    %5462 = vmatprep.subr.mxu0 0.0
    %5463 = vmatpush1.msra.mxu0 0.0
    %5464 = vmatprep.subr.mxu0 0.0
    %5465 = vmatpush1.msra.mxu0 0.0
    %5466 = vmatprep.subr.mxu0 0.0
    %5467 = vmatpush1.msra.mxu0 0.0
    %5468 = vmatprep.subr.mxu0 0.0
    %5469 = vmatpush1.msra.mxu0 0.0
    %5470 = vmatprep.subr.mxu0 0.0
    %5471 = vmatpush1.msra.mxu0 0.0
    %5472 = vmatprep.subr.mxu0 0.0
    %5473 = vmatpush1.msra.mxu0 0.0
    %5474 = vmatprep.subr.mxu0 0.0
    %5475 = vmatpush1.msra.mxu0 %v59
    %5476 = vmatprep.subr.mxu0 0.0
    %5477 = vmatpush1.msra.mxu0 %v58
    %5478 = vmatprep.subr.mxu0 0.0
    %5479 = vmatpush1.msra.mxu0 %v57
    %5480 = vmatprep.subr.mxu0 0.0
    %5481 = vmatpush1.msra.mxu0 %v56
    %5482 = vmatprep.subr.mxu0 0.0
    %5483 = vmatpush2.msra.mxu0 0.0
    %5484 = vmatprep.subr.mxu0 0.0
    %5485 = vmatpush2.msra.mxu0 0.0
    %5486 = vmatprep.subr.mxu0 0.0
    %5487 = vmatpush2.msra.mxu0 0.0
    %5488 = vmatprep.subr.mxu0 0.0
    %5489 = vmatpush2.msra.mxu0 0.0
    %5490 = vmatprep.subr.mxu0 0.0
    %5491 = vmatpush2.msra.mxu0 0.0
    %5492 = vmatprep.subr.mxu0 0.0
    %5493 = vmatpush2.msra.mxu0 0.0
    %5494 = vmatprep.subr.mxu0 0.0
    %5495 = vmatpush2.msra.mxu0 0.0
    %5496 = vmatprep.subr.mxu0 0.0
    %5497 = vmatpush2.msra.mxu0 0.0
    %5498 = vmatprep.subr.mxu0 0.0
    %5499 = vmatpush2.msra.mxu0 0.0
    %5500 = vmatprep.subr.mxu0 0.0
    %5501 = vmatpush2.msra.mxu0 0.0
    %5502 = vmatprep.subr.mxu0 0.0
    %5503 = vmatpush2.msra.mxu0 0.0
    %5504 = vmatprep.subr.mxu0 0.0
    %5505 = vmatpush2.msra.mxu0 0.0
    %5506 = vmatprep.subr.mxu0 0.0
    %5507 = vmatpush2.msra.mxu0 0.0
    %5508 = vmatprep.subr.mxu0 0.0
    %5509 = vmatpush2.msra.mxu0 0.0
    %5510 = vmatprep.subr.mxu0 0.0
    %5511 = vmatpush2.msra.mxu0 0.0
    %5512 = vmatprep.subr.mxu0 0.0
    %5513 = vmatpush2.msra.mxu0 0.0
    %5514 = vmatprep.mubr.f32.mxu0 0.0
    %5515 = vmatmul.mubr.f32.gmra.mxu0 %v5448
    %v5516 = vpop.f32.mrf.mxu0
    %v5517 = vadd.f32 %v91, %v5516
    %v5518 = vpop.f32.mrf.mxu0
    %5519 = vdwg.mxu0
    %v5520 = vmax.f32 %v5517, 0.0
    %v5522 = vsel %vm201, %v5520, 0
    %5524 = vmatprep.subr.mxu0 0.0
    %5525 = vmatpush1.msra.mxu0 0.0
    %5526 = vmatprep.subr.mxu0 0.0
    %5527 = vmatpush1.msra.mxu0 0.0
    %5528 = vmatprep.subr.mxu0 0.0
    %5529 = vmatpush1.msra.mxu0 0.0
    %5530 = vmatprep.subr.mxu0 0.0
    %5531 = vmatpush1.msra.mxu0 0.0
    %5532 = vmatprep.subr.mxu0 0.0
    %5533 = vmatpush1.msra.mxu0 0.0
    %5534 = vmatprep.subr.mxu0 0.0
    %5535 = vmatpush1.msra.mxu0 0.0
    %5536 = vmatprep.subr.mxu0 0.0
    %5537 = vmatpush1.msra.mxu0 0.0
    %5538 = vmatprep.subr.mxu0 0.0
    %5539 = vmatpush1.msra.mxu0 0.0
    %5540 = vmatprep.subr.mxu0 0.0
    %5541 = vmatpush1.msra.mxu0 0.0
    %5542 = vmatprep.subr.mxu0 0.0
    %5543 = vmatpush1.msra.mxu0 0.0
    %5544 = vmatprep.subr.mxu0 0.0
    %5545 = vmatpush1.msra.mxu0 0.0
    %5546 = vmatprep.subr.mxu0 0.0
    %5547 = vmatpush1.msra.mxu0 0.0
    %5548 = vmatprep.subr.mxu0 %v79
    %5549 = vmatpush1.msra.mxu0 %v78
    %5550 = vmatprep.subr.mxu0 %v75
    %5551 = vmatpush1.msra.mxu0 %v74
    %5552 = vmatprep.subr.mxu0 %v71
    %5553 = vmatpush1.msra.mxu0 %v70
    %5554 = vmatprep.subr.mxu0 %v67
    %5555 = vmatpush1.msra.mxu0 %v66
    %5556 = vmatprep.subr.mxu0 0.0
    %5557 = vmatpush2.msra.mxu0 0.0
    %5558 = vmatprep.subr.mxu0 0.0
    %5559 = vmatpush2.msra.mxu0 0.0
    %5560 = vmatprep.subr.mxu0 0.0
    %5561 = vmatpush2.msra.mxu0 0.0
    %5562 = vmatprep.subr.mxu0 0.0
    %5563 = vmatpush2.msra.mxu0 0.0
    %5564 = vmatprep.subr.mxu0 0.0
    %5565 = vmatpush2.msra.mxu0 0.0
    %5566 = vmatprep.subr.mxu0 0.0
    %5567 = vmatpush2.msra.mxu0 0.0
    %5568 = vmatprep.subr.mxu0 0.0
    %5569 = vmatpush2.msra.mxu0 0.0
    %5570 = vmatprep.subr.mxu0 0.0
    %5571 = vmatpush2.msra.mxu0 0.0
    %5572 = vmatprep.subr.mxu0 0.0
    %5573 = vmatpush2.msra.mxu0 0.0
    %5574 = vmatprep.subr.mxu0 0.0
    %5575 = vmatpush2.msra.mxu0 0.0
    %5576 = vmatprep.subr.mxu0 0.0
    %5577 = vmatpush2.msra.mxu0 0.0
    %5578 = vmatprep.subr.mxu0 0.0
    %5579 = vmatpush2.msra.mxu0 0.0
    %5580 = vmatprep.subr.mxu0 0.0
    %5581 = vmatpush2.msra.mxu0 0.0
    %5582 = vmatprep.subr.mxu0 0.0
    %5583 = vmatpush2.msra.mxu0 0.0
    %5584 = vmatprep.subr.mxu0 0.0
    %5585 = vmatpush2.msra.mxu0 0.0
    %5586 = vmatprep.subr.mxu0 0.0
    %5587 = vmatpush2.msra.mxu0 0.0
    %5588 = vmatprep.mubr.f32.mxu0 0.0
    %5589 = vmatmul.mubr.f32.gmra.mxu0 %v5522
    %v5590 = vpop.f32.mrf.mxu0
    %v5591 = vadd.f32 %v96, %v5590
    %v5592 = vpop.f32.mrf.mxu0
    %v5593 = vadd.f32 %v100, %v5592
    %5594 = vdwg.mxu0
    %5595 = vmatprep.subr.mxu0 0.0
    %5596 = vmatpush1.msra.mxu0 0.0
    %5597 = vmatprep.subr.mxu0 0.0
    %5598 = vmatpush1.msra.mxu0 0.0
    %5599 = vmatprep.subr.mxu0 0.0
    %5600 = vmatpush1.msra.mxu0 0.0
    %5601 = vmatprep.subr.mxu0 0.0
    %5602 = vmatpush1.msra.mxu0 0.0
    %5603 = vmatprep.subr.mxu0 0.0
    %5604 = vmatpush1.msra.mxu0 0.0
    %5605 = vmatprep.subr.mxu0 0.0
    %5606 = vmatpush1.msra.mxu0 0.0
    %5607 = vmatprep.subr.mxu0 0.0
    %5608 = vmatpush1.msra.mxu0 0.0
    %5609 = vmatprep.subr.mxu0 0.0
    %5610 = vmatpush1.msra.mxu0 0.0
    %5611 = vmatprep.subr.mxu0 0.0
    %5612 = vmatpush1.msra.mxu0 0.0
    %5613 = vmatprep.subr.mxu0 0.0
    %5614 = vmatpush1.msra.mxu0 0.0
    %5615 = vmatprep.subr.mxu0 0.0
    %5616 = vmatpush1.msra.mxu0 0.0
    %5617 = vmatprep.subr.mxu0 0.0
    %5618 = vmatpush1.msra.mxu0 0.0
    %5619 = vmatprep.subr.mxu0 %v81
    %5620 = vmatpush1.msra.mxu0 %v80
    %5621 = vmatprep.subr.mxu0 %v77
    %5622 = vmatpush1.msra.mxu0 %v76
    %5623 = vmatprep.subr.mxu0 %v73
    %5624 = vmatpush1.msra.mxu0 %v72
    %5625 = vmatprep.subr.mxu0 %v69
    %5626 = vmatpush1.msra.mxu0 %v68
    %5627 = vmatprep.subr.mxu0 0.0
    %5628 = vmatpush2.msra.mxu0 0.0
    %5629 = vmatprep.subr.mxu0 0.0
    %5630 = vmatpush2.msra.mxu0 0.0
    %5631 = vmatprep.subr.mxu0 0.0
    %5632 = vmatpush2.msra.mxu0 0.0
    %5633 = vmatprep.subr.mxu0 0.0
    %5634 = vmatpush2.msra.mxu0 0.0
    %5635 = vmatprep.subr.mxu0 0.0
    %5636 = vmatpush2.msra.mxu0 0.0
    %5637 = vmatprep.subr.mxu0 0.0
    %5638 = vmatpush2.msra.mxu0 0.0
    %5639 = vmatprep.subr.mxu0 0.0
    %5640 = vmatpush2.msra.mxu0 0.0
    %5641 = vmatprep.subr.mxu0 0.0
    %5642 = vmatpush2.msra.mxu0 0.0
    %5643 = vmatprep.subr.mxu0 0.0
    %5644 = vmatpush2.msra.mxu0 0.0
    %5645 = vmatprep.subr.mxu0 0.0
    %5646 = vmatpush2.msra.mxu0 0.0
    %5647 = vmatprep.subr.mxu0 0.0
    %5648 = vmatpush2.msra.mxu0 0.0
    %5649 = vmatprep.subr.mxu0 0.0
    %5650 = vmatpush2.msra.mxu0 0.0
    %5651 = vmatprep.subr.mxu0 0.0
    %5652 = vmatpush2.msra.mxu0 0.0
    %5653 = vmatprep.subr.mxu0 0.0
    %5654 = vmatpush2.msra.mxu0 0.0
    %5655 = vmatprep.subr.mxu0 0.0
    %5656 = vmatpush2.msra.mxu0 0.0
    %5657 = vmatprep.subr.mxu0 0.0
    %5658 = vmatpush2.msra.mxu0 0.0
    %5659 = vmatprep.mubr.f32.mxu0 0.0
    %5660 = vmatmul.mubr.f32.gmra.mxu0 %v5522
    %v5661 = vpop.f32.mrf.mxu0
    %v5662 = vadd.f32 %v104, %v5661
    %v5663 = vpop.f32.mrf.mxu0
    %v5664 = vadd.f32 %v108, %v5663
    %5665 = vdwg.mxu0
    %v5666 = vtanh.pop %v5591
    %v5667 = vtanh.pop %v5593
    %v5668 = vtanh.pop %v5662
    %v5669 = vtanh.pop %v5664
    %v5671 = vcombine.high %v5374, %v5374
    %v5673 = vunpack.c.l.s4 1983009808
    %v5674 = vunpack.c.0.s8 %v5673
    %v5675 = vlaneseq
    %v5676 = vshrl.u32 %v5675, 7
    %v5677 = vsub.s32 %v5674, %v5676
    %v5678 = vrot.slane %v5374, %v5677
    %v5680 = vunpack.c.l.s4 1983009808
    %v5681 = vunpack.c.0.s8 %v5680
    %v5682 = vlaneseq
    %v5683 = vshrl.u32 %v5682, 7
    %v5684 = vsub.s32 %v5681, %v5683
    %v5685 = vrot.slane %v5671, %v5684
    %v5686 = vcombine.high %v5678, %v5678
    %v5687 = vcombine.high %v5685, %v5685
    %v5692 = vmul.f32 %v5666, %v5678
    %v5693 = vmul.f32 %v5667, %v5686
    %v5694 = vmul.f32 %v5668, %v5685
    %v5695 = vmul.f32 %v5669, %v5687
    %v5696 = vmul.f32 %v5370, -0.001
    %v5697 = vmul.f32 %v5696, %v5375
    %v5698 = vadd.f32 %v5697, %v5692
    %v5699 = vadd.f32 %v5698, %v5693
    %v5700 = vadd.f32 %v5699, %v5694
    %v5701 = vadd.f32 %v5700, %v5695
    %v5702 = vmul.f32 %v5701, 0.33333334
    %v5703 = vadd.f32 %v5370, %v5702
    %5704 = vmatprep.subr.mxu0 0.0
    %5705 = vmatpush1.msra.mxu0 %v54
    %5706 = vmatprep.subr.mxu0 0.0
    %5707 = vmatpush1.msra.mxu0 %v53
    %5708 = vmatprep.subr.mxu0 0.0
    %5709 = vmatpush1.msra.mxu0 %v52
    %5710 = vmatprep.subr.mxu0 0.0
    %5711 = vmatpush1.msra.mxu0 %v51
    %5712 = vmatprep.subr.mxu0 0.0
    %5713 = vmatpush1.msra.mxu0 %v50
    %5714 = vmatprep.subr.mxu0 0.0
    %5715 = vmatpush1.msra.mxu0 %v49
    %5716 = vmatprep.subr.mxu0 0.0
    %5717 = vmatpush1.msra.mxu0 %v48
    %5718 = vmatprep.subr.mxu0 0.0
    %5719 = vmatpush1.msra.mxu0 %v47
    %5720 = vmatprep.subr.mxu0 0.0
    %5721 = vmatpush1.msra.mxu0 %v46
    %5722 = vmatprep.subr.mxu0 0.0
    %5723 = vmatpush1.msra.mxu0 %v45
    %5724 = vmatprep.subr.mxu0 0.0
    %5725 = vmatpush1.msra.mxu0 %v44
    %5726 = vmatprep.subr.mxu0 0.0
    %5727 = vmatpush1.msra.mxu0 %v43
    %5728 = vmatprep.subr.mxu0 0.0
    %5729 = vmatpush1.msra.mxu0 %v42
    %5730 = vmatprep.subr.mxu0 0.0
    %5731 = vmatpush1.msra.mxu0 %v41
    %5732 = vmatprep.subr.mxu0 0.0
    %5733 = vmatpush1.msra.mxu0 %v40
    %5734 = vmatprep.subr.mxu0 0.0
    %5735 = vmatpush1.msra.mxu0 %v39
    %5736 = vmatprep.subr.mxu0 0.0
    %5737 = vmatpush2.msra.mxu0 0.0
    %5738 = vmatprep.subr.mxu0 0.0
    %5739 = vmatpush2.msra.mxu0 0.0
    %5740 = vmatprep.subr.mxu0 0.0
    %5741 = vmatpush2.msra.mxu0 0.0
    %5742 = vmatprep.subr.mxu0 0.0
    %5743 = vmatpush2.msra.mxu0 0.0
    %5744 = vmatprep.subr.mxu0 0.0
    %5745 = vmatpush2.msra.mxu0 0.0
    %5746 = vmatprep.subr.mxu0 0.0
    %5747 = vmatpush2.msra.mxu0 0.0
    %5748 = vmatprep.subr.mxu0 0.0
    %5749 = vmatpush2.msra.mxu0 0.0
    %5750 = vmatprep.subr.mxu0 0.0
    %5751 = vmatpush2.msra.mxu0 0.0
    %5752 = vmatprep.subr.mxu0 0.0
    %5753 = vmatpush2.msra.mxu0 0.0
    %5754 = vmatprep.subr.mxu0 0.0
    %5755 = vmatpush2.msra.mxu0 0.0
    %5756 = vmatprep.subr.mxu0 0.0
    %5757 = vmatpush2.msra.mxu0 0.0
    %5758 = vmatprep.subr.mxu0 0.0
    %5759 = vmatpush2.msra.mxu0 0.0
    %5760 = vmatprep.subr.mxu0 0.0
    %5761 = vmatpush2.msra.mxu0 0.0
    %5762 = vmatprep.subr.mxu0 0.0
    %5763 = vmatpush2.msra.mxu0 0.0
    %5764 = vmatprep.subr.mxu0 0.0
    %5765 = vmatpush2.msra.mxu0 0.0
    %5766 = vmatprep.subr.mxu0 0.0
    %5767 = vmatpush2.msra.mxu0 0.0
    %5768 = vmatprep.mubr.f32.mxu0 0.0
    %5769 = vmatmul.mubr.f32.gmra.mxu0 %v5703
    %v5770 = vpop.f32.mrf.mxu0
    %v5771 = vadd.f32 %v87, %v5770
    %v5772 = vpop.f32.mrf.mxu0
    %5773 = vdwg.mxu0
    %v5774 = vmax.f32 %v5771, 0.0
    %v5776 = vsel %vm201, %v5774, 0
    %5778 = vmatprep.subr.mxu0 0.0
    %5779 = vmatpush1.msra.mxu0 0.0
    %5780 = vmatprep.subr.mxu0 0.0
    %5781 = vmatpush1.msra.mxu0 0.0
    %5782 = vmatprep.subr.mxu0 0.0
    %5783 = vmatpush1.msra.mxu0 0.0
    %5784 = vmatprep.subr.mxu0 0.0
    %5785 = vmatpush1.msra.mxu0 0.0
    %5786 = vmatprep.subr.mxu0 0.0
    %5787 = vmatpush1.msra.mxu0 0.0
    %5788 = vmatprep.subr.mxu0 0.0
    %5789 = vmatpush1.msra.mxu0 0.0
    %5790 = vmatprep.subr.mxu0 0.0
    %5791 = vmatpush1.msra.mxu0 0.0
    %5792 = vmatprep.subr.mxu0 0.0
    %5793 = vmatpush1.msra.mxu0 0.0
    %5794 = vmatprep.subr.mxu0 0.0
    %5795 = vmatpush1.msra.mxu0 0.0
    %5796 = vmatprep.subr.mxu0 0.0
    %5797 = vmatpush1.msra.mxu0 0.0
    %5798 = vmatprep.subr.mxu0 0.0
    %5799 = vmatpush1.msra.mxu0 0.0
    %5800 = vmatprep.subr.mxu0 0.0
    %5801 = vmatpush1.msra.mxu0 0.0
    %5802 = vmatprep.subr.mxu0 0.0
    %5803 = vmatpush1.msra.mxu0 %v59
    %5804 = vmatprep.subr.mxu0 0.0
    %5805 = vmatpush1.msra.mxu0 %v58
    %5806 = vmatprep.subr.mxu0 0.0
    %5807 = vmatpush1.msra.mxu0 %v57
    %5808 = vmatprep.subr.mxu0 0.0
    %5809 = vmatpush1.msra.mxu0 %v56
    %5810 = vmatprep.subr.mxu0 0.0
    %5811 = vmatpush2.msra.mxu0 0.0
    %5812 = vmatprep.subr.mxu0 0.0
    %5813 = vmatpush2.msra.mxu0 0.0
    %5814 = vmatprep.subr.mxu0 0.0
    %5815 = vmatpush2.msra.mxu0 0.0
    %5816 = vmatprep.subr.mxu0 0.0
    %5817 = vmatpush2.msra.mxu0 0.0
    %5818 = vmatprep.subr.mxu0 0.0
    %5819 = vmatpush2.msra.mxu0 0.0
    %5820 = vmatprep.subr.mxu0 0.0
    %5821 = vmatpush2.msra.mxu0 0.0
    %5822 = vmatprep.subr.mxu0 0.0
    %5823 = vmatpush2.msra.mxu0 0.0
    %5824 = vmatprep.subr.mxu0 0.0
    %5825 = vmatpush2.msra.mxu0 0.0
    %5826 = vmatprep.subr.mxu0 0.0
    %5827 = vmatpush2.msra.mxu0 0.0
    %5828 = vmatprep.subr.mxu0 0.0
    %5829 = vmatpush2.msra.mxu0 0.0
    %5830 = vmatprep.subr.mxu0 0.0
    %5831 = vmatpush2.msra.mxu0 0.0
    %5832 = vmatprep.subr.mxu0 0.0
    %5833 = vmatpush2.msra.mxu0 0.0
    %5834 = vmatprep.subr.mxu0 0.0
    %5835 = vmatpush2.msra.mxu0 0.0
    %5836 = vmatprep.subr.mxu0 0.0
    %5837 = vmatpush2.msra.mxu0 0.0
    %5838 = vmatprep.subr.mxu0 0.0
    %5839 = vmatpush2.msra.mxu0 0.0
    %5840 = vmatprep.subr.mxu0 0.0
    %5841 = vmatpush2.msra.mxu0 0.0
    %5842 = vmatprep.mubr.f32.mxu0 0.0
    %5843 = vmatmul.mubr.f32.gmra.mxu0 %v5776
    %v5844 = vpop.f32.mrf.mxu0
    %v5845 = vadd.f32 %v91, %v5844
    %v5846 = vpop.f32.mrf.mxu0
    %5847 = vdwg.mxu0
    %v5848 = vmax.f32 %v5845, 0.0
    %v5850 = vsel %vm201, %v5848, 0
    %5852 = vmatprep.subr.mxu0 0.0
    %5853 = vmatpush1.msra.mxu0 0.0
    %5854 = vmatprep.subr.mxu0 0.0
    %5855 = vmatpush1.msra.mxu0 0.0
    %5856 = vmatprep.subr.mxu0 0.0
    %5857 = vmatpush1.msra.mxu0 0.0
    %5858 = vmatprep.subr.mxu0 0.0
    %5859 = vmatpush1.msra.mxu0 0.0
    %5860 = vmatprep.subr.mxu0 0.0
    %5861 = vmatpush1.msra.mxu0 0.0
    %5862 = vmatprep.subr.mxu0 0.0
    %5863 = vmatpush1.msra.mxu0 0.0
    %5864 = vmatprep.subr.mxu0 0.0
    %5865 = vmatpush1.msra.mxu0 0.0
    %5866 = vmatprep.subr.mxu0 0.0
    %5867 = vmatpush1.msra.mxu0 0.0
    %5868 = vmatprep.subr.mxu0 0.0
    %5869 = vmatpush1.msra.mxu0 0.0
    %5870 = vmatprep.subr.mxu0 0.0
    %5871 = vmatpush1.msra.mxu0 0.0
    %5872 = vmatprep.subr.mxu0 0.0
    %5873 = vmatpush1.msra.mxu0 0.0
    %5874 = vmatprep.subr.mxu0 0.0
    %5875 = vmatpush1.msra.mxu0 0.0
    %5876 = vmatprep.subr.mxu0 %v79
    %5877 = vmatpush1.msra.mxu0 %v78
    %5878 = vmatprep.subr.mxu0 %v75
    %5879 = vmatpush1.msra.mxu0 %v74
    %5880 = vmatprep.subr.mxu0 %v71
    %5881 = vmatpush1.msra.mxu0 %v70
    %5882 = vmatprep.subr.mxu0 %v67
    %5883 = vmatpush1.msra.mxu0 %v66
    %5884 = vmatprep.subr.mxu0 0.0
    %5885 = vmatpush2.msra.mxu0 0.0
    %5886 = vmatprep.subr.mxu0 0.0
    %5887 = vmatpush2.msra.mxu0 0.0
    %5888 = vmatprep.subr.mxu0 0.0
    %5889 = vmatpush2.msra.mxu0 0.0
    %5890 = vmatprep.subr.mxu0 0.0
    %5891 = vmatpush2.msra.mxu0 0.0
    %5892 = vmatprep.subr.mxu0 0.0
    %5893 = vmatpush2.msra.mxu0 0.0
    %5894 = vmatprep.subr.mxu0 0.0
    %5895 = vmatpush2.msra.mxu0 0.0
    %5896 = vmatprep.subr.mxu0 0.0
    %5897 = vmatpush2.msra.mxu0 0.0
    %5898 = vmatprep.subr.mxu0 0.0
    %5899 = vmatpush2.msra.mxu0 0.0
    %5900 = vmatprep.subr.mxu0 0.0
    %5901 = vmatpush2.msra.mxu0 0.0
    %5902 = vmatprep.subr.mxu0 0.0
    %5903 = vmatpush2.msra.mxu0 0.0
    %5904 = vmatprep.subr.mxu0 0.0
    %5905 = vmatpush2.msra.mxu0 0.0
    %5906 = vmatprep.subr.mxu0 0.0
    %5907 = vmatpush2.msra.mxu0 0.0
    %5908 = vmatprep.subr.mxu0 0.0
    %5909 = vmatpush2.msra.mxu0 0.0
    %5910 = vmatprep.subr.mxu0 0.0
    %5911 = vmatpush2.msra.mxu0 0.0
    %5912 = vmatprep.subr.mxu0 0.0
    %5913 = vmatpush2.msra.mxu0 0.0
    %5914 = vmatprep.subr.mxu0 0.0
    %5915 = vmatpush2.msra.mxu0 0.0
    %5916 = vmatprep.mubr.f32.mxu0 0.0
    %5917 = vmatmul.mubr.f32.gmra.mxu0 %v5850
    %v5918 = vpop.f32.mrf.mxu0
    %v5919 = vadd.f32 %v96, %v5918
    %v5920 = vpop.f32.mrf.mxu0
    %v5921 = vadd.f32 %v100, %v5920
    %5922 = vdwg.mxu0
    %5923 = vmatprep.subr.mxu0 0.0
    %5924 = vmatpush1.msra.mxu0 0.0
    %5925 = vmatprep.subr.mxu0 0.0
    %5926 = vmatpush1.msra.mxu0 0.0
    %5927 = vmatprep.subr.mxu0 0.0
    %5928 = vmatpush1.msra.mxu0 0.0
    %5929 = vmatprep.subr.mxu0 0.0
    %5930 = vmatpush1.msra.mxu0 0.0
    %5931 = vmatprep.subr.mxu0 0.0
    %5932 = vmatpush1.msra.mxu0 0.0
    %5933 = vmatprep.subr.mxu0 0.0
    %5934 = vmatpush1.msra.mxu0 0.0
    %5935 = vmatprep.subr.mxu0 0.0
    %5936 = vmatpush1.msra.mxu0 0.0
    %5937 = vmatprep.subr.mxu0 0.0
    %5938 = vmatpush1.msra.mxu0 0.0
    %5939 = vmatprep.subr.mxu0 0.0
    %5940 = vmatpush1.msra.mxu0 0.0
    %5941 = vmatprep.subr.mxu0 0.0
    %5942 = vmatpush1.msra.mxu0 0.0
    %5943 = vmatprep.subr.mxu0 0.0
    %5944 = vmatpush1.msra.mxu0 0.0
    %5945 = vmatprep.subr.mxu0 0.0
    %5946 = vmatpush1.msra.mxu0 0.0
    %5947 = vmatprep.subr.mxu0 %v81
    %5948 = vmatpush1.msra.mxu0 %v80
    %5949 = vmatprep.subr.mxu0 %v77
    %5950 = vmatpush1.msra.mxu0 %v76
    %5951 = vmatprep.subr.mxu0 %v73
    %5952 = vmatpush1.msra.mxu0 %v72
    %5953 = vmatprep.subr.mxu0 %v69
    %5954 = vmatpush1.msra.mxu0 %v68
    %5955 = vmatprep.subr.mxu0 0.0
    %5956 = vmatpush2.msra.mxu0 0.0
    %5957 = vmatprep.subr.mxu0 0.0
    %5958 = vmatpush2.msra.mxu0 0.0
    %5959 = vmatprep.subr.mxu0 0.0
    %5960 = vmatpush2.msra.mxu0 0.0
    %5961 = vmatprep.subr.mxu0 0.0
    %5962 = vmatpush2.msra.mxu0 0.0
    %5963 = vmatprep.subr.mxu0 0.0
    %5964 = vmatpush2.msra.mxu0 0.0
    %5965 = vmatprep.subr.mxu0 0.0
    %5966 = vmatpush2.msra.mxu0 0.0
    %5967 = vmatprep.subr.mxu0 0.0
    %5968 = vmatpush2.msra.mxu0 0.0
    %5969 = vmatprep.subr.mxu0 0.0
    %5970 = vmatpush2.msra.mxu0 0.0
    %5971 = vmatprep.subr.mxu0 0.0
    %5972 = vmatpush2.msra.mxu0 0.0
    %5973 = vmatprep.subr.mxu0 0.0
    %5974 = vmatpush2.msra.mxu0 0.0
    %5975 = vmatprep.subr.mxu0 0.0
    %5976 = vmatpush2.msra.mxu0 0.0
    %5977 = vmatprep.subr.mxu0 0.0
    %5978 = vmatpush2.msra.mxu0 0.0
    %5979 = vmatprep.subr.mxu0 0.0
    %5980 = vmatpush2.msra.mxu0 0.0
    %5981 = vmatprep.subr.mxu0 0.0
    %5982 = vmatpush2.msra.mxu0 0.0
    %5983 = vmatprep.subr.mxu0 0.0
    %5984 = vmatpush2.msra.mxu0 0.0
    %5985 = vmatprep.subr.mxu0 0.0
    %5986 = vmatpush2.msra.mxu0 0.0
    %5987 = vmatprep.mubr.f32.mxu0 0.0
    %5988 = vmatmul.mubr.f32.gmra.mxu0 %v5850
    %v5989 = vpop.f32.mrf.mxu0
    %v5990 = vadd.f32 %v104, %v5989
    %v5991 = vpop.f32.mrf.mxu0
    %v5992 = vadd.f32 %v108, %v5991
    %5993 = vdwg.mxu0
    %v5994 = vtanh.pop %v5919
    %v5995 = vtanh.pop %v5921
    %v5996 = vtanh.pop %v5990
    %v5997 = vtanh.pop %v5992
    %v5998 = vmul.f32 %v5994, %v5678
    %v5999 = vmul.f32 %v5995, %v5686
    %v6000 = vmul.f32 %v5996, %v5685
    %v6001 = vmul.f32 %v5997, %v5687
    %v6002 = vmul.f32 %v5703, -0.001
    %v6003 = vmul.f32 %v6002, %v5375
    %v6004 = vadd.f32 %v6003, %v5998
    %v6005 = vadd.f32 %v6004, %v5999
    %v6006 = vadd.f32 %v6005, %v6000
    %v6007 = vadd.f32 %v6006, %v6001
    %v6008 = vsub.f32 %v6007, %v5702
    %v6009 = vadd.f32 %v5370, %v6008
    %6010 = vmatprep.subr.mxu0 0.0
    %6011 = vmatpush1.msra.mxu0 %v54
    %6012 = vmatprep.subr.mxu0 0.0
    %6013 = vmatpush1.msra.mxu0 %v53
    %6014 = vmatprep.subr.mxu0 0.0
    %6015 = vmatpush1.msra.mxu0 %v52
    %6016 = vmatprep.subr.mxu0 0.0
    %6017 = vmatpush1.msra.mxu0 %v51
    %6018 = vmatprep.subr.mxu0 0.0
    %6019 = vmatpush1.msra.mxu0 %v50
    %6020 = vmatprep.subr.mxu0 0.0
    %6021 = vmatpush1.msra.mxu0 %v49
    %6022 = vmatprep.subr.mxu0 0.0
    %6023 = vmatpush1.msra.mxu0 %v48
    %6024 = vmatprep.subr.mxu0 0.0
    %6025 = vmatpush1.msra.mxu0 %v47
    %6026 = vmatprep.subr.mxu0 0.0
    %6027 = vmatpush1.msra.mxu0 %v46
    %6028 = vmatprep.subr.mxu0 0.0
    %6029 = vmatpush1.msra.mxu0 %v45
    %6030 = vmatprep.subr.mxu0 0.0
    %6031 = vmatpush1.msra.mxu0 %v44
    %6032 = vmatprep.subr.mxu0 0.0
    %6033 = vmatpush1.msra.mxu0 %v43
    %6034 = vmatprep.subr.mxu0 0.0
    %6035 = vmatpush1.msra.mxu0 %v42
    %6036 = vmatprep.subr.mxu0 0.0
    %6037 = vmatpush1.msra.mxu0 %v41
    %6038 = vmatprep.subr.mxu0 0.0
    %6039 = vmatpush1.msra.mxu0 %v40
    %6040 = vmatprep.subr.mxu0 0.0
    %6041 = vmatpush1.msra.mxu0 %v39
    %6042 = vmatprep.subr.mxu0 0.0
    %6043 = vmatpush2.msra.mxu0 0.0
    %6044 = vmatprep.subr.mxu0 0.0
    %6045 = vmatpush2.msra.mxu0 0.0
    %6046 = vmatprep.subr.mxu0 0.0
    %6047 = vmatpush2.msra.mxu0 0.0
    %6048 = vmatprep.subr.mxu0 0.0
    %6049 = vmatpush2.msra.mxu0 0.0
    %6050 = vmatprep.subr.mxu0 0.0
    %6051 = vmatpush2.msra.mxu0 0.0
    %6052 = vmatprep.subr.mxu0 0.0
    %6053 = vmatpush2.msra.mxu0 0.0
    %6054 = vmatprep.subr.mxu0 0.0
    %6055 = vmatpush2.msra.mxu0 0.0
    %6056 = vmatprep.subr.mxu0 0.0
    %6057 = vmatpush2.msra.mxu0 0.0
    %6058 = vmatprep.subr.mxu0 0.0
    %6059 = vmatpush2.msra.mxu0 0.0
    %6060 = vmatprep.subr.mxu0 0.0
    %6061 = vmatpush2.msra.mxu0 0.0
    %6062 = vmatprep.subr.mxu0 0.0
    %6063 = vmatpush2.msra.mxu0 0.0
    %6064 = vmatprep.subr.mxu0 0.0
    %6065 = vmatpush2.msra.mxu0 0.0
    %6066 = vmatprep.subr.mxu0 0.0
    %6067 = vmatpush2.msra.mxu0 0.0
    %6068 = vmatprep.subr.mxu0 0.0
    %6069 = vmatpush2.msra.mxu0 0.0
    %6070 = vmatprep.subr.mxu0 0.0
    %6071 = vmatpush2.msra.mxu0 0.0
    %6072 = vmatprep.subr.mxu0 0.0
    %6073 = vmatpush2.msra.mxu0 0.0
    %6074 = vmatprep.mubr.f32.mxu0 0.0
    %6075 = vmatmul.mubr.f32.gmra.mxu0 %v6009
    %v6076 = vpop.f32.mrf.mxu0
    %v6077 = vadd.f32 %v87, %v6076
    %v6078 = vpop.f32.mrf.mxu0
    %6079 = vdwg.mxu0
    %v6080 = vmax.f32 %v6077, 0.0
    %v6082 = vsel %vm201, %v6080, 0
    %6084 = vmatprep.subr.mxu0 0.0
    %6085 = vmatpush1.msra.mxu0 0.0
    %6086 = vmatprep.subr.mxu0 0.0
    %6087 = vmatpush1.msra.mxu0 0.0
    %6088 = vmatprep.subr.mxu0 0.0
    %6089 = vmatpush1.msra.mxu0 0.0
    %6090 = vmatprep.subr.mxu0 0.0
    %6091 = vmatpush1.msra.mxu0 0.0
    %6092 = vmatprep.subr.mxu0 0.0
    %6093 = vmatpush1.msra.mxu0 0.0
    %6094 = vmatprep.subr.mxu0 0.0
    %6095 = vmatpush1.msra.mxu0 0.0
    %6096 = vmatprep.subr.mxu0 0.0
    %6097 = vmatpush1.msra.mxu0 0.0
    %6098 = vmatprep.subr.mxu0 0.0
    %6099 = vmatpush1.msra.mxu0 0.0
    %6100 = vmatprep.subr.mxu0 0.0
    %6101 = vmatpush1.msra.mxu0 0.0
    %6102 = vmatprep.subr.mxu0 0.0
    %6103 = vmatpush1.msra.mxu0 0.0
    %6104 = vmatprep.subr.mxu0 0.0
    %6105 = vmatpush1.msra.mxu0 0.0
    %6106 = vmatprep.subr.mxu0 0.0
    %6107 = vmatpush1.msra.mxu0 0.0
    %6108 = vmatprep.subr.mxu0 0.0
    %6109 = vmatpush1.msra.mxu0 %v59
    %6110 = vmatprep.subr.mxu0 0.0
    %6111 = vmatpush1.msra.mxu0 %v58
    %6112 = vmatprep.subr.mxu0 0.0
    %6113 = vmatpush1.msra.mxu0 %v57
    %6114 = vmatprep.subr.mxu0 0.0
    %6115 = vmatpush1.msra.mxu0 %v56
    %6116 = vmatprep.subr.mxu0 0.0
    %6117 = vmatpush2.msra.mxu0 0.0
    %6118 = vmatprep.subr.mxu0 0.0
    %6119 = vmatpush2.msra.mxu0 0.0
    %6120 = vmatprep.subr.mxu0 0.0
    %6121 = vmatpush2.msra.mxu0 0.0
    %6122 = vmatprep.subr.mxu0 0.0
    %6123 = vmatpush2.msra.mxu0 0.0
    %6124 = vmatprep.subr.mxu0 0.0
    %6125 = vmatpush2.msra.mxu0 0.0
    %6126 = vmatprep.subr.mxu0 0.0
    %6127 = vmatpush2.msra.mxu0 0.0
    %6128 = vmatprep.subr.mxu0 0.0
    %6129 = vmatpush2.msra.mxu0 0.0
    %6130 = vmatprep.subr.mxu0 0.0
    %6131 = vmatpush2.msra.mxu0 0.0
    %6132 = vmatprep.subr.mxu0 0.0
    %6133 = vmatpush2.msra.mxu0 0.0
    %6134 = vmatprep.subr.mxu0 0.0
    %6135 = vmatpush2.msra.mxu0 0.0
    %6136 = vmatprep.subr.mxu0 0.0
    %6137 = vmatpush2.msra.mxu0 0.0
    %6138 = vmatprep.subr.mxu0 0.0
    %6139 = vmatpush2.msra.mxu0 0.0
    %6140 = vmatprep.subr.mxu0 0.0
    %6141 = vmatpush2.msra.mxu0 0.0
    %6142 = vmatprep.subr.mxu0 0.0
    %6143 = vmatpush2.msra.mxu0 0.0
    %6144 = vmatprep.subr.mxu0 0.0
    %6145 = vmatpush2.msra.mxu0 0.0
    %6146 = vmatprep.subr.mxu0 0.0
    %6147 = vmatpush2.msra.mxu0 0.0
    %6148 = vmatprep.mubr.f32.mxu0 0.0
    %6149 = vmatmul.mubr.f32.gmra.mxu0 %v6082
    %v6150 = vpop.f32.mrf.mxu0
    %v6151 = vadd.f32 %v91, %v6150
    %v6152 = vpop.f32.mrf.mxu0
    %6153 = vdwg.mxu0
    %v6154 = vmax.f32 %v6151, 0.0
    %v6156 = vsel %vm201, %v6154, 0
    %6158 = vmatprep.subr.mxu0 0.0
    %6159 = vmatpush1.msra.mxu0 0.0
    %6160 = vmatprep.subr.mxu0 0.0
    %6161 = vmatpush1.msra.mxu0 0.0
    %6162 = vmatprep.subr.mxu0 0.0
    %6163 = vmatpush1.msra.mxu0 0.0
    %6164 = vmatprep.subr.mxu0 0.0
    %6165 = vmatpush1.msra.mxu0 0.0
    %6166 = vmatprep.subr.mxu0 0.0
    %6167 = vmatpush1.msra.mxu0 0.0
    %6168 = vmatprep.subr.mxu0 0.0
    %6169 = vmatpush1.msra.mxu0 0.0
    %6170 = vmatprep.subr.mxu0 0.0
    %6171 = vmatpush1.msra.mxu0 0.0
    %6172 = vmatprep.subr.mxu0 0.0
    %6173 = vmatpush1.msra.mxu0 0.0
    %6174 = vmatprep.subr.mxu0 0.0
    %6175 = vmatpush1.msra.mxu0 0.0
    %6176 = vmatprep.subr.mxu0 0.0
    %6177 = vmatpush1.msra.mxu0 0.0
    %6178 = vmatprep.subr.mxu0 0.0
    %6179 = vmatpush1.msra.mxu0 0.0
    %6180 = vmatprep.subr.mxu0 0.0
    %6181 = vmatpush1.msra.mxu0 0.0
    %6182 = vmatprep.subr.mxu0 %v79
    %6183 = vmatpush1.msra.mxu0 %v78
    %6184 = vmatprep.subr.mxu0 %v75
    %6185 = vmatpush1.msra.mxu0 %v74
    %6186 = vmatprep.subr.mxu0 %v71
    %6187 = vmatpush1.msra.mxu0 %v70
    %6188 = vmatprep.subr.mxu0 %v67
    %6189 = vmatpush1.msra.mxu0 %v66
    %6190 = vmatprep.subr.mxu0 0.0
    %6191 = vmatpush2.msra.mxu0 0.0
    %6192 = vmatprep.subr.mxu0 0.0
    %6193 = vmatpush2.msra.mxu0 0.0
    %6194 = vmatprep.subr.mxu0 0.0
    %6195 = vmatpush2.msra.mxu0 0.0
    %6196 = vmatprep.subr.mxu0 0.0
    %6197 = vmatpush2.msra.mxu0 0.0
    %6198 = vmatprep.subr.mxu0 0.0
    %6199 = vmatpush2.msra.mxu0 0.0
    %6200 = vmatprep.subr.mxu0 0.0
    %6201 = vmatpush2.msra.mxu0 0.0
    %6202 = vmatprep.subr.mxu0 0.0
    %6203 = vmatpush2.msra.mxu0 0.0
    %6204 = vmatprep.subr.mxu0 0.0
    %6205 = vmatpush2.msra.mxu0 0.0
    %6206 = vmatprep.subr.mxu0 0.0
    %6207 = vmatpush2.msra.mxu0 0.0
    %6208 = vmatprep.subr.mxu0 0.0
    %6209 = vmatpush2.msra.mxu0 0.0
    %6210 = vmatprep.subr.mxu0 0.0
    %6211 = vmatpush2.msra.mxu0 0.0
    %6212 = vmatprep.subr.mxu0 0.0
    %6213 = vmatpush2.msra.mxu0 0.0
    %6214 = vmatprep.subr.mxu0 0.0
    %6215 = vmatpush2.msra.mxu0 0.0
    %6216 = vmatprep.subr.mxu0 0.0
    %6217 = vmatpush2.msra.mxu0 0.0
    %6218 = vmatprep.subr.mxu0 0.0
    %6219 = vmatpush2.msra.mxu0 0.0
    %6220 = vmatprep.subr.mxu0 0.0
    %6221 = vmatpush2.msra.mxu0 0.0
    %6222 = vmatprep.mubr.f32.mxu0 0.0
    %6223 = vmatmul.mubr.f32.gmra.mxu0 %v6156
    %v6224 = vpop.f32.mrf.mxu0
    %v6225 = vadd.f32 %v96, %v6224
    %v6226 = vpop.f32.mrf.mxu0
    %v6227 = vadd.f32 %v100, %v6226
    %6228 = vdwg.mxu0
    %6229 = vmatprep.subr.mxu0 0.0
    %6230 = vmatpush1.msra.mxu0 0.0
    %6231 = vmatprep.subr.mxu0 0.0
    %6232 = vmatpush1.msra.mxu0 0.0
    %6233 = vmatprep.subr.mxu0 0.0
    %6234 = vmatpush1.msra.mxu0 0.0
    %6235 = vmatprep.subr.mxu0 0.0
    %6236 = vmatpush1.msra.mxu0 0.0
    %6237 = vmatprep.subr.mxu0 0.0
    %6238 = vmatpush1.msra.mxu0 0.0
    %6239 = vmatprep.subr.mxu0 0.0
    %6240 = vmatpush1.msra.mxu0 0.0
    %6241 = vmatprep.subr.mxu0 0.0
    %6242 = vmatpush1.msra.mxu0 0.0
    %6243 = vmatprep.subr.mxu0 0.0
    %6244 = vmatpush1.msra.mxu0 0.0
    %6245 = vmatprep.subr.mxu0 0.0
    %6246 = vmatpush1.msra.mxu0 0.0
    %6247 = vmatprep.subr.mxu0 0.0
    %6248 = vmatpush1.msra.mxu0 0.0
    %6249 = vmatprep.subr.mxu0 0.0
    %6250 = vmatpush1.msra.mxu0 0.0
    %6251 = vmatprep.subr.mxu0 0.0
    %6252 = vmatpush1.msra.mxu0 0.0
    %6253 = vmatprep.subr.mxu0 %v81
    %6254 = vmatpush1.msra.mxu0 %v80
    %6255 = vmatprep.subr.mxu0 %v77
    %6256 = vmatpush1.msra.mxu0 %v76
    %6257 = vmatprep.subr.mxu0 %v73
    %6258 = vmatpush1.msra.mxu0 %v72
    %6259 = vmatprep.subr.mxu0 %v69
    %6260 = vmatpush1.msra.mxu0 %v68
    %6261 = vmatprep.subr.mxu0 0.0
    %6262 = vmatpush2.msra.mxu0 0.0
    %6263 = vmatprep.subr.mxu0 0.0
    %6264 = vmatpush2.msra.mxu0 0.0
    %6265 = vmatprep.subr.mxu0 0.0
    %6266 = vmatpush2.msra.mxu0 0.0
    %6267 = vmatprep.subr.mxu0 0.0
    %6268 = vmatpush2.msra.mxu0 0.0
    %6269 = vmatprep.subr.mxu0 0.0
    %6270 = vmatpush2.msra.mxu0 0.0
    %6271 = vmatprep.subr.mxu0 0.0
    %6272 = vmatpush2.msra.mxu0 0.0
    %6273 = vmatprep.subr.mxu0 0.0
    %6274 = vmatpush2.msra.mxu0 0.0
    %6275 = vmatprep.subr.mxu0 0.0
    %6276 = vmatpush2.msra.mxu0 0.0
    %6277 = vmatprep.subr.mxu0 0.0
    %6278 = vmatpush2.msra.mxu0 0.0
    %6279 = vmatprep.subr.mxu0 0.0
    %6280 = vmatpush2.msra.mxu0 0.0
    %6281 = vmatprep.subr.mxu0 0.0
    %6282 = vmatpush2.msra.mxu0 0.0
    %6283 = vmatprep.subr.mxu0 0.0
    %6284 = vmatpush2.msra.mxu0 0.0
    %6285 = vmatprep.subr.mxu0 0.0
    %6286 = vmatpush2.msra.mxu0 0.0
    %6287 = vmatprep.subr.mxu0 0.0
    %6288 = vmatpush2.msra.mxu0 0.0
    %6289 = vmatprep.subr.mxu0 0.0
    %6290 = vmatpush2.msra.mxu0 0.0
    %6291 = vmatprep.subr.mxu0 0.0
    %6292 = vmatpush2.msra.mxu0 0.0
    %6293 = vmatprep.mubr.f32.mxu0 0.0
    %6294 = vmatmul.mubr.f32.gmra.mxu0 %v6156
    %v6295 = vpop.f32.mrf.mxu0
    %v6296 = vadd.f32 %v104, %v6295
    %v6297 = vpop.f32.mrf.mxu0
    %v6298 = vadd.f32 %v108, %v6297
    %6299 = vdwg.mxu0
    %v6300 = vtanh.pop %v6225
    %v6301 = vtanh.pop %v6227
    %v6302 = vtanh.pop %v6296
    %v6303 = vtanh.pop %v6298
    %v6304 = vmul.f32 %v6300, %v5678
    %v6305 = vmul.f32 %v6301, %v5686
    %v6306 = vmul.f32 %v6302, %v5685
    %v6307 = vmul.f32 %v6303, %v5687
    %v6308 = vmul.f32 %v6009, -0.001
    %v6309 = vmul.f32 %v6308, %v5375
    %v6310 = vadd.f32 %v6309, %v6304
    %v6311 = vadd.f32 %v6310, %v6305
    %v6312 = vadd.f32 %v6311, %v6306
    %v6313 = vadd.f32 %v6312, %v6307
    %v6314 = vsub.f32 %v5701, %v6007
    %v6315 = vadd.f32 %v6314, %v6313
    %v6316 = vadd.f32 %v5370, %v6315
    %6317 = vmatprep.subr.mxu0 0.0
    %6318 = vmatpush1.msra.mxu0 %v54
    %6319 = vmatprep.subr.mxu0 0.0
    %6320 = vmatpush1.msra.mxu0 %v53
    %6321 = vmatprep.subr.mxu0 0.0
    %6322 = vmatpush1.msra.mxu0 %v52
    %6323 = vmatprep.subr.mxu0 0.0
    %6324 = vmatpush1.msra.mxu0 %v51
    %6325 = vmatprep.subr.mxu0 0.0
    %6326 = vmatpush1.msra.mxu0 %v50
    %6327 = vmatprep.subr.mxu0 0.0
    %6328 = vmatpush1.msra.mxu0 %v49
    %6329 = vmatprep.subr.mxu0 0.0
    %6330 = vmatpush1.msra.mxu0 %v48
    %6331 = vmatprep.subr.mxu0 0.0
    %6332 = vmatpush1.msra.mxu0 %v47
    %6333 = vmatprep.subr.mxu0 0.0
    %6334 = vmatpush1.msra.mxu0 %v46
    %6335 = vmatprep.subr.mxu0 0.0
    %6336 = vmatpush1.msra.mxu0 %v45
    %6337 = vmatprep.subr.mxu0 0.0
    %6338 = vmatpush1.msra.mxu0 %v44
    %6339 = vmatprep.subr.mxu0 0.0
    %6340 = vmatpush1.msra.mxu0 %v43
    %6341 = vmatprep.subr.mxu0 0.0
    %6342 = vmatpush1.msra.mxu0 %v42
    %6343 = vmatprep.subr.mxu0 0.0
    %6344 = vmatpush1.msra.mxu0 %v41
    %6345 = vmatprep.subr.mxu0 0.0
    %6346 = vmatpush1.msra.mxu0 %v40
    %6347 = vmatprep.subr.mxu0 0.0
    %6348 = vmatpush1.msra.mxu0 %v39
    %6349 = vmatprep.subr.mxu0 0.0
    %6350 = vmatpush2.msra.mxu0 0.0
    %6351 = vmatprep.subr.mxu0 0.0
    %6352 = vmatpush2.msra.mxu0 0.0
    %6353 = vmatprep.subr.mxu0 0.0
    %6354 = vmatpush2.msra.mxu0 0.0
    %6355 = vmatprep.subr.mxu0 0.0
    %6356 = vmatpush2.msra.mxu0 0.0
    %6357 = vmatprep.subr.mxu0 0.0
    %6358 = vmatpush2.msra.mxu0 0.0
    %6359 = vmatprep.subr.mxu0 0.0
    %6360 = vmatpush2.msra.mxu0 0.0
    %6361 = vmatprep.subr.mxu0 0.0
    %6362 = vmatpush2.msra.mxu0 0.0
    %6363 = vmatprep.subr.mxu0 0.0
    %6364 = vmatpush2.msra.mxu0 0.0
    %6365 = vmatprep.subr.mxu0 0.0
    %6366 = vmatpush2.msra.mxu0 0.0
    %6367 = vmatprep.subr.mxu0 0.0
    %6368 = vmatpush2.msra.mxu0 0.0
    %6369 = vmatprep.subr.mxu0 0.0
    %6370 = vmatpush2.msra.mxu0 0.0
    %6371 = vmatprep.subr.mxu0 0.0
    %6372 = vmatpush2.msra.mxu0 0.0
    %6373 = vmatprep.subr.mxu0 0.0
    %6374 = vmatpush2.msra.mxu0 0.0
    %6375 = vmatprep.subr.mxu0 0.0
    %6376 = vmatpush2.msra.mxu0 0.0
    %6377 = vmatprep.subr.mxu0 0.0
    %6378 = vmatpush2.msra.mxu0 0.0
    %6379 = vmatprep.subr.mxu0 0.0
    %6380 = vmatpush2.msra.mxu0 0.0
    %6381 = vmatprep.mubr.f32.mxu0 0.0
    %6382 = vmatmul.mubr.f32.gmra.mxu0 %v6316
    %v6383 = vpop.f32.mrf.mxu0
    %v6384 = vadd.f32 %v87, %v6383
    %v6385 = vpop.f32.mrf.mxu0
    %6386 = vdwg.mxu0
    %v6387 = vmax.f32 %v6384, 0.0
    %v6389 = vsel %vm201, %v6387, 0
    %6391 = vmatprep.subr.mxu0 0.0
    %6392 = vmatpush1.msra.mxu0 0.0
    %6393 = vmatprep.subr.mxu0 0.0
    %6394 = vmatpush1.msra.mxu0 0.0
    %6395 = vmatprep.subr.mxu0 0.0
    %6396 = vmatpush1.msra.mxu0 0.0
    %6397 = vmatprep.subr.mxu0 0.0
    %6398 = vmatpush1.msra.mxu0 0.0
    %6399 = vmatprep.subr.mxu0 0.0
    %6400 = vmatpush1.msra.mxu0 0.0
    %6401 = vmatprep.subr.mxu0 0.0
    %6402 = vmatpush1.msra.mxu0 0.0
    %6403 = vmatprep.subr.mxu0 0.0
    %6404 = vmatpush1.msra.mxu0 0.0
    %6405 = vmatprep.subr.mxu0 0.0
    %6406 = vmatpush1.msra.mxu0 0.0
    %6407 = vmatprep.subr.mxu0 0.0
    %6408 = vmatpush1.msra.mxu0 0.0
    %6409 = vmatprep.subr.mxu0 0.0
    %6410 = vmatpush1.msra.mxu0 0.0
    %6411 = vmatprep.subr.mxu0 0.0
    %6412 = vmatpush1.msra.mxu0 0.0
    %6413 = vmatprep.subr.mxu0 0.0
    %6414 = vmatpush1.msra.mxu0 0.0
    %6415 = vmatprep.subr.mxu0 0.0
    %6416 = vmatpush1.msra.mxu0 %v59
    %6417 = vmatprep.subr.mxu0 0.0
    %6418 = vmatpush1.msra.mxu0 %v58
    %6419 = vmatprep.subr.mxu0 0.0
    %6420 = vmatpush1.msra.mxu0 %v57
    %6421 = vmatprep.subr.mxu0 0.0
    %6422 = vmatpush1.msra.mxu0 %v56
    %6423 = vmatprep.subr.mxu0 0.0
    %6424 = vmatpush2.msra.mxu0 0.0
    %6425 = vmatprep.subr.mxu0 0.0
    %6426 = vmatpush2.msra.mxu0 0.0
    %6427 = vmatprep.subr.mxu0 0.0
    %6428 = vmatpush2.msra.mxu0 0.0
    %6429 = vmatprep.subr.mxu0 0.0
    %6430 = vmatpush2.msra.mxu0 0.0
    %6431 = vmatprep.subr.mxu0 0.0
    %6432 = vmatpush2.msra.mxu0 0.0
    %6433 = vmatprep.subr.mxu0 0.0
    %6434 = vmatpush2.msra.mxu0 0.0
    %6435 = vmatprep.subr.mxu0 0.0
    %6436 = vmatpush2.msra.mxu0 0.0
    %6437 = vmatprep.subr.mxu0 0.0
    %6438 = vmatpush2.msra.mxu0 0.0
    %6439 = vmatprep.subr.mxu0 0.0
    %6440 = vmatpush2.msra.mxu0 0.0
    %6441 = vmatprep.subr.mxu0 0.0
    %6442 = vmatpush2.msra.mxu0 0.0
    %6443 = vmatprep.subr.mxu0 0.0
    %6444 = vmatpush2.msra.mxu0 0.0
    %6445 = vmatprep.subr.mxu0 0.0
    %6446 = vmatpush2.msra.mxu0 0.0
    %6447 = vmatprep.subr.mxu0 0.0
    %6448 = vmatpush2.msra.mxu0 0.0
    %6449 = vmatprep.subr.mxu0 0.0
    %6450 = vmatpush2.msra.mxu0 0.0
    %6451 = vmatprep.subr.mxu0 0.0
    %6452 = vmatpush2.msra.mxu0 0.0
    %6453 = vmatprep.subr.mxu0 0.0
    %6454 = vmatpush2.msra.mxu0 0.0
    %6455 = vmatprep.mubr.f32.mxu0 0.0
    %6456 = vmatmul.mubr.f32.gmra.mxu0 %v6389
    %v6457 = vpop.f32.mrf.mxu0
    %v6458 = vadd.f32 %v91, %v6457
    %v6459 = vpop.f32.mrf.mxu0
    %6460 = vdwg.mxu0
    %v6461 = vmax.f32 %v6458, 0.0
    %v6463 = vsel %vm201, %v6461, 0
    %6465 = vmatprep.subr.mxu0 0.0
    %6466 = vmatpush1.msra.mxu0 0.0
    %6467 = vmatprep.subr.mxu0 0.0
    %6468 = vmatpush1.msra.mxu0 0.0
    %6469 = vmatprep.subr.mxu0 0.0
    %6470 = vmatpush1.msra.mxu0 0.0
    %6471 = vmatprep.subr.mxu0 0.0
    %6472 = vmatpush1.msra.mxu0 0.0
    %6473 = vmatprep.subr.mxu0 0.0
    %6474 = vmatpush1.msra.mxu0 0.0
    %6475 = vmatprep.subr.mxu0 0.0
    %6476 = vmatpush1.msra.mxu0 0.0
    %6477 = vmatprep.subr.mxu0 0.0
    %6478 = vmatpush1.msra.mxu0 0.0
    %6479 = vmatprep.subr.mxu0 0.0
    %6480 = vmatpush1.msra.mxu0 0.0
    %6481 = vmatprep.subr.mxu0 0.0
    %6482 = vmatpush1.msra.mxu0 0.0
    %6483 = vmatprep.subr.mxu0 0.0
    %6484 = vmatpush1.msra.mxu0 0.0
    %6485 = vmatprep.subr.mxu0 0.0
    %6486 = vmatpush1.msra.mxu0 0.0
    %6487 = vmatprep.subr.mxu0 0.0
    %6488 = vmatpush1.msra.mxu0 0.0
    %6489 = vmatprep.subr.mxu0 %v79
    %6490 = vmatpush1.msra.mxu0 %v78
    %6491 = vmatprep.subr.mxu0 %v75
    %6492 = vmatpush1.msra.mxu0 %v74
    %6493 = vmatprep.subr.mxu0 %v71
    %6494 = vmatpush1.msra.mxu0 %v70
    %6495 = vmatprep.subr.mxu0 %v67
    %6496 = vmatpush1.msra.mxu0 %v66
    %6497 = vmatprep.subr.mxu0 0.0
    %6498 = vmatpush2.msra.mxu0 0.0
    %6499 = vmatprep.subr.mxu0 0.0
    %6500 = vmatpush2.msra.mxu0 0.0
    %6501 = vmatprep.subr.mxu0 0.0
    %6502 = vmatpush2.msra.mxu0 0.0
    %6503 = vmatprep.subr.mxu0 0.0
    %6504 = vmatpush2.msra.mxu0 0.0
    %6505 = vmatprep.subr.mxu0 0.0
    %6506 = vmatpush2.msra.mxu0 0.0
    %6507 = vmatprep.subr.mxu0 0.0
    %6508 = vmatpush2.msra.mxu0 0.0
    %6509 = vmatprep.subr.mxu0 0.0
    %6510 = vmatpush2.msra.mxu0 0.0
    %6511 = vmatprep.subr.mxu0 0.0
    %6512 = vmatpush2.msra.mxu0 0.0
    %6513 = vmatprep.subr.mxu0 0.0
    %6514 = vmatpush2.msra.mxu0 0.0
    %6515 = vmatprep.subr.mxu0 0.0
    %6516 = vmatpush2.msra.mxu0 0.0
    %6517 = vmatprep.subr.mxu0 0.0
    %6518 = vmatpush2.msra.mxu0 0.0
    %6519 = vmatprep.subr.mxu0 0.0
    %6520 = vmatpush2.msra.mxu0 0.0
    %6521 = vmatprep.subr.mxu0 0.0
    %6522 = vmatpush2.msra.mxu0 0.0
    %6523 = vmatprep.subr.mxu0 0.0
    %6524 = vmatpush2.msra.mxu0 0.0
    %6525 = vmatprep.subr.mxu0 0.0
    %6526 = vmatpush2.msra.mxu0 0.0
    %6527 = vmatprep.subr.mxu0 0.0
    %6528 = vmatpush2.msra.mxu0 0.0
    %6529 = vmatprep.mubr.f32.mxu0 0.0
    %6530 = vmatmul.mubr.f32.gmra.mxu0 %v6463
    %v6531 = vpop.f32.mrf.mxu0
    %v6532 = vadd.f32 %v96, %v6531
    %v6533 = vpop.f32.mrf.mxu0
    %v6534 = vadd.f32 %v100, %v6533
    %6535 = vdwg.mxu0
    %6536 = vmatprep.subr.mxu0 0.0
    %6537 = vmatpush1.msra.mxu0 0.0
    %6538 = vmatprep.subr.mxu0 0.0
    %6539 = vmatpush1.msra.mxu0 0.0
    %6540 = vmatprep.subr.mxu0 0.0
    %6541 = vmatpush1.msra.mxu0 0.0
    %6542 = vmatprep.subr.mxu0 0.0
    %6543 = vmatpush1.msra.mxu0 0.0
    %6544 = vmatprep.subr.mxu0 0.0
    %6545 = vmatpush1.msra.mxu0 0.0
    %6546 = vmatprep.subr.mxu0 0.0
    %6547 = vmatpush1.msra.mxu0 0.0
    %6548 = vmatprep.subr.mxu0 0.0
    %6549 = vmatpush1.msra.mxu0 0.0
    %6550 = vmatprep.subr.mxu0 0.0
    %6551 = vmatpush1.msra.mxu0 0.0
    %6552 = vmatprep.subr.mxu0 0.0
    %6553 = vmatpush1.msra.mxu0 0.0
    %6554 = vmatprep.subr.mxu0 0.0
    %6555 = vmatpush1.msra.mxu0 0.0
    %6556 = vmatprep.subr.mxu0 0.0
    %6557 = vmatpush1.msra.mxu0 0.0
    %6558 = vmatprep.subr.mxu0 0.0
    %6559 = vmatpush1.msra.mxu0 0.0
    %6560 = vmatprep.subr.mxu0 %v81
    %6561 = vmatpush1.msra.mxu0 %v80
    %6562 = vmatprep.subr.mxu0 %v77
    %6563 = vmatpush1.msra.mxu0 %v76
    %6564 = vmatprep.subr.mxu0 %v73
    %6565 = vmatpush1.msra.mxu0 %v72
    %6566 = vmatprep.subr.mxu0 %v69
    %6567 = vmatpush1.msra.mxu0 %v68
    %6568 = vmatprep.subr.mxu0 0.0
    %6569 = vmatpush2.msra.mxu0 0.0
    %6570 = vmatprep.subr.mxu0 0.0
    %6571 = vmatpush2.msra.mxu0 0.0
    %6572 = vmatprep.subr.mxu0 0.0
    %6573 = vmatpush2.msra.mxu0 0.0
    %6574 = vmatprep.subr.mxu0 0.0
    %6575 = vmatpush2.msra.mxu0 0.0
    %6576 = vmatprep.subr.mxu0 0.0
    %6577 = vmatpush2.msra.mxu0 0.0
    %6578 = vmatprep.subr.mxu0 0.0
    %6579 = vmatpush2.msra.mxu0 0.0
    %6580 = vmatprep.subr.mxu0 0.0
    %6581 = vmatpush2.msra.mxu0 0.0
    %6582 = vmatprep.subr.mxu0 0.0
    %6583 = vmatpush2.msra.mxu0 0.0
    %6584 = vmatprep.subr.mxu0 0.0
    %6585 = vmatpush2.msra.mxu0 0.0
    %6586 = vmatprep.subr.mxu0 0.0
    %6587 = vmatpush2.msra.mxu0 0.0
    %6588 = vmatprep.subr.mxu0 0.0
    %6589 = vmatpush2.msra.mxu0 0.0
    %6590 = vmatprep.subr.mxu0 0.0
    %6591 = vmatpush2.msra.mxu0 0.0
    %6592 = vmatprep.subr.mxu0 0.0
    %6593 = vmatpush2.msra.mxu0 0.0
    %6594 = vmatprep.subr.mxu0 0.0
    %6595 = vmatpush2.msra.mxu0 0.0
    %6596 = vmatprep.subr.mxu0 0.0
    %6597 = vmatpush2.msra.mxu0 0.0
    %6598 = vmatprep.subr.mxu0 0.0
    %6599 = vmatpush2.msra.mxu0 0.0
    %6600 = vmatprep.mubr.f32.mxu0 0.0
    %6601 = vmatmul.mubr.f32.gmra.mxu0 %v6463
    %v6602 = vpop.f32.mrf.mxu0
    %v6603 = vadd.f32 %v104, %v6602
    %v6604 = vpop.f32.mrf.mxu0
    %v6605 = vadd.f32 %v108, %v6604
    %6606 = vdwg.mxu0
    %v6607 = vtanh.pop %v6532
    %v6608 = vtanh.pop %v6534
    %v6609 = vtanh.pop %v6603
    %v6610 = vtanh.pop %v6605
    %v6611 = vmul.f32 %v6607, %v5678
    %v6612 = vmul.f32 %v6608, %v5686
    %v6613 = vmul.f32 %v6609, %v5685
    %v6614 = vmul.f32 %v6610, %v5687
    %v6615 = vmul.f32 %v6316, -0.001
    %v6616 = vmul.f32 %v6615, %v5375
    %v6617 = vadd.f32 %v6616, %v6611
    %v6618 = vadd.f32 %v6617, %v6612
    %v6619 = vadd.f32 %v6618, %v6613
    %v6620 = vadd.f32 %v6619, %v6614
    %v6621 = vadd.f32 %v6007, %v6313
    %v6622 = vmul.f32 %v6621, 3.0
    %v6623 = vadd.f32 %v5701, %v6622
    %v6624 = vadd.f32 %v6623, %v6620
    %v6625 = vmul.f32 %v6624, 0.125
    %v6626 = vadd.f32 %v5370, %v6625
    %s6627 = scalar_lea.vmem [#allocation5], 10
    %6628 = vst [vmem:[%s6627] sm:$0x3] %v6626
    %s6629 = scalar_lea.vmem %s0, 50
    %v6630 = vld [vmem:[%s6629] sm:$0xff]
    %v6631 = vld [vmem:[%s6629 + $0x8] sm:$0x3]
    %6632 = vmatprep.subr.mxu0 0.0
    %6633 = vmatpush1.msra.mxu0 %v54
    %6634 = vmatprep.subr.mxu0 0.0
    %6635 = vmatpush1.msra.mxu0 %v53
    %6636 = vmatprep.subr.mxu0 0.0
    %6637 = vmatpush1.msra.mxu0 %v52
    %6638 = vmatprep.subr.mxu0 0.0
    %6639 = vmatpush1.msra.mxu0 %v51
    %6640 = vmatprep.subr.mxu0 0.0
    %6641 = vmatpush1.msra.mxu0 %v50
    %6642 = vmatprep.subr.mxu0 0.0
    %6643 = vmatpush1.msra.mxu0 %v49
    %6644 = vmatprep.subr.mxu0 0.0
    %6645 = vmatpush1.msra.mxu0 %v48
    %6646 = vmatprep.subr.mxu0 0.0
    %6647 = vmatpush1.msra.mxu0 %v47
    %6648 = vmatprep.subr.mxu0 0.0
    %6649 = vmatpush1.msra.mxu0 %v46
    %6650 = vmatprep.subr.mxu0 0.0
    %6651 = vmatpush1.msra.mxu0 %v45
    %6652 = vmatprep.subr.mxu0 0.0
    %6653 = vmatpush1.msra.mxu0 %v44
    %6654 = vmatprep.subr.mxu0 0.0
    %6655 = vmatpush1.msra.mxu0 %v43
    %6656 = vmatprep.subr.mxu0 0.0
    %6657 = vmatpush1.msra.mxu0 %v42
    %6658 = vmatprep.subr.mxu0 0.0
    %6659 = vmatpush1.msra.mxu0 %v41
    %6660 = vmatprep.subr.mxu0 0.0
    %6661 = vmatpush1.msra.mxu0 %v40
    %6662 = vmatprep.subr.mxu0 0.0
    %6663 = vmatpush1.msra.mxu0 %v39
    %6664 = vmatprep.subr.mxu0 0.0
    %6665 = vmatpush2.msra.mxu0 0.0
    %6666 = vmatprep.subr.mxu0 0.0
    %6667 = vmatpush2.msra.mxu0 0.0
    %6668 = vmatprep.subr.mxu0 0.0
    %6669 = vmatpush2.msra.mxu0 0.0
    %6670 = vmatprep.subr.mxu0 0.0
    %6671 = vmatpush2.msra.mxu0 0.0
    %6672 = vmatprep.subr.mxu0 0.0
    %6673 = vmatpush2.msra.mxu0 0.0
    %6674 = vmatprep.subr.mxu0 0.0
    %6675 = vmatpush2.msra.mxu0 0.0
    %6676 = vmatprep.subr.mxu0 0.0
    %6677 = vmatpush2.msra.mxu0 0.0
    %6678 = vmatprep.subr.mxu0 0.0
    %6679 = vmatpush2.msra.mxu0 0.0
    %6680 = vmatprep.subr.mxu0 0.0
    %6681 = vmatpush2.msra.mxu0 0.0
    %6682 = vmatprep.subr.mxu0 0.0
    %6683 = vmatpush2.msra.mxu0 0.0
    %6684 = vmatprep.subr.mxu0 0.0
    %6685 = vmatpush2.msra.mxu0 0.0
    %6686 = vmatprep.subr.mxu0 0.0
    %6687 = vmatpush2.msra.mxu0 0.0
    %6688 = vmatprep.subr.mxu0 0.0
    %6689 = vmatpush2.msra.mxu0 0.0
    %6690 = vmatprep.subr.mxu0 0.0
    %6691 = vmatpush2.msra.mxu0 0.0
    %6692 = vmatprep.subr.mxu0 0.0
    %6693 = vmatpush2.msra.mxu0 0.0
    %6694 = vmatprep.subr.mxu0 0.0
    %6695 = vmatpush2.msra.mxu0 0.0
    %6696 = vmatprep.mubr.f32.mxu0 0.0
    %6697 = vmatmul.mubr.f32.gmra.mxu0 %v6626
    %v6698 = vpop.f32.mrf.mxu0
    %v6699 = vadd.f32 %v87, %v6698
    %v6700 = vpop.f32.mrf.mxu0
    %6701 = vdwg.mxu0
    %v6702 = vmax.f32 %v6699, 0.0
    %v6704 = vsel %vm201, %v6702, 0
    %6706 = vmatprep.subr.mxu0 0.0
    %6707 = vmatpush1.msra.mxu0 0.0
    %6708 = vmatprep.subr.mxu0 0.0
    %6709 = vmatpush1.msra.mxu0 0.0
    %6710 = vmatprep.subr.mxu0 0.0
    %6711 = vmatpush1.msra.mxu0 0.0
    %6712 = vmatprep.subr.mxu0 0.0
    %6713 = vmatpush1.msra.mxu0 0.0
    %6714 = vmatprep.subr.mxu0 0.0
    %6715 = vmatpush1.msra.mxu0 0.0
    %6716 = vmatprep.subr.mxu0 0.0
    %6717 = vmatpush1.msra.mxu0 0.0
    %6718 = vmatprep.subr.mxu0 0.0
    %6719 = vmatpush1.msra.mxu0 0.0
    %6720 = vmatprep.subr.mxu0 0.0
    %6721 = vmatpush1.msra.mxu0 0.0
    %6722 = vmatprep.subr.mxu0 0.0
    %6723 = vmatpush1.msra.mxu0 0.0
    %6724 = vmatprep.subr.mxu0 0.0
    %6725 = vmatpush1.msra.mxu0 0.0
    %6726 = vmatprep.subr.mxu0 0.0
    %6727 = vmatpush1.msra.mxu0 0.0
    %6728 = vmatprep.subr.mxu0 0.0
    %6729 = vmatpush1.msra.mxu0 0.0
    %6730 = vmatprep.subr.mxu0 0.0
    %6731 = vmatpush1.msra.mxu0 %v59
    %6732 = vmatprep.subr.mxu0 0.0
    %6733 = vmatpush1.msra.mxu0 %v58
    %6734 = vmatprep.subr.mxu0 0.0
    %6735 = vmatpush1.msra.mxu0 %v57
    %6736 = vmatprep.subr.mxu0 0.0
    %6737 = vmatpush1.msra.mxu0 %v56
    %6738 = vmatprep.subr.mxu0 0.0
    %6739 = vmatpush2.msra.mxu0 0.0
    %6740 = vmatprep.subr.mxu0 0.0
    %6741 = vmatpush2.msra.mxu0 0.0
    %6742 = vmatprep.subr.mxu0 0.0
    %6743 = vmatpush2.msra.mxu0 0.0
    %6744 = vmatprep.subr.mxu0 0.0
    %6745 = vmatpush2.msra.mxu0 0.0
    %6746 = vmatprep.subr.mxu0 0.0
    %6747 = vmatpush2.msra.mxu0 0.0
    %6748 = vmatprep.subr.mxu0 0.0
    %6749 = vmatpush2.msra.mxu0 0.0
    %6750 = vmatprep.subr.mxu0 0.0
    %6751 = vmatpush2.msra.mxu0 0.0
    %6752 = vmatprep.subr.mxu0 0.0
    %6753 = vmatpush2.msra.mxu0 0.0
    %6754 = vmatprep.subr.mxu0 0.0
    %6755 = vmatpush2.msra.mxu0 0.0
    %6756 = vmatprep.subr.mxu0 0.0
    %6757 = vmatpush2.msra.mxu0 0.0
    %6758 = vmatprep.subr.mxu0 0.0
    %6759 = vmatpush2.msra.mxu0 0.0
    %6760 = vmatprep.subr.mxu0 0.0
    %6761 = vmatpush2.msra.mxu0 0.0
    %6762 = vmatprep.subr.mxu0 0.0
    %6763 = vmatpush2.msra.mxu0 0.0
    %6764 = vmatprep.subr.mxu0 0.0
    %6765 = vmatpush2.msra.mxu0 0.0
    %6766 = vmatprep.subr.mxu0 0.0
    %6767 = vmatpush2.msra.mxu0 0.0
    %6768 = vmatprep.subr.mxu0 0.0
    %6769 = vmatpush2.msra.mxu0 0.0
    %6770 = vmatprep.mubr.f32.mxu0 0.0
    %6771 = vmatmul.mubr.f32.gmra.mxu0 %v6704
    %v6772 = vpop.f32.mrf.mxu0
    %v6773 = vadd.f32 %v91, %v6772
    %v6774 = vpop.f32.mrf.mxu0
    %6775 = vdwg.mxu0
    %v6776 = vmax.f32 %v6773, 0.0
    %v6778 = vsel %vm201, %v6776, 0
    %6780 = vmatprep.subr.mxu0 0.0
    %6781 = vmatpush1.msra.mxu0 0.0
    %6782 = vmatprep.subr.mxu0 0.0
    %6783 = vmatpush1.msra.mxu0 0.0
    %6784 = vmatprep.subr.mxu0 0.0
    %6785 = vmatpush1.msra.mxu0 0.0
    %6786 = vmatprep.subr.mxu0 0.0
    %6787 = vmatpush1.msra.mxu0 0.0
    %6788 = vmatprep.subr.mxu0 0.0
    %6789 = vmatpush1.msra.mxu0 0.0
    %6790 = vmatprep.subr.mxu0 0.0
    %6791 = vmatpush1.msra.mxu0 0.0
    %6792 = vmatprep.subr.mxu0 0.0
    %6793 = vmatpush1.msra.mxu0 0.0
    %6794 = vmatprep.subr.mxu0 0.0
    %6795 = vmatpush1.msra.mxu0 0.0
    %6796 = vmatprep.subr.mxu0 0.0
    %6797 = vmatpush1.msra.mxu0 0.0
    %6798 = vmatprep.subr.mxu0 0.0
    %6799 = vmatpush1.msra.mxu0 0.0
    %6800 = vmatprep.subr.mxu0 0.0
    %6801 = vmatpush1.msra.mxu0 0.0
    %6802 = vmatprep.subr.mxu0 0.0
    %6803 = vmatpush1.msra.mxu0 0.0
    %6804 = vmatprep.subr.mxu0 %v79
    %6805 = vmatpush1.msra.mxu0 %v78
    %6806 = vmatprep.subr.mxu0 %v75
    %6807 = vmatpush1.msra.mxu0 %v74
    %6808 = vmatprep.subr.mxu0 %v71
    %6809 = vmatpush1.msra.mxu0 %v70
    %6810 = vmatprep.subr.mxu0 %v67
    %6811 = vmatpush1.msra.mxu0 %v66
    %6812 = vmatprep.subr.mxu0 0.0
    %6813 = vmatpush2.msra.mxu0 0.0
    %6814 = vmatprep.subr.mxu0 0.0
    %6815 = vmatpush2.msra.mxu0 0.0
    %6816 = vmatprep.subr.mxu0 0.0
    %6817 = vmatpush2.msra.mxu0 0.0
    %6818 = vmatprep.subr.mxu0 0.0
    %6819 = vmatpush2.msra.mxu0 0.0
    %6820 = vmatprep.subr.mxu0 0.0
    %6821 = vmatpush2.msra.mxu0 0.0
    %6822 = vmatprep.subr.mxu0 0.0
    %6823 = vmatpush2.msra.mxu0 0.0
    %6824 = vmatprep.subr.mxu0 0.0
    %6825 = vmatpush2.msra.mxu0 0.0
    %6826 = vmatprep.subr.mxu0 0.0
    %6827 = vmatpush2.msra.mxu0 0.0
    %6828 = vmatprep.subr.mxu0 0.0
    %6829 = vmatpush2.msra.mxu0 0.0
    %6830 = vmatprep.subr.mxu0 0.0
    %6831 = vmatpush2.msra.mxu0 0.0
    %6832 = vmatprep.subr.mxu0 0.0
    %6833 = vmatpush2.msra.mxu0 0.0
    %6834 = vmatprep.subr.mxu0 0.0
    %6835 = vmatpush2.msra.mxu0 0.0
    %6836 = vmatprep.subr.mxu0 0.0
    %6837 = vmatpush2.msra.mxu0 0.0
    %6838 = vmatprep.subr.mxu0 0.0
    %6839 = vmatpush2.msra.mxu0 0.0
    %6840 = vmatprep.subr.mxu0 0.0
    %6841 = vmatpush2.msra.mxu0 0.0
    %6842 = vmatprep.subr.mxu0 0.0
    %6843 = vmatpush2.msra.mxu0 0.0
    %6844 = vmatprep.mubr.f32.mxu0 0.0
    %6845 = vmatmul.mubr.f32.gmra.mxu0 %v6778
    %v6846 = vpop.f32.mrf.mxu0
    %v6847 = vadd.f32 %v96, %v6846
    %v6848 = vpop.f32.mrf.mxu0
    %v6849 = vadd.f32 %v100, %v6848
    %6850 = vdwg.mxu0
    %6851 = vmatprep.subr.mxu0 0.0
    %6852 = vmatpush1.msra.mxu0 0.0
    %6853 = vmatprep.subr.mxu0 0.0
    %6854 = vmatpush1.msra.mxu0 0.0
    %6855 = vmatprep.subr.mxu0 0.0
    %6856 = vmatpush1.msra.mxu0 0.0
    %6857 = vmatprep.subr.mxu0 0.0
    %6858 = vmatpush1.msra.mxu0 0.0
    %6859 = vmatprep.subr.mxu0 0.0
    %6860 = vmatpush1.msra.mxu0 0.0
    %6861 = vmatprep.subr.mxu0 0.0
    %6862 = vmatpush1.msra.mxu0 0.0
    %6863 = vmatprep.subr.mxu0 0.0
    %6864 = vmatpush1.msra.mxu0 0.0
    %6865 = vmatprep.subr.mxu0 0.0
    %6866 = vmatpush1.msra.mxu0 0.0
    %6867 = vmatprep.subr.mxu0 0.0
    %6868 = vmatpush1.msra.mxu0 0.0
    %6869 = vmatprep.subr.mxu0 0.0
    %6870 = vmatpush1.msra.mxu0 0.0
    %6871 = vmatprep.subr.mxu0 0.0
    %6872 = vmatpush1.msra.mxu0 0.0
    %6873 = vmatprep.subr.mxu0 0.0
    %6874 = vmatpush1.msra.mxu0 0.0
    %6875 = vmatprep.subr.mxu0 %v81
    %6876 = vmatpush1.msra.mxu0 %v80
    %6877 = vmatprep.subr.mxu0 %v77
    %6878 = vmatpush1.msra.mxu0 %v76
    %6879 = vmatprep.subr.mxu0 %v73
    %6880 = vmatpush1.msra.mxu0 %v72
    %6881 = vmatprep.subr.mxu0 %v69
    %6882 = vmatpush1.msra.mxu0 %v68
    %6883 = vmatprep.subr.mxu0 0.0
    %6884 = vmatpush2.msra.mxu0 0.0
    %6885 = vmatprep.subr.mxu0 0.0
    %6886 = vmatpush2.msra.mxu0 0.0
    %6887 = vmatprep.subr.mxu0 0.0
    %6888 = vmatpush2.msra.mxu0 0.0
    %6889 = vmatprep.subr.mxu0 0.0
    %6890 = vmatpush2.msra.mxu0 0.0
    %6891 = vmatprep.subr.mxu0 0.0
    %6892 = vmatpush2.msra.mxu0 0.0
    %6893 = vmatprep.subr.mxu0 0.0
    %6894 = vmatpush2.msra.mxu0 0.0
    %6895 = vmatprep.subr.mxu0 0.0
    %6896 = vmatpush2.msra.mxu0 0.0
    %6897 = vmatprep.subr.mxu0 0.0
    %6898 = vmatpush2.msra.mxu0 0.0
    %6899 = vmatprep.subr.mxu0 0.0
    %6900 = vmatpush2.msra.mxu0 0.0
    %6901 = vmatprep.subr.mxu0 0.0
    %6902 = vmatpush2.msra.mxu0 0.0
    %6903 = vmatprep.subr.mxu0 0.0
    %6904 = vmatpush2.msra.mxu0 0.0
    %6905 = vmatprep.subr.mxu0 0.0
    %6906 = vmatpush2.msra.mxu0 0.0
    %6907 = vmatprep.subr.mxu0 0.0
    %6908 = vmatpush2.msra.mxu0 0.0
    %6909 = vmatprep.subr.mxu0 0.0
    %6910 = vmatpush2.msra.mxu0 0.0
    %6911 = vmatprep.subr.mxu0 0.0
    %6912 = vmatpush2.msra.mxu0 0.0
    %6913 = vmatprep.subr.mxu0 0.0
    %6914 = vmatpush2.msra.mxu0 0.0
    %6915 = vmatprep.mubr.f32.mxu0 0.0
    %6916 = vmatmul.mubr.f32.gmra.mxu0 %v6778
    %v6917 = vpop.f32.mrf.mxu0
    %v6918 = vadd.f32 %v104, %v6917
    %v6919 = vpop.f32.mrf.mxu0
    %v6920 = vadd.f32 %v108, %v6919
    %6921 = vdwg.mxu0
    %v6922 = vtanh.pop %v6847
    %v6923 = vtanh.pop %v6849
    %v6924 = vtanh.pop %v6918
    %v6925 = vtanh.pop %v6920
    %v6927 = vcombine.high %v6630, %v6630
    %v6929 = vunpack.c.l.s4 1983009808
    %v6930 = vunpack.c.0.s8 %v6929
    %v6931 = vlaneseq
    %v6932 = vshrl.u32 %v6931, 7
    %v6933 = vsub.s32 %v6930, %v6932
    %v6934 = vrot.slane %v6630, %v6933
    %v6936 = vunpack.c.l.s4 1983009808
    %v6937 = vunpack.c.0.s8 %v6936
    %v6938 = vlaneseq
    %v6939 = vshrl.u32 %v6938, 7
    %v6940 = vsub.s32 %v6937, %v6939
    %v6941 = vrot.slane %v6927, %v6940
    %v6942 = vcombine.high %v6934, %v6934
    %v6943 = vcombine.high %v6941, %v6941
    %v6948 = vmul.f32 %v6922, %v6934
    %v6949 = vmul.f32 %v6923, %v6942
    %v6950 = vmul.f32 %v6924, %v6941
    %v6951 = vmul.f32 %v6925, %v6943
    %v6952 = vmul.f32 %v6626, -0.001
    %v6953 = vmul.f32 %v6952, %v6631
    %v6954 = vadd.f32 %v6953, %v6948
    %v6955 = vadd.f32 %v6954, %v6949
    %v6956 = vadd.f32 %v6955, %v6950
    %v6957 = vadd.f32 %v6956, %v6951
    %v6958 = vmul.f32 %v6957, 0.33333334
    %v6959 = vadd.f32 %v6626, %v6958
    %6960 = vmatprep.subr.mxu0 0.0
    %6961 = vmatpush1.msra.mxu0 %v54
    %6962 = vmatprep.subr.mxu0 0.0
    %6963 = vmatpush1.msra.mxu0 %v53
    %6964 = vmatprep.subr.mxu0 0.0
    %6965 = vmatpush1.msra.mxu0 %v52
    %6966 = vmatprep.subr.mxu0 0.0
    %6967 = vmatpush1.msra.mxu0 %v51
    %6968 = vmatprep.subr.mxu0 0.0
    %6969 = vmatpush1.msra.mxu0 %v50
    %6970 = vmatprep.subr.mxu0 0.0
    %6971 = vmatpush1.msra.mxu0 %v49
    %6972 = vmatprep.subr.mxu0 0.0
    %6973 = vmatpush1.msra.mxu0 %v48
    %6974 = vmatprep.subr.mxu0 0.0
    %6975 = vmatpush1.msra.mxu0 %v47
    %6976 = vmatprep.subr.mxu0 0.0
    %6977 = vmatpush1.msra.mxu0 %v46
    %6978 = vmatprep.subr.mxu0 0.0
    %6979 = vmatpush1.msra.mxu0 %v45
    %6980 = vmatprep.subr.mxu0 0.0
    %6981 = vmatpush1.msra.mxu0 %v44
    %6982 = vmatprep.subr.mxu0 0.0
    %6983 = vmatpush1.msra.mxu0 %v43
    %6984 = vmatprep.subr.mxu0 0.0
    %6985 = vmatpush1.msra.mxu0 %v42
    %6986 = vmatprep.subr.mxu0 0.0
    %6987 = vmatpush1.msra.mxu0 %v41
    %6988 = vmatprep.subr.mxu0 0.0
    %6989 = vmatpush1.msra.mxu0 %v40
    %6990 = vmatprep.subr.mxu0 0.0
    %6991 = vmatpush1.msra.mxu0 %v39
    %6992 = vmatprep.subr.mxu0 0.0
    %6993 = vmatpush2.msra.mxu0 0.0
    %6994 = vmatprep.subr.mxu0 0.0
    %6995 = vmatpush2.msra.mxu0 0.0
    %6996 = vmatprep.subr.mxu0 0.0
    %6997 = vmatpush2.msra.mxu0 0.0
    %6998 = vmatprep.subr.mxu0 0.0
    %6999 = vmatpush2.msra.mxu0 0.0
    %7000 = vmatprep.subr.mxu0 0.0
    %7001 = vmatpush2.msra.mxu0 0.0
    %7002 = vmatprep.subr.mxu0 0.0
    %7003 = vmatpush2.msra.mxu0 0.0
    %7004 = vmatprep.subr.mxu0 0.0
    %7005 = vmatpush2.msra.mxu0 0.0
    %7006 = vmatprep.subr.mxu0 0.0
    %7007 = vmatpush2.msra.mxu0 0.0
    %7008 = vmatprep.subr.mxu0 0.0
    %7009 = vmatpush2.msra.mxu0 0.0
    %7010 = vmatprep.subr.mxu0 0.0
    %7011 = vmatpush2.msra.mxu0 0.0
    %7012 = vmatprep.subr.mxu0 0.0
    %7013 = vmatpush2.msra.mxu0 0.0
    %7014 = vmatprep.subr.mxu0 0.0
    %7015 = vmatpush2.msra.mxu0 0.0
    %7016 = vmatprep.subr.mxu0 0.0
    %7017 = vmatpush2.msra.mxu0 0.0
    %7018 = vmatprep.subr.mxu0 0.0
    %7019 = vmatpush2.msra.mxu0 0.0
    %7020 = vmatprep.subr.mxu0 0.0
    %7021 = vmatpush2.msra.mxu0 0.0
    %7022 = vmatprep.subr.mxu0 0.0
    %7023 = vmatpush2.msra.mxu0 0.0
    %7024 = vmatprep.mubr.f32.mxu0 0.0
    %7025 = vmatmul.mubr.f32.gmra.mxu0 %v6959
    %v7026 = vpop.f32.mrf.mxu0
    %v7027 = vadd.f32 %v87, %v7026
    %v7028 = vpop.f32.mrf.mxu0
    %7029 = vdwg.mxu0
    %v7030 = vmax.f32 %v7027, 0.0
    %v7032 = vsel %vm201, %v7030, 0
    %7034 = vmatprep.subr.mxu0 0.0
    %7035 = vmatpush1.msra.mxu0 0.0
    %7036 = vmatprep.subr.mxu0 0.0
    %7037 = vmatpush1.msra.mxu0 0.0
    %7038 = vmatprep.subr.mxu0 0.0
    %7039 = vmatpush1.msra.mxu0 0.0
    %7040 = vmatprep.subr.mxu0 0.0
    %7041 = vmatpush1.msra.mxu0 0.0
    %7042 = vmatprep.subr.mxu0 0.0
    %7043 = vmatpush1.msra.mxu0 0.0
    %7044 = vmatprep.subr.mxu0 0.0
    %7045 = vmatpush1.msra.mxu0 0.0
    %7046 = vmatprep.subr.mxu0 0.0
    %7047 = vmatpush1.msra.mxu0 0.0
    %7048 = vmatprep.subr.mxu0 0.0
    %7049 = vmatpush1.msra.mxu0 0.0
    %7050 = vmatprep.subr.mxu0 0.0
    %7051 = vmatpush1.msra.mxu0 0.0
    %7052 = vmatprep.subr.mxu0 0.0
    %7053 = vmatpush1.msra.mxu0 0.0
    %7054 = vmatprep.subr.mxu0 0.0
    %7055 = vmatpush1.msra.mxu0 0.0
    %7056 = vmatprep.subr.mxu0 0.0
    %7057 = vmatpush1.msra.mxu0 0.0
    %7058 = vmatprep.subr.mxu0 0.0
    %7059 = vmatpush1.msra.mxu0 %v59
    %7060 = vmatprep.subr.mxu0 0.0
    %7061 = vmatpush1.msra.mxu0 %v58
    %7062 = vmatprep.subr.mxu0 0.0
    %7063 = vmatpush1.msra.mxu0 %v57
    %7064 = vmatprep.subr.mxu0 0.0
    %7065 = vmatpush1.msra.mxu0 %v56
    %7066 = vmatprep.subr.mxu0 0.0
    %7067 = vmatpush2.msra.mxu0 0.0
    %7068 = vmatprep.subr.mxu0 0.0
    %7069 = vmatpush2.msra.mxu0 0.0
    %7070 = vmatprep.subr.mxu0 0.0
    %7071 = vmatpush2.msra.mxu0 0.0
    %7072 = vmatprep.subr.mxu0 0.0
    %7073 = vmatpush2.msra.mxu0 0.0
    %7074 = vmatprep.subr.mxu0 0.0
    %7075 = vmatpush2.msra.mxu0 0.0
    %7076 = vmatprep.subr.mxu0 0.0
    %7077 = vmatpush2.msra.mxu0 0.0
    %7078 = vmatprep.subr.mxu0 0.0
    %7079 = vmatpush2.msra.mxu0 0.0
    %7080 = vmatprep.subr.mxu0 0.0
    %7081 = vmatpush2.msra.mxu0 0.0
    %7082 = vmatprep.subr.mxu0 0.0
    %7083 = vmatpush2.msra.mxu0 0.0
    %7084 = vmatprep.subr.mxu0 0.0
    %7085 = vmatpush2.msra.mxu0 0.0
    %7086 = vmatprep.subr.mxu0 0.0
    %7087 = vmatpush2.msra.mxu0 0.0
    %7088 = vmatprep.subr.mxu0 0.0
    %7089 = vmatpush2.msra.mxu0 0.0
    %7090 = vmatprep.subr.mxu0 0.0
    %7091 = vmatpush2.msra.mxu0 0.0
    %7092 = vmatprep.subr.mxu0 0.0
    %7093 = vmatpush2.msra.mxu0 0.0
    %7094 = vmatprep.subr.mxu0 0.0
    %7095 = vmatpush2.msra.mxu0 0.0
    %7096 = vmatprep.subr.mxu0 0.0
    %7097 = vmatpush2.msra.mxu0 0.0
    %7098 = vmatprep.mubr.f32.mxu0 0.0
    %7099 = vmatmul.mubr.f32.gmra.mxu0 %v7032
    %v7100 = vpop.f32.mrf.mxu0
    %v7101 = vadd.f32 %v91, %v7100
    %v7102 = vpop.f32.mrf.mxu0
    %7103 = vdwg.mxu0
    %v7104 = vmax.f32 %v7101, 0.0
    %v7106 = vsel %vm201, %v7104, 0
    %7108 = vmatprep.subr.mxu0 0.0
    %7109 = vmatpush1.msra.mxu0 0.0
    %7110 = vmatprep.subr.mxu0 0.0
    %7111 = vmatpush1.msra.mxu0 0.0
    %7112 = vmatprep.subr.mxu0 0.0
    %7113 = vmatpush1.msra.mxu0 0.0
    %7114 = vmatprep.subr.mxu0 0.0
    %7115 = vmatpush1.msra.mxu0 0.0
    %7116 = vmatprep.subr.mxu0 0.0
    %7117 = vmatpush1.msra.mxu0 0.0
    %7118 = vmatprep.subr.mxu0 0.0
    %7119 = vmatpush1.msra.mxu0 0.0
    %7120 = vmatprep.subr.mxu0 0.0
    %7121 = vmatpush1.msra.mxu0 0.0
    %7122 = vmatprep.subr.mxu0 0.0
    %7123 = vmatpush1.msra.mxu0 0.0
    %7124 = vmatprep.subr.mxu0 0.0
    %7125 = vmatpush1.msra.mxu0 0.0
    %7126 = vmatprep.subr.mxu0 0.0
    %7127 = vmatpush1.msra.mxu0 0.0
    %7128 = vmatprep.subr.mxu0 0.0
    %7129 = vmatpush1.msra.mxu0 0.0
    %7130 = vmatprep.subr.mxu0 0.0
    %7131 = vmatpush1.msra.mxu0 0.0
    %7132 = vmatprep.subr.mxu0 %v79
    %7133 = vmatpush1.msra.mxu0 %v78
    %7134 = vmatprep.subr.mxu0 %v75
    %7135 = vmatpush1.msra.mxu0 %v74
    %7136 = vmatprep.subr.mxu0 %v71
    %7137 = vmatpush1.msra.mxu0 %v70
    %7138 = vmatprep.subr.mxu0 %v67
    %7139 = vmatpush1.msra.mxu0 %v66
    %7140 = vmatprep.subr.mxu0 0.0
    %7141 = vmatpush2.msra.mxu0 0.0
    %7142 = vmatprep.subr.mxu0 0.0
    %7143 = vmatpush2.msra.mxu0 0.0
    %7144 = vmatprep.subr.mxu0 0.0
    %7145 = vmatpush2.msra.mxu0 0.0
    %7146 = vmatprep.subr.mxu0 0.0
    %7147 = vmatpush2.msra.mxu0 0.0
    %7148 = vmatprep.subr.mxu0 0.0
    %7149 = vmatpush2.msra.mxu0 0.0
    %7150 = vmatprep.subr.mxu0 0.0
    %7151 = vmatpush2.msra.mxu0 0.0
    %7152 = vmatprep.subr.mxu0 0.0
    %7153 = vmatpush2.msra.mxu0 0.0
    %7154 = vmatprep.subr.mxu0 0.0
    %7155 = vmatpush2.msra.mxu0 0.0
    %7156 = vmatprep.subr.mxu0 0.0
    %7157 = vmatpush2.msra.mxu0 0.0
    %7158 = vmatprep.subr.mxu0 0.0
    %7159 = vmatpush2.msra.mxu0 0.0
    %7160 = vmatprep.subr.mxu0 0.0
    %7161 = vmatpush2.msra.mxu0 0.0
    %7162 = vmatprep.subr.mxu0 0.0
    %7163 = vmatpush2.msra.mxu0 0.0
    %7164 = vmatprep.subr.mxu0 0.0
    %7165 = vmatpush2.msra.mxu0 0.0
    %7166 = vmatprep.subr.mxu0 0.0
    %7167 = vmatpush2.msra.mxu0 0.0
    %7168 = vmatprep.subr.mxu0 0.0
    %7169 = vmatpush2.msra.mxu0 0.0
    %7170 = vmatprep.subr.mxu0 0.0
    %7171 = vmatpush2.msra.mxu0 0.0
    %7172 = vmatprep.mubr.f32.mxu0 0.0
    %7173 = vmatmul.mubr.f32.gmra.mxu0 %v7106
    %v7174 = vpop.f32.mrf.mxu0
    %v7175 = vadd.f32 %v96, %v7174
    %v7176 = vpop.f32.mrf.mxu0
    %v7177 = vadd.f32 %v100, %v7176
    %7178 = vdwg.mxu0
    %7179 = vmatprep.subr.mxu0 0.0
    %7180 = vmatpush1.msra.mxu0 0.0
    %7181 = vmatprep.subr.mxu0 0.0
    %7182 = vmatpush1.msra.mxu0 0.0
    %7183 = vmatprep.subr.mxu0 0.0
    %7184 = vmatpush1.msra.mxu0 0.0
    %7185 = vmatprep.subr.mxu0 0.0
    %7186 = vmatpush1.msra.mxu0 0.0
    %7187 = vmatprep.subr.mxu0 0.0
    %7188 = vmatpush1.msra.mxu0 0.0
    %7189 = vmatprep.subr.mxu0 0.0
    %7190 = vmatpush1.msra.mxu0 0.0
    %7191 = vmatprep.subr.mxu0 0.0
    %7192 = vmatpush1.msra.mxu0 0.0
    %7193 = vmatprep.subr.mxu0 0.0
    %7194 = vmatpush1.msra.mxu0 0.0
    %7195 = vmatprep.subr.mxu0 0.0
    %7196 = vmatpush1.msra.mxu0 0.0
    %7197 = vmatprep.subr.mxu0 0.0
    %7198 = vmatpush1.msra.mxu0 0.0
    %7199 = vmatprep.subr.mxu0 0.0
    %7200 = vmatpush1.msra.mxu0 0.0
    %7201 = vmatprep.subr.mxu0 0.0
    %7202 = vmatpush1.msra.mxu0 0.0
    %7203 = vmatprep.subr.mxu0 %v81
    %7204 = vmatpush1.msra.mxu0 %v80
    %7205 = vmatprep.subr.mxu0 %v77
    %7206 = vmatpush1.msra.mxu0 %v76
    %7207 = vmatprep.subr.mxu0 %v73
    %7208 = vmatpush1.msra.mxu0 %v72
    %7209 = vmatprep.subr.mxu0 %v69
    %7210 = vmatpush1.msra.mxu0 %v68
    %7211 = vmatprep.subr.mxu0 0.0
    %7212 = vmatpush2.msra.mxu0 0.0
    %7213 = vmatprep.subr.mxu0 0.0
    %7214 = vmatpush2.msra.mxu0 0.0
    %7215 = vmatprep.subr.mxu0 0.0
    %7216 = vmatpush2.msra.mxu0 0.0
    %7217 = vmatprep.subr.mxu0 0.0
    %7218 = vmatpush2.msra.mxu0 0.0
    %7219 = vmatprep.subr.mxu0 0.0
    %7220 = vmatpush2.msra.mxu0 0.0
    %7221 = vmatprep.subr.mxu0 0.0
    %7222 = vmatpush2.msra.mxu0 0.0
    %7223 = vmatprep.subr.mxu0 0.0
    %7224 = vmatpush2.msra.mxu0 0.0
    %7225 = vmatprep.subr.mxu0 0.0
    %7226 = vmatpush2.msra.mxu0 0.0
    %7227 = vmatprep.subr.mxu0 0.0
    %7228 = vmatpush2.msra.mxu0 0.0
    %7229 = vmatprep.subr.mxu0 0.0
    %7230 = vmatpush2.msra.mxu0 0.0
    %7231 = vmatprep.subr.mxu0 0.0
    %7232 = vmatpush2.msra.mxu0 0.0
    %7233 = vmatprep.subr.mxu0 0.0
    %7234 = vmatpush2.msra.mxu0 0.0
    %7235 = vmatprep.subr.mxu0 0.0
    %7236 = vmatpush2.msra.mxu0 0.0
    %7237 = vmatprep.subr.mxu0 0.0
    %7238 = vmatpush2.msra.mxu0 0.0
    %7239 = vmatprep.subr.mxu0 0.0
    %7240 = vmatpush2.msra.mxu0 0.0
    %7241 = vmatprep.subr.mxu0 0.0
    %7242 = vmatpush2.msra.mxu0 0.0
    %7243 = vmatprep.mubr.f32.mxu0 0.0
    %7244 = vmatmul.mubr.f32.gmra.mxu0 %v7106
    %v7245 = vpop.f32.mrf.mxu0
    %v7246 = vadd.f32 %v104, %v7245
    %v7247 = vpop.f32.mrf.mxu0
    %v7248 = vadd.f32 %v108, %v7247
    %7249 = vdwg.mxu0
    %v7250 = vtanh.pop %v7175
    %v7251 = vtanh.pop %v7177
    %v7252 = vtanh.pop %v7246
    %v7253 = vtanh.pop %v7248
    %v7254 = vmul.f32 %v7250, %v6934
    %v7255 = vmul.f32 %v7251, %v6942
    %v7256 = vmul.f32 %v7252, %v6941
    %v7257 = vmul.f32 %v7253, %v6943
    %v7258 = vmul.f32 %v6959, -0.001
    %v7259 = vmul.f32 %v7258, %v6631
    %v7260 = vadd.f32 %v7259, %v7254
    %v7261 = vadd.f32 %v7260, %v7255
    %v7262 = vadd.f32 %v7261, %v7256
    %v7263 = vadd.f32 %v7262, %v7257
    %v7264 = vsub.f32 %v7263, %v6958
    %v7265 = vadd.f32 %v6626, %v7264
    %7266 = vmatprep.subr.mxu0 0.0
    %7267 = vmatpush1.msra.mxu0 %v54
    %7268 = vmatprep.subr.mxu0 0.0
    %7269 = vmatpush1.msra.mxu0 %v53
    %7270 = vmatprep.subr.mxu0 0.0
    %7271 = vmatpush1.msra.mxu0 %v52
    %7272 = vmatprep.subr.mxu0 0.0
    %7273 = vmatpush1.msra.mxu0 %v51
    %7274 = vmatprep.subr.mxu0 0.0
    %7275 = vmatpush1.msra.mxu0 %v50
    %7276 = vmatprep.subr.mxu0 0.0
    %7277 = vmatpush1.msra.mxu0 %v49
    %7278 = vmatprep.subr.mxu0 0.0
    %7279 = vmatpush1.msra.mxu0 %v48
    %7280 = vmatprep.subr.mxu0 0.0
    %7281 = vmatpush1.msra.mxu0 %v47
    %7282 = vmatprep.subr.mxu0 0.0
    %7283 = vmatpush1.msra.mxu0 %v46
    %7284 = vmatprep.subr.mxu0 0.0
    %7285 = vmatpush1.msra.mxu0 %v45
    %7286 = vmatprep.subr.mxu0 0.0
    %7287 = vmatpush1.msra.mxu0 %v44
    %7288 = vmatprep.subr.mxu0 0.0
    %7289 = vmatpush1.msra.mxu0 %v43
    %7290 = vmatprep.subr.mxu0 0.0
    %7291 = vmatpush1.msra.mxu0 %v42
    %7292 = vmatprep.subr.mxu0 0.0
    %7293 = vmatpush1.msra.mxu0 %v41
    %7294 = vmatprep.subr.mxu0 0.0
    %7295 = vmatpush1.msra.mxu0 %v40
    %7296 = vmatprep.subr.mxu0 0.0
    %7297 = vmatpush1.msra.mxu0 %v39
    %7298 = vmatprep.subr.mxu0 0.0
    %7299 = vmatpush2.msra.mxu0 0.0
    %7300 = vmatprep.subr.mxu0 0.0
    %7301 = vmatpush2.msra.mxu0 0.0
    %7302 = vmatprep.subr.mxu0 0.0
    %7303 = vmatpush2.msra.mxu0 0.0
    %7304 = vmatprep.subr.mxu0 0.0
    %7305 = vmatpush2.msra.mxu0 0.0
    %7306 = vmatprep.subr.mxu0 0.0
    %7307 = vmatpush2.msra.mxu0 0.0
    %7308 = vmatprep.subr.mxu0 0.0
    %7309 = vmatpush2.msra.mxu0 0.0
    %7310 = vmatprep.subr.mxu0 0.0
    %7311 = vmatpush2.msra.mxu0 0.0
    %7312 = vmatprep.subr.mxu0 0.0
    %7313 = vmatpush2.msra.mxu0 0.0
    %7314 = vmatprep.subr.mxu0 0.0
    %7315 = vmatpush2.msra.mxu0 0.0
    %7316 = vmatprep.subr.mxu0 0.0
    %7317 = vmatpush2.msra.mxu0 0.0
    %7318 = vmatprep.subr.mxu0 0.0
    %7319 = vmatpush2.msra.mxu0 0.0
    %7320 = vmatprep.subr.mxu0 0.0
    %7321 = vmatpush2.msra.mxu0 0.0
    %7322 = vmatprep.subr.mxu0 0.0
    %7323 = vmatpush2.msra.mxu0 0.0
    %7324 = vmatprep.subr.mxu0 0.0
    %7325 = vmatpush2.msra.mxu0 0.0
    %7326 = vmatprep.subr.mxu0 0.0
    %7327 = vmatpush2.msra.mxu0 0.0
    %7328 = vmatprep.subr.mxu0 0.0
    %7329 = vmatpush2.msra.mxu0 0.0
    %7330 = vmatprep.mubr.f32.mxu0 0.0
    %7331 = vmatmul.mubr.f32.gmra.mxu0 %v7265
    %v7332 = vpop.f32.mrf.mxu0
    %v7333 = vadd.f32 %v87, %v7332
    %v7334 = vpop.f32.mrf.mxu0
    %7335 = vdwg.mxu0
    %v7336 = vmax.f32 %v7333, 0.0
    %v7338 = vsel %vm201, %v7336, 0
    %7340 = vmatprep.subr.mxu0 0.0
    %7341 = vmatpush1.msra.mxu0 0.0
    %7342 = vmatprep.subr.mxu0 0.0
    %7343 = vmatpush1.msra.mxu0 0.0
    %7344 = vmatprep.subr.mxu0 0.0
    %7345 = vmatpush1.msra.mxu0 0.0
    %7346 = vmatprep.subr.mxu0 0.0
    %7347 = vmatpush1.msra.mxu0 0.0
    %7348 = vmatprep.subr.mxu0 0.0
    %7349 = vmatpush1.msra.mxu0 0.0
    %7350 = vmatprep.subr.mxu0 0.0
    %7351 = vmatpush1.msra.mxu0 0.0
    %7352 = vmatprep.subr.mxu0 0.0
    %7353 = vmatpush1.msra.mxu0 0.0
    %7354 = vmatprep.subr.mxu0 0.0
    %7355 = vmatpush1.msra.mxu0 0.0
    %7356 = vmatprep.subr.mxu0 0.0
    %7357 = vmatpush1.msra.mxu0 0.0
    %7358 = vmatprep.subr.mxu0 0.0
    %7359 = vmatpush1.msra.mxu0 0.0
    %7360 = vmatprep.subr.mxu0 0.0
    %7361 = vmatpush1.msra.mxu0 0.0
    %7362 = vmatprep.subr.mxu0 0.0
    %7363 = vmatpush1.msra.mxu0 0.0
    %7364 = vmatprep.subr.mxu0 0.0
    %7365 = vmatpush1.msra.mxu0 %v59
    %7366 = vmatprep.subr.mxu0 0.0
    %7367 = vmatpush1.msra.mxu0 %v58
    %7368 = vmatprep.subr.mxu0 0.0
    %7369 = vmatpush1.msra.mxu0 %v57
    %7370 = vmatprep.subr.mxu0 0.0
    %7371 = vmatpush1.msra.mxu0 %v56
    %7372 = vmatprep.subr.mxu0 0.0
    %7373 = vmatpush2.msra.mxu0 0.0
    %7374 = vmatprep.subr.mxu0 0.0
    %7375 = vmatpush2.msra.mxu0 0.0
    %7376 = vmatprep.subr.mxu0 0.0
    %7377 = vmatpush2.msra.mxu0 0.0
    %7378 = vmatprep.subr.mxu0 0.0
    %7379 = vmatpush2.msra.mxu0 0.0
    %7380 = vmatprep.subr.mxu0 0.0
    %7381 = vmatpush2.msra.mxu0 0.0
    %7382 = vmatprep.subr.mxu0 0.0
    %7383 = vmatpush2.msra.mxu0 0.0
    %7384 = vmatprep.subr.mxu0 0.0
    %7385 = vmatpush2.msra.mxu0 0.0
    %7386 = vmatprep.subr.mxu0 0.0
    %7387 = vmatpush2.msra.mxu0 0.0
    %7388 = vmatprep.subr.mxu0 0.0
    %7389 = vmatpush2.msra.mxu0 0.0
    %7390 = vmatprep.subr.mxu0 0.0
    %7391 = vmatpush2.msra.mxu0 0.0
    %7392 = vmatprep.subr.mxu0 0.0
    %7393 = vmatpush2.msra.mxu0 0.0
    %7394 = vmatprep.subr.mxu0 0.0
    %7395 = vmatpush2.msra.mxu0 0.0
    %7396 = vmatprep.subr.mxu0 0.0
    %7397 = vmatpush2.msra.mxu0 0.0
    %7398 = vmatprep.subr.mxu0 0.0
    %7399 = vmatpush2.msra.mxu0 0.0
    %7400 = vmatprep.subr.mxu0 0.0
    %7401 = vmatpush2.msra.mxu0 0.0
    %7402 = vmatprep.subr.mxu0 0.0
    %7403 = vmatpush2.msra.mxu0 0.0
    %7404 = vmatprep.mubr.f32.mxu0 0.0
    %7405 = vmatmul.mubr.f32.gmra.mxu0 %v7338
    %v7406 = vpop.f32.mrf.mxu0
    %v7407 = vadd.f32 %v91, %v7406
    %v7408 = vpop.f32.mrf.mxu0
    %7409 = vdwg.mxu0
    %v7410 = vmax.f32 %v7407, 0.0
    %v7412 = vsel %vm201, %v7410, 0
    %7414 = vmatprep.subr.mxu0 0.0
    %7415 = vmatpush1.msra.mxu0 0.0
    %7416 = vmatprep.subr.mxu0 0.0
    %7417 = vmatpush1.msra.mxu0 0.0
    %7418 = vmatprep.subr.mxu0 0.0
    %7419 = vmatpush1.msra.mxu0 0.0
    %7420 = vmatprep.subr.mxu0 0.0
    %7421 = vmatpush1.msra.mxu0 0.0
    %7422 = vmatprep.subr.mxu0 0.0
    %7423 = vmatpush1.msra.mxu0 0.0
    %7424 = vmatprep.subr.mxu0 0.0
    %7425 = vmatpush1.msra.mxu0 0.0
    %7426 = vmatprep.subr.mxu0 0.0
    %7427 = vmatpush1.msra.mxu0 0.0
    %7428 = vmatprep.subr.mxu0 0.0
    %7429 = vmatpush1.msra.mxu0 0.0
    %7430 = vmatprep.subr.mxu0 0.0
    %7431 = vmatpush1.msra.mxu0 0.0
    %7432 = vmatprep.subr.mxu0 0.0
    %7433 = vmatpush1.msra.mxu0 0.0
    %7434 = vmatprep.subr.mxu0 0.0
    %7435 = vmatpush1.msra.mxu0 0.0
    %7436 = vmatprep.subr.mxu0 0.0
    %7437 = vmatpush1.msra.mxu0 0.0
    %7438 = vmatprep.subr.mxu0 %v79
    %7439 = vmatpush1.msra.mxu0 %v78
    %7440 = vmatprep.subr.mxu0 %v75
    %7441 = vmatpush1.msra.mxu0 %v74
    %7442 = vmatprep.subr.mxu0 %v71
    %7443 = vmatpush1.msra.mxu0 %v70
    %7444 = vmatprep.subr.mxu0 %v67
    %7445 = vmatpush1.msra.mxu0 %v66
    %7446 = vmatprep.subr.mxu0 0.0
    %7447 = vmatpush2.msra.mxu0 0.0
    %7448 = vmatprep.subr.mxu0 0.0
    %7449 = vmatpush2.msra.mxu0 0.0
    %7450 = vmatprep.subr.mxu0 0.0
    %7451 = vmatpush2.msra.mxu0 0.0
    %7452 = vmatprep.subr.mxu0 0.0
    %7453 = vmatpush2.msra.mxu0 0.0
    %7454 = vmatprep.subr.mxu0 0.0
    %7455 = vmatpush2.msra.mxu0 0.0
    %7456 = vmatprep.subr.mxu0 0.0
    %7457 = vmatpush2.msra.mxu0 0.0
    %7458 = vmatprep.subr.mxu0 0.0
    %7459 = vmatpush2.msra.mxu0 0.0
    %7460 = vmatprep.subr.mxu0 0.0
    %7461 = vmatpush2.msra.mxu0 0.0
    %7462 = vmatprep.subr.mxu0 0.0
    %7463 = vmatpush2.msra.mxu0 0.0
    %7464 = vmatprep.subr.mxu0 0.0
    %7465 = vmatpush2.msra.mxu0 0.0
    %7466 = vmatprep.subr.mxu0 0.0
    %7467 = vmatpush2.msra.mxu0 0.0
    %7468 = vmatprep.subr.mxu0 0.0
    %7469 = vmatpush2.msra.mxu0 0.0
    %7470 = vmatprep.subr.mxu0 0.0
    %7471 = vmatpush2.msra.mxu0 0.0
    %7472 = vmatprep.subr.mxu0 0.0
    %7473 = vmatpush2.msra.mxu0 0.0
    %7474 = vmatprep.subr.mxu0 0.0
    %7475 = vmatpush2.msra.mxu0 0.0
    %7476 = vmatprep.subr.mxu0 0.0
    %7477 = vmatpush2.msra.mxu0 0.0
    %7478 = vmatprep.mubr.f32.mxu0 0.0
    %7479 = vmatmul.mubr.f32.gmra.mxu0 %v7412
    %v7480 = vpop.f32.mrf.mxu0
    %v7481 = vadd.f32 %v96, %v7480
    %v7482 = vpop.f32.mrf.mxu0
    %v7483 = vadd.f32 %v100, %v7482
    %7484 = vdwg.mxu0
    %7485 = vmatprep.subr.mxu0 0.0
    %7486 = vmatpush1.msra.mxu0 0.0
    %7487 = vmatprep.subr.mxu0 0.0
    %7488 = vmatpush1.msra.mxu0 0.0
    %7489 = vmatprep.subr.mxu0 0.0
    %7490 = vmatpush1.msra.mxu0 0.0
    %7491 = vmatprep.subr.mxu0 0.0
    %7492 = vmatpush1.msra.mxu0 0.0
    %7493 = vmatprep.subr.mxu0 0.0
    %7494 = vmatpush1.msra.mxu0 0.0
    %7495 = vmatprep.subr.mxu0 0.0
    %7496 = vmatpush1.msra.mxu0 0.0
    %7497 = vmatprep.subr.mxu0 0.0
    %7498 = vmatpush1.msra.mxu0 0.0
    %7499 = vmatprep.subr.mxu0 0.0
    %7500 = vmatpush1.msra.mxu0 0.0
    %7501 = vmatprep.subr.mxu0 0.0
    %7502 = vmatpush1.msra.mxu0 0.0
    %7503 = vmatprep.subr.mxu0 0.0
    %7504 = vmatpush1.msra.mxu0 0.0
    %7505 = vmatprep.subr.mxu0 0.0
    %7506 = vmatpush1.msra.mxu0 0.0
    %7507 = vmatprep.subr.mxu0 0.0
    %7508 = vmatpush1.msra.mxu0 0.0
    %7509 = vmatprep.subr.mxu0 %v81
    %7510 = vmatpush1.msra.mxu0 %v80
    %7511 = vmatprep.subr.mxu0 %v77
    %7512 = vmatpush1.msra.mxu0 %v76
    %7513 = vmatprep.subr.mxu0 %v73
    %7514 = vmatpush1.msra.mxu0 %v72
    %7515 = vmatprep.subr.mxu0 %v69
    %7516 = vmatpush1.msra.mxu0 %v68
    %7517 = vmatprep.subr.mxu0 0.0
    %7518 = vmatpush2.msra.mxu0 0.0
    %7519 = vmatprep.subr.mxu0 0.0
    %7520 = vmatpush2.msra.mxu0 0.0
    %7521 = vmatprep.subr.mxu0 0.0
    %7522 = vmatpush2.msra.mxu0 0.0
    %7523 = vmatprep.subr.mxu0 0.0
    %7524 = vmatpush2.msra.mxu0 0.0
    %7525 = vmatprep.subr.mxu0 0.0
    %7526 = vmatpush2.msra.mxu0 0.0
    %7527 = vmatprep.subr.mxu0 0.0
    %7528 = vmatpush2.msra.mxu0 0.0
    %7529 = vmatprep.subr.mxu0 0.0
    %7530 = vmatpush2.msra.mxu0 0.0
    %7531 = vmatprep.subr.mxu0 0.0
    %7532 = vmatpush2.msra.mxu0 0.0
    %7533 = vmatprep.subr.mxu0 0.0
    %7534 = vmatpush2.msra.mxu0 0.0
    %7535 = vmatprep.subr.mxu0 0.0
    %7536 = vmatpush2.msra.mxu0 0.0
    %7537 = vmatprep.subr.mxu0 0.0
    %7538 = vmatpush2.msra.mxu0 0.0
    %7539 = vmatprep.subr.mxu0 0.0
    %7540 = vmatpush2.msra.mxu0 0.0
    %7541 = vmatprep.subr.mxu0 0.0
    %7542 = vmatpush2.msra.mxu0 0.0
    %7543 = vmatprep.subr.mxu0 0.0
    %7544 = vmatpush2.msra.mxu0 0.0
    %7545 = vmatprep.subr.mxu0 0.0
    %7546 = vmatpush2.msra.mxu0 0.0
    %7547 = vmatprep.subr.mxu0 0.0
    %7548 = vmatpush2.msra.mxu0 0.0
    %7549 = vmatprep.mubr.f32.mxu0 0.0
    %7550 = vmatmul.mubr.f32.gmra.mxu0 %v7412
    %v7551 = vpop.f32.mrf.mxu0
    %v7552 = vadd.f32 %v104, %v7551
    %v7553 = vpop.f32.mrf.mxu0
    %v7554 = vadd.f32 %v108, %v7553
    %7555 = vdwg.mxu0
    %v7556 = vtanh.pop %v7481
    %v7557 = vtanh.pop %v7483
    %v7558 = vtanh.pop %v7552
    %v7559 = vtanh.pop %v7554
    %v7560 = vmul.f32 %v7556, %v6934
    %v7561 = vmul.f32 %v7557, %v6942
    %v7562 = vmul.f32 %v7558, %v6941
    %v7563 = vmul.f32 %v7559, %v6943
    %v7564 = vmul.f32 %v7265, -0.001
    %v7565 = vmul.f32 %v7564, %v6631
    %v7566 = vadd.f32 %v7565, %v7560
    %v7567 = vadd.f32 %v7566, %v7561
    %v7568 = vadd.f32 %v7567, %v7562
    %v7569 = vadd.f32 %v7568, %v7563
    %v7570 = vsub.f32 %v6957, %v7263
    %v7571 = vadd.f32 %v7570, %v7569
    %v7572 = vadd.f32 %v6626, %v7571
    %7573 = vmatprep.subr.mxu0 0.0
    %7574 = vmatpush1.msra.mxu0 %v54
    %7575 = vmatprep.subr.mxu0 0.0
    %7576 = vmatpush1.msra.mxu0 %v53
    %7577 = vmatprep.subr.mxu0 0.0
    %7578 = vmatpush1.msra.mxu0 %v52
    %7579 = vmatprep.subr.mxu0 0.0
    %7580 = vmatpush1.msra.mxu0 %v51
    %7581 = vmatprep.subr.mxu0 0.0
    %7582 = vmatpush1.msra.mxu0 %v50
    %7583 = vmatprep.subr.mxu0 0.0
    %7584 = vmatpush1.msra.mxu0 %v49
    %7585 = vmatprep.subr.mxu0 0.0
    %7586 = vmatpush1.msra.mxu0 %v48
    %7587 = vmatprep.subr.mxu0 0.0
    %7588 = vmatpush1.msra.mxu0 %v47
    %7589 = vmatprep.subr.mxu0 0.0
    %7590 = vmatpush1.msra.mxu0 %v46
    %7591 = vmatprep.subr.mxu0 0.0
    %7592 = vmatpush1.msra.mxu0 %v45
    %7593 = vmatprep.subr.mxu0 0.0
    %7594 = vmatpush1.msra.mxu0 %v44
    %7595 = vmatprep.subr.mxu0 0.0
    %7596 = vmatpush1.msra.mxu0 %v43
    %7597 = vmatprep.subr.mxu0 0.0
    %7598 = vmatpush1.msra.mxu0 %v42
    %7599 = vmatprep.subr.mxu0 0.0
    %7600 = vmatpush1.msra.mxu0 %v41
    %7601 = vmatprep.subr.mxu0 0.0
    %7602 = vmatpush1.msra.mxu0 %v40
    %7603 = vmatprep.subr.mxu0 0.0
    %7604 = vmatpush1.msra.mxu0 %v39
    %7605 = vmatprep.subr.mxu0 0.0
    %7606 = vmatpush2.msra.mxu0 0.0
    %7607 = vmatprep.subr.mxu0 0.0
    %7608 = vmatpush2.msra.mxu0 0.0
    %7609 = vmatprep.subr.mxu0 0.0
    %7610 = vmatpush2.msra.mxu0 0.0
    %7611 = vmatprep.subr.mxu0 0.0
    %7612 = vmatpush2.msra.mxu0 0.0
    %7613 = vmatprep.subr.mxu0 0.0
    %7614 = vmatpush2.msra.mxu0 0.0
    %7615 = vmatprep.subr.mxu0 0.0
    %7616 = vmatpush2.msra.mxu0 0.0
    %7617 = vmatprep.subr.mxu0 0.0
    %7618 = vmatpush2.msra.mxu0 0.0
    %7619 = vmatprep.subr.mxu0 0.0
    %7620 = vmatpush2.msra.mxu0 0.0
    %7621 = vmatprep.subr.mxu0 0.0
    %7622 = vmatpush2.msra.mxu0 0.0
    %7623 = vmatprep.subr.mxu0 0.0
    %7624 = vmatpush2.msra.mxu0 0.0
    %7625 = vmatprep.subr.mxu0 0.0
    %7626 = vmatpush2.msra.mxu0 0.0
    %7627 = vmatprep.subr.mxu0 0.0
    %7628 = vmatpush2.msra.mxu0 0.0
    %7629 = vmatprep.subr.mxu0 0.0
    %7630 = vmatpush2.msra.mxu0 0.0
    %7631 = vmatprep.subr.mxu0 0.0
    %7632 = vmatpush2.msra.mxu0 0.0
    %7633 = vmatprep.subr.mxu0 0.0
    %7634 = vmatpush2.msra.mxu0 0.0
    %7635 = vmatprep.subr.mxu0 0.0
    %7636 = vmatpush2.msra.mxu0 0.0
    %7637 = vmatprep.mubr.f32.mxu0 0.0
    %7638 = vmatmul.mubr.f32.gmra.mxu0 %v7572
    %v7639 = vpop.f32.mrf.mxu0
    %v7640 = vadd.f32 %v87, %v7639
    %v7641 = vpop.f32.mrf.mxu0
    %7642 = vdwg.mxu0
    %v7643 = vmax.f32 %v7640, 0.0
    %v7645 = vsel %vm201, %v7643, 0
    %7647 = vmatprep.subr.mxu0 0.0
    %7648 = vmatpush1.msra.mxu0 0.0
    %7649 = vmatprep.subr.mxu0 0.0
    %7650 = vmatpush1.msra.mxu0 0.0
    %7651 = vmatprep.subr.mxu0 0.0
    %7652 = vmatpush1.msra.mxu0 0.0
    %7653 = vmatprep.subr.mxu0 0.0
    %7654 = vmatpush1.msra.mxu0 0.0
    %7655 = vmatprep.subr.mxu0 0.0
    %7656 = vmatpush1.msra.mxu0 0.0
    %7657 = vmatprep.subr.mxu0 0.0
    %7658 = vmatpush1.msra.mxu0 0.0
    %7659 = vmatprep.subr.mxu0 0.0
    %7660 = vmatpush1.msra.mxu0 0.0
    %7661 = vmatprep.subr.mxu0 0.0
    %7662 = vmatpush1.msra.mxu0 0.0
    %7663 = vmatprep.subr.mxu0 0.0
    %7664 = vmatpush1.msra.mxu0 0.0
    %7665 = vmatprep.subr.mxu0 0.0
    %7666 = vmatpush1.msra.mxu0 0.0
    %7667 = vmatprep.subr.mxu0 0.0
    %7668 = vmatpush1.msra.mxu0 0.0
    %7669 = vmatprep.subr.mxu0 0.0
    %7670 = vmatpush1.msra.mxu0 0.0
    %7671 = vmatprep.subr.mxu0 0.0
    %7672 = vmatpush1.msra.mxu0 %v59
    %7673 = vmatprep.subr.mxu0 0.0
    %7674 = vmatpush1.msra.mxu0 %v58
    %7675 = vmatprep.subr.mxu0 0.0
    %7676 = vmatpush1.msra.mxu0 %v57
    %7677 = vmatprep.subr.mxu0 0.0
    %7678 = vmatpush1.msra.mxu0 %v56
    %7679 = vmatprep.subr.mxu0 0.0
    %7680 = vmatpush2.msra.mxu0 0.0
    %7681 = vmatprep.subr.mxu0 0.0
    %7682 = vmatpush2.msra.mxu0 0.0
    %7683 = vmatprep.subr.mxu0 0.0
    %7684 = vmatpush2.msra.mxu0 0.0
    %7685 = vmatprep.subr.mxu0 0.0
    %7686 = vmatpush2.msra.mxu0 0.0
    %7687 = vmatprep.subr.mxu0 0.0
    %7688 = vmatpush2.msra.mxu0 0.0
    %7689 = vmatprep.subr.mxu0 0.0
    %7690 = vmatpush2.msra.mxu0 0.0
    %7691 = vmatprep.subr.mxu0 0.0
    %7692 = vmatpush2.msra.mxu0 0.0
    %7693 = vmatprep.subr.mxu0 0.0
    %7694 = vmatpush2.msra.mxu0 0.0
    %7695 = vmatprep.subr.mxu0 0.0
    %7696 = vmatpush2.msra.mxu0 0.0
    %7697 = vmatprep.subr.mxu0 0.0
    %7698 = vmatpush2.msra.mxu0 0.0
    %7699 = vmatprep.subr.mxu0 0.0
    %7700 = vmatpush2.msra.mxu0 0.0
    %7701 = vmatprep.subr.mxu0 0.0
    %7702 = vmatpush2.msra.mxu0 0.0
    %7703 = vmatprep.subr.mxu0 0.0
    %7704 = vmatpush2.msra.mxu0 0.0
    %7705 = vmatprep.subr.mxu0 0.0
    %7706 = vmatpush2.msra.mxu0 0.0
    %7707 = vmatprep.subr.mxu0 0.0
    %7708 = vmatpush2.msra.mxu0 0.0
    %7709 = vmatprep.subr.mxu0 0.0
    %7710 = vmatpush2.msra.mxu0 0.0
    %7711 = vmatprep.mubr.f32.mxu0 0.0
    %7712 = vmatmul.mubr.f32.gmra.mxu0 %v7645
    %v7713 = vpop.f32.mrf.mxu0
    %v7714 = vadd.f32 %v91, %v7713
    %v7715 = vpop.f32.mrf.mxu0
    %7716 = vdwg.mxu0
    %v7717 = vmax.f32 %v7714, 0.0
    %v7719 = vsel %vm201, %v7717, 0
    %7721 = vmatprep.subr.mxu0 0.0
    %7722 = vmatpush1.msra.mxu0 0.0
    %7723 = vmatprep.subr.mxu0 0.0
    %7724 = vmatpush1.msra.mxu0 0.0
    %7725 = vmatprep.subr.mxu0 0.0
    %7726 = vmatpush1.msra.mxu0 0.0
    %7727 = vmatprep.subr.mxu0 0.0
    %7728 = vmatpush1.msra.mxu0 0.0
    %7729 = vmatprep.subr.mxu0 0.0
    %7730 = vmatpush1.msra.mxu0 0.0
    %7731 = vmatprep.subr.mxu0 0.0
    %7732 = vmatpush1.msra.mxu0 0.0
    %7733 = vmatprep.subr.mxu0 0.0
    %7734 = vmatpush1.msra.mxu0 0.0
    %7735 = vmatprep.subr.mxu0 0.0
    %7736 = vmatpush1.msra.mxu0 0.0
    %7737 = vmatprep.subr.mxu0 0.0
    %7738 = vmatpush1.msra.mxu0 0.0
    %7739 = vmatprep.subr.mxu0 0.0
    %7740 = vmatpush1.msra.mxu0 0.0
    %7741 = vmatprep.subr.mxu0 0.0
    %7742 = vmatpush1.msra.mxu0 0.0
    %7743 = vmatprep.subr.mxu0 0.0
    %7744 = vmatpush1.msra.mxu0 0.0
    %7745 = vmatprep.subr.mxu0 %v79
    %7746 = vmatpush1.msra.mxu0 %v78
    %7747 = vmatprep.subr.mxu0 %v75
    %7748 = vmatpush1.msra.mxu0 %v74
    %7749 = vmatprep.subr.mxu0 %v71
    %7750 = vmatpush1.msra.mxu0 %v70
    %7751 = vmatprep.subr.mxu0 %v67
    %7752 = vmatpush1.msra.mxu0 %v66
    %7753 = vmatprep.subr.mxu0 0.0
    %7754 = vmatpush2.msra.mxu0 0.0
    %7755 = vmatprep.subr.mxu0 0.0
    %7756 = vmatpush2.msra.mxu0 0.0
    %7757 = vmatprep.subr.mxu0 0.0
    %7758 = vmatpush2.msra.mxu0 0.0
    %7759 = vmatprep.subr.mxu0 0.0
    %7760 = vmatpush2.msra.mxu0 0.0
    %7761 = vmatprep.subr.mxu0 0.0
    %7762 = vmatpush2.msra.mxu0 0.0
    %7763 = vmatprep.subr.mxu0 0.0
    %7764 = vmatpush2.msra.mxu0 0.0
    %7765 = vmatprep.subr.mxu0 0.0
    %7766 = vmatpush2.msra.mxu0 0.0
    %7767 = vmatprep.subr.mxu0 0.0
    %7768 = vmatpush2.msra.mxu0 0.0
    %7769 = vmatprep.subr.mxu0 0.0
    %7770 = vmatpush2.msra.mxu0 0.0
    %7771 = vmatprep.subr.mxu0 0.0
    %7772 = vmatpush2.msra.mxu0 0.0
    %7773 = vmatprep.subr.mxu0 0.0
    %7774 = vmatpush2.msra.mxu0 0.0
    %7775 = vmatprep.subr.mxu0 0.0
    %7776 = vmatpush2.msra.mxu0 0.0
    %7777 = vmatprep.subr.mxu0 0.0
    %7778 = vmatpush2.msra.mxu0 0.0
    %7779 = vmatprep.subr.mxu0 0.0
    %7780 = vmatpush2.msra.mxu0 0.0
    %7781 = vmatprep.subr.mxu0 0.0
    %7782 = vmatpush2.msra.mxu0 0.0
    %7783 = vmatprep.subr.mxu0 0.0
    %7784 = vmatpush2.msra.mxu0 0.0
    %7785 = vmatprep.mubr.f32.mxu0 0.0
    %7786 = vmatmul.mubr.f32.gmra.mxu0 %v7719
    %v7787 = vpop.f32.mrf.mxu0
    %v7788 = vadd.f32 %v96, %v7787
    %v7789 = vpop.f32.mrf.mxu0
    %v7790 = vadd.f32 %v100, %v7789
    %7791 = vdwg.mxu0
    %7792 = vmatprep.subr.mxu0 0.0
    %7793 = vmatpush1.msra.mxu0 0.0
    %7794 = vmatprep.subr.mxu0 0.0
    %7795 = vmatpush1.msra.mxu0 0.0
    %7796 = vmatprep.subr.mxu0 0.0
    %7797 = vmatpush1.msra.mxu0 0.0
    %7798 = vmatprep.subr.mxu0 0.0
    %7799 = vmatpush1.msra.mxu0 0.0
    %7800 = vmatprep.subr.mxu0 0.0
    %7801 = vmatpush1.msra.mxu0 0.0
    %7802 = vmatprep.subr.mxu0 0.0
    %7803 = vmatpush1.msra.mxu0 0.0
    %7804 = vmatprep.subr.mxu0 0.0
    %7805 = vmatpush1.msra.mxu0 0.0
    %7806 = vmatprep.subr.mxu0 0.0
    %7807 = vmatpush1.msra.mxu0 0.0
    %7808 = vmatprep.subr.mxu0 0.0
    %7809 = vmatpush1.msra.mxu0 0.0
    %7810 = vmatprep.subr.mxu0 0.0
    %7811 = vmatpush1.msra.mxu0 0.0
    %7812 = vmatprep.subr.mxu0 0.0
    %7813 = vmatpush1.msra.mxu0 0.0
    %7814 = vmatprep.subr.mxu0 0.0
    %7815 = vmatpush1.msra.mxu0 0.0
    %7816 = vmatprep.subr.mxu0 %v81
    %7817 = vmatpush1.msra.mxu0 %v80
    %7818 = vmatprep.subr.mxu0 %v77
    %7819 = vmatpush1.msra.mxu0 %v76
    %7820 = vmatprep.subr.mxu0 %v73
    %7821 = vmatpush1.msra.mxu0 %v72
    %7822 = vmatprep.subr.mxu0 %v69
    %7823 = vmatpush1.msra.mxu0 %v68
    %7824 = vmatprep.subr.mxu0 0.0
    %7825 = vmatpush2.msra.mxu0 0.0
    %7826 = vmatprep.subr.mxu0 0.0
    %7827 = vmatpush2.msra.mxu0 0.0
    %7828 = vmatprep.subr.mxu0 0.0
    %7829 = vmatpush2.msra.mxu0 0.0
    %7830 = vmatprep.subr.mxu0 0.0
    %7831 = vmatpush2.msra.mxu0 0.0
    %7832 = vmatprep.subr.mxu0 0.0
    %7833 = vmatpush2.msra.mxu0 0.0
    %7834 = vmatprep.subr.mxu0 0.0
    %7835 = vmatpush2.msra.mxu0 0.0
    %7836 = vmatprep.subr.mxu0 0.0
    %7837 = vmatpush2.msra.mxu0 0.0
    %7838 = vmatprep.subr.mxu0 0.0
    %7839 = vmatpush2.msra.mxu0 0.0
    %7840 = vmatprep.subr.mxu0 0.0
    %7841 = vmatpush2.msra.mxu0 0.0
    %7842 = vmatprep.subr.mxu0 0.0
    %7843 = vmatpush2.msra.mxu0 0.0
    %7844 = vmatprep.subr.mxu0 0.0
    %7845 = vmatpush2.msra.mxu0 0.0
    %7846 = vmatprep.subr.mxu0 0.0
    %7847 = vmatpush2.msra.mxu0 0.0
    %7848 = vmatprep.subr.mxu0 0.0
    %7849 = vmatpush2.msra.mxu0 0.0
    %7850 = vmatprep.subr.mxu0 0.0
    %7851 = vmatpush2.msra.mxu0 0.0
    %7852 = vmatprep.subr.mxu0 0.0
    %7853 = vmatpush2.msra.mxu0 0.0
    %7854 = vmatprep.subr.mxu0 0.0
    %7855 = vmatpush2.msra.mxu0 0.0
    %7856 = vmatprep.mubr.f32.mxu0 0.0
    %7857 = vmatmul.mubr.f32.gmra.mxu0 %v7719
    %v7858 = vpop.f32.mrf.mxu0
    %v7859 = vadd.f32 %v104, %v7858
    %v7860 = vpop.f32.mrf.mxu0
    %v7861 = vadd.f32 %v108, %v7860
    %7862 = vdwg.mxu0
    %v7863 = vtanh.pop %v7788
    %v7864 = vtanh.pop %v7790
    %v7865 = vtanh.pop %v7859
    %v7866 = vtanh.pop %v7861
    %v7867 = vmul.f32 %v7863, %v6934
    %v7868 = vmul.f32 %v7864, %v6942
    %v7869 = vmul.f32 %v7865, %v6941
    %v7870 = vmul.f32 %v7866, %v6943
    %v7871 = vmul.f32 %v7572, -0.001
    %v7872 = vmul.f32 %v7871, %v6631
    %v7873 = vadd.f32 %v7872, %v7867
    %v7874 = vadd.f32 %v7873, %v7868
    %v7875 = vadd.f32 %v7874, %v7869
    %v7876 = vadd.f32 %v7875, %v7870
    %v7877 = vadd.f32 %v7263, %v7569
    %v7878 = vmul.f32 %v7877, 3.0
    %v7879 = vadd.f32 %v6957, %v7878
    %v7880 = vadd.f32 %v7879, %v7876
    %v7881 = vmul.f32 %v7880, 0.125
    %v7882 = vadd.f32 %v6626, %v7881
    %s7883 = scalar_lea.vmem [#allocation5], 12
    %7884 = vst [vmem:[%s7883] sm:$0x3] %v7882
    %s7885 = scalar_lea.vmem %s0, 60
    %v7886 = vld [vmem:[%s7885] sm:$0xff]
    %v7887 = vld [vmem:[%s7885 + $0x8] sm:$0x3]
    %7888 = vmatprep.subr.mxu0 0.0
    %7889 = vmatpush1.msra.mxu0 %v54
    %7890 = vmatprep.subr.mxu0 0.0
    %7891 = vmatpush1.msra.mxu0 %v53
    %7892 = vmatprep.subr.mxu0 0.0
    %7893 = vmatpush1.msra.mxu0 %v52
    %7894 = vmatprep.subr.mxu0 0.0
    %7895 = vmatpush1.msra.mxu0 %v51
    %7896 = vmatprep.subr.mxu0 0.0
    %7897 = vmatpush1.msra.mxu0 %v50
    %7898 = vmatprep.subr.mxu0 0.0
    %7899 = vmatpush1.msra.mxu0 %v49
    %7900 = vmatprep.subr.mxu0 0.0
    %7901 = vmatpush1.msra.mxu0 %v48
    %7902 = vmatprep.subr.mxu0 0.0
    %7903 = vmatpush1.msra.mxu0 %v47
    %7904 = vmatprep.subr.mxu0 0.0
    %7905 = vmatpush1.msra.mxu0 %v46
    %7906 = vmatprep.subr.mxu0 0.0
    %7907 = vmatpush1.msra.mxu0 %v45
    %7908 = vmatprep.subr.mxu0 0.0
    %7909 = vmatpush1.msra.mxu0 %v44
    %7910 = vmatprep.subr.mxu0 0.0
    %7911 = vmatpush1.msra.mxu0 %v43
    %7912 = vmatprep.subr.mxu0 0.0
    %7913 = vmatpush1.msra.mxu0 %v42
    %7914 = vmatprep.subr.mxu0 0.0
    %7915 = vmatpush1.msra.mxu0 %v41
    %7916 = vmatprep.subr.mxu0 0.0
    %7917 = vmatpush1.msra.mxu0 %v40
    %7918 = vmatprep.subr.mxu0 0.0
    %7919 = vmatpush1.msra.mxu0 %v39
    %7920 = vmatprep.subr.mxu0 0.0
    %7921 = vmatpush2.msra.mxu0 0.0
    %7922 = vmatprep.subr.mxu0 0.0
    %7923 = vmatpush2.msra.mxu0 0.0
    %7924 = vmatprep.subr.mxu0 0.0
    %7925 = vmatpush2.msra.mxu0 0.0
    %7926 = vmatprep.subr.mxu0 0.0
    %7927 = vmatpush2.msra.mxu0 0.0
    %7928 = vmatprep.subr.mxu0 0.0
    %7929 = vmatpush2.msra.mxu0 0.0
    %7930 = vmatprep.subr.mxu0 0.0
    %7931 = vmatpush2.msra.mxu0 0.0
    %7932 = vmatprep.subr.mxu0 0.0
    %7933 = vmatpush2.msra.mxu0 0.0
    %7934 = vmatprep.subr.mxu0 0.0
    %7935 = vmatpush2.msra.mxu0 0.0
    %7936 = vmatprep.subr.mxu0 0.0
    %7937 = vmatpush2.msra.mxu0 0.0
    %7938 = vmatprep.subr.mxu0 0.0
    %7939 = vmatpush2.msra.mxu0 0.0
    %7940 = vmatprep.subr.mxu0 0.0
    %7941 = vmatpush2.msra.mxu0 0.0
    %7942 = vmatprep.subr.mxu0 0.0
    %7943 = vmatpush2.msra.mxu0 0.0
    %7944 = vmatprep.subr.mxu0 0.0
    %7945 = vmatpush2.msra.mxu0 0.0
    %7946 = vmatprep.subr.mxu0 0.0
    %7947 = vmatpush2.msra.mxu0 0.0
    %7948 = vmatprep.subr.mxu0 0.0
    %7949 = vmatpush2.msra.mxu0 0.0
    %7950 = vmatprep.subr.mxu0 0.0
    %7951 = vmatpush2.msra.mxu0 0.0
    %7952 = vmatprep.mubr.f32.mxu0 0.0
    %7953 = vmatmul.mubr.f32.gmra.mxu0 %v7882
    %v7954 = vpop.f32.mrf.mxu0
    %v7955 = vadd.f32 %v87, %v7954
    %v7956 = vpop.f32.mrf.mxu0
    %7957 = vdwg.mxu0
    %v7958 = vmax.f32 %v7955, 0.0
    %v7960 = vsel %vm201, %v7958, 0
    %7962 = vmatprep.subr.mxu0 0.0
    %7963 = vmatpush1.msra.mxu0 0.0
    %7964 = vmatprep.subr.mxu0 0.0
    %7965 = vmatpush1.msra.mxu0 0.0
    %7966 = vmatprep.subr.mxu0 0.0
    %7967 = vmatpush1.msra.mxu0 0.0
    %7968 = vmatprep.subr.mxu0 0.0
    %7969 = vmatpush1.msra.mxu0 0.0
    %7970 = vmatprep.subr.mxu0 0.0
    %7971 = vmatpush1.msra.mxu0 0.0
    %7972 = vmatprep.subr.mxu0 0.0
    %7973 = vmatpush1.msra.mxu0 0.0
    %7974 = vmatprep.subr.mxu0 0.0
    %7975 = vmatpush1.msra.mxu0 0.0
    %7976 = vmatprep.subr.mxu0 0.0
    %7977 = vmatpush1.msra.mxu0 0.0
    %7978 = vmatprep.subr.mxu0 0.0
    %7979 = vmatpush1.msra.mxu0 0.0
    %7980 = vmatprep.subr.mxu0 0.0
    %7981 = vmatpush1.msra.mxu0 0.0
    %7982 = vmatprep.subr.mxu0 0.0
    %7983 = vmatpush1.msra.mxu0 0.0
    %7984 = vmatprep.subr.mxu0 0.0
    %7985 = vmatpush1.msra.mxu0 0.0
    %7986 = vmatprep.subr.mxu0 0.0
    %7987 = vmatpush1.msra.mxu0 %v59
    %7988 = vmatprep.subr.mxu0 0.0
    %7989 = vmatpush1.msra.mxu0 %v58
    %7990 = vmatprep.subr.mxu0 0.0
    %7991 = vmatpush1.msra.mxu0 %v57
    %7992 = vmatprep.subr.mxu0 0.0
    %7993 = vmatpush1.msra.mxu0 %v56
    %7994 = vmatprep.subr.mxu0 0.0
    %7995 = vmatpush2.msra.mxu0 0.0
    %7996 = vmatprep.subr.mxu0 0.0
    %7997 = vmatpush2.msra.mxu0 0.0
    %7998 = vmatprep.subr.mxu0 0.0
    %7999 = vmatpush2.msra.mxu0 0.0
    %8000 = vmatprep.subr.mxu0 0.0
    %8001 = vmatpush2.msra.mxu0 0.0
    %8002 = vmatprep.subr.mxu0 0.0
    %8003 = vmatpush2.msra.mxu0 0.0
    %8004 = vmatprep.subr.mxu0 0.0
    %8005 = vmatpush2.msra.mxu0 0.0
    %8006 = vmatprep.subr.mxu0 0.0
    %8007 = vmatpush2.msra.mxu0 0.0
    %8008 = vmatprep.subr.mxu0 0.0
    %8009 = vmatpush2.msra.mxu0 0.0
    %8010 = vmatprep.subr.mxu0 0.0
    %8011 = vmatpush2.msra.mxu0 0.0
    %8012 = vmatprep.subr.mxu0 0.0
    %8013 = vmatpush2.msra.mxu0 0.0
    %8014 = vmatprep.subr.mxu0 0.0
    %8015 = vmatpush2.msra.mxu0 0.0
    %8016 = vmatprep.subr.mxu0 0.0
    %8017 = vmatpush2.msra.mxu0 0.0
    %8018 = vmatprep.subr.mxu0 0.0
    %8019 = vmatpush2.msra.mxu0 0.0
    %8020 = vmatprep.subr.mxu0 0.0
    %8021 = vmatpush2.msra.mxu0 0.0
    %8022 = vmatprep.subr.mxu0 0.0
    %8023 = vmatpush2.msra.mxu0 0.0
    %8024 = vmatprep.subr.mxu0 0.0
    %8025 = vmatpush2.msra.mxu0 0.0
    %8026 = vmatprep.mubr.f32.mxu0 0.0
    %8027 = vmatmul.mubr.f32.gmra.mxu0 %v7960
    %v8028 = vpop.f32.mrf.mxu0
    %v8029 = vadd.f32 %v91, %v8028
    %v8030 = vpop.f32.mrf.mxu0
    %8031 = vdwg.mxu0
    %v8032 = vmax.f32 %v8029, 0.0
    %v8034 = vsel %vm201, %v8032, 0
    %8036 = vmatprep.subr.mxu0 0.0
    %8037 = vmatpush1.msra.mxu0 0.0
    %8038 = vmatprep.subr.mxu0 0.0
    %8039 = vmatpush1.msra.mxu0 0.0
    %8040 = vmatprep.subr.mxu0 0.0
    %8041 = vmatpush1.msra.mxu0 0.0
    %8042 = vmatprep.subr.mxu0 0.0
    %8043 = vmatpush1.msra.mxu0 0.0
    %8044 = vmatprep.subr.mxu0 0.0
    %8045 = vmatpush1.msra.mxu0 0.0
    %8046 = vmatprep.subr.mxu0 0.0
    %8047 = vmatpush1.msra.mxu0 0.0
    %8048 = vmatprep.subr.mxu0 0.0
    %8049 = vmatpush1.msra.mxu0 0.0
    %8050 = vmatprep.subr.mxu0 0.0
    %8051 = vmatpush1.msra.mxu0 0.0
    %8052 = vmatprep.subr.mxu0 0.0
    %8053 = vmatpush1.msra.mxu0 0.0
    %8054 = vmatprep.subr.mxu0 0.0
    %8055 = vmatpush1.msra.mxu0 0.0
    %8056 = vmatprep.subr.mxu0 0.0
    %8057 = vmatpush1.msra.mxu0 0.0
    %8058 = vmatprep.subr.mxu0 0.0
    %8059 = vmatpush1.msra.mxu0 0.0
    %8060 = vmatprep.subr.mxu0 %v79
    %8061 = vmatpush1.msra.mxu0 %v78
    %8062 = vmatprep.subr.mxu0 %v75
    %8063 = vmatpush1.msra.mxu0 %v74
    %8064 = vmatprep.subr.mxu0 %v71
    %8065 = vmatpush1.msra.mxu0 %v70
    %8066 = vmatprep.subr.mxu0 %v67
    %8067 = vmatpush1.msra.mxu0 %v66
    %8068 = vmatprep.subr.mxu0 0.0
    %8069 = vmatpush2.msra.mxu0 0.0
    %8070 = vmatprep.subr.mxu0 0.0
    %8071 = vmatpush2.msra.mxu0 0.0
    %8072 = vmatprep.subr.mxu0 0.0
    %8073 = vmatpush2.msra.mxu0 0.0
    %8074 = vmatprep.subr.mxu0 0.0
    %8075 = vmatpush2.msra.mxu0 0.0
    %8076 = vmatprep.subr.mxu0 0.0
    %8077 = vmatpush2.msra.mxu0 0.0
    %8078 = vmatprep.subr.mxu0 0.0
    %8079 = vmatpush2.msra.mxu0 0.0
    %8080 = vmatprep.subr.mxu0 0.0
    %8081 = vmatpush2.msra.mxu0 0.0
    %8082 = vmatprep.subr.mxu0 0.0
    %8083 = vmatpush2.msra.mxu0 0.0
    %8084 = vmatprep.subr.mxu0 0.0
    %8085 = vmatpush2.msra.mxu0 0.0
    %8086 = vmatprep.subr.mxu0 0.0
    %8087 = vmatpush2.msra.mxu0 0.0
    %8088 = vmatprep.subr.mxu0 0.0
    %8089 = vmatpush2.msra.mxu0 0.0
    %8090 = vmatprep.subr.mxu0 0.0
    %8091 = vmatpush2.msra.mxu0 0.0
    %8092 = vmatprep.subr.mxu0 0.0
    %8093 = vmatpush2.msra.mxu0 0.0
    %8094 = vmatprep.subr.mxu0 0.0
    %8095 = vmatpush2.msra.mxu0 0.0
    %8096 = vmatprep.subr.mxu0 0.0
    %8097 = vmatpush2.msra.mxu0 0.0
    %8098 = vmatprep.subr.mxu0 0.0
    %8099 = vmatpush2.msra.mxu0 0.0
    %8100 = vmatprep.mubr.f32.mxu0 0.0
    %8101 = vmatmul.mubr.f32.gmra.mxu0 %v8034
    %v8102 = vpop.f32.mrf.mxu0
    %v8103 = vadd.f32 %v96, %v8102
    %v8104 = vpop.f32.mrf.mxu0
    %v8105 = vadd.f32 %v100, %v8104
    %8106 = vdwg.mxu0
    %8107 = vmatprep.subr.mxu0 0.0
    %8108 = vmatpush1.msra.mxu0 0.0
    %8109 = vmatprep.subr.mxu0 0.0
    %8110 = vmatpush1.msra.mxu0 0.0
    %8111 = vmatprep.subr.mxu0 0.0
    %8112 = vmatpush1.msra.mxu0 0.0
    %8113 = vmatprep.subr.mxu0 0.0
    %8114 = vmatpush1.msra.mxu0 0.0
    %8115 = vmatprep.subr.mxu0 0.0
    %8116 = vmatpush1.msra.mxu0 0.0
    %8117 = vmatprep.subr.mxu0 0.0
    %8118 = vmatpush1.msra.mxu0 0.0
    %8119 = vmatprep.subr.mxu0 0.0
    %8120 = vmatpush1.msra.mxu0 0.0
    %8121 = vmatprep.subr.mxu0 0.0
    %8122 = vmatpush1.msra.mxu0 0.0
    %8123 = vmatprep.subr.mxu0 0.0
    %8124 = vmatpush1.msra.mxu0 0.0
    %8125 = vmatprep.subr.mxu0 0.0
    %8126 = vmatpush1.msra.mxu0 0.0
    %8127 = vmatprep.subr.mxu0 0.0
    %8128 = vmatpush1.msra.mxu0 0.0
    %8129 = vmatprep.subr.mxu0 0.0
    %8130 = vmatpush1.msra.mxu0 0.0
    %8131 = vmatprep.subr.mxu0 %v81
    %8132 = vmatpush1.msra.mxu0 %v80
    %8133 = vmatprep.subr.mxu0 %v77
    %8134 = vmatpush1.msra.mxu0 %v76
    %8135 = vmatprep.subr.mxu0 %v73
    %8136 = vmatpush1.msra.mxu0 %v72
    %8137 = vmatprep.subr.mxu0 %v69
    %8138 = vmatpush1.msra.mxu0 %v68
    %8139 = vmatprep.subr.mxu0 0.0
    %8140 = vmatpush2.msra.mxu0 0.0
    %8141 = vmatprep.subr.mxu0 0.0
    %8142 = vmatpush2.msra.mxu0 0.0
    %8143 = vmatprep.subr.mxu0 0.0
    %8144 = vmatpush2.msra.mxu0 0.0
    %8145 = vmatprep.subr.mxu0 0.0
    %8146 = vmatpush2.msra.mxu0 0.0
    %8147 = vmatprep.subr.mxu0 0.0
    %8148 = vmatpush2.msra.mxu0 0.0
    %8149 = vmatprep.subr.mxu0 0.0
    %8150 = vmatpush2.msra.mxu0 0.0
    %8151 = vmatprep.subr.mxu0 0.0
    %8152 = vmatpush2.msra.mxu0 0.0
    %8153 = vmatprep.subr.mxu0 0.0
    %8154 = vmatpush2.msra.mxu0 0.0
    %8155 = vmatprep.subr.mxu0 0.0
    %8156 = vmatpush2.msra.mxu0 0.0
    %8157 = vmatprep.subr.mxu0 0.0
    %8158 = vmatpush2.msra.mxu0 0.0
    %8159 = vmatprep.subr.mxu0 0.0
    %8160 = vmatpush2.msra.mxu0 0.0
    %8161 = vmatprep.subr.mxu0 0.0
    %8162 = vmatpush2.msra.mxu0 0.0
    %8163 = vmatprep.subr.mxu0 0.0
    %8164 = vmatpush2.msra.mxu0 0.0
    %8165 = vmatprep.subr.mxu0 0.0
    %8166 = vmatpush2.msra.mxu0 0.0
    %8167 = vmatprep.subr.mxu0 0.0
    %8168 = vmatpush2.msra.mxu0 0.0
    %8169 = vmatprep.subr.mxu0 0.0
    %8170 = vmatpush2.msra.mxu0 0.0
    %8171 = vmatprep.mubr.f32.mxu0 0.0
    %8172 = vmatmul.mubr.f32.gmra.mxu0 %v8034
    %v8173 = vpop.f32.mrf.mxu0
    %v8174 = vadd.f32 %v104, %v8173
    %v8175 = vpop.f32.mrf.mxu0
    %v8176 = vadd.f32 %v108, %v8175
    %8177 = vdwg.mxu0
    %v8178 = vtanh.pop %v8103
    %v8179 = vtanh.pop %v8105
    %v8180 = vtanh.pop %v8174
    %v8181 = vtanh.pop %v8176
    %v8183 = vcombine.high %v7886, %v7886
    %v8185 = vunpack.c.l.s4 1983009808
    %v8186 = vunpack.c.0.s8 %v8185
    %v8187 = vlaneseq
    %v8188 = vshrl.u32 %v8187, 7
    %v8189 = vsub.s32 %v8186, %v8188
    %v8190 = vrot.slane %v7886, %v8189
    %v8192 = vunpack.c.l.s4 1983009808
    %v8193 = vunpack.c.0.s8 %v8192
    %v8194 = vlaneseq
    %v8195 = vshrl.u32 %v8194, 7
    %v8196 = vsub.s32 %v8193, %v8195
    %v8197 = vrot.slane %v8183, %v8196
    %v8198 = vcombine.high %v8190, %v8190
    %v8199 = vcombine.high %v8197, %v8197
    %v8204 = vmul.f32 %v8178, %v8190
    %v8205 = vmul.f32 %v8179, %v8198
    %v8206 = vmul.f32 %v8180, %v8197
    %v8207 = vmul.f32 %v8181, %v8199
    %v8208 = vmul.f32 %v7882, -0.001
    %v8209 = vmul.f32 %v8208, %v7887
    %v8210 = vadd.f32 %v8209, %v8204
    %v8211 = vadd.f32 %v8210, %v8205
    %v8212 = vadd.f32 %v8211, %v8206
    %v8213 = vadd.f32 %v8212, %v8207
    %v8214 = vmul.f32 %v8213, 0.33333334
    %v8215 = vadd.f32 %v7882, %v8214
    %8216 = vmatprep.subr.mxu0 0.0
    %8217 = vmatpush1.msra.mxu0 %v54
    %8218 = vmatprep.subr.mxu0 0.0
    %8219 = vmatpush1.msra.mxu0 %v53
    %8220 = vmatprep.subr.mxu0 0.0
    %8221 = vmatpush1.msra.mxu0 %v52
    %8222 = vmatprep.subr.mxu0 0.0
    %8223 = vmatpush1.msra.mxu0 %v51
    %8224 = vmatprep.subr.mxu0 0.0
    %8225 = vmatpush1.msra.mxu0 %v50
    %8226 = vmatprep.subr.mxu0 0.0
    %8227 = vmatpush1.msra.mxu0 %v49
    %8228 = vmatprep.subr.mxu0 0.0
    %8229 = vmatpush1.msra.mxu0 %v48
    %8230 = vmatprep.subr.mxu0 0.0
    %8231 = vmatpush1.msra.mxu0 %v47
    %8232 = vmatprep.subr.mxu0 0.0
    %8233 = vmatpush1.msra.mxu0 %v46
    %8234 = vmatprep.subr.mxu0 0.0
    %8235 = vmatpush1.msra.mxu0 %v45
    %8236 = vmatprep.subr.mxu0 0.0
    %8237 = vmatpush1.msra.mxu0 %v44
    %8238 = vmatprep.subr.mxu0 0.0
    %8239 = vmatpush1.msra.mxu0 %v43
    %8240 = vmatprep.subr.mxu0 0.0
    %8241 = vmatpush1.msra.mxu0 %v42
    %8242 = vmatprep.subr.mxu0 0.0
    %8243 = vmatpush1.msra.mxu0 %v41
    %8244 = vmatprep.subr.mxu0 0.0
    %8245 = vmatpush1.msra.mxu0 %v40
    %8246 = vmatprep.subr.mxu0 0.0
    %8247 = vmatpush1.msra.mxu0 %v39
    %8248 = vmatprep.subr.mxu0 0.0
    %8249 = vmatpush2.msra.mxu0 0.0
    %8250 = vmatprep.subr.mxu0 0.0
    %8251 = vmatpush2.msra.mxu0 0.0
    %8252 = vmatprep.subr.mxu0 0.0
    %8253 = vmatpush2.msra.mxu0 0.0
    %8254 = vmatprep.subr.mxu0 0.0
    %8255 = vmatpush2.msra.mxu0 0.0
    %8256 = vmatprep.subr.mxu0 0.0
    %8257 = vmatpush2.msra.mxu0 0.0
    %8258 = vmatprep.subr.mxu0 0.0
    %8259 = vmatpush2.msra.mxu0 0.0
    %8260 = vmatprep.subr.mxu0 0.0
    %8261 = vmatpush2.msra.mxu0 0.0
    %8262 = vmatprep.subr.mxu0 0.0
    %8263 = vmatpush2.msra.mxu0 0.0
    %8264 = vmatprep.subr.mxu0 0.0
    %8265 = vmatpush2.msra.mxu0 0.0
    %8266 = vmatprep.subr.mxu0 0.0
    %8267 = vmatpush2.msra.mxu0 0.0
    %8268 = vmatprep.subr.mxu0 0.0
    %8269 = vmatpush2.msra.mxu0 0.0
    %8270 = vmatprep.subr.mxu0 0.0
    %8271 = vmatpush2.msra.mxu0 0.0
    %8272 = vmatprep.subr.mxu0 0.0
    %8273 = vmatpush2.msra.mxu0 0.0
    %8274 = vmatprep.subr.mxu0 0.0
    %8275 = vmatpush2.msra.mxu0 0.0
    %8276 = vmatprep.subr.mxu0 0.0
    %8277 = vmatpush2.msra.mxu0 0.0
    %8278 = vmatprep.subr.mxu0 0.0
    %8279 = vmatpush2.msra.mxu0 0.0
    %8280 = vmatprep.mubr.f32.mxu0 0.0
    %8281 = vmatmul.mubr.f32.gmra.mxu0 %v8215
    %v8282 = vpop.f32.mrf.mxu0
    %v8283 = vadd.f32 %v87, %v8282
    %v8284 = vpop.f32.mrf.mxu0
    %8285 = vdwg.mxu0
    %v8286 = vmax.f32 %v8283, 0.0
    %v8288 = vsel %vm201, %v8286, 0
    %8290 = vmatprep.subr.mxu0 0.0
    %8291 = vmatpush1.msra.mxu0 0.0
    %8292 = vmatprep.subr.mxu0 0.0
    %8293 = vmatpush1.msra.mxu0 0.0
    %8294 = vmatprep.subr.mxu0 0.0
    %8295 = vmatpush1.msra.mxu0 0.0
    %8296 = vmatprep.subr.mxu0 0.0
    %8297 = vmatpush1.msra.mxu0 0.0
    %8298 = vmatprep.subr.mxu0 0.0
    %8299 = vmatpush1.msra.mxu0 0.0
    %8300 = vmatprep.subr.mxu0 0.0
    %8301 = vmatpush1.msra.mxu0 0.0
    %8302 = vmatprep.subr.mxu0 0.0
    %8303 = vmatpush1.msra.mxu0 0.0
    %8304 = vmatprep.subr.mxu0 0.0
    %8305 = vmatpush1.msra.mxu0 0.0
    %8306 = vmatprep.subr.mxu0 0.0
    %8307 = vmatpush1.msra.mxu0 0.0
    %8308 = vmatprep.subr.mxu0 0.0
    %8309 = vmatpush1.msra.mxu0 0.0
    %8310 = vmatprep.subr.mxu0 0.0
    %8311 = vmatpush1.msra.mxu0 0.0
    %8312 = vmatprep.subr.mxu0 0.0
    %8313 = vmatpush1.msra.mxu0 0.0
    %8314 = vmatprep.subr.mxu0 0.0
    %8315 = vmatpush1.msra.mxu0 %v59
    %8316 = vmatprep.subr.mxu0 0.0
    %8317 = vmatpush1.msra.mxu0 %v58
    %8318 = vmatprep.subr.mxu0 0.0
    %8319 = vmatpush1.msra.mxu0 %v57
    %8320 = vmatprep.subr.mxu0 0.0
    %8321 = vmatpush1.msra.mxu0 %v56
    %8322 = vmatprep.subr.mxu0 0.0
    %8323 = vmatpush2.msra.mxu0 0.0
    %8324 = vmatprep.subr.mxu0 0.0
    %8325 = vmatpush2.msra.mxu0 0.0
    %8326 = vmatprep.subr.mxu0 0.0
    %8327 = vmatpush2.msra.mxu0 0.0
    %8328 = vmatprep.subr.mxu0 0.0
    %8329 = vmatpush2.msra.mxu0 0.0
    %8330 = vmatprep.subr.mxu0 0.0
    %8331 = vmatpush2.msra.mxu0 0.0
    %8332 = vmatprep.subr.mxu0 0.0
    %8333 = vmatpush2.msra.mxu0 0.0
    %8334 = vmatprep.subr.mxu0 0.0
    %8335 = vmatpush2.msra.mxu0 0.0
    %8336 = vmatprep.subr.mxu0 0.0
    %8337 = vmatpush2.msra.mxu0 0.0
    %8338 = vmatprep.subr.mxu0 0.0
    %8339 = vmatpush2.msra.mxu0 0.0
    %8340 = vmatprep.subr.mxu0 0.0
    %8341 = vmatpush2.msra.mxu0 0.0
    %8342 = vmatprep.subr.mxu0 0.0
    %8343 = vmatpush2.msra.mxu0 0.0
    %8344 = vmatprep.subr.mxu0 0.0
    %8345 = vmatpush2.msra.mxu0 0.0
    %8346 = vmatprep.subr.mxu0 0.0
    %8347 = vmatpush2.msra.mxu0 0.0
    %8348 = vmatprep.subr.mxu0 0.0
    %8349 = vmatpush2.msra.mxu0 0.0
    %8350 = vmatprep.subr.mxu0 0.0
    %8351 = vmatpush2.msra.mxu0 0.0
    %8352 = vmatprep.subr.mxu0 0.0
    %8353 = vmatpush2.msra.mxu0 0.0
    %8354 = vmatprep.mubr.f32.mxu0 0.0
    %8355 = vmatmul.mubr.f32.gmra.mxu0 %v8288
    %v8356 = vpop.f32.mrf.mxu0
    %v8357 = vadd.f32 %v91, %v8356
    %v8358 = vpop.f32.mrf.mxu0
    %8359 = vdwg.mxu0
    %v8360 = vmax.f32 %v8357, 0.0
    %v8362 = vsel %vm201, %v8360, 0
    %8364 = vmatprep.subr.mxu0 0.0
    %8365 = vmatpush1.msra.mxu0 0.0
    %8366 = vmatprep.subr.mxu0 0.0
    %8367 = vmatpush1.msra.mxu0 0.0
    %8368 = vmatprep.subr.mxu0 0.0
    %8369 = vmatpush1.msra.mxu0 0.0
    %8370 = vmatprep.subr.mxu0 0.0
    %8371 = vmatpush1.msra.mxu0 0.0
    %8372 = vmatprep.subr.mxu0 0.0
    %8373 = vmatpush1.msra.mxu0 0.0
    %8374 = vmatprep.subr.mxu0 0.0
    %8375 = vmatpush1.msra.mxu0 0.0
    %8376 = vmatprep.subr.mxu0 0.0
    %8377 = vmatpush1.msra.mxu0 0.0
    %8378 = vmatprep.subr.mxu0 0.0
    %8379 = vmatpush1.msra.mxu0 0.0
    %8380 = vmatprep.subr.mxu0 0.0
    %8381 = vmatpush1.msra.mxu0 0.0
    %8382 = vmatprep.subr.mxu0 0.0
    %8383 = vmatpush1.msra.mxu0 0.0
    %8384 = vmatprep.subr.mxu0 0.0
    %8385 = vmatpush1.msra.mxu0 0.0
    %8386 = vmatprep.subr.mxu0 0.0
    %8387 = vmatpush1.msra.mxu0 0.0
    %8388 = vmatprep.subr.mxu0 %v79
    %8389 = vmatpush1.msra.mxu0 %v78
    %8390 = vmatprep.subr.mxu0 %v75
    %8391 = vmatpush1.msra.mxu0 %v74
    %8392 = vmatprep.subr.mxu0 %v71
    %8393 = vmatpush1.msra.mxu0 %v70
    %8394 = vmatprep.subr.mxu0 %v67
    %8395 = vmatpush1.msra.mxu0 %v66
    %8396 = vmatprep.subr.mxu0 0.0
    %8397 = vmatpush2.msra.mxu0 0.0
    %8398 = vmatprep.subr.mxu0 0.0
    %8399 = vmatpush2.msra.mxu0 0.0
    %8400 = vmatprep.subr.mxu0 0.0
    %8401 = vmatpush2.msra.mxu0 0.0
    %8402 = vmatprep.subr.mxu0 0.0
    %8403 = vmatpush2.msra.mxu0 0.0
    %8404 = vmatprep.subr.mxu0 0.0
    %8405 = vmatpush2.msra.mxu0 0.0
    %8406 = vmatprep.subr.mxu0 0.0
    %8407 = vmatpush2.msra.mxu0 0.0
    %8408 = vmatprep.subr.mxu0 0.0
    %8409 = vmatpush2.msra.mxu0 0.0
    %8410 = vmatprep.subr.mxu0 0.0
    %8411 = vmatpush2.msra.mxu0 0.0
    %8412 = vmatprep.subr.mxu0 0.0
    %8413 = vmatpush2.msra.mxu0 0.0
    %8414 = vmatprep.subr.mxu0 0.0
    %8415 = vmatpush2.msra.mxu0 0.0
    %8416 = vmatprep.subr.mxu0 0.0
    %8417 = vmatpush2.msra.mxu0 0.0
    %8418 = vmatprep.subr.mxu0 0.0
    %8419 = vmatpush2.msra.mxu0 0.0
    %8420 = vmatprep.subr.mxu0 0.0
    %8421 = vmatpush2.msra.mxu0 0.0
    %8422 = vmatprep.subr.mxu0 0.0
    %8423 = vmatpush2.msra.mxu0 0.0
    %8424 = vmatprep.subr.mxu0 0.0
    %8425 = vmatpush2.msra.mxu0 0.0
    %8426 = vmatprep.subr.mxu0 0.0
    %8427 = vmatpush2.msra.mxu0 0.0
    %8428 = vmatprep.mubr.f32.mxu0 0.0
    %8429 = vmatmul.mubr.f32.gmra.mxu0 %v8362
    %v8430 = vpop.f32.mrf.mxu0
    %v8431 = vadd.f32 %v96, %v8430
    %v8432 = vpop.f32.mrf.mxu0
    %v8433 = vadd.f32 %v100, %v8432
    %8434 = vdwg.mxu0
    %8435 = vmatprep.subr.mxu0 0.0
    %8436 = vmatpush1.msra.mxu0 0.0
    %8437 = vmatprep.subr.mxu0 0.0
    %8438 = vmatpush1.msra.mxu0 0.0
    %8439 = vmatprep.subr.mxu0 0.0
    %8440 = vmatpush1.msra.mxu0 0.0
    %8441 = vmatprep.subr.mxu0 0.0
    %8442 = vmatpush1.msra.mxu0 0.0
    %8443 = vmatprep.subr.mxu0 0.0
    %8444 = vmatpush1.msra.mxu0 0.0
    %8445 = vmatprep.subr.mxu0 0.0
    %8446 = vmatpush1.msra.mxu0 0.0
    %8447 = vmatprep.subr.mxu0 0.0
    %8448 = vmatpush1.msra.mxu0 0.0
    %8449 = vmatprep.subr.mxu0 0.0
    %8450 = vmatpush1.msra.mxu0 0.0
    %8451 = vmatprep.subr.mxu0 0.0
    %8452 = vmatpush1.msra.mxu0 0.0
    %8453 = vmatprep.subr.mxu0 0.0
    %8454 = vmatpush1.msra.mxu0 0.0
    %8455 = vmatprep.subr.mxu0 0.0
    %8456 = vmatpush1.msra.mxu0 0.0
    %8457 = vmatprep.subr.mxu0 0.0
    %8458 = vmatpush1.msra.mxu0 0.0
    %8459 = vmatprep.subr.mxu0 %v81
    %8460 = vmatpush1.msra.mxu0 %v80
    %8461 = vmatprep.subr.mxu0 %v77
    %8462 = vmatpush1.msra.mxu0 %v76
    %8463 = vmatprep.subr.mxu0 %v73
    %8464 = vmatpush1.msra.mxu0 %v72
    %8465 = vmatprep.subr.mxu0 %v69
    %8466 = vmatpush1.msra.mxu0 %v68
    %8467 = vmatprep.subr.mxu0 0.0
    %8468 = vmatpush2.msra.mxu0 0.0
    %8469 = vmatprep.subr.mxu0 0.0
    %8470 = vmatpush2.msra.mxu0 0.0
    %8471 = vmatprep.subr.mxu0 0.0
    %8472 = vmatpush2.msra.mxu0 0.0
    %8473 = vmatprep.subr.mxu0 0.0
    %8474 = vmatpush2.msra.mxu0 0.0
    %8475 = vmatprep.subr.mxu0 0.0
    %8476 = vmatpush2.msra.mxu0 0.0
    %8477 = vmatprep.subr.mxu0 0.0
    %8478 = vmatpush2.msra.mxu0 0.0
    %8479 = vmatprep.subr.mxu0 0.0
    %8480 = vmatpush2.msra.mxu0 0.0
    %8481 = vmatprep.subr.mxu0 0.0
    %8482 = vmatpush2.msra.mxu0 0.0
    %8483 = vmatprep.subr.mxu0 0.0
    %8484 = vmatpush2.msra.mxu0 0.0
    %8485 = vmatprep.subr.mxu0 0.0
    %8486 = vmatpush2.msra.mxu0 0.0
    %8487 = vmatprep.subr.mxu0 0.0
    %8488 = vmatpush2.msra.mxu0 0.0
    %8489 = vmatprep.subr.mxu0 0.0
    %8490 = vmatpush2.msra.mxu0 0.0
    %8491 = vmatprep.subr.mxu0 0.0
    %8492 = vmatpush2.msra.mxu0 0.0
    %8493 = vmatprep.subr.mxu0 0.0
    %8494 = vmatpush2.msra.mxu0 0.0
    %8495 = vmatprep.subr.mxu0 0.0
    %8496 = vmatpush2.msra.mxu0 0.0
    %8497 = vmatprep.subr.mxu0 0.0
    %8498 = vmatpush2.msra.mxu0 0.0
    %8499 = vmatprep.mubr.f32.mxu0 0.0
    %8500 = vmatmul.mubr.f32.gmra.mxu0 %v8362
    %v8501 = vpop.f32.mrf.mxu0
    %v8502 = vadd.f32 %v104, %v8501
    %v8503 = vpop.f32.mrf.mxu0
    %v8504 = vadd.f32 %v108, %v8503
    %8505 = vdwg.mxu0
    %v8506 = vtanh.pop %v8431
    %v8507 = vtanh.pop %v8433
    %v8508 = vtanh.pop %v8502
    %v8509 = vtanh.pop %v8504
    %v8510 = vmul.f32 %v8506, %v8190
    %v8511 = vmul.f32 %v8507, %v8198
    %v8512 = vmul.f32 %v8508, %v8197
    %v8513 = vmul.f32 %v8509, %v8199
    %v8514 = vmul.f32 %v8215, -0.001
    %v8515 = vmul.f32 %v8514, %v7887
    %v8516 = vadd.f32 %v8515, %v8510
    %v8517 = vadd.f32 %v8516, %v8511
    %v8518 = vadd.f32 %v8517, %v8512
    %v8519 = vadd.f32 %v8518, %v8513
    %v8520 = vsub.f32 %v8519, %v8214
    %v8521 = vadd.f32 %v7882, %v8520
    %8522 = vmatprep.subr.mxu0 0.0
    %8523 = vmatpush1.msra.mxu0 %v54
    %8524 = vmatprep.subr.mxu0 0.0
    %8525 = vmatpush1.msra.mxu0 %v53
    %8526 = vmatprep.subr.mxu0 0.0
    %8527 = vmatpush1.msra.mxu0 %v52
    %8528 = vmatprep.subr.mxu0 0.0
    %8529 = vmatpush1.msra.mxu0 %v51
    %8530 = vmatprep.subr.mxu0 0.0
    %8531 = vmatpush1.msra.mxu0 %v50
    %8532 = vmatprep.subr.mxu0 0.0
    %8533 = vmatpush1.msra.mxu0 %v49
    %8534 = vmatprep.subr.mxu0 0.0
    %8535 = vmatpush1.msra.mxu0 %v48
    %8536 = vmatprep.subr.mxu0 0.0
    %8537 = vmatpush1.msra.mxu0 %v47
    %8538 = vmatprep.subr.mxu0 0.0
    %8539 = vmatpush1.msra.mxu0 %v46
    %8540 = vmatprep.subr.mxu0 0.0
    %8541 = vmatpush1.msra.mxu0 %v45
    %8542 = vmatprep.subr.mxu0 0.0
    %8543 = vmatpush1.msra.mxu0 %v44
    %8544 = vmatprep.subr.mxu0 0.0
    %8545 = vmatpush1.msra.mxu0 %v43
    %8546 = vmatprep.subr.mxu0 0.0
    %8547 = vmatpush1.msra.mxu0 %v42
    %8548 = vmatprep.subr.mxu0 0.0
    %8549 = vmatpush1.msra.mxu0 %v41
    %8550 = vmatprep.subr.mxu0 0.0
    %8551 = vmatpush1.msra.mxu0 %v40
    %8552 = vmatprep.subr.mxu0 0.0
    %8553 = vmatpush1.msra.mxu0 %v39
    %8554 = vmatprep.subr.mxu0 0.0
    %8555 = vmatpush2.msra.mxu0 0.0
    %8556 = vmatprep.subr.mxu0 0.0
    %8557 = vmatpush2.msra.mxu0 0.0
    %8558 = vmatprep.subr.mxu0 0.0
    %8559 = vmatpush2.msra.mxu0 0.0
    %8560 = vmatprep.subr.mxu0 0.0
    %8561 = vmatpush2.msra.mxu0 0.0
    %8562 = vmatprep.subr.mxu0 0.0
    %8563 = vmatpush2.msra.mxu0 0.0
    %8564 = vmatprep.subr.mxu0 0.0
    %8565 = vmatpush2.msra.mxu0 0.0
    %8566 = vmatprep.subr.mxu0 0.0
    %8567 = vmatpush2.msra.mxu0 0.0
    %8568 = vmatprep.subr.mxu0 0.0
    %8569 = vmatpush2.msra.mxu0 0.0
    %8570 = vmatprep.subr.mxu0 0.0
    %8571 = vmatpush2.msra.mxu0 0.0
    %8572 = vmatprep.subr.mxu0 0.0
    %8573 = vmatpush2.msra.mxu0 0.0
    %8574 = vmatprep.subr.mxu0 0.0
    %8575 = vmatpush2.msra.mxu0 0.0
    %8576 = vmatprep.subr.mxu0 0.0
    %8577 = vmatpush2.msra.mxu0 0.0
    %8578 = vmatprep.subr.mxu0 0.0
    %8579 = vmatpush2.msra.mxu0 0.0
    %8580 = vmatprep.subr.mxu0 0.0
    %8581 = vmatpush2.msra.mxu0 0.0
    %8582 = vmatprep.subr.mxu0 0.0
    %8583 = vmatpush2.msra.mxu0 0.0
    %8584 = vmatprep.subr.mxu0 0.0
    %8585 = vmatpush2.msra.mxu0 0.0
    %8586 = vmatprep.mubr.f32.mxu0 0.0
    %8587 = vmatmul.mubr.f32.gmra.mxu0 %v8521
    %v8588 = vpop.f32.mrf.mxu0
    %v8589 = vadd.f32 %v87, %v8588
    %v8590 = vpop.f32.mrf.mxu0
    %8591 = vdwg.mxu0
    %v8592 = vmax.f32 %v8589, 0.0
    %v8594 = vsel %vm201, %v8592, 0
    %8596 = vmatprep.subr.mxu0 0.0
    %8597 = vmatpush1.msra.mxu0 0.0
    %8598 = vmatprep.subr.mxu0 0.0
    %8599 = vmatpush1.msra.mxu0 0.0
    %8600 = vmatprep.subr.mxu0 0.0
    %8601 = vmatpush1.msra.mxu0 0.0
    %8602 = vmatprep.subr.mxu0 0.0
    %8603 = vmatpush1.msra.mxu0 0.0
    %8604 = vmatprep.subr.mxu0 0.0
    %8605 = vmatpush1.msra.mxu0 0.0
    %8606 = vmatprep.subr.mxu0 0.0
    %8607 = vmatpush1.msra.mxu0 0.0
    %8608 = vmatprep.subr.mxu0 0.0
    %8609 = vmatpush1.msra.mxu0 0.0
    %8610 = vmatprep.subr.mxu0 0.0
    %8611 = vmatpush1.msra.mxu0 0.0
    %8612 = vmatprep.subr.mxu0 0.0
    %8613 = vmatpush1.msra.mxu0 0.0
    %8614 = vmatprep.subr.mxu0 0.0
    %8615 = vmatpush1.msra.mxu0 0.0
    %8616 = vmatprep.subr.mxu0 0.0
    %8617 = vmatpush1.msra.mxu0 0.0
    %8618 = vmatprep.subr.mxu0 0.0
    %8619 = vmatpush1.msra.mxu0 0.0
    %8620 = vmatprep.subr.mxu0 0.0
    %8621 = vmatpush1.msra.mxu0 %v59
    %8622 = vmatprep.subr.mxu0 0.0
    %8623 = vmatpush1.msra.mxu0 %v58
    %8624 = vmatprep.subr.mxu0 0.0
    %8625 = vmatpush1.msra.mxu0 %v57
    %8626 = vmatprep.subr.mxu0 0.0
    %8627 = vmatpush1.msra.mxu0 %v56
    %8628 = vmatprep.subr.mxu0 0.0
    %8629 = vmatpush2.msra.mxu0 0.0
    %8630 = vmatprep.subr.mxu0 0.0
    %8631 = vmatpush2.msra.mxu0 0.0
    %8632 = vmatprep.subr.mxu0 0.0
    %8633 = vmatpush2.msra.mxu0 0.0
    %8634 = vmatprep.subr.mxu0 0.0
    %8635 = vmatpush2.msra.mxu0 0.0
    %8636 = vmatprep.subr.mxu0 0.0
    %8637 = vmatpush2.msra.mxu0 0.0
    %8638 = vmatprep.subr.mxu0 0.0
    %8639 = vmatpush2.msra.mxu0 0.0
    %8640 = vmatprep.subr.mxu0 0.0
    %8641 = vmatpush2.msra.mxu0 0.0
    %8642 = vmatprep.subr.mxu0 0.0
    %8643 = vmatpush2.msra.mxu0 0.0
    %8644 = vmatprep.subr.mxu0 0.0
    %8645 = vmatpush2.msra.mxu0 0.0
    %8646 = vmatprep.subr.mxu0 0.0
    %8647 = vmatpush2.msra.mxu0 0.0
    %8648 = vmatprep.subr.mxu0 0.0
    %8649 = vmatpush2.msra.mxu0 0.0
    %8650 = vmatprep.subr.mxu0 0.0
    %8651 = vmatpush2.msra.mxu0 0.0
    %8652 = vmatprep.subr.mxu0 0.0
    %8653 = vmatpush2.msra.mxu0 0.0
    %8654 = vmatprep.subr.mxu0 0.0
    %8655 = vmatpush2.msra.mxu0 0.0
    %8656 = vmatprep.subr.mxu0 0.0
    %8657 = vmatpush2.msra.mxu0 0.0
    %8658 = vmatprep.subr.mxu0 0.0
    %8659 = vmatpush2.msra.mxu0 0.0
    %8660 = vmatprep.mubr.f32.mxu0 0.0
    %8661 = vmatmul.mubr.f32.gmra.mxu0 %v8594
    %v8662 = vpop.f32.mrf.mxu0
    %v8663 = vadd.f32 %v91, %v8662
    %v8664 = vpop.f32.mrf.mxu0
    %8665 = vdwg.mxu0
    %v8666 = vmax.f32 %v8663, 0.0
    %v8668 = vsel %vm201, %v8666, 0
    %8670 = vmatprep.subr.mxu0 0.0
    %8671 = vmatpush1.msra.mxu0 0.0
    %8672 = vmatprep.subr.mxu0 0.0
    %8673 = vmatpush1.msra.mxu0 0.0
    %8674 = vmatprep.subr.mxu0 0.0
    %8675 = vmatpush1.msra.mxu0 0.0
    %8676 = vmatprep.subr.mxu0 0.0
    %8677 = vmatpush1.msra.mxu0 0.0
    %8678 = vmatprep.subr.mxu0 0.0
    %8679 = vmatpush1.msra.mxu0 0.0
    %8680 = vmatprep.subr.mxu0 0.0
    %8681 = vmatpush1.msra.mxu0 0.0
    %8682 = vmatprep.subr.mxu0 0.0
    %8683 = vmatpush1.msra.mxu0 0.0
    %8684 = vmatprep.subr.mxu0 0.0
    %8685 = vmatpush1.msra.mxu0 0.0
    %8686 = vmatprep.subr.mxu0 0.0
    %8687 = vmatpush1.msra.mxu0 0.0
    %8688 = vmatprep.subr.mxu0 0.0
    %8689 = vmatpush1.msra.mxu0 0.0
    %8690 = vmatprep.subr.mxu0 0.0
    %8691 = vmatpush1.msra.mxu0 0.0
    %8692 = vmatprep.subr.mxu0 0.0
    %8693 = vmatpush1.msra.mxu0 0.0
    %8694 = vmatprep.subr.mxu0 %v79
    %8695 = vmatpush1.msra.mxu0 %v78
    %8696 = vmatprep.subr.mxu0 %v75
    %8697 = vmatpush1.msra.mxu0 %v74
    %8698 = vmatprep.subr.mxu0 %v71
    %8699 = vmatpush1.msra.mxu0 %v70
    %8700 = vmatprep.subr.mxu0 %v67
    %8701 = vmatpush1.msra.mxu0 %v66
    %8702 = vmatprep.subr.mxu0 0.0
    %8703 = vmatpush2.msra.mxu0 0.0
    %8704 = vmatprep.subr.mxu0 0.0
    %8705 = vmatpush2.msra.mxu0 0.0
    %8706 = vmatprep.subr.mxu0 0.0
    %8707 = vmatpush2.msra.mxu0 0.0
    %8708 = vmatprep.subr.mxu0 0.0
    %8709 = vmatpush2.msra.mxu0 0.0
    %8710 = vmatprep.subr.mxu0 0.0
    %8711 = vmatpush2.msra.mxu0 0.0
    %8712 = vmatprep.subr.mxu0 0.0
    %8713 = vmatpush2.msra.mxu0 0.0
    %8714 = vmatprep.subr.mxu0 0.0
    %8715 = vmatpush2.msra.mxu0 0.0
    %8716 = vmatprep.subr.mxu0 0.0
    %8717 = vmatpush2.msra.mxu0 0.0
    %8718 = vmatprep.subr.mxu0 0.0
    %8719 = vmatpush2.msra.mxu0 0.0
    %8720 = vmatprep.subr.mxu0 0.0
    %8721 = vmatpush2.msra.mxu0 0.0
    %8722 = vmatprep.subr.mxu0 0.0
    %8723 = vmatpush2.msra.mxu0 0.0
    %8724 = vmatprep.subr.mxu0 0.0
    %8725 = vmatpush2.msra.mxu0 0.0
    %8726 = vmatprep.subr.mxu0 0.0
    %8727 = vmatpush2.msra.mxu0 0.0
    %8728 = vmatprep.subr.mxu0 0.0
    %8729 = vmatpush2.msra.mxu0 0.0
    %8730 = vmatprep.subr.mxu0 0.0
    %8731 = vmatpush2.msra.mxu0 0.0
    %8732 = vmatprep.subr.mxu0 0.0
    %8733 = vmatpush2.msra.mxu0 0.0
    %8734 = vmatprep.mubr.f32.mxu0 0.0
    %8735 = vmatmul.mubr.f32.gmra.mxu0 %v8668
    %v8736 = vpop.f32.mrf.mxu0
    %v8737 = vadd.f32 %v96, %v8736
    %v8738 = vpop.f32.mrf.mxu0
    %v8739 = vadd.f32 %v100, %v8738
    %8740 = vdwg.mxu0
    %8741 = vmatprep.subr.mxu0 0.0
    %8742 = vmatpush1.msra.mxu0 0.0
    %8743 = vmatprep.subr.mxu0 0.0
    %8744 = vmatpush1.msra.mxu0 0.0
    %8745 = vmatprep.subr.mxu0 0.0
    %8746 = vmatpush1.msra.mxu0 0.0
    %8747 = vmatprep.subr.mxu0 0.0
    %8748 = vmatpush1.msra.mxu0 0.0
    %8749 = vmatprep.subr.mxu0 0.0
    %8750 = vmatpush1.msra.mxu0 0.0
    %8751 = vmatprep.subr.mxu0 0.0
    %8752 = vmatpush1.msra.mxu0 0.0
    %8753 = vmatprep.subr.mxu0 0.0
    %8754 = vmatpush1.msra.mxu0 0.0
    %8755 = vmatprep.subr.mxu0 0.0
    %8756 = vmatpush1.msra.mxu0 0.0
    %8757 = vmatprep.subr.mxu0 0.0
    %8758 = vmatpush1.msra.mxu0 0.0
    %8759 = vmatprep.subr.mxu0 0.0
    %8760 = vmatpush1.msra.mxu0 0.0
    %8761 = vmatprep.subr.mxu0 0.0
    %8762 = vmatpush1.msra.mxu0 0.0
    %8763 = vmatprep.subr.mxu0 0.0
    %8764 = vmatpush1.msra.mxu0 0.0
    %8765 = vmatprep.subr.mxu0 %v81
    %8766 = vmatpush1.msra.mxu0 %v80
    %8767 = vmatprep.subr.mxu0 %v77
    %8768 = vmatpush1.msra.mxu0 %v76
    %8769 = vmatprep.subr.mxu0 %v73
    %8770 = vmatpush1.msra.mxu0 %v72
    %8771 = vmatprep.subr.mxu0 %v69
    %8772 = vmatpush1.msra.mxu0 %v68
    %8773 = vmatprep.subr.mxu0 0.0
    %8774 = vmatpush2.msra.mxu0 0.0
    %8775 = vmatprep.subr.mxu0 0.0
    %8776 = vmatpush2.msra.mxu0 0.0
    %8777 = vmatprep.subr.mxu0 0.0
    %8778 = vmatpush2.msra.mxu0 0.0
    %8779 = vmatprep.subr.mxu0 0.0
    %8780 = vmatpush2.msra.mxu0 0.0
    %8781 = vmatprep.subr.mxu0 0.0
    %8782 = vmatpush2.msra.mxu0 0.0
    %8783 = vmatprep.subr.mxu0 0.0
    %8784 = vmatpush2.msra.mxu0 0.0
    %8785 = vmatprep.subr.mxu0 0.0
    %8786 = vmatpush2.msra.mxu0 0.0
    %8787 = vmatprep.subr.mxu0 0.0
    %8788 = vmatpush2.msra.mxu0 0.0
    %8789 = vmatprep.subr.mxu0 0.0
    %8790 = vmatpush2.msra.mxu0 0.0
    %8791 = vmatprep.subr.mxu0 0.0
    %8792 = vmatpush2.msra.mxu0 0.0
    %8793 = vmatprep.subr.mxu0 0.0
    %8794 = vmatpush2.msra.mxu0 0.0
    %8795 = vmatprep.subr.mxu0 0.0
    %8796 = vmatpush2.msra.mxu0 0.0
    %8797 = vmatprep.subr.mxu0 0.0
    %8798 = vmatpush2.msra.mxu0 0.0
    %8799 = vmatprep.subr.mxu0 0.0
    %8800 = vmatpush2.msra.mxu0 0.0
    %8801 = vmatprep.subr.mxu0 0.0
    %8802 = vmatpush2.msra.mxu0 0.0
    %8803 = vmatprep.subr.mxu0 0.0
    %8804 = vmatpush2.msra.mxu0 0.0
    %8805 = vmatprep.mubr.f32.mxu0 0.0
    %8806 = vmatmul.mubr.f32.gmra.mxu0 %v8668
    %v8807 = vpop.f32.mrf.mxu0
    %v8808 = vadd.f32 %v104, %v8807
    %v8809 = vpop.f32.mrf.mxu0
    %v8810 = vadd.f32 %v108, %v8809
    %8811 = vdwg.mxu0
    %v8812 = vtanh.pop %v8737
    %v8813 = vtanh.pop %v8739
    %v8814 = vtanh.pop %v8808
    %v8815 = vtanh.pop %v8810
    %v8816 = vmul.f32 %v8812, %v8190
    %v8817 = vmul.f32 %v8813, %v8198
    %v8818 = vmul.f32 %v8814, %v8197
    %v8819 = vmul.f32 %v8815, %v8199
    %v8820 = vmul.f32 %v8521, -0.001
    %v8821 = vmul.f32 %v8820, %v7887
    %v8822 = vadd.f32 %v8821, %v8816
    %v8823 = vadd.f32 %v8822, %v8817
    %v8824 = vadd.f32 %v8823, %v8818
    %v8825 = vadd.f32 %v8824, %v8819
    %v8826 = vsub.f32 %v8213, %v8519
    %v8827 = vadd.f32 %v8826, %v8825
    %v8828 = vadd.f32 %v7882, %v8827
    %8829 = vmatprep.subr.mxu0 0.0
    %8830 = vmatpush1.msra.mxu0 %v54
    %8831 = vmatprep.subr.mxu0 0.0
    %8832 = vmatpush1.msra.mxu0 %v53
    %8833 = vmatprep.subr.mxu0 0.0
    %8834 = vmatpush1.msra.mxu0 %v52
    %8835 = vmatprep.subr.mxu0 0.0
    %8836 = vmatpush1.msra.mxu0 %v51
    %8837 = vmatprep.subr.mxu0 0.0
    %8838 = vmatpush1.msra.mxu0 %v50
    %8839 = vmatprep.subr.mxu0 0.0
    %8840 = vmatpush1.msra.mxu0 %v49
    %8841 = vmatprep.subr.mxu0 0.0
    %8842 = vmatpush1.msra.mxu0 %v48
    %8843 = vmatprep.subr.mxu0 0.0
    %8844 = vmatpush1.msra.mxu0 %v47
    %8845 = vmatprep.subr.mxu0 0.0
    %8846 = vmatpush1.msra.mxu0 %v46
    %8847 = vmatprep.subr.mxu0 0.0
    %8848 = vmatpush1.msra.mxu0 %v45
    %8849 = vmatprep.subr.mxu0 0.0
    %8850 = vmatpush1.msra.mxu0 %v44
    %8851 = vmatprep.subr.mxu0 0.0
    %8852 = vmatpush1.msra.mxu0 %v43
    %8853 = vmatprep.subr.mxu0 0.0
    %8854 = vmatpush1.msra.mxu0 %v42
    %8855 = vmatprep.subr.mxu0 0.0
    %8856 = vmatpush1.msra.mxu0 %v41
    %8857 = vmatprep.subr.mxu0 0.0
    %8858 = vmatpush1.msra.mxu0 %v40
    %8859 = vmatprep.subr.mxu0 0.0
    %8860 = vmatpush1.msra.mxu0 %v39
    %8861 = vmatprep.subr.mxu0 0.0
    %8862 = vmatpush2.msra.mxu0 0.0
    %8863 = vmatprep.subr.mxu0 0.0
    %8864 = vmatpush2.msra.mxu0 0.0
    %8865 = vmatprep.subr.mxu0 0.0
    %8866 = vmatpush2.msra.mxu0 0.0
    %8867 = vmatprep.subr.mxu0 0.0
    %8868 = vmatpush2.msra.mxu0 0.0
    %8869 = vmatprep.subr.mxu0 0.0
    %8870 = vmatpush2.msra.mxu0 0.0
    %8871 = vmatprep.subr.mxu0 0.0
    %8872 = vmatpush2.msra.mxu0 0.0
    %8873 = vmatprep.subr.mxu0 0.0
    %8874 = vmatpush2.msra.mxu0 0.0
    %8875 = vmatprep.subr.mxu0 0.0
    %8876 = vmatpush2.msra.mxu0 0.0
    %8877 = vmatprep.subr.mxu0 0.0
    %8878 = vmatpush2.msra.mxu0 0.0
    %8879 = vmatprep.subr.mxu0 0.0
    %8880 = vmatpush2.msra.mxu0 0.0
    %8881 = vmatprep.subr.mxu0 0.0
    %8882 = vmatpush2.msra.mxu0 0.0
    %8883 = vmatprep.subr.mxu0 0.0
    %8884 = vmatpush2.msra.mxu0 0.0
    %8885 = vmatprep.subr.mxu0 0.0
    %8886 = vmatpush2.msra.mxu0 0.0
    %8887 = vmatprep.subr.mxu0 0.0
    %8888 = vmatpush2.msra.mxu0 0.0
    %8889 = vmatprep.subr.mxu0 0.0
    %8890 = vmatpush2.msra.mxu0 0.0
    %8891 = vmatprep.subr.mxu0 0.0
    %8892 = vmatpush2.msra.mxu0 0.0
    %8893 = vmatprep.mubr.f32.mxu0 0.0
    %8894 = vmatmul.mubr.f32.gmra.mxu0 %v8828
    %v8895 = vpop.f32.mrf.mxu0
    %v8896 = vadd.f32 %v87, %v8895
    %v8897 = vpop.f32.mrf.mxu0
    %8898 = vdwg.mxu0
    %v8899 = vmax.f32 %v8896, 0.0
    %v8901 = vsel %vm201, %v8899, 0
    %8903 = vmatprep.subr.mxu0 0.0
    %8904 = vmatpush1.msra.mxu0 0.0
    %8905 = vmatprep.subr.mxu0 0.0
    %8906 = vmatpush1.msra.mxu0 0.0
    %8907 = vmatprep.subr.mxu0 0.0
    %8908 = vmatpush1.msra.mxu0 0.0
    %8909 = vmatprep.subr.mxu0 0.0
    %8910 = vmatpush1.msra.mxu0 0.0
    %8911 = vmatprep.subr.mxu0 0.0
    %8912 = vmatpush1.msra.mxu0 0.0
    %8913 = vmatprep.subr.mxu0 0.0
    %8914 = vmatpush1.msra.mxu0 0.0
    %8915 = vmatprep.subr.mxu0 0.0
    %8916 = vmatpush1.msra.mxu0 0.0
    %8917 = vmatprep.subr.mxu0 0.0
    %8918 = vmatpush1.msra.mxu0 0.0
    %8919 = vmatprep.subr.mxu0 0.0
    %8920 = vmatpush1.msra.mxu0 0.0
    %8921 = vmatprep.subr.mxu0 0.0
    %8922 = vmatpush1.msra.mxu0 0.0
    %8923 = vmatprep.subr.mxu0 0.0
    %8924 = vmatpush1.msra.mxu0 0.0
    %8925 = vmatprep.subr.mxu0 0.0
    %8926 = vmatpush1.msra.mxu0 0.0
    %8927 = vmatprep.subr.mxu0 0.0
    %8928 = vmatpush1.msra.mxu0 %v59
    %8929 = vmatprep.subr.mxu0 0.0
    %8930 = vmatpush1.msra.mxu0 %v58
    %8931 = vmatprep.subr.mxu0 0.0
    %8932 = vmatpush1.msra.mxu0 %v57
    %8933 = vmatprep.subr.mxu0 0.0
    %8934 = vmatpush1.msra.mxu0 %v56
    %8935 = vmatprep.subr.mxu0 0.0
    %8936 = vmatpush2.msra.mxu0 0.0
    %8937 = vmatprep.subr.mxu0 0.0
    %8938 = vmatpush2.msra.mxu0 0.0
    %8939 = vmatprep.subr.mxu0 0.0
    %8940 = vmatpush2.msra.mxu0 0.0
    %8941 = vmatprep.subr.mxu0 0.0
    %8942 = vmatpush2.msra.mxu0 0.0
    %8943 = vmatprep.subr.mxu0 0.0
    %8944 = vmatpush2.msra.mxu0 0.0
    %8945 = vmatprep.subr.mxu0 0.0
    %8946 = vmatpush2.msra.mxu0 0.0
    %8947 = vmatprep.subr.mxu0 0.0
    %8948 = vmatpush2.msra.mxu0 0.0
    %8949 = vmatprep.subr.mxu0 0.0
    %8950 = vmatpush2.msra.mxu0 0.0
    %8951 = vmatprep.subr.mxu0 0.0
    %8952 = vmatpush2.msra.mxu0 0.0
    %8953 = vmatprep.subr.mxu0 0.0
    %8954 = vmatpush2.msra.mxu0 0.0
    %8955 = vmatprep.subr.mxu0 0.0
    %8956 = vmatpush2.msra.mxu0 0.0
    %8957 = vmatprep.subr.mxu0 0.0
    %8958 = vmatpush2.msra.mxu0 0.0
    %8959 = vmatprep.subr.mxu0 0.0
    %8960 = vmatpush2.msra.mxu0 0.0
    %8961 = vmatprep.subr.mxu0 0.0
    %8962 = vmatpush2.msra.mxu0 0.0
    %8963 = vmatprep.subr.mxu0 0.0
    %8964 = vmatpush2.msra.mxu0 0.0
    %8965 = vmatprep.subr.mxu0 0.0
    %8966 = vmatpush2.msra.mxu0 0.0
    %8967 = vmatprep.mubr.f32.mxu0 0.0
    %8968 = vmatmul.mubr.f32.gmra.mxu0 %v8901
    %v8969 = vpop.f32.mrf.mxu0
    %v8970 = vadd.f32 %v91, %v8969
    %v8971 = vpop.f32.mrf.mxu0
    %8972 = vdwg.mxu0
    %v8973 = vmax.f32 %v8970, 0.0
    %v8975 = vsel %vm201, %v8973, 0
    %8977 = vmatprep.subr.mxu0 0.0
    %8978 = vmatpush1.msra.mxu0 0.0
    %8979 = vmatprep.subr.mxu0 0.0
    %8980 = vmatpush1.msra.mxu0 0.0
    %8981 = vmatprep.subr.mxu0 0.0
    %8982 = vmatpush1.msra.mxu0 0.0
    %8983 = vmatprep.subr.mxu0 0.0
    %8984 = vmatpush1.msra.mxu0 0.0
    %8985 = vmatprep.subr.mxu0 0.0
    %8986 = vmatpush1.msra.mxu0 0.0
    %8987 = vmatprep.subr.mxu0 0.0
    %8988 = vmatpush1.msra.mxu0 0.0
    %8989 = vmatprep.subr.mxu0 0.0
    %8990 = vmatpush1.msra.mxu0 0.0
    %8991 = vmatprep.subr.mxu0 0.0
    %8992 = vmatpush1.msra.mxu0 0.0
    %8993 = vmatprep.subr.mxu0 0.0
    %8994 = vmatpush1.msra.mxu0 0.0
    %8995 = vmatprep.subr.mxu0 0.0
    %8996 = vmatpush1.msra.mxu0 0.0
    %8997 = vmatprep.subr.mxu0 0.0
    %8998 = vmatpush1.msra.mxu0 0.0
    %8999 = vmatprep.subr.mxu0 0.0
    %9000 = vmatpush1.msra.mxu0 0.0
    %9001 = vmatprep.subr.mxu0 %v79
    %9002 = vmatpush1.msra.mxu0 %v78
    %9003 = vmatprep.subr.mxu0 %v75
    %9004 = vmatpush1.msra.mxu0 %v74
    %9005 = vmatprep.subr.mxu0 %v71
    %9006 = vmatpush1.msra.mxu0 %v70
    %9007 = vmatprep.subr.mxu0 %v67
    %9008 = vmatpush1.msra.mxu0 %v66
    %9009 = vmatprep.subr.mxu0 0.0
    %9010 = vmatpush2.msra.mxu0 0.0
    %9011 = vmatprep.subr.mxu0 0.0
    %9012 = vmatpush2.msra.mxu0 0.0
    %9013 = vmatprep.subr.mxu0 0.0
    %9014 = vmatpush2.msra.mxu0 0.0
    %9015 = vmatprep.subr.mxu0 0.0
    %9016 = vmatpush2.msra.mxu0 0.0
    %9017 = vmatprep.subr.mxu0 0.0
    %9018 = vmatpush2.msra.mxu0 0.0
    %9019 = vmatprep.subr.mxu0 0.0
    %9020 = vmatpush2.msra.mxu0 0.0
    %9021 = vmatprep.subr.mxu0 0.0
    %9022 = vmatpush2.msra.mxu0 0.0
    %9023 = vmatprep.subr.mxu0 0.0
    %9024 = vmatpush2.msra.mxu0 0.0
    %9025 = vmatprep.subr.mxu0 0.0
    %9026 = vmatpush2.msra.mxu0 0.0
    %9027 = vmatprep.subr.mxu0 0.0
    %9028 = vmatpush2.msra.mxu0 0.0
    %9029 = vmatprep.subr.mxu0 0.0
    %9030 = vmatpush2.msra.mxu0 0.0
    %9031 = vmatprep.subr.mxu0 0.0
    %9032 = vmatpush2.msra.mxu0 0.0
    %9033 = vmatprep.subr.mxu0 0.0
    %9034 = vmatpush2.msra.mxu0 0.0
    %9035 = vmatprep.subr.mxu0 0.0
    %9036 = vmatpush2.msra.mxu0 0.0
    %9037 = vmatprep.subr.mxu0 0.0
    %9038 = vmatpush2.msra.mxu0 0.0
    %9039 = vmatprep.subr.mxu0 0.0
    %9040 = vmatpush2.msra.mxu0 0.0
    %9041 = vmatprep.mubr.f32.mxu0 0.0
    %9042 = vmatmul.mubr.f32.gmra.mxu0 %v8975
    %v9043 = vpop.f32.mrf.mxu0
    %v9044 = vadd.f32 %v96, %v9043
    %v9045 = vpop.f32.mrf.mxu0
    %v9046 = vadd.f32 %v100, %v9045
    %9047 = vdwg.mxu0
    %9048 = vmatprep.subr.mxu0 0.0
    %9049 = vmatpush1.msra.mxu0 0.0
    %9050 = vmatprep.subr.mxu0 0.0
    %9051 = vmatpush1.msra.mxu0 0.0
    %9052 = vmatprep.subr.mxu0 0.0
    %9053 = vmatpush1.msra.mxu0 0.0
    %9054 = vmatprep.subr.mxu0 0.0
    %9055 = vmatpush1.msra.mxu0 0.0
    %9056 = vmatprep.subr.mxu0 0.0
    %9057 = vmatpush1.msra.mxu0 0.0
    %9058 = vmatprep.subr.mxu0 0.0
    %9059 = vmatpush1.msra.mxu0 0.0
    %9060 = vmatprep.subr.mxu0 0.0
    %9061 = vmatpush1.msra.mxu0 0.0
    %9062 = vmatprep.subr.mxu0 0.0
    %9063 = vmatpush1.msra.mxu0 0.0
    %9064 = vmatprep.subr.mxu0 0.0
    %9065 = vmatpush1.msra.mxu0 0.0
    %9066 = vmatprep.subr.mxu0 0.0
    %9067 = vmatpush1.msra.mxu0 0.0
    %9068 = vmatprep.subr.mxu0 0.0
    %9069 = vmatpush1.msra.mxu0 0.0
    %9070 = vmatprep.subr.mxu0 0.0
    %9071 = vmatpush1.msra.mxu0 0.0
    %9072 = vmatprep.subr.mxu0 %v81
    %9073 = vmatpush1.msra.mxu0 %v80
    %9074 = vmatprep.subr.mxu0 %v77
    %9075 = vmatpush1.msra.mxu0 %v76
    %9076 = vmatprep.subr.mxu0 %v73
    %9077 = vmatpush1.msra.mxu0 %v72
    %9078 = vmatprep.subr.mxu0 %v69
    %9079 = vmatpush1.msra.mxu0 %v68
    %9080 = vmatprep.subr.mxu0 0.0
    %9081 = vmatpush2.msra.mxu0 0.0
    %9082 = vmatprep.subr.mxu0 0.0
    %9083 = vmatpush2.msra.mxu0 0.0
    %9084 = vmatprep.subr.mxu0 0.0
    %9085 = vmatpush2.msra.mxu0 0.0
    %9086 = vmatprep.subr.mxu0 0.0
    %9087 = vmatpush2.msra.mxu0 0.0
    %9088 = vmatprep.subr.mxu0 0.0
    %9089 = vmatpush2.msra.mxu0 0.0
    %9090 = vmatprep.subr.mxu0 0.0
    %9091 = vmatpush2.msra.mxu0 0.0
    %9092 = vmatprep.subr.mxu0 0.0
    %9093 = vmatpush2.msra.mxu0 0.0
    %9094 = vmatprep.subr.mxu0 0.0
    %9095 = vmatpush2.msra.mxu0 0.0
    %9096 = vmatprep.subr.mxu0 0.0
    %9097 = vmatpush2.msra.mxu0 0.0
    %9098 = vmatprep.subr.mxu0 0.0
    %9099 = vmatpush2.msra.mxu0 0.0
    %9100 = vmatprep.subr.mxu0 0.0
    %9101 = vmatpush2.msra.mxu0 0.0
    %9102 = vmatprep.subr.mxu0 0.0
    %9103 = vmatpush2.msra.mxu0 0.0
    %9104 = vmatprep.subr.mxu0 0.0
    %9105 = vmatpush2.msra.mxu0 0.0
    %9106 = vmatprep.subr.mxu0 0.0
    %9107 = vmatpush2.msra.mxu0 0.0
    %9108 = vmatprep.subr.mxu0 0.0
    %9109 = vmatpush2.msra.mxu0 0.0
    %9110 = vmatprep.subr.mxu0 0.0
    %9111 = vmatpush2.msra.mxu0 0.0
    %9112 = vmatprep.mubr.f32.mxu0 0.0
    %9113 = vmatmul.mubr.f32.gmra.mxu0 %v8975
    %v9114 = vpop.f32.mrf.mxu0
    %v9115 = vadd.f32 %v104, %v9114
    %v9116 = vpop.f32.mrf.mxu0
    %v9117 = vadd.f32 %v108, %v9116
    %9118 = vdwg.mxu0
    %v9119 = vtanh.pop %v9044
    %v9120 = vtanh.pop %v9046
    %v9121 = vtanh.pop %v9115
    %v9122 = vtanh.pop %v9117
    %v9123 = vmul.f32 %v9119, %v8190
    %v9124 = vmul.f32 %v9120, %v8198
    %v9125 = vmul.f32 %v9121, %v8197
    %v9126 = vmul.f32 %v9122, %v8199
    %v9127 = vmul.f32 %v8828, -0.001
    %v9128 = vmul.f32 %v9127, %v7887
    %v9129 = vadd.f32 %v9128, %v9123
    %v9130 = vadd.f32 %v9129, %v9124
    %v9131 = vadd.f32 %v9130, %v9125
    %v9132 = vadd.f32 %v9131, %v9126
    %v9133 = vadd.f32 %v8519, %v8825
    %v9134 = vmul.f32 %v9133, 3.0
    %v9135 = vadd.f32 %v8213, %v9134
    %v9136 = vadd.f32 %v9135, %v9132
    %v9137 = vmul.f32 %v9136, 0.125
    %v9138 = vadd.f32 %v7882, %v9137
    %s9139 = scalar_lea.vmem [#allocation5], 14
    %9140 = vst [vmem:[%s9139] sm:$0x3] %v9138
    %s9141 = scalar_lea.vmem %s0, 70
    %v9142 = vld [vmem:[%s9141] sm:$0xff]
    %v9143 = vld [vmem:[%s9141 + $0x8] sm:$0x3]
    %9144 = vmatprep.subr.mxu0 0.0
    %9145 = vmatpush1.msra.mxu0 %v54
    %9146 = vmatprep.subr.mxu0 0.0
    %9147 = vmatpush1.msra.mxu0 %v53
    %9148 = vmatprep.subr.mxu0 0.0
    %9149 = vmatpush1.msra.mxu0 %v52
    %9150 = vmatprep.subr.mxu0 0.0
    %9151 = vmatpush1.msra.mxu0 %v51
    %9152 = vmatprep.subr.mxu0 0.0
    %9153 = vmatpush1.msra.mxu0 %v50
    %9154 = vmatprep.subr.mxu0 0.0
    %9155 = vmatpush1.msra.mxu0 %v49
    %9156 = vmatprep.subr.mxu0 0.0
    %9157 = vmatpush1.msra.mxu0 %v48
    %9158 = vmatprep.subr.mxu0 0.0
    %9159 = vmatpush1.msra.mxu0 %v47
    %9160 = vmatprep.subr.mxu0 0.0
    %9161 = vmatpush1.msra.mxu0 %v46
    %9162 = vmatprep.subr.mxu0 0.0
    %9163 = vmatpush1.msra.mxu0 %v45
    %9164 = vmatprep.subr.mxu0 0.0
    %9165 = vmatpush1.msra.mxu0 %v44
    %9166 = vmatprep.subr.mxu0 0.0
    %9167 = vmatpush1.msra.mxu0 %v43
    %9168 = vmatprep.subr.mxu0 0.0
    %9169 = vmatpush1.msra.mxu0 %v42
    %9170 = vmatprep.subr.mxu0 0.0
    %9171 = vmatpush1.msra.mxu0 %v41
    %9172 = vmatprep.subr.mxu0 0.0
    %9173 = vmatpush1.msra.mxu0 %v40
    %9174 = vmatprep.subr.mxu0 0.0
    %9175 = vmatpush1.msra.mxu0 %v39
    %9176 = vmatprep.subr.mxu0 0.0
    %9177 = vmatpush2.msra.mxu0 0.0
    %9178 = vmatprep.subr.mxu0 0.0
    %9179 = vmatpush2.msra.mxu0 0.0
    %9180 = vmatprep.subr.mxu0 0.0
    %9181 = vmatpush2.msra.mxu0 0.0
    %9182 = vmatprep.subr.mxu0 0.0
    %9183 = vmatpush2.msra.mxu0 0.0
    %9184 = vmatprep.subr.mxu0 0.0
    %9185 = vmatpush2.msra.mxu0 0.0
    %9186 = vmatprep.subr.mxu0 0.0
    %9187 = vmatpush2.msra.mxu0 0.0
    %9188 = vmatprep.subr.mxu0 0.0
    %9189 = vmatpush2.msra.mxu0 0.0
    %9190 = vmatprep.subr.mxu0 0.0
    %9191 = vmatpush2.msra.mxu0 0.0
    %9192 = vmatprep.subr.mxu0 0.0
    %9193 = vmatpush2.msra.mxu0 0.0
    %9194 = vmatprep.subr.mxu0 0.0
    %9195 = vmatpush2.msra.mxu0 0.0
    %9196 = vmatprep.subr.mxu0 0.0
    %9197 = vmatpush2.msra.mxu0 0.0
    %9198 = vmatprep.subr.mxu0 0.0
    %9199 = vmatpush2.msra.mxu0 0.0
    %9200 = vmatprep.subr.mxu0 0.0
    %9201 = vmatpush2.msra.mxu0 0.0
    %9202 = vmatprep.subr.mxu0 0.0
    %9203 = vmatpush2.msra.mxu0 0.0
    %9204 = vmatprep.subr.mxu0 0.0
    %9205 = vmatpush2.msra.mxu0 0.0
    %9206 = vmatprep.subr.mxu0 0.0
    %9207 = vmatpush2.msra.mxu0 0.0
    %9208 = vmatprep.mubr.f32.mxu0 0.0
    %9209 = vmatmul.mubr.f32.gmra.mxu0 %v9138
    %v9210 = vpop.f32.mrf.mxu0
    %v9211 = vadd.f32 %v87, %v9210
    %v9212 = vpop.f32.mrf.mxu0
    %9213 = vdwg.mxu0
    %v9214 = vmax.f32 %v9211, 0.0
    %v9216 = vsel %vm201, %v9214, 0
    %9218 = vmatprep.subr.mxu0 0.0
    %9219 = vmatpush1.msra.mxu0 0.0
    %9220 = vmatprep.subr.mxu0 0.0
    %9221 = vmatpush1.msra.mxu0 0.0
    %9222 = vmatprep.subr.mxu0 0.0
    %9223 = vmatpush1.msra.mxu0 0.0
    %9224 = vmatprep.subr.mxu0 0.0
    %9225 = vmatpush1.msra.mxu0 0.0
    %9226 = vmatprep.subr.mxu0 0.0
    %9227 = vmatpush1.msra.mxu0 0.0
    %9228 = vmatprep.subr.mxu0 0.0
    %9229 = vmatpush1.msra.mxu0 0.0
    %9230 = vmatprep.subr.mxu0 0.0
    %9231 = vmatpush1.msra.mxu0 0.0
    %9232 = vmatprep.subr.mxu0 0.0
    %9233 = vmatpush1.msra.mxu0 0.0
    %9234 = vmatprep.subr.mxu0 0.0
    %9235 = vmatpush1.msra.mxu0 0.0
    %9236 = vmatprep.subr.mxu0 0.0
    %9237 = vmatpush1.msra.mxu0 0.0
    %9238 = vmatprep.subr.mxu0 0.0
    %9239 = vmatpush1.msra.mxu0 0.0
    %9240 = vmatprep.subr.mxu0 0.0
    %9241 = vmatpush1.msra.mxu0 0.0
    %9242 = vmatprep.subr.mxu0 0.0
    %9243 = vmatpush1.msra.mxu0 %v59
    %9244 = vmatprep.subr.mxu0 0.0
    %9245 = vmatpush1.msra.mxu0 %v58
    %9246 = vmatprep.subr.mxu0 0.0
    %9247 = vmatpush1.msra.mxu0 %v57
    %9248 = vmatprep.subr.mxu0 0.0
    %9249 = vmatpush1.msra.mxu0 %v56
    %9250 = vmatprep.subr.mxu0 0.0
    %9251 = vmatpush2.msra.mxu0 0.0
    %9252 = vmatprep.subr.mxu0 0.0
    %9253 = vmatpush2.msra.mxu0 0.0
    %9254 = vmatprep.subr.mxu0 0.0
    %9255 = vmatpush2.msra.mxu0 0.0
    %9256 = vmatprep.subr.mxu0 0.0
    %9257 = vmatpush2.msra.mxu0 0.0
    %9258 = vmatprep.subr.mxu0 0.0
    %9259 = vmatpush2.msra.mxu0 0.0
    %9260 = vmatprep.subr.mxu0 0.0
    %9261 = vmatpush2.msra.mxu0 0.0
    %9262 = vmatprep.subr.mxu0 0.0
    %9263 = vmatpush2.msra.mxu0 0.0
    %9264 = vmatprep.subr.mxu0 0.0
    %9265 = vmatpush2.msra.mxu0 0.0
    %9266 = vmatprep.subr.mxu0 0.0
    %9267 = vmatpush2.msra.mxu0 0.0
    %9268 = vmatprep.subr.mxu0 0.0
    %9269 = vmatpush2.msra.mxu0 0.0
    %9270 = vmatprep.subr.mxu0 0.0
    %9271 = vmatpush2.msra.mxu0 0.0
    %9272 = vmatprep.subr.mxu0 0.0
    %9273 = vmatpush2.msra.mxu0 0.0
    %9274 = vmatprep.subr.mxu0 0.0
    %9275 = vmatpush2.msra.mxu0 0.0
    %9276 = vmatprep.subr.mxu0 0.0
    %9277 = vmatpush2.msra.mxu0 0.0
    %9278 = vmatprep.subr.mxu0 0.0
    %9279 = vmatpush2.msra.mxu0 0.0
    %9280 = vmatprep.subr.mxu0 0.0
    %9281 = vmatpush2.msra.mxu0 0.0
    %9282 = vmatprep.mubr.f32.mxu0 0.0
    %9283 = vmatmul.mubr.f32.gmra.mxu0 %v9216
    %v9284 = vpop.f32.mrf.mxu0
    %v9285 = vadd.f32 %v91, %v9284
    %v9286 = vpop.f32.mrf.mxu0
    %9287 = vdwg.mxu0
    %v9288 = vmax.f32 %v9285, 0.0
    %v9290 = vsel %vm201, %v9288, 0
    %9292 = vmatprep.subr.mxu0 0.0
    %9293 = vmatpush1.msra.mxu0 0.0
    %9294 = vmatprep.subr.mxu0 0.0
    %9295 = vmatpush1.msra.mxu0 0.0
    %9296 = vmatprep.subr.mxu0 0.0
    %9297 = vmatpush1.msra.mxu0 0.0
    %9298 = vmatprep.subr.mxu0 0.0
    %9299 = vmatpush1.msra.mxu0 0.0
    %9300 = vmatprep.subr.mxu0 0.0
    %9301 = vmatpush1.msra.mxu0 0.0
    %9302 = vmatprep.subr.mxu0 0.0
    %9303 = vmatpush1.msra.mxu0 0.0
    %9304 = vmatprep.subr.mxu0 0.0
    %9305 = vmatpush1.msra.mxu0 0.0
    %9306 = vmatprep.subr.mxu0 0.0
    %9307 = vmatpush1.msra.mxu0 0.0
    %9308 = vmatprep.subr.mxu0 0.0
    %9309 = vmatpush1.msra.mxu0 0.0
    %9310 = vmatprep.subr.mxu0 0.0
    %9311 = vmatpush1.msra.mxu0 0.0
    %9312 = vmatprep.subr.mxu0 0.0
    %9313 = vmatpush1.msra.mxu0 0.0
    %9314 = vmatprep.subr.mxu0 0.0
    %9315 = vmatpush1.msra.mxu0 0.0
    %9316 = vmatprep.subr.mxu0 %v79
    %9317 = vmatpush1.msra.mxu0 %v78
    %9318 = vmatprep.subr.mxu0 %v75
    %9319 = vmatpush1.msra.mxu0 %v74
    %9320 = vmatprep.subr.mxu0 %v71
    %9321 = vmatpush1.msra.mxu0 %v70
    %9322 = vmatprep.subr.mxu0 %v67
    %9323 = vmatpush1.msra.mxu0 %v66
    %9324 = vmatprep.subr.mxu0 0.0
    %9325 = vmatpush2.msra.mxu0 0.0
    %9326 = vmatprep.subr.mxu0 0.0
    %9327 = vmatpush2.msra.mxu0 0.0
    %9328 = vmatprep.subr.mxu0 0.0
    %9329 = vmatpush2.msra.mxu0 0.0
    %9330 = vmatprep.subr.mxu0 0.0
    %9331 = vmatpush2.msra.mxu0 0.0
    %9332 = vmatprep.subr.mxu0 0.0
    %9333 = vmatpush2.msra.mxu0 0.0
    %9334 = vmatprep.subr.mxu0 0.0
    %9335 = vmatpush2.msra.mxu0 0.0
    %9336 = vmatprep.subr.mxu0 0.0
    %9337 = vmatpush2.msra.mxu0 0.0
    %9338 = vmatprep.subr.mxu0 0.0
    %9339 = vmatpush2.msra.mxu0 0.0
    %9340 = vmatprep.subr.mxu0 0.0
    %9341 = vmatpush2.msra.mxu0 0.0
    %9342 = vmatprep.subr.mxu0 0.0
    %9343 = vmatpush2.msra.mxu0 0.0
    %9344 = vmatprep.subr.mxu0 0.0
    %9345 = vmatpush2.msra.mxu0 0.0
    %9346 = vmatprep.subr.mxu0 0.0
    %9347 = vmatpush2.msra.mxu0 0.0
    %9348 = vmatprep.subr.mxu0 0.0
    %9349 = vmatpush2.msra.mxu0 0.0
    %9350 = vmatprep.subr.mxu0 0.0
    %9351 = vmatpush2.msra.mxu0 0.0
    %9352 = vmatprep.subr.mxu0 0.0
    %9353 = vmatpush2.msra.mxu0 0.0
    %9354 = vmatprep.subr.mxu0 0.0
    %9355 = vmatpush2.msra.mxu0 0.0
    %9356 = vmatprep.mubr.f32.mxu0 0.0
    %9357 = vmatmul.mubr.f32.gmra.mxu0 %v9290
    %v9358 = vpop.f32.mrf.mxu0
    %v9359 = vadd.f32 %v96, %v9358
    %v9360 = vpop.f32.mrf.mxu0
    %v9361 = vadd.f32 %v100, %v9360
    %9362 = vdwg.mxu0
    %9363 = vmatprep.subr.mxu0 0.0
    %9364 = vmatpush1.msra.mxu0 0.0
    %9365 = vmatprep.subr.mxu0 0.0
    %9366 = vmatpush1.msra.mxu0 0.0
    %9367 = vmatprep.subr.mxu0 0.0
    %9368 = vmatpush1.msra.mxu0 0.0
    %9369 = vmatprep.subr.mxu0 0.0
    %9370 = vmatpush1.msra.mxu0 0.0
    %9371 = vmatprep.subr.mxu0 0.0
    %9372 = vmatpush1.msra.mxu0 0.0
    %9373 = vmatprep.subr.mxu0 0.0
    %9374 = vmatpush1.msra.mxu0 0.0
    %9375 = vmatprep.subr.mxu0 0.0
    %9376 = vmatpush1.msra.mxu0 0.0
    %9377 = vmatprep.subr.mxu0 0.0
    %9378 = vmatpush1.msra.mxu0 0.0
    %9379 = vmatprep.subr.mxu0 0.0
    %9380 = vmatpush1.msra.mxu0 0.0
    %9381 = vmatprep.subr.mxu0 0.0
    %9382 = vmatpush1.msra.mxu0 0.0
    %9383 = vmatprep.subr.mxu0 0.0
    %9384 = vmatpush1.msra.mxu0 0.0
    %9385 = vmatprep.subr.mxu0 0.0
    %9386 = vmatpush1.msra.mxu0 0.0
    %9387 = vmatprep.subr.mxu0 %v81
    %9388 = vmatpush1.msra.mxu0 %v80
    %9389 = vmatprep.subr.mxu0 %v77
    %9390 = vmatpush1.msra.mxu0 %v76
    %9391 = vmatprep.subr.mxu0 %v73
    %9392 = vmatpush1.msra.mxu0 %v72
    %9393 = vmatprep.subr.mxu0 %v69
    %9394 = vmatpush1.msra.mxu0 %v68
    %9395 = vmatprep.subr.mxu0 0.0
    %9396 = vmatpush2.msra.mxu0 0.0
    %9397 = vmatprep.subr.mxu0 0.0
    %9398 = vmatpush2.msra.mxu0 0.0
    %9399 = vmatprep.subr.mxu0 0.0
    %9400 = vmatpush2.msra.mxu0 0.0
    %9401 = vmatprep.subr.mxu0 0.0
    %9402 = vmatpush2.msra.mxu0 0.0
    %9403 = vmatprep.subr.mxu0 0.0
    %9404 = vmatpush2.msra.mxu0 0.0
    %9405 = vmatprep.subr.mxu0 0.0
    %9406 = vmatpush2.msra.mxu0 0.0
    %9407 = vmatprep.subr.mxu0 0.0
    %9408 = vmatpush2.msra.mxu0 0.0
    %9409 = vmatprep.subr.mxu0 0.0
    %9410 = vmatpush2.msra.mxu0 0.0
    %9411 = vmatprep.subr.mxu0 0.0
    %9412 = vmatpush2.msra.mxu0 0.0
    %9413 = vmatprep.subr.mxu0 0.0
    %9414 = vmatpush2.msra.mxu0 0.0
    %9415 = vmatprep.subr.mxu0 0.0
    %9416 = vmatpush2.msra.mxu0 0.0
    %9417 = vmatprep.subr.mxu0 0.0
    %9418 = vmatpush2.msra.mxu0 0.0
    %9419 = vmatprep.subr.mxu0 0.0
    %9420 = vmatpush2.msra.mxu0 0.0
    %9421 = vmatprep.subr.mxu0 0.0
    %9422 = vmatpush2.msra.mxu0 0.0
    %9423 = vmatprep.subr.mxu0 0.0
    %9424 = vmatpush2.msra.mxu0 0.0
    %9425 = vmatprep.subr.mxu0 0.0
    %9426 = vmatpush2.msra.mxu0 0.0
    %9427 = vmatprep.mubr.f32.mxu0 0.0
    %9428 = vmatmul.mubr.f32.gmra.mxu0 %v9290
    %v9429 = vpop.f32.mrf.mxu0
    %v9430 = vadd.f32 %v104, %v9429
    %v9431 = vpop.f32.mrf.mxu0
    %v9432 = vadd.f32 %v108, %v9431
    %9433 = vdwg.mxu0
    %v9434 = vtanh.pop %v9359
    %v9435 = vtanh.pop %v9361
    %v9436 = vtanh.pop %v9430
    %v9437 = vtanh.pop %v9432
    %v9439 = vcombine.high %v9142, %v9142
    %v9441 = vunpack.c.l.s4 1983009808
    %v9442 = vunpack.c.0.s8 %v9441
    %v9443 = vlaneseq
    %v9444 = vshrl.u32 %v9443, 7
    %v9445 = vsub.s32 %v9442, %v9444
    %v9446 = vrot.slane %v9142, %v9445
    %v9448 = vunpack.c.l.s4 1983009808
    %v9449 = vunpack.c.0.s8 %v9448
    %v9450 = vlaneseq
    %v9451 = vshrl.u32 %v9450, 7
    %v9452 = vsub.s32 %v9449, %v9451
    %v9453 = vrot.slane %v9439, %v9452
    %v9454 = vcombine.high %v9446, %v9446
    %v9455 = vcombine.high %v9453, %v9453
    %v9460 = vmul.f32 %v9434, %v9446
    %v9461 = vmul.f32 %v9435, %v9454
    %v9462 = vmul.f32 %v9436, %v9453
    %v9463 = vmul.f32 %v9437, %v9455
    %v9464 = vmul.f32 %v9138, -0.001
    %v9465 = vmul.f32 %v9464, %v9143
    %v9466 = vadd.f32 %v9465, %v9460
    %v9467 = vadd.f32 %v9466, %v9461
    %v9468 = vadd.f32 %v9467, %v9462
    %v9469 = vadd.f32 %v9468, %v9463
    %v9470 = vmul.f32 %v9469, 0.33333334
    %v9471 = vadd.f32 %v9138, %v9470
    %9472 = vmatprep.subr.mxu0 0.0
    %9473 = vmatpush1.msra.mxu0 %v54
    %9474 = vmatprep.subr.mxu0 0.0
    %9475 = vmatpush1.msra.mxu0 %v53
    %9476 = vmatprep.subr.mxu0 0.0
    %9477 = vmatpush1.msra.mxu0 %v52
    %9478 = vmatprep.subr.mxu0 0.0
    %9479 = vmatpush1.msra.mxu0 %v51
    %9480 = vmatprep.subr.mxu0 0.0
    %9481 = vmatpush1.msra.mxu0 %v50
    %9482 = vmatprep.subr.mxu0 0.0
    %9483 = vmatpush1.msra.mxu0 %v49
    %9484 = vmatprep.subr.mxu0 0.0
    %9485 = vmatpush1.msra.mxu0 %v48
    %9486 = vmatprep.subr.mxu0 0.0
    %9487 = vmatpush1.msra.mxu0 %v47
    %9488 = vmatprep.subr.mxu0 0.0
    %9489 = vmatpush1.msra.mxu0 %v46
    %9490 = vmatprep.subr.mxu0 0.0
    %9491 = vmatpush1.msra.mxu0 %v45
    %9492 = vmatprep.subr.mxu0 0.0
    %9493 = vmatpush1.msra.mxu0 %v44
    %9494 = vmatprep.subr.mxu0 0.0
    %9495 = vmatpush1.msra.mxu0 %v43
    %9496 = vmatprep.subr.mxu0 0.0
    %9497 = vmatpush1.msra.mxu0 %v42
    %9498 = vmatprep.subr.mxu0 0.0
    %9499 = vmatpush1.msra.mxu0 %v41
    %9500 = vmatprep.subr.mxu0 0.0
    %9501 = vmatpush1.msra.mxu0 %v40
    %9502 = vmatprep.subr.mxu0 0.0
    %9503 = vmatpush1.msra.mxu0 %v39
    %9504 = vmatprep.subr.mxu0 0.0
    %9505 = vmatpush2.msra.mxu0 0.0
    %9506 = vmatprep.subr.mxu0 0.0
    %9507 = vmatpush2.msra.mxu0 0.0
    %9508 = vmatprep.subr.mxu0 0.0
    %9509 = vmatpush2.msra.mxu0 0.0
    %9510 = vmatprep.subr.mxu0 0.0
    %9511 = vmatpush2.msra.mxu0 0.0
    %9512 = vmatprep.subr.mxu0 0.0
    %9513 = vmatpush2.msra.mxu0 0.0
    %9514 = vmatprep.subr.mxu0 0.0
    %9515 = vmatpush2.msra.mxu0 0.0
    %9516 = vmatprep.subr.mxu0 0.0
    %9517 = vmatpush2.msra.mxu0 0.0
    %9518 = vmatprep.subr.mxu0 0.0
    %9519 = vmatpush2.msra.mxu0 0.0
    %9520 = vmatprep.subr.mxu0 0.0
    %9521 = vmatpush2.msra.mxu0 0.0
    %9522 = vmatprep.subr.mxu0 0.0
    %9523 = vmatpush2.msra.mxu0 0.0
    %9524 = vmatprep.subr.mxu0 0.0
    %9525 = vmatpush2.msra.mxu0 0.0
    %9526 = vmatprep.subr.mxu0 0.0
    %9527 = vmatpush2.msra.mxu0 0.0
    %9528 = vmatprep.subr.mxu0 0.0
    %9529 = vmatpush2.msra.mxu0 0.0
    %9530 = vmatprep.subr.mxu0 0.0
    %9531 = vmatpush2.msra.mxu0 0.0
    %9532 = vmatprep.subr.mxu0 0.0
    %9533 = vmatpush2.msra.mxu0 0.0
    %9534 = vmatprep.subr.mxu0 0.0
    %9535 = vmatpush2.msra.mxu0 0.0
    %9536 = vmatprep.mubr.f32.mxu0 0.0
    %9537 = vmatmul.mubr.f32.gmra.mxu0 %v9471
    %v9538 = vpop.f32.mrf.mxu0
    %v9539 = vadd.f32 %v87, %v9538
    %v9540 = vpop.f32.mrf.mxu0
    %9541 = vdwg.mxu0
    %v9542 = vmax.f32 %v9539, 0.0
    %v9544 = vsel %vm201, %v9542, 0
    %9546 = vmatprep.subr.mxu0 0.0
    %9547 = vmatpush1.msra.mxu0 0.0
    %9548 = vmatprep.subr.mxu0 0.0
    %9549 = vmatpush1.msra.mxu0 0.0
    %9550 = vmatprep.subr.mxu0 0.0
    %9551 = vmatpush1.msra.mxu0 0.0
    %9552 = vmatprep.subr.mxu0 0.0
    %9553 = vmatpush1.msra.mxu0 0.0
    %9554 = vmatprep.subr.mxu0 0.0
    %9555 = vmatpush1.msra.mxu0 0.0
    %9556 = vmatprep.subr.mxu0 0.0
    %9557 = vmatpush1.msra.mxu0 0.0
    %9558 = vmatprep.subr.mxu0 0.0
    %9559 = vmatpush1.msra.mxu0 0.0
    %9560 = vmatprep.subr.mxu0 0.0
    %9561 = vmatpush1.msra.mxu0 0.0
    %9562 = vmatprep.subr.mxu0 0.0
    %9563 = vmatpush1.msra.mxu0 0.0
    %9564 = vmatprep.subr.mxu0 0.0
    %9565 = vmatpush1.msra.mxu0 0.0
    %9566 = vmatprep.subr.mxu0 0.0
    %9567 = vmatpush1.msra.mxu0 0.0
    %9568 = vmatprep.subr.mxu0 0.0
    %9569 = vmatpush1.msra.mxu0 0.0
    %9570 = vmatprep.subr.mxu0 0.0
    %9571 = vmatpush1.msra.mxu0 %v59
    %9572 = vmatprep.subr.mxu0 0.0
    %9573 = vmatpush1.msra.mxu0 %v58
    %9574 = vmatprep.subr.mxu0 0.0
    %9575 = vmatpush1.msra.mxu0 %v57
    %9576 = vmatprep.subr.mxu0 0.0
    %9577 = vmatpush1.msra.mxu0 %v56
    %9578 = vmatprep.subr.mxu0 0.0
    %9579 = vmatpush2.msra.mxu0 0.0
    %9580 = vmatprep.subr.mxu0 0.0
    %9581 = vmatpush2.msra.mxu0 0.0
    %9582 = vmatprep.subr.mxu0 0.0
    %9583 = vmatpush2.msra.mxu0 0.0
    %9584 = vmatprep.subr.mxu0 0.0
    %9585 = vmatpush2.msra.mxu0 0.0
    %9586 = vmatprep.subr.mxu0 0.0
    %9587 = vmatpush2.msra.mxu0 0.0
    %9588 = vmatprep.subr.mxu0 0.0
    %9589 = vmatpush2.msra.mxu0 0.0
    %9590 = vmatprep.subr.mxu0 0.0
    %9591 = vmatpush2.msra.mxu0 0.0
    %9592 = vmatprep.subr.mxu0 0.0
    %9593 = vmatpush2.msra.mxu0 0.0
    %9594 = vmatprep.subr.mxu0 0.0
    %9595 = vmatpush2.msra.mxu0 0.0
    %9596 = vmatprep.subr.mxu0 0.0
    %9597 = vmatpush2.msra.mxu0 0.0
    %9598 = vmatprep.subr.mxu0 0.0
    %9599 = vmatpush2.msra.mxu0 0.0
    %9600 = vmatprep.subr.mxu0 0.0
    %9601 = vmatpush2.msra.mxu0 0.0
    %9602 = vmatprep.subr.mxu0 0.0
    %9603 = vmatpush2.msra.mxu0 0.0
    %9604 = vmatprep.subr.mxu0 0.0
    %9605 = vmatpush2.msra.mxu0 0.0
    %9606 = vmatprep.subr.mxu0 0.0
    %9607 = vmatpush2.msra.mxu0 0.0
    %9608 = vmatprep.subr.mxu0 0.0
    %9609 = vmatpush2.msra.mxu0 0.0
    %9610 = vmatprep.mubr.f32.mxu0 0.0
    %9611 = vmatmul.mubr.f32.gmra.mxu0 %v9544
    %v9612 = vpop.f32.mrf.mxu0
    %v9613 = vadd.f32 %v91, %v9612
    %v9614 = vpop.f32.mrf.mxu0
    %9615 = vdwg.mxu0
    %v9616 = vmax.f32 %v9613, 0.0
    %v9618 = vsel %vm201, %v9616, 0
    %9620 = vmatprep.subr.mxu0 0.0
    %9621 = vmatpush1.msra.mxu0 0.0
    %9622 = vmatprep.subr.mxu0 0.0
    %9623 = vmatpush1.msra.mxu0 0.0
    %9624 = vmatprep.subr.mxu0 0.0
    %9625 = vmatpush1.msra.mxu0 0.0
    %9626 = vmatprep.subr.mxu0 0.0
    %9627 = vmatpush1.msra.mxu0 0.0
    %9628 = vmatprep.subr.mxu0 0.0
    %9629 = vmatpush1.msra.mxu0 0.0
    %9630 = vmatprep.subr.mxu0 0.0
    %9631 = vmatpush1.msra.mxu0 0.0
    %9632 = vmatprep.subr.mxu0 0.0
    %9633 = vmatpush1.msra.mxu0 0.0
    %9634 = vmatprep.subr.mxu0 0.0
    %9635 = vmatpush1.msra.mxu0 0.0
    %9636 = vmatprep.subr.mxu0 0.0
    %9637 = vmatpush1.msra.mxu0 0.0
    %9638 = vmatprep.subr.mxu0 0.0
    %9639 = vmatpush1.msra.mxu0 0.0
    %9640 = vmatprep.subr.mxu0 0.0
    %9641 = vmatpush1.msra.mxu0 0.0
    %9642 = vmatprep.subr.mxu0 0.0
    %9643 = vmatpush1.msra.mxu0 0.0
    %9644 = vmatprep.subr.mxu0 %v79
    %9645 = vmatpush1.msra.mxu0 %v78
    %9646 = vmatprep.subr.mxu0 %v75
    %9647 = vmatpush1.msra.mxu0 %v74
    %9648 = vmatprep.subr.mxu0 %v71
    %9649 = vmatpush1.msra.mxu0 %v70
    %9650 = vmatprep.subr.mxu0 %v67
    %9651 = vmatpush1.msra.mxu0 %v66
    %9652 = vmatprep.subr.mxu0 0.0
    %9653 = vmatpush2.msra.mxu0 0.0
    %9654 = vmatprep.subr.mxu0 0.0
    %9655 = vmatpush2.msra.mxu0 0.0
    %9656 = vmatprep.subr.mxu0 0.0
    %9657 = vmatpush2.msra.mxu0 0.0
    %9658 = vmatprep.subr.mxu0 0.0
    %9659 = vmatpush2.msra.mxu0 0.0
    %9660 = vmatprep.subr.mxu0 0.0
    %9661 = vmatpush2.msra.mxu0 0.0
    %9662 = vmatprep.subr.mxu0 0.0
    %9663 = vmatpush2.msra.mxu0 0.0
    %9664 = vmatprep.subr.mxu0 0.0
    %9665 = vmatpush2.msra.mxu0 0.0
    %9666 = vmatprep.subr.mxu0 0.0
    %9667 = vmatpush2.msra.mxu0 0.0
    %9668 = vmatprep.subr.mxu0 0.0
    %9669 = vmatpush2.msra.mxu0 0.0
    %9670 = vmatprep.subr.mxu0 0.0
    %9671 = vmatpush2.msra.mxu0 0.0
    %9672 = vmatprep.subr.mxu0 0.0
    %9673 = vmatpush2.msra.mxu0 0.0
    %9674 = vmatprep.subr.mxu0 0.0
    %9675 = vmatpush2.msra.mxu0 0.0
    %9676 = vmatprep.subr.mxu0 0.0
    %9677 = vmatpush2.msra.mxu0 0.0
    %9678 = vmatprep.subr.mxu0 0.0
    %9679 = vmatpush2.msra.mxu0 0.0
    %9680 = vmatprep.subr.mxu0 0.0
    %9681 = vmatpush2.msra.mxu0 0.0
    %9682 = vmatprep.subr.mxu0 0.0
    %9683 = vmatpush2.msra.mxu0 0.0
    %9684 = vmatprep.mubr.f32.mxu0 0.0
    %9685 = vmatmul.mubr.f32.gmra.mxu0 %v9618
    %v9686 = vpop.f32.mrf.mxu0
    %v9687 = vadd.f32 %v96, %v9686
    %v9688 = vpop.f32.mrf.mxu0
    %v9689 = vadd.f32 %v100, %v9688
    %9690 = vdwg.mxu0
    %9691 = vmatprep.subr.mxu0 0.0
    %9692 = vmatpush1.msra.mxu0 0.0
    %9693 = vmatprep.subr.mxu0 0.0
    %9694 = vmatpush1.msra.mxu0 0.0
    %9695 = vmatprep.subr.mxu0 0.0
    %9696 = vmatpush1.msra.mxu0 0.0
    %9697 = vmatprep.subr.mxu0 0.0
    %9698 = vmatpush1.msra.mxu0 0.0
    %9699 = vmatprep.subr.mxu0 0.0
    %9700 = vmatpush1.msra.mxu0 0.0
    %9701 = vmatprep.subr.mxu0 0.0
    %9702 = vmatpush1.msra.mxu0 0.0
    %9703 = vmatprep.subr.mxu0 0.0
    %9704 = vmatpush1.msra.mxu0 0.0
    %9705 = vmatprep.subr.mxu0 0.0
    %9706 = vmatpush1.msra.mxu0 0.0
    %9707 = vmatprep.subr.mxu0 0.0
    %9708 = vmatpush1.msra.mxu0 0.0
    %9709 = vmatprep.subr.mxu0 0.0
    %9710 = vmatpush1.msra.mxu0 0.0
    %9711 = vmatprep.subr.mxu0 0.0
    %9712 = vmatpush1.msra.mxu0 0.0
    %9713 = vmatprep.subr.mxu0 0.0
    %9714 = vmatpush1.msra.mxu0 0.0
    %9715 = vmatprep.subr.mxu0 %v81
    %9716 = vmatpush1.msra.mxu0 %v80
    %9717 = vmatprep.subr.mxu0 %v77
    %9718 = vmatpush1.msra.mxu0 %v76
    %9719 = vmatprep.subr.mxu0 %v73
    %9720 = vmatpush1.msra.mxu0 %v72
    %9721 = vmatprep.subr.mxu0 %v69
    %9722 = vmatpush1.msra.mxu0 %v68
    %9723 = vmatprep.subr.mxu0 0.0
    %9724 = vmatpush2.msra.mxu0 0.0
    %9725 = vmatprep.subr.mxu0 0.0
    %9726 = vmatpush2.msra.mxu0 0.0
    %9727 = vmatprep.subr.mxu0 0.0
    %9728 = vmatpush2.msra.mxu0 0.0
    %9729 = vmatprep.subr.mxu0 0.0
    %9730 = vmatpush2.msra.mxu0 0.0
    %9731 = vmatprep.subr.mxu0 0.0
    %9732 = vmatpush2.msra.mxu0 0.0
    %9733 = vmatprep.subr.mxu0 0.0
    %9734 = vmatpush2.msra.mxu0 0.0
    %9735 = vmatprep.subr.mxu0 0.0
    %9736 = vmatpush2.msra.mxu0 0.0
    %9737 = vmatprep.subr.mxu0 0.0
    %9738 = vmatpush2.msra.mxu0 0.0
    %9739 = vmatprep.subr.mxu0 0.0
    %9740 = vmatpush2.msra.mxu0 0.0
    %9741 = vmatprep.subr.mxu0 0.0
    %9742 = vmatpush2.msra.mxu0 0.0
    %9743 = vmatprep.subr.mxu0 0.0
    %9744 = vmatpush2.msra.mxu0 0.0
    %9745 = vmatprep.subr.mxu0 0.0
    %9746 = vmatpush2.msra.mxu0 0.0
    %9747 = vmatprep.subr.mxu0 0.0
    %9748 = vmatpush2.msra.mxu0 0.0
    %9749 = vmatprep.subr.mxu0 0.0
    %9750 = vmatpush2.msra.mxu0 0.0
    %9751 = vmatprep.subr.mxu0 0.0
    %9752 = vmatpush2.msra.mxu0 0.0
    %9753 = vmatprep.subr.mxu0 0.0
    %9754 = vmatpush2.msra.mxu0 0.0
    %9755 = vmatprep.mubr.f32.mxu0 0.0
    %9756 = vmatmul.mubr.f32.gmra.mxu0 %v9618
    %v9757 = vpop.f32.mrf.mxu0
    %v9758 = vadd.f32 %v104, %v9757
    %v9759 = vpop.f32.mrf.mxu0
    %v9760 = vadd.f32 %v108, %v9759
    %9761 = vdwg.mxu0
    %v9762 = vtanh.pop %v9687
    %v9763 = vtanh.pop %v9689
    %v9764 = vtanh.pop %v9758
    %v9765 = vtanh.pop %v9760
    %v9766 = vmul.f32 %v9762, %v9446
    %v9767 = vmul.f32 %v9763, %v9454
    %v9768 = vmul.f32 %v9764, %v9453
    %v9769 = vmul.f32 %v9765, %v9455
    %v9770 = vmul.f32 %v9471, -0.001
    %v9771 = vmul.f32 %v9770, %v9143
    %v9772 = vadd.f32 %v9771, %v9766
    %v9773 = vadd.f32 %v9772, %v9767
    %v9774 = vadd.f32 %v9773, %v9768
    %v9775 = vadd.f32 %v9774, %v9769
    %v9776 = vsub.f32 %v9775, %v9470
    %v9777 = vadd.f32 %v9138, %v9776
    %9778 = vmatprep.subr.mxu0 0.0
    %9779 = vmatpush1.msra.mxu0 %v54
    %9780 = vmatprep.subr.mxu0 0.0
    %9781 = vmatpush1.msra.mxu0 %v53
    %9782 = vmatprep.subr.mxu0 0.0
    %9783 = vmatpush1.msra.mxu0 %v52
    %9784 = vmatprep.subr.mxu0 0.0
    %9785 = vmatpush1.msra.mxu0 %v51
    %9786 = vmatprep.subr.mxu0 0.0
    %9787 = vmatpush1.msra.mxu0 %v50
    %9788 = vmatprep.subr.mxu0 0.0
    %9789 = vmatpush1.msra.mxu0 %v49
    %9790 = vmatprep.subr.mxu0 0.0
    %9791 = vmatpush1.msra.mxu0 %v48
    %9792 = vmatprep.subr.mxu0 0.0
    %9793 = vmatpush1.msra.mxu0 %v47
    %9794 = vmatprep.subr.mxu0 0.0
    %9795 = vmatpush1.msra.mxu0 %v46
    %9796 = vmatprep.subr.mxu0 0.0
    %9797 = vmatpush1.msra.mxu0 %v45
    %9798 = vmatprep.subr.mxu0 0.0
    %9799 = vmatpush1.msra.mxu0 %v44
    %9800 = vmatprep.subr.mxu0 0.0
    %9801 = vmatpush1.msra.mxu0 %v43
    %9802 = vmatprep.subr.mxu0 0.0
    %9803 = vmatpush1.msra.mxu0 %v42
    %9804 = vmatprep.subr.mxu0 0.0
    %9805 = vmatpush1.msra.mxu0 %v41
    %9806 = vmatprep.subr.mxu0 0.0
    %9807 = vmatpush1.msra.mxu0 %v40
    %9808 = vmatprep.subr.mxu0 0.0
    %9809 = vmatpush1.msra.mxu0 %v39
    %9810 = vmatprep.subr.mxu0 0.0
    %9811 = vmatpush2.msra.mxu0 0.0
    %9812 = vmatprep.subr.mxu0 0.0
    %9813 = vmatpush2.msra.mxu0 0.0
    %9814 = vmatprep.subr.mxu0 0.0
    %9815 = vmatpush2.msra.mxu0 0.0
    %9816 = vmatprep.subr.mxu0 0.0
    %9817 = vmatpush2.msra.mxu0 0.0
    %9818 = vmatprep.subr.mxu0 0.0
    %9819 = vmatpush2.msra.mxu0 0.0
    %9820 = vmatprep.subr.mxu0 0.0
    %9821 = vmatpush2.msra.mxu0 0.0
    %9822 = vmatprep.subr.mxu0 0.0
    %9823 = vmatpush2.msra.mxu0 0.0
    %9824 = vmatprep.subr.mxu0 0.0
    %9825 = vmatpush2.msra.mxu0 0.0
    %9826 = vmatprep.subr.mxu0 0.0
    %9827 = vmatpush2.msra.mxu0 0.0
    %9828 = vmatprep.subr.mxu0 0.0
    %9829 = vmatpush2.msra.mxu0 0.0
    %9830 = vmatprep.subr.mxu0 0.0
    %9831 = vmatpush2.msra.mxu0 0.0
    %9832 = vmatprep.subr.mxu0 0.0
    %9833 = vmatpush2.msra.mxu0 0.0
    %9834 = vmatprep.subr.mxu0 0.0
    %9835 = vmatpush2.msra.mxu0 0.0
    %9836 = vmatprep.subr.mxu0 0.0
    %9837 = vmatpush2.msra.mxu0 0.0
    %9838 = vmatprep.subr.mxu0 0.0
    %9839 = vmatpush2.msra.mxu0 0.0
    %9840 = vmatprep.subr.mxu0 0.0
    %9841 = vmatpush2.msra.mxu0 0.0
    %9842 = vmatprep.mubr.f32.mxu0 0.0
    %9843 = vmatmul.mubr.f32.gmra.mxu0 %v9777
    %v9844 = vpop.f32.mrf.mxu0
    %v9845 = vadd.f32 %v87, %v9844
    %v9846 = vpop.f32.mrf.mxu0
    %9847 = vdwg.mxu0
    %v9848 = vmax.f32 %v9845, 0.0
    %v9850 = vsel %vm201, %v9848, 0
    %9852 = vmatprep.subr.mxu0 0.0
    %9853 = vmatpush1.msra.mxu0 0.0
    %9854 = vmatprep.subr.mxu0 0.0
    %9855 = vmatpush1.msra.mxu0 0.0
    %9856 = vmatprep.subr.mxu0 0.0
    %9857 = vmatpush1.msra.mxu0 0.0
    %9858 = vmatprep.subr.mxu0 0.0
    %9859 = vmatpush1.msra.mxu0 0.0
    %9860 = vmatprep.subr.mxu0 0.0
    %9861 = vmatpush1.msra.mxu0 0.0
    %9862 = vmatprep.subr.mxu0 0.0
    %9863 = vmatpush1.msra.mxu0 0.0
    %9864 = vmatprep.subr.mxu0 0.0
    %9865 = vmatpush1.msra.mxu0 0.0
    %9866 = vmatprep.subr.mxu0 0.0
    %9867 = vmatpush1.msra.mxu0 0.0
    %9868 = vmatprep.subr.mxu0 0.0
    %9869 = vmatpush1.msra.mxu0 0.0
    %9870 = vmatprep.subr.mxu0 0.0
    %9871 = vmatpush1.msra.mxu0 0.0
    %9872 = vmatprep.subr.mxu0 0.0
    %9873 = vmatpush1.msra.mxu0 0.0
    %9874 = vmatprep.subr.mxu0 0.0
    %9875 = vmatpush1.msra.mxu0 0.0
    %9876 = vmatprep.subr.mxu0 0.0
    %9877 = vmatpush1.msra.mxu0 %v59
    %9878 = vmatprep.subr.mxu0 0.0
    %9879 = vmatpush1.msra.mxu0 %v58
    %9880 = vmatprep.subr.mxu0 0.0
    %9881 = vmatpush1.msra.mxu0 %v57
    %9882 = vmatprep.subr.mxu0 0.0
    %9883 = vmatpush1.msra.mxu0 %v56
    %9884 = vmatprep.subr.mxu0 0.0
    %9885 = vmatpush2.msra.mxu0 0.0
    %9886 = vmatprep.subr.mxu0 0.0
    %9887 = vmatpush2.msra.mxu0 0.0
    %9888 = vmatprep.subr.mxu0 0.0
    %9889 = vmatpush2.msra.mxu0 0.0
    %9890 = vmatprep.subr.mxu0 0.0
    %9891 = vmatpush2.msra.mxu0 0.0
    %9892 = vmatprep.subr.mxu0 0.0
    %9893 = vmatpush2.msra.mxu0 0.0
    %9894 = vmatprep.subr.mxu0 0.0
    %9895 = vmatpush2.msra.mxu0 0.0
    %9896 = vmatprep.subr.mxu0 0.0
    %9897 = vmatpush2.msra.mxu0 0.0
    %9898 = vmatprep.subr.mxu0 0.0
    %9899 = vmatpush2.msra.mxu0 0.0
    %9900 = vmatprep.subr.mxu0 0.0
    %9901 = vmatpush2.msra.mxu0 0.0
    %9902 = vmatprep.subr.mxu0 0.0
    %9903 = vmatpush2.msra.mxu0 0.0
    %9904 = vmatprep.subr.mxu0 0.0
    %9905 = vmatpush2.msra.mxu0 0.0
    %9906 = vmatprep.subr.mxu0 0.0
    %9907 = vmatpush2.msra.mxu0 0.0
    %9908 = vmatprep.subr.mxu0 0.0
    %9909 = vmatpush2.msra.mxu0 0.0
    %9910 = vmatprep.subr.mxu0 0.0
    %9911 = vmatpush2.msra.mxu0 0.0
    %9912 = vmatprep.subr.mxu0 0.0
    %9913 = vmatpush2.msra.mxu0 0.0
    %9914 = vmatprep.subr.mxu0 0.0
    %9915 = vmatpush2.msra.mxu0 0.0
    %9916 = vmatprep.mubr.f32.mxu0 0.0
    %9917 = vmatmul.mubr.f32.gmra.mxu0 %v9850
    %v9918 = vpop.f32.mrf.mxu0
    %v9919 = vadd.f32 %v91, %v9918
    %v9920 = vpop.f32.mrf.mxu0
    %9921 = vdwg.mxu0
    %v9922 = vmax.f32 %v9919, 0.0
    %v9924 = vsel %vm201, %v9922, 0
    %9926 = vmatprep.subr.mxu0 0.0
    %9927 = vmatpush1.msra.mxu0 0.0
    %9928 = vmatprep.subr.mxu0 0.0
    %9929 = vmatpush1.msra.mxu0 0.0
    %9930 = vmatprep.subr.mxu0 0.0
    %9931 = vmatpush1.msra.mxu0 0.0
    %9932 = vmatprep.subr.mxu0 0.0
    %9933 = vmatpush1.msra.mxu0 0.0
    %9934 = vmatprep.subr.mxu0 0.0
    %9935 = vmatpush1.msra.mxu0 0.0
    %9936 = vmatprep.subr.mxu0 0.0
    %9937 = vmatpush1.msra.mxu0 0.0
    %9938 = vmatprep.subr.mxu0 0.0
    %9939 = vmatpush1.msra.mxu0 0.0
    %9940 = vmatprep.subr.mxu0 0.0
    %9941 = vmatpush1.msra.mxu0 0.0
    %9942 = vmatprep.subr.mxu0 0.0
    %9943 = vmatpush1.msra.mxu0 0.0
    %9944 = vmatprep.subr.mxu0 0.0
    %9945 = vmatpush1.msra.mxu0 0.0
    %9946 = vmatprep.subr.mxu0 0.0
    %9947 = vmatpush1.msra.mxu0 0.0
    %9948 = vmatprep.subr.mxu0 0.0
    %9949 = vmatpush1.msra.mxu0 0.0
    %9950 = vmatprep.subr.mxu0 %v79
    %9951 = vmatpush1.msra.mxu0 %v78
    %9952 = vmatprep.subr.mxu0 %v75
    %9953 = vmatpush1.msra.mxu0 %v74
    %9954 = vmatprep.subr.mxu0 %v71
    %9955 = vmatpush1.msra.mxu0 %v70
    %9956 = vmatprep.subr.mxu0 %v67
    %9957 = vmatpush1.msra.mxu0 %v66
    %9958 = vmatprep.subr.mxu0 0.0
    %9959 = vmatpush2.msra.mxu0 0.0
    %9960 = vmatprep.subr.mxu0 0.0
    %9961 = vmatpush2.msra.mxu0 0.0
    %9962 = vmatprep.subr.mxu0 0.0
    %9963 = vmatpush2.msra.mxu0 0.0
    %9964 = vmatprep.subr.mxu0 0.0
    %9965 = vmatpush2.msra.mxu0 0.0
    %9966 = vmatprep.subr.mxu0 0.0
    %9967 = vmatpush2.msra.mxu0 0.0
    %9968 = vmatprep.subr.mxu0 0.0
    %9969 = vmatpush2.msra.mxu0 0.0
    %9970 = vmatprep.subr.mxu0 0.0
    %9971 = vmatpush2.msra.mxu0 0.0
    %9972 = vmatprep.subr.mxu0 0.0
    %9973 = vmatpush2.msra.mxu0 0.0
    %9974 = vmatprep.subr.mxu0 0.0
    %9975 = vmatpush2.msra.mxu0 0.0
    %9976 = vmatprep.subr.mxu0 0.0
    %9977 = vmatpush2.msra.mxu0 0.0
    %9978 = vmatprep.subr.mxu0 0.0
    %9979 = vmatpush2.msra.mxu0 0.0
    %9980 = vmatprep.subr.mxu0 0.0
    %9981 = vmatpush2.msra.mxu0 0.0
    %9982 = vmatprep.subr.mxu0 0.0
    %9983 = vmatpush2.msra.mxu0 0.0
    %9984 = vmatprep.subr.mxu0 0.0
    %9985 = vmatpush2.msra.mxu0 0.0
    %9986 = vmatprep.subr.mxu0 0.0
    %9987 = vmatpush2.msra.mxu0 0.0
    %9988 = vmatprep.subr.mxu0 0.0
    %9989 = vmatpush2.msra.mxu0 0.0
    %9990 = vmatprep.mubr.f32.mxu0 0.0
    %9991 = vmatmul.mubr.f32.gmra.mxu0 %v9924
    %v9992 = vpop.f32.mrf.mxu0
    %v9993 = vadd.f32 %v96, %v9992
    %v9994 = vpop.f32.mrf.mxu0
    %v9995 = vadd.f32 %v100, %v9994
    %9996 = vdwg.mxu0
    %9997 = vmatprep.subr.mxu0 0.0
    %9998 = vmatpush1.msra.mxu0 0.0
    %9999 = vmatprep.subr.mxu0 0.0
    %10000 = vmatpush1.msra.mxu0 0.0
    %10001 = vmatprep.subr.mxu0 0.0
    %10002 = vmatpush1.msra.mxu0 0.0
    %10003 = vmatprep.subr.mxu0 0.0
    %10004 = vmatpush1.msra.mxu0 0.0
    %10005 = vmatprep.subr.mxu0 0.0
    %10006 = vmatpush1.msra.mxu0 0.0
    %10007 = vmatprep.subr.mxu0 0.0
    %10008 = vmatpush1.msra.mxu0 0.0
    %10009 = vmatprep.subr.mxu0 0.0
    %10010 = vmatpush1.msra.mxu0 0.0
    %10011 = vmatprep.subr.mxu0 0.0
    %10012 = vmatpush1.msra.mxu0 0.0
    %10013 = vmatprep.subr.mxu0 0.0
    %10014 = vmatpush1.msra.mxu0 0.0
    %10015 = vmatprep.subr.mxu0 0.0
    %10016 = vmatpush1.msra.mxu0 0.0
    %10017 = vmatprep.subr.mxu0 0.0
    %10018 = vmatpush1.msra.mxu0 0.0
    %10019 = vmatprep.subr.mxu0 0.0
    %10020 = vmatpush1.msra.mxu0 0.0
    %10021 = vmatprep.subr.mxu0 %v81
    %10022 = vmatpush1.msra.mxu0 %v80
    %10023 = vmatprep.subr.mxu0 %v77
    %10024 = vmatpush1.msra.mxu0 %v76
    %10025 = vmatprep.subr.mxu0 %v73
    %10026 = vmatpush1.msra.mxu0 %v72
    %10027 = vmatprep.subr.mxu0 %v69
    %10028 = vmatpush1.msra.mxu0 %v68
    %10029 = vmatprep.subr.mxu0 0.0
    %10030 = vmatpush2.msra.mxu0 0.0
    %10031 = vmatprep.subr.mxu0 0.0
    %10032 = vmatpush2.msra.mxu0 0.0
    %10033 = vmatprep.subr.mxu0 0.0
    %10034 = vmatpush2.msra.mxu0 0.0
    %10035 = vmatprep.subr.mxu0 0.0
    %10036 = vmatpush2.msra.mxu0 0.0
    %10037 = vmatprep.subr.mxu0 0.0
    %10038 = vmatpush2.msra.mxu0 0.0
    %10039 = vmatprep.subr.mxu0 0.0
    %10040 = vmatpush2.msra.mxu0 0.0
    %10041 = vmatprep.subr.mxu0 0.0
    %10042 = vmatpush2.msra.mxu0 0.0
    %10043 = vmatprep.subr.mxu0 0.0
    %10044 = vmatpush2.msra.mxu0 0.0
    %10045 = vmatprep.subr.mxu0 0.0
    %10046 = vmatpush2.msra.mxu0 0.0
    %10047 = vmatprep.subr.mxu0 0.0
    %10048 = vmatpush2.msra.mxu0 0.0
    %10049 = vmatprep.subr.mxu0 0.0
    %10050 = vmatpush2.msra.mxu0 0.0
    %10051 = vmatprep.subr.mxu0 0.0
    %10052 = vmatpush2.msra.mxu0 0.0
    %10053 = vmatprep.subr.mxu0 0.0
    %10054 = vmatpush2.msra.mxu0 0.0
    %10055 = vmatprep.subr.mxu0 0.0
    %10056 = vmatpush2.msra.mxu0 0.0
    %10057 = vmatprep.subr.mxu0 0.0
    %10058 = vmatpush2.msra.mxu0 0.0
    %10059 = vmatprep.subr.mxu0 0.0
    %10060 = vmatpush2.msra.mxu0 0.0
    %10061 = vmatprep.mubr.f32.mxu0 0.0
    %10062 = vmatmul.mubr.f32.gmra.mxu0 %v9924
    %v10063 = vpop.f32.mrf.mxu0
    %v10064 = vadd.f32 %v104, %v10063
    %v10065 = vpop.f32.mrf.mxu0
    %v10066 = vadd.f32 %v108, %v10065
    %10067 = vdwg.mxu0
    %v10068 = vtanh.pop %v9993
    %v10069 = vtanh.pop %v9995
    %v10070 = vtanh.pop %v10064
    %v10071 = vtanh.pop %v10066
    %v10072 = vmul.f32 %v10068, %v9446
    %v10073 = vmul.f32 %v10069, %v9454
    %v10074 = vmul.f32 %v10070, %v9453
    %v10075 = vmul.f32 %v10071, %v9455
    %v10076 = vmul.f32 %v9777, -0.001
    %v10077 = vmul.f32 %v10076, %v9143
    %v10078 = vadd.f32 %v10077, %v10072
    %v10079 = vadd.f32 %v10078, %v10073
    %v10080 = vadd.f32 %v10079, %v10074
    %v10081 = vadd.f32 %v10080, %v10075
    %v10082 = vsub.f32 %v9469, %v9775
    %v10083 = vadd.f32 %v10082, %v10081
    %v10084 = vadd.f32 %v9138, %v10083
    %10085 = vmatprep.subr.mxu0 0.0
    %10086 = vmatpush1.msra.mxu0 %v54
    %10087 = vmatprep.subr.mxu0 0.0
    %10088 = vmatpush1.msra.mxu0 %v53
    %10089 = vmatprep.subr.mxu0 0.0
    %10090 = vmatpush1.msra.mxu0 %v52
    %10091 = vmatprep.subr.mxu0 0.0
    %10092 = vmatpush1.msra.mxu0 %v51
    %10093 = vmatprep.subr.mxu0 0.0
    %10094 = vmatpush1.msra.mxu0 %v50
    %10095 = vmatprep.subr.mxu0 0.0
    %10096 = vmatpush1.msra.mxu0 %v49
    %10097 = vmatprep.subr.mxu0 0.0
    %10098 = vmatpush1.msra.mxu0 %v48
    %10099 = vmatprep.subr.mxu0 0.0
    %10100 = vmatpush1.msra.mxu0 %v47
    %10101 = vmatprep.subr.mxu0 0.0
    %10102 = vmatpush1.msra.mxu0 %v46
    %10103 = vmatprep.subr.mxu0 0.0
    %10104 = vmatpush1.msra.mxu0 %v45
    %10105 = vmatprep.subr.mxu0 0.0
    %10106 = vmatpush1.msra.mxu0 %v44
    %10107 = vmatprep.subr.mxu0 0.0
    %10108 = vmatpush1.msra.mxu0 %v43
    %10109 = vmatprep.subr.mxu0 0.0
    %10110 = vmatpush1.msra.mxu0 %v42
    %10111 = vmatprep.subr.mxu0 0.0
    %10112 = vmatpush1.msra.mxu0 %v41
    %10113 = vmatprep.subr.mxu0 0.0
    %10114 = vmatpush1.msra.mxu0 %v40
    %10115 = vmatprep.subr.mxu0 0.0
    %10116 = vmatpush1.msra.mxu0 %v39
    %10117 = vmatprep.subr.mxu0 0.0
    %10118 = vmatpush2.msra.mxu0 0.0
    %10119 = vmatprep.subr.mxu0 0.0
    %10120 = vmatpush2.msra.mxu0 0.0
    %10121 = vmatprep.subr.mxu0 0.0
    %10122 = vmatpush2.msra.mxu0 0.0
    %10123 = vmatprep.subr.mxu0 0.0
    %10124 = vmatpush2.msra.mxu0 0.0
    %10125 = vmatprep.subr.mxu0 0.0
    %10126 = vmatpush2.msra.mxu0 0.0
    %10127 = vmatprep.subr.mxu0 0.0
    %10128 = vmatpush2.msra.mxu0 0.0
    %10129 = vmatprep.subr.mxu0 0.0
    %10130 = vmatpush2.msra.mxu0 0.0
    %10131 = vmatprep.subr.mxu0 0.0
    %10132 = vmatpush2.msra.mxu0 0.0
    %10133 = vmatprep.subr.mxu0 0.0
    %10134 = vmatpush2.msra.mxu0 0.0
    %10135 = vmatprep.subr.mxu0 0.0
    %10136 = vmatpush2.msra.mxu0 0.0
    %10137 = vmatprep.subr.mxu0 0.0
    %10138 = vmatpush2.msra.mxu0 0.0
    %10139 = vmatprep.subr.mxu0 0.0
    %10140 = vmatpush2.msra.mxu0 0.0
    %10141 = vmatprep.subr.mxu0 0.0
    %10142 = vmatpush2.msra.mxu0 0.0
    %10143 = vmatprep.subr.mxu0 0.0
    %10144 = vmatpush2.msra.mxu0 0.0
    %10145 = vmatprep.subr.mxu0 0.0
    %10146 = vmatpush2.msra.mxu0 0.0
    %10147 = vmatprep.subr.mxu0 0.0
    %10148 = vmatpush2.msra.mxu0 0.0
    %10149 = vmatprep.mubr.f32.mxu0 0.0
    %10150 = vmatmul.mubr.f32.gmra.mxu0 %v10084
    %v10151 = vpop.f32.mrf.mxu0
    %v10152 = vadd.f32 %v87, %v10151
    %v10153 = vpop.f32.mrf.mxu0
    %10154 = vdwg.mxu0
    %v10155 = vmax.f32 %v10152, 0.0
    %v10157 = vsel %vm201, %v10155, 0
    %10159 = vmatprep.subr.mxu0 0.0
    %10160 = vmatpush1.msra.mxu0 0.0
    %10161 = vmatprep.subr.mxu0 0.0
    %10162 = vmatpush1.msra.mxu0 0.0
    %10163 = vmatprep.subr.mxu0 0.0
    %10164 = vmatpush1.msra.mxu0 0.0
    %10165 = vmatprep.subr.mxu0 0.0
    %10166 = vmatpush1.msra.mxu0 0.0
    %10167 = vmatprep.subr.mxu0 0.0
    %10168 = vmatpush1.msra.mxu0 0.0
    %10169 = vmatprep.subr.mxu0 0.0
    %10170 = vmatpush1.msra.mxu0 0.0
    %10171 = vmatprep.subr.mxu0 0.0
    %10172 = vmatpush1.msra.mxu0 0.0
    %10173 = vmatprep.subr.mxu0 0.0
    %10174 = vmatpush1.msra.mxu0 0.0
    %10175 = vmatprep.subr.mxu0 0.0
    %10176 = vmatpush1.msra.mxu0 0.0
    %10177 = vmatprep.subr.mxu0 0.0
    %10178 = vmatpush1.msra.mxu0 0.0
    %10179 = vmatprep.subr.mxu0 0.0
    %10180 = vmatpush1.msra.mxu0 0.0
    %10181 = vmatprep.subr.mxu0 0.0
    %10182 = vmatpush1.msra.mxu0 0.0
    %10183 = vmatprep.subr.mxu0 0.0
    %10184 = vmatpush1.msra.mxu0 %v59
    %10185 = vmatprep.subr.mxu0 0.0
    %10186 = vmatpush1.msra.mxu0 %v58
    %10187 = vmatprep.subr.mxu0 0.0
    %10188 = vmatpush1.msra.mxu0 %v57
    %10189 = vmatprep.subr.mxu0 0.0
    %10190 = vmatpush1.msra.mxu0 %v56
    %10191 = vmatprep.subr.mxu0 0.0
    %10192 = vmatpush2.msra.mxu0 0.0
    %10193 = vmatprep.subr.mxu0 0.0
    %10194 = vmatpush2.msra.mxu0 0.0
    %10195 = vmatprep.subr.mxu0 0.0
    %10196 = vmatpush2.msra.mxu0 0.0
    %10197 = vmatprep.subr.mxu0 0.0
    %10198 = vmatpush2.msra.mxu0 0.0
    %10199 = vmatprep.subr.mxu0 0.0
    %10200 = vmatpush2.msra.mxu0 0.0
    %10201 = vmatprep.subr.mxu0 0.0
    %10202 = vmatpush2.msra.mxu0 0.0
    %10203 = vmatprep.subr.mxu0 0.0
    %10204 = vmatpush2.msra.mxu0 0.0
    %10205 = vmatprep.subr.mxu0 0.0
    %10206 = vmatpush2.msra.mxu0 0.0
    %10207 = vmatprep.subr.mxu0 0.0
    %10208 = vmatpush2.msra.mxu0 0.0
    %10209 = vmatprep.subr.mxu0 0.0
    %10210 = vmatpush2.msra.mxu0 0.0
    %10211 = vmatprep.subr.mxu0 0.0
    %10212 = vmatpush2.msra.mxu0 0.0
    %10213 = vmatprep.subr.mxu0 0.0
    %10214 = vmatpush2.msra.mxu0 0.0
    %10215 = vmatprep.subr.mxu0 0.0
    %10216 = vmatpush2.msra.mxu0 0.0
    %10217 = vmatprep.subr.mxu0 0.0
    %10218 = vmatpush2.msra.mxu0 0.0
    %10219 = vmatprep.subr.mxu0 0.0
    %10220 = vmatpush2.msra.mxu0 0.0
    %10221 = vmatprep.subr.mxu0 0.0
    %10222 = vmatpush2.msra.mxu0 0.0
    %10223 = vmatprep.mubr.f32.mxu0 0.0
    %10224 = vmatmul.mubr.f32.gmra.mxu0 %v10157
    %v10225 = vpop.f32.mrf.mxu0
    %v10226 = vadd.f32 %v91, %v10225
    %v10227 = vpop.f32.mrf.mxu0
    %10228 = vdwg.mxu0
    %v10229 = vmax.f32 %v10226, 0.0
    %v10231 = vsel %vm201, %v10229, 0
    %10233 = vmatprep.subr.mxu0 0.0
    %10234 = vmatpush1.msra.mxu0 0.0
    %10235 = vmatprep.subr.mxu0 0.0
    %10236 = vmatpush1.msra.mxu0 0.0
    %10237 = vmatprep.subr.mxu0 0.0
    %10238 = vmatpush1.msra.mxu0 0.0
    %10239 = vmatprep.subr.mxu0 0.0
    %10240 = vmatpush1.msra.mxu0 0.0
    %10241 = vmatprep.subr.mxu0 0.0
    %10242 = vmatpush1.msra.mxu0 0.0
    %10243 = vmatprep.subr.mxu0 0.0
    %10244 = vmatpush1.msra.mxu0 0.0
    %10245 = vmatprep.subr.mxu0 0.0
    %10246 = vmatpush1.msra.mxu0 0.0
    %10247 = vmatprep.subr.mxu0 0.0
    %10248 = vmatpush1.msra.mxu0 0.0
    %10249 = vmatprep.subr.mxu0 0.0
    %10250 = vmatpush1.msra.mxu0 0.0
    %10251 = vmatprep.subr.mxu0 0.0
    %10252 = vmatpush1.msra.mxu0 0.0
    %10253 = vmatprep.subr.mxu0 0.0
    %10254 = vmatpush1.msra.mxu0 0.0
    %10255 = vmatprep.subr.mxu0 0.0
    %10256 = vmatpush1.msra.mxu0 0.0
    %10257 = vmatprep.subr.mxu0 %v79
    %10258 = vmatpush1.msra.mxu0 %v78
    %10259 = vmatprep.subr.mxu0 %v75
    %10260 = vmatpush1.msra.mxu0 %v74
    %10261 = vmatprep.subr.mxu0 %v71
    %10262 = vmatpush1.msra.mxu0 %v70
    %10263 = vmatprep.subr.mxu0 %v67
    %10264 = vmatpush1.msra.mxu0 %v66
    %10265 = vmatprep.subr.mxu0 0.0
    %10266 = vmatpush2.msra.mxu0 0.0
    %10267 = vmatprep.subr.mxu0 0.0
    %10268 = vmatpush2.msra.mxu0 0.0
    %10269 = vmatprep.subr.mxu0 0.0
    %10270 = vmatpush2.msra.mxu0 0.0
    %10271 = vmatprep.subr.mxu0 0.0
    %10272 = vmatpush2.msra.mxu0 0.0
    %10273 = vmatprep.subr.mxu0 0.0
    %10274 = vmatpush2.msra.mxu0 0.0
    %10275 = vmatprep.subr.mxu0 0.0
    %10276 = vmatpush2.msra.mxu0 0.0
    %10277 = vmatprep.subr.mxu0 0.0
    %10278 = vmatpush2.msra.mxu0 0.0
    %10279 = vmatprep.subr.mxu0 0.0
    %10280 = vmatpush2.msra.mxu0 0.0
    %10281 = vmatprep.subr.mxu0 0.0
    %10282 = vmatpush2.msra.mxu0 0.0
    %10283 = vmatprep.subr.mxu0 0.0
    %10284 = vmatpush2.msra.mxu0 0.0
    %10285 = vmatprep.subr.mxu0 0.0
    %10286 = vmatpush2.msra.mxu0 0.0
    %10287 = vmatprep.subr.mxu0 0.0
    %10288 = vmatpush2.msra.mxu0 0.0
    %10289 = vmatprep.subr.mxu0 0.0
    %10290 = vmatpush2.msra.mxu0 0.0
    %10291 = vmatprep.subr.mxu0 0.0
    %10292 = vmatpush2.msra.mxu0 0.0
    %10293 = vmatprep.subr.mxu0 0.0
    %10294 = vmatpush2.msra.mxu0 0.0
    %10295 = vmatprep.subr.mxu0 0.0
    %10296 = vmatpush2.msra.mxu0 0.0
    %10297 = vmatprep.mubr.f32.mxu0 0.0
    %10298 = vmatmul.mubr.f32.gmra.mxu0 %v10231
    %v10299 = vpop.f32.mrf.mxu0
    %v10300 = vadd.f32 %v96, %v10299
    %v10301 = vpop.f32.mrf.mxu0
    %v10302 = vadd.f32 %v100, %v10301
    %10303 = vdwg.mxu0
    %10304 = vmatprep.subr.mxu0 0.0
    %10305 = vmatpush1.msra.mxu0 0.0
    %10306 = vmatprep.subr.mxu0 0.0
    %10307 = vmatpush1.msra.mxu0 0.0
    %10308 = vmatprep.subr.mxu0 0.0
    %10309 = vmatpush1.msra.mxu0 0.0
    %10310 = vmatprep.subr.mxu0 0.0
    %10311 = vmatpush1.msra.mxu0 0.0
    %10312 = vmatprep.subr.mxu0 0.0
    %10313 = vmatpush1.msra.mxu0 0.0
    %10314 = vmatprep.subr.mxu0 0.0
    %10315 = vmatpush1.msra.mxu0 0.0
    %10316 = vmatprep.subr.mxu0 0.0
    %10317 = vmatpush1.msra.mxu0 0.0
    %10318 = vmatprep.subr.mxu0 0.0
    %10319 = vmatpush1.msra.mxu0 0.0
    %10320 = vmatprep.subr.mxu0 0.0
    %10321 = vmatpush1.msra.mxu0 0.0
    %10322 = vmatprep.subr.mxu0 0.0
    %10323 = vmatpush1.msra.mxu0 0.0
    %10324 = vmatprep.subr.mxu0 0.0
    %10325 = vmatpush1.msra.mxu0 0.0
    %10326 = vmatprep.subr.mxu0 0.0
    %10327 = vmatpush1.msra.mxu0 0.0
    %10328 = vmatprep.subr.mxu0 %v81
    %10329 = vmatpush1.msra.mxu0 %v80
    %10330 = vmatprep.subr.mxu0 %v77
    %10331 = vmatpush1.msra.mxu0 %v76
    %10332 = vmatprep.subr.mxu0 %v73
    %10333 = vmatpush1.msra.mxu0 %v72
    %10334 = vmatprep.subr.mxu0 %v69
    %10335 = vmatpush1.msra.mxu0 %v68
    %10336 = vmatprep.subr.mxu0 0.0
    %10337 = vmatpush2.msra.mxu0 0.0
    %10338 = vmatprep.subr.mxu0 0.0
    %10339 = vmatpush2.msra.mxu0 0.0
    %10340 = vmatprep.subr.mxu0 0.0
    %10341 = vmatpush2.msra.mxu0 0.0
    %10342 = vmatprep.subr.mxu0 0.0
    %10343 = vmatpush2.msra.mxu0 0.0
    %10344 = vmatprep.subr.mxu0 0.0
    %10345 = vmatpush2.msra.mxu0 0.0
    %10346 = vmatprep.subr.mxu0 0.0
    %10347 = vmatpush2.msra.mxu0 0.0
    %10348 = vmatprep.subr.mxu0 0.0
    %10349 = vmatpush2.msra.mxu0 0.0
    %10350 = vmatprep.subr.mxu0 0.0
    %10351 = vmatpush2.msra.mxu0 0.0
    %10352 = vmatprep.subr.mxu0 0.0
    %10353 = vmatpush2.msra.mxu0 0.0
    %10354 = vmatprep.subr.mxu0 0.0
    %10355 = vmatpush2.msra.mxu0 0.0
    %10356 = vmatprep.subr.mxu0 0.0
    %10357 = vmatpush2.msra.mxu0 0.0
    %10358 = vmatprep.subr.mxu0 0.0
    %10359 = vmatpush2.msra.mxu0 0.0
    %10360 = vmatprep.subr.mxu0 0.0
    %10361 = vmatpush2.msra.mxu0 0.0
    %10362 = vmatprep.subr.mxu0 0.0
    %10363 = vmatpush2.msra.mxu0 0.0
    %10364 = vmatprep.subr.mxu0 0.0
    %10365 = vmatpush2.msra.mxu0 0.0
    %10366 = vmatprep.subr.mxu0 0.0
    %10367 = vmatpush2.msra.mxu0 0.0
    %10368 = vmatprep.mubr.f32.mxu0 0.0
    %10369 = vmatmul.mubr.f32.gmra.mxu0 %v10231
    %v10370 = vpop.f32.mrf.mxu0
    %v10371 = vadd.f32 %v104, %v10370
    %v10372 = vpop.f32.mrf.mxu0
    %v10373 = vadd.f32 %v108, %v10372
    %10374 = vdwg.mxu0
    %v10375 = vtanh.pop %v10300
    %v10376 = vtanh.pop %v10302
    %v10377 = vtanh.pop %v10371
    %v10378 = vtanh.pop %v10373
    %v10379 = vmul.f32 %v10375, %v9446
    %v10380 = vmul.f32 %v10376, %v9454
    %v10381 = vmul.f32 %v10377, %v9453
    %v10382 = vmul.f32 %v10378, %v9455
    %v10383 = vmul.f32 %v10084, -0.001
    %v10384 = vmul.f32 %v10383, %v9143
    %v10385 = vadd.f32 %v10384, %v10379
    %v10386 = vadd.f32 %v10385, %v10380
    %v10387 = vadd.f32 %v10386, %v10381
    %v10388 = vadd.f32 %v10387, %v10382
    %v10389 = vadd.f32 %v9775, %v10081
    %v10390 = vmul.f32 %v10389, 3.0
    %v10391 = vadd.f32 %v9469, %v10390
    %v10392 = vadd.f32 %v10391, %v10388
    %v10393 = vmul.f32 %v10392, 0.125
    %v10394 = vadd.f32 %v9138, %v10393
    %s10395 = scalar_lea.vmem [#allocation5], 16
    %10396 = vst [vmem:[%s10395] sm:$0x3] %v10394
    // Predicated region
    $region22: #{tpu_custom_call.1} parent=1 // pred_check
      _
    $region23: #{tpu_custom_call.1} parent=1 // pred_check_branch
      %10398 = sbr.rel (0) target = $region25
    $region24: #{tpu_custom_call.1} parent=1 // pred_region
      %s10400 = ssub.s32 288, 288
      %10401 = vsyncadd [#allocation4], %s10400
      %s10402 = sshll.u32 [#allocation5], 4
      %s10403 = int_to_ptr.vmem [resolvable:$true] %s10402
      %10408 = dma.vmem_to_hbm [thread:$0]  %s10403, 288, %s4, [#allocation4], 32, 32, 2
    $region25: #{tpu_custom_call.1} parent=1 // pred_fallthru
      _
    // Predicated region
    $region26: #{tpu_custom_call.1} parent=1 // pred_check
      _
    $region27: #{tpu_custom_call.1} parent=1 // pred_check_branch
      %10410 = sbr.rel (0) target = $region29
    $region28: #{tpu_custom_call.1} parent=1 // pred_region
      %10411 = dma.done [#allocation4], 288
    $region29: #{tpu_custom_call.1} parent=1 // pred_fallthru
      _
    %10412 = vsyncpa [#allocation3], 1
    %10413 = vsyncpa [#allocation4], 1

</llo_original>
